<compile_context>
chip_gen: v5e
topology: v5e:2x2
jax: 0.10.0
libtpu: 0.0.40
codegen_flags: <defaults>
</compile_context>

<pallas_src>
import numpy as np
import jax
import jax.numpy as jnp
from jax.experimental import pallas as pl
from jax.experimental.pallas import tpu as pltpu

HI = jax.lax.Precision.HIGHEST


# -----------------------------------------------------------------------------
# Fused kernel: conv1+relu+pool1 -> conv2+relu+pool2 -> flatten+fc1
# -----------------------------------------------------------------------------
def net_kernel(x1_ref, t1_ref, t2_ref, b2_ref, wf_ref, bf_ref, o_ref):
    TB = o_ref.shape[0]          # batch-tile size
    HP = 16 * TB                 # rows per conv1 h-parity half
    M2 = 7 * TB                  # conv2 output rows per row-parity (valid only)

    # ---- conv1 (3x3, pad 1) + bias (folded via constant-1 lane) + ReLU -------
    #   x1 rows : (h_parity, pad_group, m, n)  -> 32*TB  (some rows are exact 0)
    #   t1 cols : w_parity*256 + (w//2)*16 + c_out -> 512 (cols 224..255 of each
    #             256-half are zero padding so pool1 lane slices are 128-aligned)
    y1 = jnp.maximum(
        jnp.dot(x1_ref[...], t1_ref[...],
                preferred_element_type=jnp.float32, precision=HI), 0.0)

    # ---- pool1 (2x2): max of the two h-parity ROW halves, then of the two
    #      128-aligned w-parity LANE halves.  Resulting row layout:
    #        rows [0   , 8*TB ) = PE : spatially padded EVEN rows, PE[m*TB+n]
    #        rows [8*TB, 16*TB) = PO : spatially padded ODD  rows, PO[m*TB+n]
    #      (zero-pad rows are exact zeros thanks to the bias fold).
    ph = jnp.maximum(y1[0:HP, :], y1[HP:2 * HP, :])
    pooled = jnp.maximum(ph[:, 0:256], ph[:, 256:512])        # (16*TB, 256)
    pe = pooled[0:8 * TB, :]
    po = pooled[8 * TB:16 * TB, :]

    # ---- conv2 (3x3, pad 1) as 6 whole-array shifted MXU matmuls -------------
    #      even output rows h2=2m and odd rows h2=2m+1 (m in 0..6); contraction
    #      over (pooled1 column, c_in) = 256 lanes.  No junk rows are produced.
    acc_e = (jnp.dot(pe[0:M2], t2_ref[0], preferred_element_type=jnp.float32, precision=HI)
             + jnp.dot(po[0:M2], t2_ref[1], preferred_element_type=jnp.float32, precision=HI)
             + jnp.dot(pe[TB:TB + M2], t2_ref[2], preferred_element_type=jnp.float32, precision=HI))
    acc_o = (jnp.dot(po[0:M2], t2_ref[0], preferred_element_type=jnp.float32, precision=HI)
             + jnp.dot(pe[TB:TB + M2], t2_ref[1], preferred_element_type=jnp.float32, precision=HI)
             + jnp.dot(po[TB:TB + M2], t2_ref[2], preferred_element_type=jnp.float32, precision=HI))
    b2row = b2_ref[...]                                       # (1, 56)
    y2e = jnp.maximum(acc_e + b2row, 0.0)
    y2o = jnp.maximum(acc_o + b2row, 0.0)

    # ---- pool2 (2x2): h-pair max = even-vs-odd whole-array max; w-pair max =
    #      max of the two 28-lane halves.  Rows: r = hk*TB + n, lanes: (w//2)*4+c.
    hmax = jnp.maximum(y2e, y2o)                              # (7*TB, 56)
    pooled2 = jnp.maximum(hmax[:, 0:28], hmax[:, 28:56])      # (7*TB, 28)

    # ---- fc1: NCHW flatten folded into 7 accumulated (TB,28)@(28,10) matmuls --
    acc = jnp.dot(pooled2[0:TB, :], wf_ref[0],
                  preferred_element_type=jnp.float32, precision=HI)
    for hk in range(1, 7):
        acc = acc + jnp.dot(pooled2[hk * TB:(hk + 1) * TB, :], wf_ref[hk],
                            preferred_element_type=jnp.float32, precision=HI)
    o_ref[...] = (acc + bf_ref[...]).astype(o_ref.dtype)


# -----------------------------------------------------------------------------
# One-time parameter packing (hoisted out of the forward path; pure numpy)
# -----------------------------------------------------------------------------
def prepare_params(params):
    w1, b1, w2, b2, wf, bf = (np.asarray(p, np.float32) for p in params)

    # conv1 -> banded (91, 512). row = dh*30 + padded_input_col, row 90 = bias.
    # col = w_parity*256 + (w//2)*16 + c_out; cols 224..255 of each half stay 0.
    t1 = np.zeros((91, 512), np.float32)
    for dh in range(3):
        for dw in range(3):
            for p in range(2):
                for k in range(14):
                    row = dh * 30 + 2 * k + p + dw
                    c0 = p * 256 + k * 16
                    t1[row, c0:c0 + 16] = w1[:, 0, dh, dw]
    for p in range(2):
        for k in range(14):
            t1[90, p * 256 + k * 16: p * 256 + k * 16 + 16] = b1

    # conv2 -> banded (3, 256, 56). [dh] row = (pooled1 col)*16 + c_in,
    # col = w_parity*28 + (w//2)*4 + c_out. W-pad taps dropped (data is 0 there).
    t2 = np.zeros((3, 256, 56), np.float32)
    for dh in range(3):
        for dw in range(3):
            for w2c in range(14):
                pw = w2c + dw
                if 1 <= pw <= 14:
                    r0 = (pw - 1) * 16
                    c0 = (w2c % 2) * 28 + (w2c // 2) * 4
                    t2[dh, r0:r0 + 16, c0:c0 + 4] = w2[:, :, dh, dw].T

    b2t = np.tile(b2, 14).reshape(1, 56)

    # fc1 weights permuted to the kernel feature order (hk, w//2, c_out) so the
    # torch NCHW .view(-1,196) semantics are exact; shaped (7, 28, 10).
    wfp = wf.reshape(10, 4, 7, 7).transpose(2, 3, 1, 0).reshape(7, 28, 10).copy()
    bfr = bf.reshape(1, 10)

    return (jnp.asarray(t1), jnp.asarray(t2), jnp.asarray(b2t),
            jnp.asarray(wfp), jnp.asarray(bfr))


# -----------------------------------------------------------------------------
# Per-call input prep: im2col + constant-1 bias lane, rows pre-permuted so the
# kernel's pool1/conv2/pool2/fc stages are pure whole-array ops.
# -----------------------------------------------------------------------------
def _build_x1(x_nchw, TB):
    N = x_nchw.shape[0]
    NT = N // TB
    xpad = jnp.pad(x_nchw[:, 0].astype(jnp.float32), ((0, 0), (1, 1), (1, 1)))   # (N,30,30)
    rows = jnp.concatenate([xpad[:, dh:dh + 28, :] for dh in range(3)], axis=-1)  # (N,28,90)
    rows = jnp.concatenate([rows, jnp.ones((N, 28, 1), jnp.float32)], axis=-1)    # (N,28,91)
    rows = rows.reshape(N, 7, 2, 2, 91)            # [n, j, q, p_h, :], h = 2*(2j+q)+p_h
    odd = rows[:, :, 1, :, :].reshape(NT, TB, 7, 2, 91)    # hk1 = 2j+1 -> PE, m=j+1
    even = rows[:, :, 0, :, :].reshape(NT, TB, 7, 2, 91)   # hk1 = 2j   -> PO, m=j
    odd = jnp.transpose(odd, (0, 3, 2, 1, 4))      # [t, p_h, m-1, n, :]
    even = jnp.transpose(even, (0, 3, 2, 1, 4))    # [t, p_h, m,   n, :]
    z = jnp.zeros((NT, 2, 1, TB, 91), jnp.float32)
    pe_rows = jnp.concatenate([z, odd], axis=2)    # m = 0..7 (m=0 -> zero pad row)
    po_rows = jnp.concatenate([even, z], axis=2)   # m = 0..7 (m=7 -> zero pad row)
    x1 = jnp.stack([pe_rows, po_rows], axis=2)     # [t, p_h, G, m, n, :]
    return x1.reshape(NT * 32 * TB, 91)


def net_forward_pallas(x_nchw, packed):
    t1, t2, b2t, wfp, bfr = packed
    N = x_nchw.shape[0]

    # Batch tiling: one grid step per tile of TB samples ("parallel" lets the two
    # v7x TensorCores split tiles; TB<=64 keeps per-tile VMEM well under 64 MiB).
    if N <= 64:
        TB, NT = N, 1
        xin = x_nchw
    else:
        TB = 64
        NT = -(-N // TB)
        xin = jnp.pad(x_nchw, ((0, NT * TB - N), (0, 0), (0, 0), (0, 0)))

    x1 = _build_x1(xin, TB)                                    # (NT*32*TB, 91)

    out = pl.pallas_call(
        net_kernel,
        out_shape=jax.ShapeDtypeStruct((NT * TB, 10), jnp.float32),
        grid=(NT,),
        in_specs=[
            pl.BlockSpec((32 * TB, 91), lambda i: (i, 0)),      # per-tile input
            pl.BlockSpec((91, 512), lambda i: (0, 0)),          # conv1 banded W (+bias row)
            pl.BlockSpec((3, 256, 56), lambda i: (0, 0, 0)),    # conv2 banded W
            pl.BlockSpec((1, 56), lambda i: (0, 0)),            # conv2 bias tile
            pl.BlockSpec((7, 28, 10), lambda i: (0, 0, 0)),     # fc1 weights (per hk)
            pl.BlockSpec((1, 10), lambda i: (0, 0)),            # fc1 bias
        ],
        out_specs=pl.BlockSpec((TB, 10), lambda i: (i, 0)),
        compiler_params=pltpu.CompilerParams(
            dimension_semantics=("parallel",),
            vmem_limit_bytes=32 * 1024 * 1024),
    )(x1, t1, t2, b2t, wfp, bfr)
    return out[:N]


# -----------------------------------------------------------------------------
# Pure-JAX reference (mirrors the PyTorch module exactly)
# -----------------------------------------------------------------------------
def _maxpool_ref(y):
    n, c, h, w = y.shape
    return y.reshape(n, c, h // 2, 2, w // 2, 2).max(axis=(3, 5))


def net_forward_reference(x_nchw, params):
    w1, b1, w2, b2, wf, bf = params
    dn = ("NCHW", "OIHW", "NCHW")
    y = jax.lax.conv_general_dilated(x_nchw, w1, (1, 1), ((1, 1), (1, 1)),
                                     dimension_numbers=dn, precision=HI)
    y = _maxpool_ref(jnp.maximum(y + b1[None, :, None, None], 0.0))
    y = jax.lax.conv_general_dilated(y, w2, (1, 1), ((1, 1), (1, 1)),
                                     dimension_numbers=dn, precision=HI)
    y = _maxpool_ref(jnp.maximum(y + b2[None, :, None, None], 0.0))
    return jnp.dot(y.reshape(y.shape[0], -1), wf.T, precision=HI) + bf


# -----------------------------------------------------------------------------
# Main
# -----------------------------------------------------------------------------
if __name__ == "__main__":
    key = jax.random.PRNGKey(0)
    kx, k1, k2, k3, k4, k5, k6 = jax.random.split(key, 7)

    # Deterministic synthetic parameters (PyTorch shapes).
    w1 = jax.random.normal(k1, (16, 1, 3, 3), jnp.float32) * 0.1   # conv1.weight
    b1 = jax.random.normal(k2, (16,), jnp.float32) * 0.1           # conv1.bias
    w2 = jax.random.normal(k3, (4, 16, 3, 3), jnp.float32) * 0.1   # conv2.weight
    b2 = jax.random.normal(k4, (4,), jnp.float32) * 0.1            # conv2.bias
    wf = jax.random.normal(k5, (10, 196), jnp.float32) * 0.05      # fc1.weight
    bf = jax.random.normal(k6, (10,), jnp.float32) * 0.05          # fc1.bias
    params = (w1, b1, w2, b2, wf, bf)

    packed = prepare_params(params)   # one-time packing, hoisted out of forward

    # Input: the module implies 1x28x28 images (4*7*7 = 196 flattened features).
    x = jax.random.normal(kx, (2, 1, 28, 28), jnp.float32)

    fwd = jax.jit(net_forward_pallas)
    out = jax.block_until_ready(fwd(x, packed))
    ref = net_forward_reference(x, params)

    assert out.shape == (2, 10), out.shape
    if not jnp.allclose(out, ref, atol=1e-3, rtol=1e-3):
        raise AssertionError("Pallas output does not match JAX reference")

    print("KERNEL_OK")
</pallas_src>

<mosaic_0001>
module attributes {stable_mosaic.version = 11 : i64} {
  func.func @net_kernel(%arg0: i32, %arg1: memref<64x91xf32, #tpu.memory_space<vmem>>, %arg2: memref<91x512xf32, #tpu.memory_space<vmem>>, %arg3: memref<3x256x56xf32, #tpu.memory_space<vmem>>, %arg4: memref<1x56xf32, #tpu.memory_space<vmem>>, %arg5: memref<7x28x10xf32, #tpu.memory_space<vmem>>, %arg6: memref<1x10xf32, #tpu.memory_space<vmem>>, %arg7: memref<2x10xf32, #tpu.memory_space<vmem>>) attributes {dimension_semantics = [#tpu.dimension_semantics<parallel>], iteration_bounds = array<i64: 1>, scalar_prefetch = 0 : i64, scratch_operands = 0 : i64, tpu.core_type = #tpu.core_type<tc>, window_params = [{transform_indices = @transform_0, window_bounds = array<i64: 64, 91>}, {pipeline_mode = #tpu.pipeline_mode<synchronous>, transform_indices = @transform_1, window_bounds = array<i64: 91, 512>}, {pipeline_mode = #tpu.pipeline_mode<synchronous>, transform_indices = @transform_2, window_bounds = array<i64: 3, 256, 56>}, {pipeline_mode = #tpu.pipeline_mode<synchronous>, transform_indices = @transform_3, window_bounds = array<i64: 1, 56>}, {pipeline_mode = #tpu.pipeline_mode<synchronous>, transform_indices = @transform_4, window_bounds = array<i64: 7, 28, 10>}, {pipeline_mode = #tpu.pipeline_mode<synchronous>, transform_indices = @transform_5, window_bounds = array<i64: 1, 10>}, {transform_indices = @transform_6, window_bounds = array<i64: 2, 10>}]} {
    %c0 = arith.constant 0 : index
    %c0_0 = arith.constant 0 : index
    %0 = vector.load %arg1[%c0, %c0_0] : memref<64x91xf32, #tpu.memory_space<vmem>>, vector<64x91xf32>
    %c0_1 = arith.constant 0 : index
    %c0_2 = arith.constant 0 : index
    %1 = vector.load %arg2[%c0_1, %c0_2] : memref<91x512xf32, #tpu.memory_space<vmem>>, vector<91x512xf32>
    %cst = arith.constant dense<0.000000e+00> : vector<64x512xf32>
    %2 = tpu.matmul %0, %1, %cst {dimension_numbers = #tpu.dot_dimension_numbers<[1], [0], [0], [1], [0, 0, 1, 1], [], []>, precision = #tpu.contract_precision<fp32>} : vector<64x91xf32>, vector<91x512xf32>, vector<64x512xf32> -> vector<64x512xf32>
    %cst_3 = arith.constant 0.000000e+00 : f32
    %3 = vector.broadcast %cst_3 : f32 to vector<64x512xf32>
    %4 = arith.maximumf %2, %3 : vector<64x512xf32>
    %5 = vector.extract_strided_slice %4 {offsets = [0, 0], sizes = [32, 512], strides = [1, 1]} : vector<64x512xf32> to vector<32x512xf32>
    %6 = vector.extract_strided_slice %4 {offsets = [32, 0], sizes = [32, 512], strides = [1, 1]} : vector<64x512xf32> to vector<32x512xf32>
    %7 = arith.maximumf %5, %6 : vector<32x512xf32>
    %8 = vector.extract_strided_slice %7 {offsets = [0, 0], sizes = [32, 256], strides = [1, 1]} : vector<32x512xf32> to vector<32x256xf32>
    %9 = vector.extract_strided_slice %7 {offsets = [0, 256], sizes = [32, 256], strides = [1, 1]} : vector<32x512xf32> to vector<32x256xf32>
    %10 = arith.maximumf %8, %9 : vector<32x256xf32>
    %11 = vector.extract_strided_slice %10 {offsets = [0, 0], sizes = [16, 256], strides = [1, 1]} : vector<32x256xf32> to vector<16x256xf32>
    %12 = vector.extract_strided_slice %10 {offsets = [16, 0], sizes = [16, 256], strides = [1, 1]} : vector<32x256xf32> to vector<16x256xf32>
    %13 = vector.extract_strided_slice %11 {offsets = [0, 0], sizes = [14, 256], strides = [1, 1]} : vector<16x256xf32> to vector<14x256xf32>
    %c0_4 = arith.constant 0 : index
    %c0_5 = arith.constant 0 : index
    %c0_6 = arith.constant 0 : index
    %14 = vector.load %arg3[%c0_4, %c0_5, %c0_6] : memref<3x256x56xf32, #tpu.memory_space<vmem>>, vector<1x256x56xf32>
    %15 = vector.shape_cast %14 : vector<1x256x56xf32> to vector<256x56xf32>
    %cst_7 = arith.constant dense<0.000000e+00> : vector<14x56xf32>
    %16 = tpu.matmul %13, %15, %cst_7 {dimension_numbers = #tpu.dot_dimension_numbers<[1], [0], [0], [1], [0, 0, 1, 1], [], []>, precision = #tpu.contract_precision<fp32>} : vector<14x256xf32>, vector<256x56xf32>, vector<14x56xf32> -> vector<14x56xf32>
    %17 = vector.extract_strided_slice %12 {offsets = [0, 0], sizes = [14, 256], strides = [1, 1]} : vector<16x256xf32> to vector<14x256xf32>
    %c1 = arith.constant 1 : index
    %c0_8 = arith.constant 0 : index
    %c0_9 = arith.constant 0 : index
    %18 = vector.load %arg3[%c1, %c0_8, %c0_9] : memref<3x256x56xf32, #tpu.memory_space<vmem>>, vector<1x256x56xf32>
    %19 = vector.shape_cast %18 : vector<1x256x56xf32> to vector<256x56xf32>
    %cst_10 = arith.constant dense<0.000000e+00> : vector<14x56xf32>
    %20 = tpu.matmul %17, %19, %cst_10 {dimension_numbers = #tpu.dot_dimension_numbers<[1], [0], [0], [1], [0, 0, 1, 1], [], []>, precision = #tpu.contract_precision<fp32>} : vector<14x256xf32>, vector<256x56xf32>, vector<14x56xf32> -> vector<14x56xf32>
    %21 = arith.addf %16, %20 : vector<14x56xf32>
    %22 = vector.extract_strided_slice %11 {offsets = [2, 0], sizes = [14, 256], strides = [1, 1]} : vector<16x256xf32> to vector<14x256xf32>
    %c2 = arith.constant 2 : index
    %c0_11 = arith.constant 0 : index
    %c0_12 = arith.constant 0 : index
    %23 = vector.load %arg3[%c2, %c0_11, %c0_12] : memref<3x256x56xf32, #tpu.memory_space<vmem>>, vector<1x256x56xf32>
    %24 = vector.shape_cast %23 : vector<1x256x56xf32> to vector<256x56xf32>
    %cst_13 = arith.constant dense<0.000000e+00> : vector<14x56xf32>
    %25 = tpu.matmul %22, %24, %cst_13 {dimension_numbers = #tpu.dot_dimension_numbers<[1], [0], [0], [1], [0, 0, 1, 1], [], []>, precision = #tpu.contract_precision<fp32>} : vector<14x256xf32>, vector<256x56xf32>, vector<14x56xf32> -> vector<14x56xf32>
    %26 = arith.addf %21, %25 : vector<14x56xf32>
    %27 = vector.extract_strided_slice %12 {offsets = [0, 0], sizes = [14, 256], strides = [1, 1]} : vector<16x256xf32> to vector<14x256xf32>
    %c0_14 = arith.constant 0 : index
    %c0_15 = arith.constant 0 : index
    %c0_16 = arith.constant 0 : index
    %28 = vector.load %arg3[%c0_14, %c0_15, %c0_16] : memref<3x256x56xf32, #tpu.memory_space<vmem>>, vector<1x256x56xf32>
    %29 = vector.shape_cast %28 : vector<1x256x56xf32> to vector<256x56xf32>
    %cst_17 = arith.constant dense<0.000000e+00> : vector<14x56xf32>
    %30 = tpu.matmul %27, %29, %cst_17 {dimension_numbers = #tpu.dot_dimension_numbers<[1], [0], [0], [1], [0, 0, 1, 1], [], []>, precision = #tpu.contract_precision<fp32>} : vector<14x256xf32>, vector<256x56xf32>, vector<14x56xf32> -> vector<14x56xf32>
    %31 = vector.extract_strided_slice %11 {offsets = [2, 0], sizes = [14, 256], strides = [1, 1]} : vector<16x256xf32> to vector<14x256xf32>
    %c1_18 = arith.constant 1 : index
    %c0_19 = arith.constant 0 : index
    %c0_20 = arith.constant 0 : index
    %32 = vector.load %arg3[%c1_18, %c0_19, %c0_20] : memref<3x256x56xf32, #tpu.memory_space<vmem>>, vector<1x256x56xf32>
    %33 = vector.shape_cast %32 : vector<1x256x56xf32> to vector<256x56xf32>
    %cst_21 = arith.constant dense<0.000000e+00> : vector<14x56xf32>
    %34 = tpu.matmul %31, %33, %cst_21 {dimension_numbers = #tpu.dot_dimension_numbers<[1], [0], [0], [1], [0, 0, 1, 1], [], []>, precision = #tpu.contract_precision<fp32>} : vector<14x256xf32>, vector<256x56xf32>, vector<14x56xf32> -> vector<14x56xf32>
    %35 = arith.addf %30, %34 : vector<14x56xf32>
    %36 = vector.extract_strided_slice %12 {offsets = [2, 0], sizes = [14, 256], strides = [1, 1]} : vector<16x256xf32> to vector<14x256xf32>
    %c2_22 = arith.constant 2 : index
    %c0_23 = arith.constant 0 : index
    %c0_24 = arith.constant 0 : index
    %37 = vector.load %arg3[%c2_22, %c0_23, %c0_24] : memref<3x256x56xf32, #tpu.memory_space<vmem>>, vector<1x256x56xf32>
    %38 = vector.shape_cast %37 : vector<1x256x56xf32> to vector<256x56xf32>
    %cst_25 = arith.constant dense<0.000000e+00> : vector<14x56xf32>
    %39 = tpu.matmul %36, %38, %cst_25 {dimension_numbers = #tpu.dot_dimension_numbers<[1], [0], [0], [1], [0, 0, 1, 1], [], []>, precision = #tpu.contract_precision<fp32>} : vector<14x256xf32>, vector<256x56xf32>, vector<14x56xf32> -> vector<14x56xf32>
    %40 = arith.addf %35, %39 : vector<14x56xf32>
    %c0_26 = arith.constant 0 : index
    %c0_27 = arith.constant 0 : index
    %41 = vector.load %arg4[%c0_26, %c0_27] : memref<1x56xf32, #tpu.memory_space<vmem>>, vector<1x56xf32>
    %42 = vector.broadcast %41 : vector<1x56xf32> to vector<14x56xf32>
    %43 = arith.addf %26, %42 : vector<14x56xf32>
    %cst_28 = arith.constant 0.000000e+00 : f32
    %44 = vector.broadcast %cst_28 : f32 to vector<14x56xf32>
    %45 = arith.maximumf %43, %44 : vector<14x56xf32>
    %46 = vector.broadcast %41 : vector<1x56xf32> to vector<14x56xf32>
    %47 = arith.addf %40, %46 : vector<14x56xf32>
    %cst_29 = arith.constant 0.000000e+00 : f32
    %48 = vector.broadcast %cst_29 : f32 to vector<14x56xf32>
    %49 = arith.maximumf %47, %48 : vector<14x56xf32>
    %50 = arith.maximumf %45, %49 : vector<14x56xf32>
    %51 = vector.extract_strided_slice %50 {offsets = [0, 0], sizes = [14, 28], strides = [1, 1]} : vector<14x56xf32> to vector<14x28xf32>
    %52 = vector.extract_strided_slice %50 {offsets = [0, 28], sizes = [14, 28], strides = [1, 1]} : vector<14x56xf32> to vector<14x28xf32>
    %53 = arith.maximumf %51, %52 : vector<14x28xf32>
    %54 = vector.extract_strided_slice %53 {offsets = [0, 0], sizes = [2, 28], strides = [1, 1]} : vector<14x28xf32> to vector<2x28xf32>
    %c0_30 = arith.constant 0 : index
    %c0_31 = arith.constant 0 : index
    %c0_32 = arith.constant 0 : index
    %55 = vector.load %arg5[%c0_30, %c0_31, %c0_32] : memref<7x28x10xf32, #tpu.memory_space<vmem>>, vector<1x28x10xf32>
    %56 = vector.shape_cast %55 : vector<1x28x10xf32> to vector<28x10xf32>
    %cst_33 = arith.constant dense<0.000000e+00> : vector<2x10xf32>
    %57 = tpu.matmul %54, %56, %cst_33 {dimension_numbers = #tpu.dot_dimension_numbers<[1], [0], [0], [1], [0, 0, 1, 1], [], []>, precision = #tpu.contract_precision<fp32>} : vector<2x28xf32>, vector<28x10xf32>, vector<2x10xf32> -> vector<2x10xf32>
    %58 = vector.extract_strided_slice %53 {offsets = [2, 0], sizes = [2, 28], strides = [1, 1]} : vector<14x28xf32> to vector<2x28xf32>
    %c1_34 = arith.constant 1 : index
    %c0_35 = arith.constant 0 : index
    %c0_36 = arith.constant 0 : index
    %59 = vector.load %arg5[%c1_34, %c0_35, %c0_36] : memref<7x28x10xf32, #tpu.memory_space<vmem>>, vector<1x28x10xf32>
    %60 = vector.shape_cast %59 : vector<1x28x10xf32> to vector<28x10xf32>
    %cst_37 = arith.constant dense<0.000000e+00> : vector<2x10xf32>
    %61 = tpu.matmul %58, %60, %cst_37 {dimension_numbers = #tpu.dot_dimension_numbers<[1], [0], [0], [1], [0, 0, 1, 1], [], []>, precision = #tpu.contract_precision<fp32>} : vector<2x28xf32>, vector<28x10xf32>, vector<2x10xf32> -> vector<2x10xf32>
    %62 = arith.addf %57, %61 : vector<2x10xf32>
    %63 = vector.extract_strided_slice %53 {offsets = [4, 0], sizes = [2, 28], strides = [1, 1]} : vector<14x28xf32> to vector<2x28xf32>
    %c2_38 = arith.constant 2 : index
    %c0_39 = arith.constant 0 : index
    %c0_40 = arith.constant 0 : index
    %64 = vector.load %arg5[%c2_38, %c0_39, %c0_40] : memref<7x28x10xf32, #tpu.memory_space<vmem>>, vector<1x28x10xf32>
    %65 = vector.shape_cast %64 : vector<1x28x10xf32> to vector<28x10xf32>
    %cst_41 = arith.constant dense<0.000000e+00> : vector<2x10xf32>
    %66 = tpu.matmul %63, %65, %cst_41 {dimension_numbers = #tpu.dot_dimension_numbers<[1], [0], [0], [1], [0, 0, 1, 1], [], []>, precision = #tpu.contract_precision<fp32>} : vector<2x28xf32>, vector<28x10xf32>, vector<2x10xf32> -> vector<2x10xf32>
    %67 = arith.addf %62, %66 : vector<2x10xf32>
    %68 = vector.extract_strided_slice %53 {offsets = [6, 0], sizes = [2, 28], strides = [1, 1]} : vector<14x28xf32> to vector<2x28xf32>
    %c3 = arith.constant 3 : index
    %c0_42 = arith.constant 0 : index
    %c0_43 = arith.constant 0 : index
    %69 = vector.load %arg5[%c3, %c0_42, %c0_43] : memref<7x28x10xf32, #tpu.memory_space<vmem>>, vector<1x28x10xf32>
    %70 = vector.shape_cast %69 : vector<1x28x10xf32> to vector<28x10xf32>
    %cst_44 = arith.constant dense<0.000000e+00> : vector<2x10xf32>
    %71 = tpu.matmul %68, %70, %cst_44 {dimension_numbers = #tpu.dot_dimension_numbers<[1], [0], [0], [1], [0, 0, 1, 1], [], []>, precision = #tpu.contract_precision<fp32>} : vector<2x28xf32>, vector<28x10xf32>, vector<2x10xf32> -> vector<2x10xf32>
    %72 = arith.addf %67, %71 : vector<2x10xf32>
    %73 = vector.extract_strided_slice %53 {offsets = [8, 0], sizes = [2, 28], strides = [1, 1]} : vector<14x28xf32> to vector<2x28xf32>
    %c4 = arith.constant 4 : index
    %c0_45 = arith.constant 0 : index
    %c0_46 = arith.constant 0 : index
    %74 = vector.load %arg5[%c4, %c0_45, %c0_46] : memref<7x28x10xf32, #tpu.memory_space<vmem>>, vector<1x28x10xf32>
    %75 = vector.shape_cast %74 : vector<1x28x10xf32> to vector<28x10xf32>
    %cst_47 = arith.constant dense<0.000000e+00> : vector<2x10xf32>
    %76 = tpu.matmul %73, %75, %cst_47 {dimension_numbers = #tpu.dot_dimension_numbers<[1], [0], [0], [1], [0, 0, 1, 1], [], []>, precision = #tpu.contract_precision<fp32>} : vector<2x28xf32>, vector<28x10xf32>, vector<2x10xf32> -> vector<2x10xf32>
    %77 = arith.addf %72, %76 : vector<2x10xf32>
    %78 = vector.extract_strided_slice %53 {offsets = [10, 0], sizes = [2, 28], strides = [1, 1]} : vector<14x28xf32> to vector<2x28xf32>
    %c5 = arith.constant 5 : index
    %c0_48 = arith.constant 0 : index
    %c0_49 = arith.constant 0 : index
    %79 = vector.load %arg5[%c5, %c0_48, %c0_49] : memref<7x28x10xf32, #tpu.memory_space<vmem>>, vector<1x28x10xf32>
    %80 = vector.shape_cast %79 : vector<1x28x10xf32> to vector<28x10xf32>
    %cst_50 = arith.constant dense<0.000000e+00> : vector<2x10xf32>
    %81 = tpu.matmul %78, %80, %cst_50 {dimension_numbers = #tpu.dot_dimension_numbers<[1], [0], [0], [1], [0, 0, 1, 1], [], []>, precision = #tpu.contract_precision<fp32>} : vector<2x28xf32>, vector<28x10xf32>, vector<2x10xf32> -> vector<2x10xf32>
    %82 = arith.addf %77, %81 : vector<2x10xf32>
    %83 = vector.extract_strided_slice %53 {offsets = [12, 0], sizes = [2, 28], strides = [1, 1]} : vector<14x28xf32> to vector<2x28xf32>
    %c6 = arith.constant 6 : index
    %c0_51 = arith.constant 0 : index
    %c0_52 = arith.constant 0 : index
    %84 = vector.load %arg5[%c6, %c0_51, %c0_52] : memref<7x28x10xf32, #tpu.memory_space<vmem>>, vector<1x28x10xf32>
    %85 = vector.shape_cast %84 : vector<1x28x10xf32> to vector<28x10xf32>
    %cst_53 = arith.constant dense<0.000000e+00> : vector<2x10xf32>
    %86 = tpu.matmul %83, %85, %cst_53 {dimension_numbers = #tpu.dot_dimension_numbers<[1], [0], [0], [1], [0, 0, 1, 1], [], []>, precision = #tpu.contract_precision<fp32>} : vector<2x28xf32>, vector<28x10xf32>, vector<2x10xf32> -> vector<2x10xf32>
    %87 = arith.addf %82, %86 : vector<2x10xf32>
    %c0_54 = arith.constant 0 : index
    %c0_55 = arith.constant 0 : index
    %88 = vector.load %arg6[%c0_54, %c0_55] : memref<1x10xf32, #tpu.memory_space<vmem>>, vector<1x10xf32>
    %89 = vector.broadcast %88 : vector<1x10xf32> to vector<2x10xf32>
    %90 = arith.addf %87, %89 : vector<2x10xf32>
    %c0_56 = arith.constant 0 : index
    %c0_57 = arith.constant 0 : index
    %91 = vector.load %arg7[%c0_56, %c0_57] : memref<2x10xf32, #tpu.memory_space<vmem>>, vector<2x10xf32>
    tpu.vector_store %arg7[%c0_56, %c0_57], %90 {strides = array<i32>} : memref<2x10xf32, #tpu.memory_space<vmem>>, vector<2x10xf32>,
    return
  }
  func.func @transform_0(%arg0: i32) -> (i32, i32) {
    %c0_i32 = arith.constant 0 : i32
    %c0_i32_0 = arith.constant 0 : i32
    return %arg0, %c0_i32 : i32, i32
  }
  func.func @transform_1(%arg0: i32) -> (i32, i32) {
    %c0_i32 = arith.constant 0 : i32
    %c0_i32_0 = arith.constant 0 : i32
    %c0_i32_1 = arith.constant 0 : i32
    return %c0_i32, %c0_i32_0 : i32, i32
  }
  func.func @transform_2(%arg0: i32) -> (i32, i32, i32) {
    %c0_i32 = arith.constant 0 : i32
    %c0_i32_0 = arith.constant 0 : i32
    %c0_i32_1 = arith.constant 0 : i32
    %c0_i32_2 = arith.constant 0 : i32
    return %c0_i32, %c0_i32_0, %c0_i32_1 : i32, i32, i32
  }
  func.func @transform_3(%arg0: i32) -> (i32, i32) {
    %c0_i32 = arith.constant 0 : i32
    %c0_i32_0 = arith.constant 0 : i32
    %c0_i32_1 = arith.constant 0 : i32
    return %c0_i32, %c0_i32_0 : i32, i32
  }
  func.func @transform_4(%arg0: i32) -> (i32, i32, i32) {
    %c0_i32 = arith.constant 0 : i32
    %c0_i32_0 = arith.constant 0 : i32
    %c0_i32_1 = arith.constant 0 : i32
    %c0_i32_2 = arith.constant 0 : i32
    return %c0_i32, %c0_i32_0, %c0_i32_1 : i32, i32, i32
  }
  func.func @transform_5(%arg0: i32) -> (i32, i32) {
    %c0_i32 = arith.constant 0 : i32
    %c0_i32_0 = arith.constant 0 : i32
    %c0_i32_1 = arith.constant 0 : i32
    return %c0_i32, %c0_i32_0 : i32, i32
  }
  func.func @transform_6(%arg0: i32) -> (i32, i32) {
    %c0_i32 = arith.constant 0 : i32
    %c0_i32_0 = arith.constant 0 : i32
    return %arg0, %c0_i32 : i32, i32
  }
}

</mosaic_0001>

<llo_original>
// kernel: net_forward_pallas.1
$region0: #{net_forward_pallas.1}
  #allocation0 [shape = 'u32[]', space=smem, size = 0x4, offset = 0x4, fixed_abs, tag = 'smem constant byte address 0x4 - core index']
  #allocation1 [shape = 'u32[72,128]{1,0:T(1,128)}', space=vmem, size = 0x9000, scoped, tag = 'internal scratch']
  %s0 = inlined_call_operand.vmem [shape: f32[64,91], index: 0, kind: input, shape index: {}]
  %s1 = inlined_call_operand.vmem [shape: f32[91,512], index: 1, kind: input, shape index: {}]
  %s2 = inlined_call_operand.vmem [shape: f32[3,256,56], index: 2, kind: input, shape index: {}]
  %s3 = inlined_call_operand.vmem [shape: f32[1,56], index: 3, kind: input, shape index: {}]
  %s4 = inlined_call_operand.vmem [shape: f32[7,28,10], index: 4, kind: input, shape index: {}]
  %s5 = inlined_call_operand.vmem [shape: f32[1,10], index: 5, kind: input, shape index: {}]
  %s6 = inlined_call_operand.hbm [shape: f32[2,10], index: 6, kind: output, shape index: {}]
  %s7 = sld [smem:[#allocation0]]
  $region34: #{net_forward_pallas.1} parent=0
    _
  %s9 = ssub.s32 1, %s7
  %s10 = scalar_select 0, %s9, %s7
  $region1: #{net_forward_pallas.1} parent=0
    #allocation2 [shape = 'u8[1024]{0}', space=vmem, size = 0x400, scoped, tag = 'output window, operand 0, single buffered']
    #allocation3 [shape = 's32[1]{0}', space=sflag, size = 0x4, scoped, tag = 'scoped memory for net_forward_pallas.1']
    %11 = vsyncpa [#allocation3], 0
    // Predicated region
    $region2: #{net_forward_pallas.1} parent=1 // pred_check
      _
    $region3: #{net_forward_pallas.1} parent=1 // pred_check_branch
      %13 = sbr.rel (0) target = $region5
    $region4: #{net_forward_pallas.1} parent=1 // pred_region
      _
    $region5: #{net_forward_pallas.1} parent=1 // pred_fallthru
      _
    // Predicated region
    $region6: #{net_forward_pallas.1} parent=1 // pred_check
      _
    $region7: #{net_forward_pallas.1} parent=1 // pred_check_branch
      %15 = sbr.rel (0) target = $region9
    $region8: #{net_forward_pallas.1} parent=1 // pred_region
      _
    $region9: #{net_forward_pallas.1} parent=1 // pred_fallthru
      _
    // Predicated region
    $region10: #{net_forward_pallas.1} parent=1 // pred_check
      _
    $region11: #{net_forward_pallas.1} parent=1 // pred_check_branch
      %17 = sbr.rel (0) target = $region13
    $region12: #{net_forward_pallas.1} parent=1 // pred_region
      _
    $region13: #{net_forward_pallas.1} parent=1 // pred_fallthru
      _
    // Predicated region
    $region14: #{net_forward_pallas.1} parent=1 // pred_check
      _
    $region15: #{net_forward_pallas.1} parent=1 // pred_check_branch
      %19 = sbr.rel (0) target = $region17
    $region16: #{net_forward_pallas.1} parent=1 // pred_region
      _
    $region17: #{net_forward_pallas.1} parent=1 // pred_fallthru
      _
    // Predicated region
    $region18: #{net_forward_pallas.1} parent=1 // pred_check
      _
    $region19: #{net_forward_pallas.1} parent=1 // pred_check_branch
      %21 = sbr.rel (0) target = $region21
    $region20: #{net_forward_pallas.1} parent=1 // pred_region
      _
    $region21: #{net_forward_pallas.1} parent=1 // pred_fallthru
      _
    // Predicated region
    $region22: #{net_forward_pallas.1} parent=1 // pred_check
      _
    $region23: #{net_forward_pallas.1} parent=1 // pred_check_branch
      %23 = sbr.rel (0) target = $region25
    $region24: #{net_forward_pallas.1} parent=1 // pred_region
      _
    $region25: #{net_forward_pallas.1} parent=1 // pred_fallthru
      _
    %v24 = vld [vmem:[%s0] sm:$0xff]
    %v25 = vld [vmem:[%s0 + $0x8] sm:$0xff]
    %v26 = vld [vmem:[%s0 + $0x10] sm:$0xff]
    %v27 = vld [vmem:[%s0 + $0x18] sm:$0xff]
    %v28 = vld [vmem:[%s0 + $0x20] sm:$0xff]
    %v29 = vld [vmem:[%s0 + $0x28] sm:$0xff]
    %v30 = vld [vmem:[%s0 + $0x30] sm:$0xff]
    %v31 = vld [vmem:[%s0 + $0x38] sm:$0xff]
    %v32 = vld [vmem:[%s1] sm:$0xff]
    %v33 = vld [vmem:[%s1 + $0x8] sm:$0xff]
    %v34 = vld [vmem:[%s1 + $0x10] sm:$0xff]
    %v35 = vld [vmem:[%s1 + $0x18] sm:$0xff]
    %v36 = vld [vmem:[%s1 + $0x20] sm:$0xff]
    %v37 = vld [vmem:[%s1 + $0x28] sm:$0xff]
    %v38 = vld [vmem:[%s1 + $0x30] sm:$0xff]
    %v39 = vld [vmem:[%s1 + $0x38] sm:$0xff]
    %v40 = vld [vmem:[%s1 + $0x40] sm:$0xff]
    %v41 = vld [vmem:[%s1 + $0x48] sm:$0xff]
    %v42 = vld [vmem:[%s1 + $0x50] sm:$0xff]
    %v43 = vld [vmem:[%s1 + $0x58] sm:$0xff]
    %v44 = vld [vmem:[%s1 + $0x60] sm:$0xff]
    %v45 = vld [vmem:[%s1 + $0x68] sm:$0xff]
    %v46 = vld [vmem:[%s1 + $0x70] sm:$0xff]
    %v47 = vld [vmem:[%s1 + $0x78] sm:$0xff]
    %v48 = vld [vmem:[%s1 + $0x80] sm:$0xff]
    %v49 = vld [vmem:[%s1 + $0x88] sm:$0xff]
    %v50 = vld [vmem:[%s1 + $0x90] sm:$0xff]
    %v51 = vld [vmem:[%s1 + $0x98] sm:$0xff]
    %v52 = vld [vmem:[%s1 + $0xa0] sm:$0xff]
    %v53 = vld [vmem:[%s1 + $0xa8] sm:$0xff]
    %v54 = vld [vmem:[%s1 + $0xb0] sm:$0xff]
    %v55 = vld [vmem:[%s1 + $0xb8] sm:$0xff]
    %v56 = vld [vmem:[%s1 + $0xc0] sm:$0xff]
    %v57 = vld [vmem:[%s1 + $0xc8] sm:$0xff]
    %v58 = vld [vmem:[%s1 + $0xd0] sm:$0xff]
    %v59 = vld [vmem:[%s1 + $0xd8] sm:$0xff]
    %v60 = vld [vmem:[%s1 + $0xe0] sm:$0xff]
    %v61 = vld [vmem:[%s1 + $0xe8] sm:$0xff]
    %v62 = vld [vmem:[%s1 + $0xf0] sm:$0xff]
    %v63 = vld [vmem:[%s1 + $0xf8] sm:$0xff]
    %v64 = vld [vmem:[%s1 + $0x100] sm:$0xff]
    %v65 = vld [vmem:[%s1 + $0x108] sm:$0xff]
    %v66 = vld [vmem:[%s1 + $0x110] sm:$0xff]
    %v67 = vld [vmem:[%s1 + $0x118] sm:$0xff]
    %v68 = vld [vmem:[%s1 + $0x120] sm:$0xff]
    %v69 = vld [vmem:[%s1 + $0x128] sm:$0xff]
    %v70 = vld [vmem:[%s1 + $0x130] sm:$0xff]
    %v71 = vld [vmem:[%s1 + $0x138] sm:$0xff]
    %v72 = vld [vmem:[%s1 + $0x140] sm:$0xff]
    %v73 = vld [vmem:[%s1 + $0x148] sm:$0xff]
    %v74 = vld [vmem:[%s1 + $0x150] sm:$0xff]
    %v75 = vld [vmem:[%s1 + $0x158] sm:$0xff]
    %v76 = vld [vmem:[%s1 + $0x160] sm:$0x7]
    %v77 = vld [vmem:[%s1 + $0x168] sm:$0x7]
    %v78 = vld [vmem:[%s1 + $0x170] sm:$0x7]
    %v79 = vld [vmem:[%s1 + $0x178] sm:$0x7]
    %vm80 = vcmask 744448
    %v82 = vsel %vm80, %v24, 0
    %v85 = vsel %vm80, %v25, 0
    %v88 = vsel %vm80, %v26, 0
    %v91 = vsel %vm80, %v27, 0
    %v94 = vsel %vm80, %v28, 0
    %v97 = vsel %vm80, %v29, 0
    %v100 = vsel %vm80, %v30, 0
    %v103 = vsel %vm80, %v31, 0
    %vm105 = vcmask 1042432
    %v107 = vsel %vm105, %v76, 0
    %v110 = vsel %vm105, %v77, 0
    %v113 = vsel %vm105, %v78, 0
    %v116 = vsel %vm105, %v79, 0
    %118 = vmatpush.msra.mxu0 0.0
    %119 = vmatpush.msra.mxu0 0.0
    %120 = vmatpush.msra.mxu0 0.0
    %121 = vmatpush.msra.mxu0 0.0
    %v122 = vand.u32 %v107, 4294901760
    %123 = vmatpush.msra.mxu0 %v122
    %v124 = vand.u32 %v72, 4294901760
    %125 = vmatpush.msra.mxu0 %v124
    %v126 = vand.u32 %v68, 4294901760
    %127 = vmatpush.msra.mxu0 %v126
    %v128 = vand.u32 %v64, 4294901760
    %129 = vmatpush.msra.mxu0 %v128
    %v130 = vand.u32 %v60, 4294901760
    %131 = vmatpush.msra.mxu0 %v130
    %v132 = vand.u32 %v56, 4294901760
    %133 = vmatpush.msra.mxu0 %v132
    %v134 = vand.u32 %v52, 4294901760
    %135 = vmatpush.msra.mxu0 %v134
    %v136 = vand.u32 %v48, 4294901760
    %137 = vmatpush.msra.mxu0 %v136
    %v138 = vand.u32 %v44, 4294901760
    %139 = vmatpush.msra.mxu0 %v138
    %v140 = vand.u32 %v40, 4294901760
    %141 = vmatpush.msra.mxu0 %v140
    %v142 = vand.u32 %v36, 4294901760
    %143 = vmatpush.msra.mxu0 %v142
    %v144 = vand.u32 %v32, 4294901760
    %145 = vmatpush.msra.mxu0 %v144
    %v146 = vand.u32 %v82, 4294901760
    %v147 = vsub.f32 %v82, %v146
    %v148 = vand.u32 %v147, 4294901760
    %v149 = vsub.f32 %v147, %v148
    %v150 = vand.u32 %v149, 4294901760
    %151 = vmatmul.f32.gmra.mxu0 %v150
    %v152 = vpop.f32.mrf.mxu0
    %v153 = vadd.f32 0.0, %v152
    %v154 = vand.u32 %v85, 4294901760
    %v155 = vsub.f32 %v85, %v154
    %v156 = vand.u32 %v155, 4294901760
    %v157 = vsub.f32 %v155, %v156
    %v158 = vand.u32 %v157, 4294901760
    %159 = vmatmul.f32.gmra.mxu0 %v158
    %v160 = vpop.f32.mrf.mxu0
    %v161 = vadd.f32 0.0, %v160
    %v162 = vand.u32 %v88, 4294901760
    %v163 = vsub.f32 %v88, %v162
    %v164 = vand.u32 %v163, 4294901760
    %v165 = vsub.f32 %v163, %v164
    %v166 = vand.u32 %v165, 4294901760
    %167 = vmatmul.f32.gmra.mxu0 %v166
    %v168 = vpop.f32.mrf.mxu0
    %v169 = vadd.f32 0.0, %v168
    %v170 = vand.u32 %v91, 4294901760
    %v171 = vsub.f32 %v91, %v170
    %v172 = vand.u32 %v171, 4294901760
    %v173 = vsub.f32 %v171, %v172
    %v174 = vand.u32 %v173, 4294901760
    %175 = vmatmul.f32.gmra.mxu0 %v174
    %v176 = vpop.f32.mrf.mxu0
    %v177 = vadd.f32 0.0, %v176
    %v178 = vand.u32 %v94, 4294901760
    %v179 = vsub.f32 %v94, %v178
    %v180 = vand.u32 %v179, 4294901760
    %v181 = vsub.f32 %v179, %v180
    %v182 = vand.u32 %v181, 4294901760
    %183 = vmatmul.f32.gmra.mxu0 %v182
    %v184 = vpop.f32.mrf.mxu0
    %v185 = vadd.f32 0.0, %v184
    %v186 = vand.u32 %v97, 4294901760
    %v187 = vsub.f32 %v97, %v186
    %v188 = vand.u32 %v187, 4294901760
    %v189 = vsub.f32 %v187, %v188
    %v190 = vand.u32 %v189, 4294901760
    %191 = vmatmul.f32.gmra.mxu0 %v190
    %v192 = vpop.f32.mrf.mxu0
    %v193 = vadd.f32 0.0, %v192
    %v194 = vand.u32 %v100, 4294901760
    %v195 = vsub.f32 %v100, %v194
    %v196 = vand.u32 %v195, 4294901760
    %v197 = vsub.f32 %v195, %v196
    %v198 = vand.u32 %v197, 4294901760
    %199 = vmatmul.f32.gmra.mxu0 %v198
    %v200 = vpop.f32.mrf.mxu0
    %v201 = vadd.f32 0.0, %v200
    %v202 = vand.u32 %v103, 4294901760
    %v203 = vsub.f32 %v103, %v202
    %v204 = vand.u32 %v203, 4294901760
    %v205 = vsub.f32 %v203, %v204
    %v206 = vand.u32 %v205, 4294901760
    %207 = vmatmul.f32.gmra.mxu0 %v206
    %v208 = vpop.f32.mrf.mxu0
    %v209 = vadd.f32 0.0, %v208
    %210 = vdwg.mxu0
    %211 = vmatpush.msra.mxu0 0.0
    %212 = vmatpush.msra.mxu0 0.0
    %213 = vmatpush.msra.mxu0 0.0
    %214 = vmatpush.msra.mxu0 0.0
    %v215 = vand.u32 %v107, 4294901760
    %v216 = vsub.f32 %v107, %v215
    %v217 = vand.u32 %v216, 4294901760
    %v218 = vsub.f32 %v216, %v217
    %v219 = vand.u32 %v218, 4294901760
    %220 = vmatpush.msra.mxu0 %v219
    %v221 = vand.u32 %v72, 4294901760
    %v222 = vsub.f32 %v72, %v221
    %v223 = vand.u32 %v222, 4294901760
    %v224 = vsub.f32 %v222, %v223
    %v225 = vand.u32 %v224, 4294901760
    %226 = vmatpush.msra.mxu0 %v225
    %v227 = vand.u32 %v68, 4294901760
    %v228 = vsub.f32 %v68, %v227
    %v229 = vand.u32 %v228, 4294901760
    %v230 = vsub.f32 %v228, %v229
    %v231 = vand.u32 %v230, 4294901760
    %232 = vmatpush.msra.mxu0 %v231
    %v233 = vand.u32 %v64, 4294901760
    %v234 = vsub.f32 %v64, %v233
    %v235 = vand.u32 %v234, 4294901760
    %v236 = vsub.f32 %v234, %v235
    %v237 = vand.u32 %v236, 4294901760
    %238 = vmatpush.msra.mxu0 %v237
    %v239 = vand.u32 %v60, 4294901760
    %v240 = vsub.f32 %v60, %v239
    %v241 = vand.u32 %v240, 4294901760
    %v242 = vsub.f32 %v240, %v241
    %v243 = vand.u32 %v242, 4294901760
    %244 = vmatpush.msra.mxu0 %v243
    %v245 = vand.u32 %v56, 4294901760
    %v246 = vsub.f32 %v56, %v245
    %v247 = vand.u32 %v246, 4294901760
    %v248 = vsub.f32 %v246, %v247
    %v249 = vand.u32 %v248, 4294901760
    %250 = vmatpush.msra.mxu0 %v249
    %v251 = vand.u32 %v52, 4294901760
    %v252 = vsub.f32 %v52, %v251
    %v253 = vand.u32 %v252, 4294901760
    %v254 = vsub.f32 %v252, %v253
    %v255 = vand.u32 %v254, 4294901760
    %256 = vmatpush.msra.mxu0 %v255
    %v257 = vand.u32 %v48, 4294901760
    %v258 = vsub.f32 %v48, %v257
    %v259 = vand.u32 %v258, 4294901760
    %v260 = vsub.f32 %v258, %v259
    %v261 = vand.u32 %v260, 4294901760
    %262 = vmatpush.msra.mxu0 %v261
    %v263 = vand.u32 %v44, 4294901760
    %v264 = vsub.f32 %v44, %v263
    %v265 = vand.u32 %v264, 4294901760
    %v266 = vsub.f32 %v264, %v265
    %v267 = vand.u32 %v266, 4294901760
    %268 = vmatpush.msra.mxu0 %v267
    %v269 = vand.u32 %v40, 4294901760
    %v270 = vsub.f32 %v40, %v269
    %v271 = vand.u32 %v270, 4294901760
    %v272 = vsub.f32 %v270, %v271
    %v273 = vand.u32 %v272, 4294901760
    %274 = vmatpush.msra.mxu0 %v273
    %v275 = vand.u32 %v36, 4294901760
    %v276 = vsub.f32 %v36, %v275
    %v277 = vand.u32 %v276, 4294901760
    %v278 = vsub.f32 %v276, %v277
    %v279 = vand.u32 %v278, 4294901760
    %280 = vmatpush.msra.mxu0 %v279
    %v281 = vand.u32 %v32, 4294901760
    %v282 = vsub.f32 %v32, %v281
    %v283 = vand.u32 %v282, 4294901760
    %v284 = vsub.f32 %v282, %v283
    %v285 = vand.u32 %v284, 4294901760
    %286 = vmatpush.msra.mxu0 %v285
    %v287 = vand.u32 %v82, 4294901760
    %288 = vmatmul.f32.gmra.mxu0 %v287
    %v289 = vpop.f32.mrf.mxu0
    %v290 = vadd.f32 %v153, %v289
    %v291 = vand.u32 %v85, 4294901760
    %292 = vmatmul.f32.gmra.mxu0 %v291
    %v293 = vpop.f32.mrf.mxu0
    %v294 = vadd.f32 %v161, %v293
    %v295 = vand.u32 %v88, 4294901760
    %296 = vmatmul.f32.gmra.mxu0 %v295
    %v297 = vpop.f32.mrf.mxu0
    %v298 = vadd.f32 %v169, %v297
    %v299 = vand.u32 %v91, 4294901760
    %300 = vmatmul.f32.gmra.mxu0 %v299
    %v301 = vpop.f32.mrf.mxu0
    %v302 = vadd.f32 %v177, %v301
    %v303 = vand.u32 %v94, 4294901760
    %304 = vmatmul.f32.gmra.mxu0 %v303
    %v305 = vpop.f32.mrf.mxu0
    %v306 = vadd.f32 %v185, %v305
    %v307 = vand.u32 %v97, 4294901760
    %308 = vmatmul.f32.gmra.mxu0 %v307
    %v309 = vpop.f32.mrf.mxu0
    %v310 = vadd.f32 %v193, %v309
    %v311 = vand.u32 %v100, 4294901760
    %312 = vmatmul.f32.gmra.mxu0 %v311
    %v313 = vpop.f32.mrf.mxu0
    %v314 = vadd.f32 %v201, %v313
    %v315 = vand.u32 %v103, 4294901760
    %316 = vmatmul.f32.gmra.mxu0 %v315
    %v317 = vpop.f32.mrf.mxu0
    %v318 = vadd.f32 %v209, %v317
    %319 = vdwg.mxu0
    %320 = vmatpush.msra.mxu0 0.0
    %321 = vmatpush.msra.mxu0 0.0
    %322 = vmatpush.msra.mxu0 0.0
    %323 = vmatpush.msra.mxu0 0.0
    %v324 = vand.u32 %v107, 4294901760
    %v325 = vsub.f32 %v107, %v324
    %326 = vmatpush.msra.mxu0 %v325
    %v327 = vand.u32 %v72, 4294901760
    %v328 = vsub.f32 %v72, %v327
    %329 = vmatpush.msra.mxu0 %v328
    %v330 = vand.u32 %v68, 4294901760
    %v331 = vsub.f32 %v68, %v330
    %332 = vmatpush.msra.mxu0 %v331
    %v333 = vand.u32 %v64, 4294901760
    %v334 = vsub.f32 %v64, %v333
    %335 = vmatpush.msra.mxu0 %v334
    %v336 = vand.u32 %v60, 4294901760
    %v337 = vsub.f32 %v60, %v336
    %338 = vmatpush.msra.mxu0 %v337
    %v339 = vand.u32 %v56, 4294901760
    %v340 = vsub.f32 %v56, %v339
    %341 = vmatpush.msra.mxu0 %v340
    %v342 = vand.u32 %v52, 4294901760
    %v343 = vsub.f32 %v52, %v342
    %344 = vmatpush.msra.mxu0 %v343
    %v345 = vand.u32 %v48, 4294901760
    %v346 = vsub.f32 %v48, %v345
    %347 = vmatpush.msra.mxu0 %v346
    %v348 = vand.u32 %v44, 4294901760
    %v349 = vsub.f32 %v44, %v348
    %350 = vmatpush.msra.mxu0 %v349
    %v351 = vand.u32 %v40, 4294901760
    %v352 = vsub.f32 %v40, %v351
    %353 = vmatpush.msra.mxu0 %v352
    %v354 = vand.u32 %v36, 4294901760
    %v355 = vsub.f32 %v36, %v354
    %356 = vmatpush.msra.mxu0 %v355
    %v357 = vand.u32 %v32, 4294901760
    %v358 = vsub.f32 %v32, %v357
    %359 = vmatpush.msra.mxu0 %v358
    %v360 = vand.u32 %v82, 4294901760
    %v361 = vsub.f32 %v82, %v360
    %362 = vmatmul.f32.gmra.mxu0 %v361
    %v363 = vpop.f32.mrf.mxu0
    %v364 = vadd.f32 %v290, %v363
    %v365 = vand.u32 %v85, 4294901760
    %v366 = vsub.f32 %v85, %v365
    %367 = vmatmul.f32.gmra.mxu0 %v366
    %v368 = vpop.f32.mrf.mxu0
    %v369 = vadd.f32 %v294, %v368
    %v370 = vand.u32 %v88, 4294901760
    %v371 = vsub.f32 %v88, %v370
    %372 = vmatmul.f32.gmra.mxu0 %v371
    %v373 = vpop.f32.mrf.mxu0
    %v374 = vadd.f32 %v298, %v373
    %v375 = vand.u32 %v91, 4294901760
    %v376 = vsub.f32 %v91, %v375
    %377 = vmatmul.f32.gmra.mxu0 %v376
    %v378 = vpop.f32.mrf.mxu0
    %v379 = vadd.f32 %v302, %v378
    %v380 = vand.u32 %v94, 4294901760
    %v381 = vsub.f32 %v94, %v380
    %382 = vmatmul.f32.gmra.mxu0 %v381
    %v383 = vpop.f32.mrf.mxu0
    %v384 = vadd.f32 %v306, %v383
    %v385 = vand.u32 %v97, 4294901760
    %v386 = vsub.f32 %v97, %v385
    %387 = vmatmul.f32.gmra.mxu0 %v386
    %v388 = vpop.f32.mrf.mxu0
    %v389 = vadd.f32 %v310, %v388
    %v390 = vand.u32 %v100, 4294901760
    %v391 = vsub.f32 %v100, %v390
    %392 = vmatmul.f32.gmra.mxu0 %v391
    %v393 = vpop.f32.mrf.mxu0
    %v394 = vadd.f32 %v314, %v393
    %v395 = vand.u32 %v103, 4294901760
    %v396 = vsub.f32 %v103, %v395
    %397 = vmatmul.f32.gmra.mxu0 %v396
    %v398 = vpop.f32.mrf.mxu0
    %v399 = vadd.f32 %v318, %v398
    %400 = vdwg.mxu0
    %401 = vmatpush.msra.mxu0 0.0
    %402 = vmatpush.msra.mxu0 0.0
    %403 = vmatpush.msra.mxu0 0.0
    %404 = vmatpush.msra.mxu0 0.0
    %v405 = vand.u32 %v107, 4294901760
    %406 = vmatpush.msra.mxu0 %v405
    %v407 = vand.u32 %v72, 4294901760
    %408 = vmatpush.msra.mxu0 %v407
    %v409 = vand.u32 %v68, 4294901760
    %410 = vmatpush.msra.mxu0 %v409
    %v411 = vand.u32 %v64, 4294901760
    %412 = vmatpush.msra.mxu0 %v411
    %v413 = vand.u32 %v60, 4294901760
    %414 = vmatpush.msra.mxu0 %v413
    %v415 = vand.u32 %v56, 4294901760
    %416 = vmatpush.msra.mxu0 %v415
    %v417 = vand.u32 %v52, 4294901760
    %418 = vmatpush.msra.mxu0 %v417
    %v419 = vand.u32 %v48, 4294901760
    %420 = vmatpush.msra.mxu0 %v419
    %v421 = vand.u32 %v44, 4294901760
    %422 = vmatpush.msra.mxu0 %v421
    %v423 = vand.u32 %v40, 4294901760
    %424 = vmatpush.msra.mxu0 %v423
    %v425 = vand.u32 %v36, 4294901760
    %426 = vmatpush.msra.mxu0 %v425
    %v427 = vand.u32 %v32, 4294901760
    %428 = vmatpush.msra.mxu0 %v427
    %v429 = vand.u32 %v82, 4294901760
    %v430 = vsub.f32 %v82, %v429
    %v431 = vand.u32 %v430, 4294901760
    %432 = vmatmul.f32.gmra.mxu0 %v431
    %v433 = vpop.f32.mrf.mxu0
    %v434 = vadd.f32 %v364, %v433
    %v435 = vand.u32 %v85, 4294901760
    %v436 = vsub.f32 %v85, %v435
    %v437 = vand.u32 %v436, 4294901760
    %438 = vmatmul.f32.gmra.mxu0 %v437
    %v439 = vpop.f32.mrf.mxu0
    %v440 = vadd.f32 %v369, %v439
    %v441 = vand.u32 %v88, 4294901760
    %v442 = vsub.f32 %v88, %v441
    %v443 = vand.u32 %v442, 4294901760
    %444 = vmatmul.f32.gmra.mxu0 %v443
    %v445 = vpop.f32.mrf.mxu0
    %v446 = vadd.f32 %v374, %v445
    %v447 = vand.u32 %v91, 4294901760
    %v448 = vsub.f32 %v91, %v447
    %v449 = vand.u32 %v448, 4294901760
    %450 = vmatmul.f32.gmra.mxu0 %v449
    %v451 = vpop.f32.mrf.mxu0
    %v452 = vadd.f32 %v379, %v451
    %v453 = vand.u32 %v94, 4294901760
    %v454 = vsub.f32 %v94, %v453
    %v455 = vand.u32 %v454, 4294901760
    %456 = vmatmul.f32.gmra.mxu0 %v455
    %v457 = vpop.f32.mrf.mxu0
    %v458 = vadd.f32 %v384, %v457
    %v459 = vand.u32 %v97, 4294901760
    %v460 = vsub.f32 %v97, %v459
    %v461 = vand.u32 %v460, 4294901760
    %462 = vmatmul.f32.gmra.mxu0 %v461
    %v463 = vpop.f32.mrf.mxu0
    %v464 = vadd.f32 %v389, %v463
    %v465 = vand.u32 %v100, 4294901760
    %v466 = vsub.f32 %v100, %v465
    %v467 = vand.u32 %v466, 4294901760
    %468 = vmatmul.f32.gmra.mxu0 %v467
    %v469 = vpop.f32.mrf.mxu0
    %v470 = vadd.f32 %v394, %v469
    %v471 = vand.u32 %v103, 4294901760
    %v472 = vsub.f32 %v103, %v471
    %v473 = vand.u32 %v472, 4294901760
    %474 = vmatmul.f32.gmra.mxu0 %v473
    %v475 = vpop.f32.mrf.mxu0
    %v476 = vadd.f32 %v399, %v475
    %477 = vdwg.mxu0
    %478 = vmatpush.msra.mxu0 0.0
    %479 = vmatpush.msra.mxu0 0.0
    %480 = vmatpush.msra.mxu0 0.0
    %481 = vmatpush.msra.mxu0 0.0
    %v482 = vand.u32 %v107, 4294901760
    %v483 = vsub.f32 %v107, %v482
    %v484 = vand.u32 %v483, 4294901760
    %485 = vmatpush.msra.mxu0 %v484
    %v486 = vand.u32 %v72, 4294901760
    %v487 = vsub.f32 %v72, %v486
    %v488 = vand.u32 %v487, 4294901760
    %489 = vmatpush.msra.mxu0 %v488
    %v490 = vand.u32 %v68, 4294901760
    %v491 = vsub.f32 %v68, %v490
    %v492 = vand.u32 %v491, 4294901760
    %493 = vmatpush.msra.mxu0 %v492
    %v494 = vand.u32 %v64, 4294901760
    %v495 = vsub.f32 %v64, %v494
    %v496 = vand.u32 %v495, 4294901760
    %497 = vmatpush.msra.mxu0 %v496
    %v498 = vand.u32 %v60, 4294901760
    %v499 = vsub.f32 %v60, %v498
    %v500 = vand.u32 %v499, 4294901760
    %501 = vmatpush.msra.mxu0 %v500
    %v502 = vand.u32 %v56, 4294901760
    %v503 = vsub.f32 %v56, %v502
    %v504 = vand.u32 %v503, 4294901760
    %505 = vmatpush.msra.mxu0 %v504
    %v506 = vand.u32 %v52, 4294901760
    %v507 = vsub.f32 %v52, %v506
    %v508 = vand.u32 %v507, 4294901760
    %509 = vmatpush.msra.mxu0 %v508
    %v510 = vand.u32 %v48, 4294901760
    %v511 = vsub.f32 %v48, %v510
    %v512 = vand.u32 %v511, 4294901760
    %513 = vmatpush.msra.mxu0 %v512
    %v514 = vand.u32 %v44, 4294901760
    %v515 = vsub.f32 %v44, %v514
    %v516 = vand.u32 %v515, 4294901760
    %517 = vmatpush.msra.mxu0 %v516
    %v518 = vand.u32 %v40, 4294901760
    %v519 = vsub.f32 %v40, %v518
    %v520 = vand.u32 %v519, 4294901760
    %521 = vmatpush.msra.mxu0 %v520
    %v522 = vand.u32 %v36, 4294901760
    %v523 = vsub.f32 %v36, %v522
    %v524 = vand.u32 %v523, 4294901760
    %525 = vmatpush.msra.mxu0 %v524
    %v526 = vand.u32 %v32, 4294901760
    %v527 = vsub.f32 %v32, %v526
    %v528 = vand.u32 %v527, 4294901760
    %529 = vmatpush.msra.mxu0 %v528
    %v530 = vand.u32 %v82, 4294901760
    %531 = vmatmul.f32.gmra.mxu0 %v530
    %v532 = vpop.f32.mrf.mxu0
    %v533 = vadd.f32 %v434, %v532
    %v534 = vand.u32 %v85, 4294901760
    %535 = vmatmul.f32.gmra.mxu0 %v534
    %v536 = vpop.f32.mrf.mxu0
    %v537 = vadd.f32 %v440, %v536
    %v538 = vand.u32 %v88, 4294901760
    %539 = vmatmul.f32.gmra.mxu0 %v538
    %v540 = vpop.f32.mrf.mxu0
    %v541 = vadd.f32 %v446, %v540
    %v542 = vand.u32 %v91, 4294901760
    %543 = vmatmul.f32.gmra.mxu0 %v542
    %v544 = vpop.f32.mrf.mxu0
    %v545 = vadd.f32 %v452, %v544
    %v546 = vand.u32 %v94, 4294901760
    %547 = vmatmul.f32.gmra.mxu0 %v546
    %v548 = vpop.f32.mrf.mxu0
    %v549 = vadd.f32 %v458, %v548
    %v550 = vand.u32 %v97, 4294901760
    %551 = vmatmul.f32.gmra.mxu0 %v550
    %v552 = vpop.f32.mrf.mxu0
    %v553 = vadd.f32 %v464, %v552
    %v554 = vand.u32 %v100, 4294901760
    %555 = vmatmul.f32.gmra.mxu0 %v554
    %v556 = vpop.f32.mrf.mxu0
    %v557 = vadd.f32 %v470, %v556
    %v558 = vand.u32 %v103, 4294901760
    %559 = vmatmul.f32.gmra.mxu0 %v558
    %v560 = vpop.f32.mrf.mxu0
    %v561 = vadd.f32 %v476, %v560
    %562 = vdwg.mxu0
    %563 = vmatpush.msra.mxu0 0.0
    %564 = vmatpush.msra.mxu0 0.0
    %565 = vmatpush.msra.mxu0 0.0
    %566 = vmatpush.msra.mxu0 0.0
    %v567 = vand.u32 %v107, 4294901760
    %568 = vmatpush.msra.mxu0 %v567
    %v569 = vand.u32 %v72, 4294901760
    %570 = vmatpush.msra.mxu0 %v569
    %v571 = vand.u32 %v68, 4294901760
    %572 = vmatpush.msra.mxu0 %v571
    %v573 = vand.u32 %v64, 4294901760
    %574 = vmatpush.msra.mxu0 %v573
    %v575 = vand.u32 %v60, 4294901760
    %576 = vmatpush.msra.mxu0 %v575
    %v577 = vand.u32 %v56, 4294901760
    %578 = vmatpush.msra.mxu0 %v577
    %v579 = vand.u32 %v52, 4294901760
    %580 = vmatpush.msra.mxu0 %v579
    %v581 = vand.u32 %v48, 4294901760
    %582 = vmatpush.msra.mxu0 %v581
    %v583 = vand.u32 %v44, 4294901760
    %584 = vmatpush.msra.mxu0 %v583
    %v585 = vand.u32 %v40, 4294901760
    %586 = vmatpush.msra.mxu0 %v585
    %v587 = vand.u32 %v36, 4294901760
    %588 = vmatpush.msra.mxu0 %v587
    %v589 = vand.u32 %v32, 4294901760
    %590 = vmatpush.msra.mxu0 %v589
    %v591 = vand.u32 %v82, 4294901760
    %592 = vmatmul.f32.gmra.mxu0 %v591
    %v593 = vpop.f32.mrf.mxu0
    %v594 = vadd.f32 %v533, %v593
    %v595 = vand.u32 %v85, 4294901760
    %596 = vmatmul.f32.gmra.mxu0 %v595
    %v597 = vpop.f32.mrf.mxu0
    %v598 = vadd.f32 %v537, %v597
    %v599 = vand.u32 %v88, 4294901760
    %600 = vmatmul.f32.gmra.mxu0 %v599
    %v601 = vpop.f32.mrf.mxu0
    %v602 = vadd.f32 %v541, %v601
    %v603 = vand.u32 %v91, 4294901760
    %604 = vmatmul.f32.gmra.mxu0 %v603
    %v605 = vpop.f32.mrf.mxu0
    %v606 = vadd.f32 %v545, %v605
    %v607 = vand.u32 %v94, 4294901760
    %608 = vmatmul.f32.gmra.mxu0 %v607
    %v609 = vpop.f32.mrf.mxu0
    %v610 = vadd.f32 %v549, %v609
    %v611 = vand.u32 %v97, 4294901760
    %612 = vmatmul.f32.gmra.mxu0 %v611
    %v613 = vpop.f32.mrf.mxu0
    %v614 = vadd.f32 %v553, %v613
    %v615 = vand.u32 %v100, 4294901760
    %616 = vmatmul.f32.gmra.mxu0 %v615
    %v617 = vpop.f32.mrf.mxu0
    %v618 = vadd.f32 %v557, %v617
    %v619 = vand.u32 %v103, 4294901760
    %620 = vmatmul.f32.gmra.mxu0 %v619
    %v621 = vpop.f32.mrf.mxu0
    %v622 = vadd.f32 %v561, %v621
    %623 = vdwg.mxu0
    %624 = vmatpush.msra.mxu0 0.0
    %625 = vmatpush.msra.mxu0 0.0
    %626 = vmatpush.msra.mxu0 0.0
    %627 = vmatpush.msra.mxu0 0.0
    %v628 = vand.u32 %v110, 4294901760
    %629 = vmatpush.msra.mxu0 %v628
    %v630 = vand.u32 %v73, 4294901760
    %631 = vmatpush.msra.mxu0 %v630
    %v632 = vand.u32 %v69, 4294901760
    %633 = vmatpush.msra.mxu0 %v632
    %v634 = vand.u32 %v65, 4294901760
    %635 = vmatpush.msra.mxu0 %v634
    %v636 = vand.u32 %v61, 4294901760
    %637 = vmatpush.msra.mxu0 %v636
    %v638 = vand.u32 %v57, 4294901760
    %639 = vmatpush.msra.mxu0 %v638
    %v640 = vand.u32 %v53, 4294901760
    %641 = vmatpush.msra.mxu0 %v640
    %v642 = vand.u32 %v49, 4294901760
    %643 = vmatpush.msra.mxu0 %v642
    %v644 = vand.u32 %v45, 4294901760
    %645 = vmatpush.msra.mxu0 %v644
    %v646 = vand.u32 %v41, 4294901760
    %647 = vmatpush.msra.mxu0 %v646
    %v648 = vand.u32 %v37, 4294901760
    %649 = vmatpush.msra.mxu0 %v648
    %v650 = vand.u32 %v33, 4294901760
    %651 = vmatpush.msra.mxu0 %v650
    %v652 = vand.u32 %v82, 4294901760
    %v653 = vsub.f32 %v82, %v652
    %v654 = vand.u32 %v653, 4294901760
    %v655 = vsub.f32 %v653, %v654
    %v656 = vand.u32 %v655, 4294901760
    %657 = vmatmul.f32.gmra.mxu0 %v656
    %v658 = vpop.f32.mrf.mxu0
    %v659 = vadd.f32 0.0, %v658
    %v660 = vand.u32 %v85, 4294901760
    %v661 = vsub.f32 %v85, %v660
    %v662 = vand.u32 %v661, 4294901760
    %v663 = vsub.f32 %v661, %v662
    %v664 = vand.u32 %v663, 4294901760
    %665 = vmatmul.f32.gmra.mxu0 %v664
    %v666 = vpop.f32.mrf.mxu0
    %v667 = vadd.f32 0.0, %v666
    %v668 = vand.u32 %v88, 4294901760
    %v669 = vsub.f32 %v88, %v668
    %v670 = vand.u32 %v669, 4294901760
    %v671 = vsub.f32 %v669, %v670
    %v672 = vand.u32 %v671, 4294901760
    %673 = vmatmul.f32.gmra.mxu0 %v672
    %v674 = vpop.f32.mrf.mxu0
    %v675 = vadd.f32 0.0, %v674
    %v676 = vand.u32 %v91, 4294901760
    %v677 = vsub.f32 %v91, %v676
    %v678 = vand.u32 %v677, 4294901760
    %v679 = vsub.f32 %v677, %v678
    %v680 = vand.u32 %v679, 4294901760
    %681 = vmatmul.f32.gmra.mxu0 %v680
    %v682 = vpop.f32.mrf.mxu0
    %v683 = vadd.f32 0.0, %v682
    %v684 = vand.u32 %v94, 4294901760
    %v685 = vsub.f32 %v94, %v684
    %v686 = vand.u32 %v685, 4294901760
    %v687 = vsub.f32 %v685, %v686
    %v688 = vand.u32 %v687, 4294901760
    %689 = vmatmul.f32.gmra.mxu0 %v688
    %v690 = vpop.f32.mrf.mxu0
    %v691 = vadd.f32 0.0, %v690
    %v692 = vand.u32 %v97, 4294901760
    %v693 = vsub.f32 %v97, %v692
    %v694 = vand.u32 %v693, 4294901760
    %v695 = vsub.f32 %v693, %v694
    %v696 = vand.u32 %v695, 4294901760
    %697 = vmatmul.f32.gmra.mxu0 %v696
    %v698 = vpop.f32.mrf.mxu0
    %v699 = vadd.f32 0.0, %v698
    %v700 = vand.u32 %v100, 4294901760
    %v701 = vsub.f32 %v100, %v700
    %v702 = vand.u32 %v701, 4294901760
    %v703 = vsub.f32 %v701, %v702
    %v704 = vand.u32 %v703, 4294901760
    %705 = vmatmul.f32.gmra.mxu0 %v704
    %v706 = vpop.f32.mrf.mxu0
    %v707 = vadd.f32 0.0, %v706
    %v708 = vand.u32 %v103, 4294901760
    %v709 = vsub.f32 %v103, %v708
    %v710 = vand.u32 %v709, 4294901760
    %v711 = vsub.f32 %v709, %v710
    %v712 = vand.u32 %v711, 4294901760
    %713 = vmatmul.f32.gmra.mxu0 %v712
    %v714 = vpop.f32.mrf.mxu0
    %v715 = vadd.f32 0.0, %v714
    %716 = vdwg.mxu0
    %717 = vmatpush.msra.mxu0 0.0
    %718 = vmatpush.msra.mxu0 0.0
    %719 = vmatpush.msra.mxu0 0.0
    %720 = vmatpush.msra.mxu0 0.0
    %v721 = vand.u32 %v110, 4294901760
    %v722 = vsub.f32 %v110, %v721
    %v723 = vand.u32 %v722, 4294901760
    %v724 = vsub.f32 %v722, %v723
    %v725 = vand.u32 %v724, 4294901760
    %726 = vmatpush.msra.mxu0 %v725
    %v727 = vand.u32 %v73, 4294901760
    %v728 = vsub.f32 %v73, %v727
    %v729 = vand.u32 %v728, 4294901760
    %v730 = vsub.f32 %v728, %v729
    %v731 = vand.u32 %v730, 4294901760
    %732 = vmatpush.msra.mxu0 %v731
    %v733 = vand.u32 %v69, 4294901760
    %v734 = vsub.f32 %v69, %v733
    %v735 = vand.u32 %v734, 4294901760
    %v736 = vsub.f32 %v734, %v735
    %v737 = vand.u32 %v736, 4294901760
    %738 = vmatpush.msra.mxu0 %v737
    %v739 = vand.u32 %v65, 4294901760
    %v740 = vsub.f32 %v65, %v739
    %v741 = vand.u32 %v740, 4294901760
    %v742 = vsub.f32 %v740, %v741
    %v743 = vand.u32 %v742, 4294901760
    %744 = vmatpush.msra.mxu0 %v743
    %v745 = vand.u32 %v61, 4294901760
    %v746 = vsub.f32 %v61, %v745
    %v747 = vand.u32 %v746, 4294901760
    %v748 = vsub.f32 %v746, %v747
    %v749 = vand.u32 %v748, 4294901760
    %750 = vmatpush.msra.mxu0 %v749
    %v751 = vand.u32 %v57, 4294901760
    %v752 = vsub.f32 %v57, %v751
    %v753 = vand.u32 %v752, 4294901760
    %v754 = vsub.f32 %v752, %v753
    %v755 = vand.u32 %v754, 4294901760
    %756 = vmatpush.msra.mxu0 %v755
    %v757 = vand.u32 %v53, 4294901760
    %v758 = vsub.f32 %v53, %v757
    %v759 = vand.u32 %v758, 4294901760
    %v760 = vsub.f32 %v758, %v759
    %v761 = vand.u32 %v760, 4294901760
    %762 = vmatpush.msra.mxu0 %v761
    %v763 = vand.u32 %v49, 4294901760
    %v764 = vsub.f32 %v49, %v763
    %v765 = vand.u32 %v764, 4294901760
    %v766 = vsub.f32 %v764, %v765
    %v767 = vand.u32 %v766, 4294901760
    %768 = vmatpush.msra.mxu0 %v767
    %v769 = vand.u32 %v45, 4294901760
    %v770 = vsub.f32 %v45, %v769
    %v771 = vand.u32 %v770, 4294901760
    %v772 = vsub.f32 %v770, %v771
    %v773 = vand.u32 %v772, 4294901760
    %774 = vmatpush.msra.mxu0 %v773
    %v775 = vand.u32 %v41, 4294901760
    %v776 = vsub.f32 %v41, %v775
    %v777 = vand.u32 %v776, 4294901760
    %v778 = vsub.f32 %v776, %v777
    %v779 = vand.u32 %v778, 4294901760
    %780 = vmatpush.msra.mxu0 %v779
    %v781 = vand.u32 %v37, 4294901760
    %v782 = vsub.f32 %v37, %v781
    %v783 = vand.u32 %v782, 4294901760
    %v784 = vsub.f32 %v782, %v783
    %v785 = vand.u32 %v784, 4294901760
    %786 = vmatpush.msra.mxu0 %v785
    %v787 = vand.u32 %v33, 4294901760
    %v788 = vsub.f32 %v33, %v787
    %v789 = vand.u32 %v788, 4294901760
    %v790 = vsub.f32 %v788, %v789
    %v791 = vand.u32 %v790, 4294901760
    %792 = vmatpush.msra.mxu0 %v791
    %v793 = vand.u32 %v82, 4294901760
    %794 = vmatmul.f32.gmra.mxu0 %v793
    %v795 = vpop.f32.mrf.mxu0
    %v796 = vadd.f32 %v659, %v795
    %v797 = vand.u32 %v85, 4294901760
    %798 = vmatmul.f32.gmra.mxu0 %v797
    %v799 = vpop.f32.mrf.mxu0
    %v800 = vadd.f32 %v667, %v799
    %v801 = vand.u32 %v88, 4294901760
    %802 = vmatmul.f32.gmra.mxu0 %v801
    %v803 = vpop.f32.mrf.mxu0
    %v804 = vadd.f32 %v675, %v803
    %v805 = vand.u32 %v91, 4294901760
    %806 = vmatmul.f32.gmra.mxu0 %v805
    %v807 = vpop.f32.mrf.mxu0
    %v808 = vadd.f32 %v683, %v807
    %v809 = vand.u32 %v94, 4294901760
    %810 = vmatmul.f32.gmra.mxu0 %v809
    %v811 = vpop.f32.mrf.mxu0
    %v812 = vadd.f32 %v691, %v811
    %v813 = vand.u32 %v97, 4294901760
    %814 = vmatmul.f32.gmra.mxu0 %v813
    %v815 = vpop.f32.mrf.mxu0
    %v816 = vadd.f32 %v699, %v815
    %v817 = vand.u32 %v100, 4294901760
    %818 = vmatmul.f32.gmra.mxu0 %v817
    %v819 = vpop.f32.mrf.mxu0
    %v820 = vadd.f32 %v707, %v819
    %v821 = vand.u32 %v103, 4294901760
    %822 = vmatmul.f32.gmra.mxu0 %v821
    %v823 = vpop.f32.mrf.mxu0
    %v824 = vadd.f32 %v715, %v823
    %825 = vdwg.mxu0
    %826 = vmatpush.msra.mxu0 0.0
    %827 = vmatpush.msra.mxu0 0.0
    %828 = vmatpush.msra.mxu0 0.0
    %829 = vmatpush.msra.mxu0 0.0
    %v830 = vand.u32 %v110, 4294901760
    %v831 = vsub.f32 %v110, %v830
    %832 = vmatpush.msra.mxu0 %v831
    %v833 = vand.u32 %v73, 4294901760
    %v834 = vsub.f32 %v73, %v833
    %835 = vmatpush.msra.mxu0 %v834
    %v836 = vand.u32 %v69, 4294901760
    %v837 = vsub.f32 %v69, %v836
    %838 = vmatpush.msra.mxu0 %v837
    %v839 = vand.u32 %v65, 4294901760
    %v840 = vsub.f32 %v65, %v839
    %841 = vmatpush.msra.mxu0 %v840
    %v842 = vand.u32 %v61, 4294901760
    %v843 = vsub.f32 %v61, %v842
    %844 = vmatpush.msra.mxu0 %v843
    %v845 = vand.u32 %v57, 4294901760
    %v846 = vsub.f32 %v57, %v845
    %847 = vmatpush.msra.mxu0 %v846
    %v848 = vand.u32 %v53, 4294901760
    %v849 = vsub.f32 %v53, %v848
    %850 = vmatpush.msra.mxu0 %v849
    %v851 = vand.u32 %v49, 4294901760
    %v852 = vsub.f32 %v49, %v851
    %853 = vmatpush.msra.mxu0 %v852
    %v854 = vand.u32 %v45, 4294901760
    %v855 = vsub.f32 %v45, %v854
    %856 = vmatpush.msra.mxu0 %v855
    %v857 = vand.u32 %v41, 4294901760
    %v858 = vsub.f32 %v41, %v857
    %859 = vmatpush.msra.mxu0 %v858
    %v860 = vand.u32 %v37, 4294901760
    %v861 = vsub.f32 %v37, %v860
    %862 = vmatpush.msra.mxu0 %v861
    %v863 = vand.u32 %v33, 4294901760
    %v864 = vsub.f32 %v33, %v863
    %865 = vmatpush.msra.mxu0 %v864
    %v866 = vand.u32 %v82, 4294901760
    %v867 = vsub.f32 %v82, %v866
    %868 = vmatmul.f32.gmra.mxu0 %v867
    %v869 = vpop.f32.mrf.mxu0
    %v870 = vadd.f32 %v796, %v869
    %v871 = vand.u32 %v85, 4294901760
    %v872 = vsub.f32 %v85, %v871
    %873 = vmatmul.f32.gmra.mxu0 %v872
    %v874 = vpop.f32.mrf.mxu0
    %v875 = vadd.f32 %v800, %v874
    %v876 = vand.u32 %v88, 4294901760
    %v877 = vsub.f32 %v88, %v876
    %878 = vmatmul.f32.gmra.mxu0 %v877
    %v879 = vpop.f32.mrf.mxu0
    %v880 = vadd.f32 %v804, %v879
    %v881 = vand.u32 %v91, 4294901760
    %v882 = vsub.f32 %v91, %v881
    %883 = vmatmul.f32.gmra.mxu0 %v882
    %v884 = vpop.f32.mrf.mxu0
    %v885 = vadd.f32 %v808, %v884
    %v886 = vand.u32 %v94, 4294901760
    %v887 = vsub.f32 %v94, %v886
    %888 = vmatmul.f32.gmra.mxu0 %v887
    %v889 = vpop.f32.mrf.mxu0
    %v890 = vadd.f32 %v812, %v889
    %v891 = vand.u32 %v97, 4294901760
    %v892 = vsub.f32 %v97, %v891
    %893 = vmatmul.f32.gmra.mxu0 %v892
    %v894 = vpop.f32.mrf.mxu0
    %v895 = vadd.f32 %v816, %v894
    %v896 = vand.u32 %v100, 4294901760
    %v897 = vsub.f32 %v100, %v896
    %898 = vmatmul.f32.gmra.mxu0 %v897
    %v899 = vpop.f32.mrf.mxu0
    %v900 = vadd.f32 %v820, %v899
    %v901 = vand.u32 %v103, 4294901760
    %v902 = vsub.f32 %v103, %v901
    %903 = vmatmul.f32.gmra.mxu0 %v902
    %v904 = vpop.f32.mrf.mxu0
    %v905 = vadd.f32 %v824, %v904
    %906 = vdwg.mxu0
    %907 = vmatpush.msra.mxu0 0.0
    %908 = vmatpush.msra.mxu0 0.0
    %909 = vmatpush.msra.mxu0 0.0
    %910 = vmatpush.msra.mxu0 0.0
    %v911 = vand.u32 %v110, 4294901760
    %912 = vmatpush.msra.mxu0 %v911
    %v913 = vand.u32 %v73, 4294901760
    %914 = vmatpush.msra.mxu0 %v913
    %v915 = vand.u32 %v69, 4294901760
    %916 = vmatpush.msra.mxu0 %v915
    %v917 = vand.u32 %v65, 4294901760
    %918 = vmatpush.msra.mxu0 %v917
    %v919 = vand.u32 %v61, 4294901760
    %920 = vmatpush.msra.mxu0 %v919
    %v921 = vand.u32 %v57, 4294901760
    %922 = vmatpush.msra.mxu0 %v921
    %v923 = vand.u32 %v53, 4294901760
    %924 = vmatpush.msra.mxu0 %v923
    %v925 = vand.u32 %v49, 4294901760
    %926 = vmatpush.msra.mxu0 %v925
    %v927 = vand.u32 %v45, 4294901760
    %928 = vmatpush.msra.mxu0 %v927
    %v929 = vand.u32 %v41, 4294901760
    %930 = vmatpush.msra.mxu0 %v929
    %v931 = vand.u32 %v37, 4294901760
    %932 = vmatpush.msra.mxu0 %v931
    %v933 = vand.u32 %v33, 4294901760
    %934 = vmatpush.msra.mxu0 %v933
    %v935 = vand.u32 %v82, 4294901760
    %v936 = vsub.f32 %v82, %v935
    %v937 = vand.u32 %v936, 4294901760
    %938 = vmatmul.f32.gmra.mxu0 %v937
    %v939 = vpop.f32.mrf.mxu0
    %v940 = vadd.f32 %v870, %v939
    %v941 = vand.u32 %v85, 4294901760
    %v942 = vsub.f32 %v85, %v941
    %v943 = vand.u32 %v942, 4294901760
    %944 = vmatmul.f32.gmra.mxu0 %v943
    %v945 = vpop.f32.mrf.mxu0
    %v946 = vadd.f32 %v875, %v945
    %v947 = vand.u32 %v88, 4294901760
    %v948 = vsub.f32 %v88, %v947
    %v949 = vand.u32 %v948, 4294901760
    %950 = vmatmul.f32.gmra.mxu0 %v949
    %v951 = vpop.f32.mrf.mxu0
    %v952 = vadd.f32 %v880, %v951
    %v953 = vand.u32 %v91, 4294901760
    %v954 = vsub.f32 %v91, %v953
    %v955 = vand.u32 %v954, 4294901760
    %956 = vmatmul.f32.gmra.mxu0 %v955
    %v957 = vpop.f32.mrf.mxu0
    %v958 = vadd.f32 %v885, %v957
    %v959 = vand.u32 %v94, 4294901760
    %v960 = vsub.f32 %v94, %v959
    %v961 = vand.u32 %v960, 4294901760
    %962 = vmatmul.f32.gmra.mxu0 %v961
    %v963 = vpop.f32.mrf.mxu0
    %v964 = vadd.f32 %v890, %v963
    %v965 = vand.u32 %v97, 4294901760
    %v966 = vsub.f32 %v97, %v965
    %v967 = vand.u32 %v966, 4294901760
    %968 = vmatmul.f32.gmra.mxu0 %v967
    %v969 = vpop.f32.mrf.mxu0
    %v970 = vadd.f32 %v895, %v969
    %v971 = vand.u32 %v100, 4294901760
    %v972 = vsub.f32 %v100, %v971
    %v973 = vand.u32 %v972, 4294901760
    %974 = vmatmul.f32.gmra.mxu0 %v973
    %v975 = vpop.f32.mrf.mxu0
    %v976 = vadd.f32 %v900, %v975
    %v977 = vand.u32 %v103, 4294901760
    %v978 = vsub.f32 %v103, %v977
    %v979 = vand.u32 %v978, 4294901760
    %980 = vmatmul.f32.gmra.mxu0 %v979
    %v981 = vpop.f32.mrf.mxu0
    %v982 = vadd.f32 %v905, %v981
    %983 = vdwg.mxu0
    %984 = vmatpush.msra.mxu0 0.0
    %985 = vmatpush.msra.mxu0 0.0
    %986 = vmatpush.msra.mxu0 0.0
    %987 = vmatpush.msra.mxu0 0.0
    %v988 = vand.u32 %v110, 4294901760
    %v989 = vsub.f32 %v110, %v988
    %v990 = vand.u32 %v989, 4294901760
    %991 = vmatpush.msra.mxu0 %v990
    %v992 = vand.u32 %v73, 4294901760
    %v993 = vsub.f32 %v73, %v992
    %v994 = vand.u32 %v993, 4294901760
    %995 = vmatpush.msra.mxu0 %v994
    %v996 = vand.u32 %v69, 4294901760
    %v997 = vsub.f32 %v69, %v996
    %v998 = vand.u32 %v997, 4294901760
    %999 = vmatpush.msra.mxu0 %v998
    %v1000 = vand.u32 %v65, 4294901760
    %v1001 = vsub.f32 %v65, %v1000
    %v1002 = vand.u32 %v1001, 4294901760
    %1003 = vmatpush.msra.mxu0 %v1002
    %v1004 = vand.u32 %v61, 4294901760
    %v1005 = vsub.f32 %v61, %v1004
    %v1006 = vand.u32 %v1005, 4294901760
    %1007 = vmatpush.msra.mxu0 %v1006
    %v1008 = vand.u32 %v57, 4294901760
    %v1009 = vsub.f32 %v57, %v1008
    %v1010 = vand.u32 %v1009, 4294901760
    %1011 = vmatpush.msra.mxu0 %v1010
    %v1012 = vand.u32 %v53, 4294901760
    %v1013 = vsub.f32 %v53, %v1012
    %v1014 = vand.u32 %v1013, 4294901760
    %1015 = vmatpush.msra.mxu0 %v1014
    %v1016 = vand.u32 %v49, 4294901760
    %v1017 = vsub.f32 %v49, %v1016
    %v1018 = vand.u32 %v1017, 4294901760
    %1019 = vmatpush.msra.mxu0 %v1018
    %v1020 = vand.u32 %v45, 4294901760
    %v1021 = vsub.f32 %v45, %v1020
    %v1022 = vand.u32 %v1021, 4294901760
    %1023 = vmatpush.msra.mxu0 %v1022
    %v1024 = vand.u32 %v41, 4294901760
    %v1025 = vsub.f32 %v41, %v1024
    %v1026 = vand.u32 %v1025, 4294901760
    %1027 = vmatpush.msra.mxu0 %v1026
    %v1028 = vand.u32 %v37, 4294901760
    %v1029 = vsub.f32 %v37, %v1028
    %v1030 = vand.u32 %v1029, 4294901760
    %1031 = vmatpush.msra.mxu0 %v1030
    %v1032 = vand.u32 %v33, 4294901760
    %v1033 = vsub.f32 %v33, %v1032
    %v1034 = vand.u32 %v1033, 4294901760
    %1035 = vmatpush.msra.mxu0 %v1034
    %v1036 = vand.u32 %v82, 4294901760
    %1037 = vmatmul.f32.gmra.mxu0 %v1036
    %v1038 = vpop.f32.mrf.mxu0
    %v1039 = vadd.f32 %v940, %v1038
    %v1040 = vand.u32 %v85, 4294901760
    %1041 = vmatmul.f32.gmra.mxu0 %v1040
    %v1042 = vpop.f32.mrf.mxu0
    %v1043 = vadd.f32 %v946, %v1042
    %v1044 = vand.u32 %v88, 4294901760
    %1045 = vmatmul.f32.gmra.mxu0 %v1044
    %v1046 = vpop.f32.mrf.mxu0
    %v1047 = vadd.f32 %v952, %v1046
    %v1048 = vand.u32 %v91, 4294901760
    %1049 = vmatmul.f32.gmra.mxu0 %v1048
    %v1050 = vpop.f32.mrf.mxu0
    %v1051 = vadd.f32 %v958, %v1050
    %v1052 = vand.u32 %v94, 4294901760
    %1053 = vmatmul.f32.gmra.mxu0 %v1052
    %v1054 = vpop.f32.mrf.mxu0
    %v1055 = vadd.f32 %v964, %v1054
    %v1056 = vand.u32 %v97, 4294901760
    %1057 = vmatmul.f32.gmra.mxu0 %v1056
    %v1058 = vpop.f32.mrf.mxu0
    %v1059 = vadd.f32 %v970, %v1058
    %v1060 = vand.u32 %v100, 4294901760
    %1061 = vmatmul.f32.gmra.mxu0 %v1060
    %v1062 = vpop.f32.mrf.mxu0
    %v1063 = vadd.f32 %v976, %v1062
    %v1064 = vand.u32 %v103, 4294901760
    %1065 = vmatmul.f32.gmra.mxu0 %v1064
    %v1066 = vpop.f32.mrf.mxu0
    %v1067 = vadd.f32 %v982, %v1066
    %1068 = vdwg.mxu0
    %1069 = vmatpush.msra.mxu0 0.0
    %1070 = vmatpush.msra.mxu0 0.0
    %1071 = vmatpush.msra.mxu0 0.0
    %1072 = vmatpush.msra.mxu0 0.0
    %v1073 = vand.u32 %v110, 4294901760
    %1074 = vmatpush.msra.mxu0 %v1073
    %v1075 = vand.u32 %v73, 4294901760
    %1076 = vmatpush.msra.mxu0 %v1075
    %v1077 = vand.u32 %v69, 4294901760
    %1078 = vmatpush.msra.mxu0 %v1077
    %v1079 = vand.u32 %v65, 4294901760
    %1080 = vmatpush.msra.mxu0 %v1079
    %v1081 = vand.u32 %v61, 4294901760
    %1082 = vmatpush.msra.mxu0 %v1081
    %v1083 = vand.u32 %v57, 4294901760
    %1084 = vmatpush.msra.mxu0 %v1083
    %v1085 = vand.u32 %v53, 4294901760
    %1086 = vmatpush.msra.mxu0 %v1085
    %v1087 = vand.u32 %v49, 4294901760
    %1088 = vmatpush.msra.mxu0 %v1087
    %v1089 = vand.u32 %v45, 4294901760
    %1090 = vmatpush.msra.mxu0 %v1089
    %v1091 = vand.u32 %v41, 4294901760
    %1092 = vmatpush.msra.mxu0 %v1091
    %v1093 = vand.u32 %v37, 4294901760
    %1094 = vmatpush.msra.mxu0 %v1093
    %v1095 = vand.u32 %v33, 4294901760
    %1096 = vmatpush.msra.mxu0 %v1095
    %v1097 = vand.u32 %v82, 4294901760
    %1098 = vmatmul.f32.gmra.mxu0 %v1097
    %v1099 = vpop.f32.mrf.mxu0
    %v1100 = vadd.f32 %v1039, %v1099
    %v1101 = vand.u32 %v85, 4294901760
    %1102 = vmatmul.f32.gmra.mxu0 %v1101
    %v1103 = vpop.f32.mrf.mxu0
    %v1104 = vadd.f32 %v1043, %v1103
    %v1105 = vand.u32 %v88, 4294901760
    %1106 = vmatmul.f32.gmra.mxu0 %v1105
    %v1107 = vpop.f32.mrf.mxu0
    %v1108 = vadd.f32 %v1047, %v1107
    %v1109 = vand.u32 %v91, 4294901760
    %1110 = vmatmul.f32.gmra.mxu0 %v1109
    %v1111 = vpop.f32.mrf.mxu0
    %v1112 = vadd.f32 %v1051, %v1111
    %v1113 = vand.u32 %v94, 4294901760
    %1114 = vmatmul.f32.gmra.mxu0 %v1113
    %v1115 = vpop.f32.mrf.mxu0
    %v1116 = vadd.f32 %v1055, %v1115
    %v1117 = vand.u32 %v97, 4294901760
    %1118 = vmatmul.f32.gmra.mxu0 %v1117
    %v1119 = vpop.f32.mrf.mxu0
    %v1120 = vadd.f32 %v1059, %v1119
    %v1121 = vand.u32 %v100, 4294901760
    %1122 = vmatmul.f32.gmra.mxu0 %v1121
    %v1123 = vpop.f32.mrf.mxu0
    %v1124 = vadd.f32 %v1063, %v1123
    %v1125 = vand.u32 %v103, 4294901760
    %1126 = vmatmul.f32.gmra.mxu0 %v1125
    %v1127 = vpop.f32.mrf.mxu0
    %v1128 = vadd.f32 %v1067, %v1127
    %1129 = vdwg.mxu0
    %1130 = vmatpush.msra.mxu0 0.0
    %1131 = vmatpush.msra.mxu0 0.0
    %1132 = vmatpush.msra.mxu0 0.0
    %1133 = vmatpush.msra.mxu0 0.0
    %v1134 = vand.u32 %v113, 4294901760
    %1135 = vmatpush.msra.mxu0 %v1134
    %v1136 = vand.u32 %v74, 4294901760
    %1137 = vmatpush.msra.mxu0 %v1136
    %v1138 = vand.u32 %v70, 4294901760
    %1139 = vmatpush.msra.mxu0 %v1138
    %v1140 = vand.u32 %v66, 4294901760
    %1141 = vmatpush.msra.mxu0 %v1140
    %v1142 = vand.u32 %v62, 4294901760
    %1143 = vmatpush.msra.mxu0 %v1142
    %v1144 = vand.u32 %v58, 4294901760
    %1145 = vmatpush.msra.mxu0 %v1144
    %v1146 = vand.u32 %v54, 4294901760
    %1147 = vmatpush.msra.mxu0 %v1146
    %v1148 = vand.u32 %v50, 4294901760
    %1149 = vmatpush.msra.mxu0 %v1148
    %v1150 = vand.u32 %v46, 4294901760
    %1151 = vmatpush.msra.mxu0 %v1150
    %v1152 = vand.u32 %v42, 4294901760
    %1153 = vmatpush.msra.mxu0 %v1152
    %v1154 = vand.u32 %v38, 4294901760
    %1155 = vmatpush.msra.mxu0 %v1154
    %v1156 = vand.u32 %v34, 4294901760
    %1157 = vmatpush.msra.mxu0 %v1156
    %v1158 = vand.u32 %v82, 4294901760
    %v1159 = vsub.f32 %v82, %v1158
    %v1160 = vand.u32 %v1159, 4294901760
    %v1161 = vsub.f32 %v1159, %v1160
    %v1162 = vand.u32 %v1161, 4294901760
    %1163 = vmatmul.f32.gmra.mxu0 %v1162
    %v1164 = vpop.f32.mrf.mxu0
    %v1165 = vadd.f32 0.0, %v1164
    %v1166 = vand.u32 %v85, 4294901760
    %v1167 = vsub.f32 %v85, %v1166
    %v1168 = vand.u32 %v1167, 4294901760
    %v1169 = vsub.f32 %v1167, %v1168
    %v1170 = vand.u32 %v1169, 4294901760
    %1171 = vmatmul.f32.gmra.mxu0 %v1170
    %v1172 = vpop.f32.mrf.mxu0
    %v1173 = vadd.f32 0.0, %v1172
    %v1174 = vand.u32 %v88, 4294901760
    %v1175 = vsub.f32 %v88, %v1174
    %v1176 = vand.u32 %v1175, 4294901760
    %v1177 = vsub.f32 %v1175, %v1176
    %v1178 = vand.u32 %v1177, 4294901760
    %1179 = vmatmul.f32.gmra.mxu0 %v1178
    %v1180 = vpop.f32.mrf.mxu0
    %v1181 = vadd.f32 0.0, %v1180
    %v1182 = vand.u32 %v91, 4294901760
    %v1183 = vsub.f32 %v91, %v1182
    %v1184 = vand.u32 %v1183, 4294901760
    %v1185 = vsub.f32 %v1183, %v1184
    %v1186 = vand.u32 %v1185, 4294901760
    %1187 = vmatmul.f32.gmra.mxu0 %v1186
    %v1188 = vpop.f32.mrf.mxu0
    %v1189 = vadd.f32 0.0, %v1188
    %v1190 = vand.u32 %v94, 4294901760
    %v1191 = vsub.f32 %v94, %v1190
    %v1192 = vand.u32 %v1191, 4294901760
    %v1193 = vsub.f32 %v1191, %v1192
    %v1194 = vand.u32 %v1193, 4294901760
    %1195 = vmatmul.f32.gmra.mxu0 %v1194
    %v1196 = vpop.f32.mrf.mxu0
    %v1197 = vadd.f32 0.0, %v1196
    %v1198 = vand.u32 %v97, 4294901760
    %v1199 = vsub.f32 %v97, %v1198
    %v1200 = vand.u32 %v1199, 4294901760
    %v1201 = vsub.f32 %v1199, %v1200
    %v1202 = vand.u32 %v1201, 4294901760
    %1203 = vmatmul.f32.gmra.mxu0 %v1202
    %v1204 = vpop.f32.mrf.mxu0
    %v1205 = vadd.f32 0.0, %v1204
    %v1206 = vand.u32 %v100, 4294901760
    %v1207 = vsub.f32 %v100, %v1206
    %v1208 = vand.u32 %v1207, 4294901760
    %v1209 = vsub.f32 %v1207, %v1208
    %v1210 = vand.u32 %v1209, 4294901760
    %1211 = vmatmul.f32.gmra.mxu0 %v1210
    %v1212 = vpop.f32.mrf.mxu0
    %v1213 = vadd.f32 0.0, %v1212
    %v1214 = vand.u32 %v103, 4294901760
    %v1215 = vsub.f32 %v103, %v1214
    %v1216 = vand.u32 %v1215, 4294901760
    %v1217 = vsub.f32 %v1215, %v1216
    %v1218 = vand.u32 %v1217, 4294901760
    %1219 = vmatmul.f32.gmra.mxu0 %v1218
    %v1220 = vpop.f32.mrf.mxu0
    %v1221 = vadd.f32 0.0, %v1220
    %1222 = vdwg.mxu0
    %1223 = vmatpush.msra.mxu0 0.0
    %1224 = vmatpush.msra.mxu0 0.0
    %1225 = vmatpush.msra.mxu0 0.0
    %1226 = vmatpush.msra.mxu0 0.0
    %v1227 = vand.u32 %v113, 4294901760
    %v1228 = vsub.f32 %v113, %v1227
    %v1229 = vand.u32 %v1228, 4294901760
    %v1230 = vsub.f32 %v1228, %v1229
    %v1231 = vand.u32 %v1230, 4294901760
    %1232 = vmatpush.msra.mxu0 %v1231
    %v1233 = vand.u32 %v74, 4294901760
    %v1234 = vsub.f32 %v74, %v1233
    %v1235 = vand.u32 %v1234, 4294901760
    %v1236 = vsub.f32 %v1234, %v1235
    %v1237 = vand.u32 %v1236, 4294901760
    %1238 = vmatpush.msra.mxu0 %v1237
    %v1239 = vand.u32 %v70, 4294901760
    %v1240 = vsub.f32 %v70, %v1239
    %v1241 = vand.u32 %v1240, 4294901760
    %v1242 = vsub.f32 %v1240, %v1241
    %v1243 = vand.u32 %v1242, 4294901760
    %1244 = vmatpush.msra.mxu0 %v1243
    %v1245 = vand.u32 %v66, 4294901760
    %v1246 = vsub.f32 %v66, %v1245
    %v1247 = vand.u32 %v1246, 4294901760
    %v1248 = vsub.f32 %v1246, %v1247
    %v1249 = vand.u32 %v1248, 4294901760
    %1250 = vmatpush.msra.mxu0 %v1249
    %v1251 = vand.u32 %v62, 4294901760
    %v1252 = vsub.f32 %v62, %v1251
    %v1253 = vand.u32 %v1252, 4294901760
    %v1254 = vsub.f32 %v1252, %v1253
    %v1255 = vand.u32 %v1254, 4294901760
    %1256 = vmatpush.msra.mxu0 %v1255
    %v1257 = vand.u32 %v58, 4294901760
    %v1258 = vsub.f32 %v58, %v1257
    %v1259 = vand.u32 %v1258, 4294901760
    %v1260 = vsub.f32 %v1258, %v1259
    %v1261 = vand.u32 %v1260, 4294901760
    %1262 = vmatpush.msra.mxu0 %v1261
    %v1263 = vand.u32 %v54, 4294901760
    %v1264 = vsub.f32 %v54, %v1263
    %v1265 = vand.u32 %v1264, 4294901760
    %v1266 = vsub.f32 %v1264, %v1265
    %v1267 = vand.u32 %v1266, 4294901760
    %1268 = vmatpush.msra.mxu0 %v1267
    %v1269 = vand.u32 %v50, 4294901760
    %v1270 = vsub.f32 %v50, %v1269
    %v1271 = vand.u32 %v1270, 4294901760
    %v1272 = vsub.f32 %v1270, %v1271
    %v1273 = vand.u32 %v1272, 4294901760
    %1274 = vmatpush.msra.mxu0 %v1273
    %v1275 = vand.u32 %v46, 4294901760
    %v1276 = vsub.f32 %v46, %v1275
    %v1277 = vand.u32 %v1276, 4294901760
    %v1278 = vsub.f32 %v1276, %v1277
    %v1279 = vand.u32 %v1278, 4294901760
    %1280 = vmatpush.msra.mxu0 %v1279
    %v1281 = vand.u32 %v42, 4294901760
    %v1282 = vsub.f32 %v42, %v1281
    %v1283 = vand.u32 %v1282, 4294901760
    %v1284 = vsub.f32 %v1282, %v1283
    %v1285 = vand.u32 %v1284, 4294901760
    %1286 = vmatpush.msra.mxu0 %v1285
    %v1287 = vand.u32 %v38, 4294901760
    %v1288 = vsub.f32 %v38, %v1287
    %v1289 = vand.u32 %v1288, 4294901760
    %v1290 = vsub.f32 %v1288, %v1289
    %v1291 = vand.u32 %v1290, 4294901760
    %1292 = vmatpush.msra.mxu0 %v1291
    %v1293 = vand.u32 %v34, 4294901760
    %v1294 = vsub.f32 %v34, %v1293
    %v1295 = vand.u32 %v1294, 4294901760
    %v1296 = vsub.f32 %v1294, %v1295
    %v1297 = vand.u32 %v1296, 4294901760
    %1298 = vmatpush.msra.mxu0 %v1297
    %v1299 = vand.u32 %v82, 4294901760
    %1300 = vmatmul.f32.gmra.mxu0 %v1299
    %v1301 = vpop.f32.mrf.mxu0
    %v1302 = vadd.f32 %v1165, %v1301
    %v1303 = vand.u32 %v85, 4294901760
    %1304 = vmatmul.f32.gmra.mxu0 %v1303
    %v1305 = vpop.f32.mrf.mxu0
    %v1306 = vadd.f32 %v1173, %v1305
    %v1307 = vand.u32 %v88, 4294901760
    %1308 = vmatmul.f32.gmra.mxu0 %v1307
    %v1309 = vpop.f32.mrf.mxu0
    %v1310 = vadd.f32 %v1181, %v1309
    %v1311 = vand.u32 %v91, 4294901760
    %1312 = vmatmul.f32.gmra.mxu0 %v1311
    %v1313 = vpop.f32.mrf.mxu0
    %v1314 = vadd.f32 %v1189, %v1313
    %v1315 = vand.u32 %v94, 4294901760
    %1316 = vmatmul.f32.gmra.mxu0 %v1315
    %v1317 = vpop.f32.mrf.mxu0
    %v1318 = vadd.f32 %v1197, %v1317
    %v1319 = vand.u32 %v97, 4294901760
    %1320 = vmatmul.f32.gmra.mxu0 %v1319
    %v1321 = vpop.f32.mrf.mxu0
    %v1322 = vadd.f32 %v1205, %v1321
    %v1323 = vand.u32 %v100, 4294901760
    %1324 = vmatmul.f32.gmra.mxu0 %v1323
    %v1325 = vpop.f32.mrf.mxu0
    %v1326 = vadd.f32 %v1213, %v1325
    %v1327 = vand.u32 %v103, 4294901760
    %1328 = vmatmul.f32.gmra.mxu0 %v1327
    %v1329 = vpop.f32.mrf.mxu0
    %v1330 = vadd.f32 %v1221, %v1329
    %1331 = vdwg.mxu0
    %1332 = vmatpush.msra.mxu0 0.0
    %1333 = vmatpush.msra.mxu0 0.0
    %1334 = vmatpush.msra.mxu0 0.0
    %1335 = vmatpush.msra.mxu0 0.0
    %v1336 = vand.u32 %v113, 4294901760
    %v1337 = vsub.f32 %v113, %v1336
    %1338 = vmatpush.msra.mxu0 %v1337
    %v1339 = vand.u32 %v74, 4294901760
    %v1340 = vsub.f32 %v74, %v1339
    %1341 = vmatpush.msra.mxu0 %v1340
    %v1342 = vand.u32 %v70, 4294901760
    %v1343 = vsub.f32 %v70, %v1342
    %1344 = vmatpush.msra.mxu0 %v1343
    %v1345 = vand.u32 %v66, 4294901760
    %v1346 = vsub.f32 %v66, %v1345
    %1347 = vmatpush.msra.mxu0 %v1346
    %v1348 = vand.u32 %v62, 4294901760
    %v1349 = vsub.f32 %v62, %v1348
    %1350 = vmatpush.msra.mxu0 %v1349
    %v1351 = vand.u32 %v58, 4294901760
    %v1352 = vsub.f32 %v58, %v1351
    %1353 = vmatpush.msra.mxu0 %v1352
    %v1354 = vand.u32 %v54, 4294901760
    %v1355 = vsub.f32 %v54, %v1354
    %1356 = vmatpush.msra.mxu0 %v1355
    %v1357 = vand.u32 %v50, 4294901760
    %v1358 = vsub.f32 %v50, %v1357
    %1359 = vmatpush.msra.mxu0 %v1358
    %v1360 = vand.u32 %v46, 4294901760
    %v1361 = vsub.f32 %v46, %v1360
    %1362 = vmatpush.msra.mxu0 %v1361
    %v1363 = vand.u32 %v42, 4294901760
    %v1364 = vsub.f32 %v42, %v1363
    %1365 = vmatpush.msra.mxu0 %v1364
    %v1366 = vand.u32 %v38, 4294901760
    %v1367 = vsub.f32 %v38, %v1366
    %1368 = vmatpush.msra.mxu0 %v1367
    %v1369 = vand.u32 %v34, 4294901760
    %v1370 = vsub.f32 %v34, %v1369
    %1371 = vmatpush.msra.mxu0 %v1370
    %v1372 = vand.u32 %v82, 4294901760
    %v1373 = vsub.f32 %v82, %v1372
    %1374 = vmatmul.f32.gmra.mxu0 %v1373
    %v1375 = vpop.f32.mrf.mxu0
    %v1376 = vadd.f32 %v1302, %v1375
    %v1377 = vand.u32 %v85, 4294901760
    %v1378 = vsub.f32 %v85, %v1377
    %1379 = vmatmul.f32.gmra.mxu0 %v1378
    %v1380 = vpop.f32.mrf.mxu0
    %v1381 = vadd.f32 %v1306, %v1380
    %v1382 = vand.u32 %v88, 4294901760
    %v1383 = vsub.f32 %v88, %v1382
    %1384 = vmatmul.f32.gmra.mxu0 %v1383
    %v1385 = vpop.f32.mrf.mxu0
    %v1386 = vadd.f32 %v1310, %v1385
    %v1387 = vand.u32 %v91, 4294901760
    %v1388 = vsub.f32 %v91, %v1387
    %1389 = vmatmul.f32.gmra.mxu0 %v1388
    %v1390 = vpop.f32.mrf.mxu0
    %v1391 = vadd.f32 %v1314, %v1390
    %v1392 = vand.u32 %v94, 4294901760
    %v1393 = vsub.f32 %v94, %v1392
    %1394 = vmatmul.f32.gmra.mxu0 %v1393
    %v1395 = vpop.f32.mrf.mxu0
    %v1396 = vadd.f32 %v1318, %v1395
    %v1397 = vand.u32 %v97, 4294901760
    %v1398 = vsub.f32 %v97, %v1397
    %1399 = vmatmul.f32.gmra.mxu0 %v1398
    %v1400 = vpop.f32.mrf.mxu0
    %v1401 = vadd.f32 %v1322, %v1400
    %v1402 = vand.u32 %v100, 4294901760
    %v1403 = vsub.f32 %v100, %v1402
    %1404 = vmatmul.f32.gmra.mxu0 %v1403
    %v1405 = vpop.f32.mrf.mxu0
    %v1406 = vadd.f32 %v1326, %v1405
    %v1407 = vand.u32 %v103, 4294901760
    %v1408 = vsub.f32 %v103, %v1407
    %1409 = vmatmul.f32.gmra.mxu0 %v1408
    %v1410 = vpop.f32.mrf.mxu0
    %v1411 = vadd.f32 %v1330, %v1410
    %1412 = vdwg.mxu0
    %1413 = vmatpush.msra.mxu0 0.0
    %1414 = vmatpush.msra.mxu0 0.0
    %1415 = vmatpush.msra.mxu0 0.0
    %1416 = vmatpush.msra.mxu0 0.0
    %v1417 = vand.u32 %v113, 4294901760
    %1418 = vmatpush.msra.mxu0 %v1417
    %v1419 = vand.u32 %v74, 4294901760
    %1420 = vmatpush.msra.mxu0 %v1419
    %v1421 = vand.u32 %v70, 4294901760
    %1422 = vmatpush.msra.mxu0 %v1421
    %v1423 = vand.u32 %v66, 4294901760
    %1424 = vmatpush.msra.mxu0 %v1423
    %v1425 = vand.u32 %v62, 4294901760
    %1426 = vmatpush.msra.mxu0 %v1425
    %v1427 = vand.u32 %v58, 4294901760
    %1428 = vmatpush.msra.mxu0 %v1427
    %v1429 = vand.u32 %v54, 4294901760
    %1430 = vmatpush.msra.mxu0 %v1429
    %v1431 = vand.u32 %v50, 4294901760
    %1432 = vmatpush.msra.mxu0 %v1431
    %v1433 = vand.u32 %v46, 4294901760
    %1434 = vmatpush.msra.mxu0 %v1433
    %v1435 = vand.u32 %v42, 4294901760
    %1436 = vmatpush.msra.mxu0 %v1435
    %v1437 = vand.u32 %v38, 4294901760
    %1438 = vmatpush.msra.mxu0 %v1437
    %v1439 = vand.u32 %v34, 4294901760
    %1440 = vmatpush.msra.mxu0 %v1439
    %v1441 = vand.u32 %v82, 4294901760
    %v1442 = vsub.f32 %v82, %v1441
    %v1443 = vand.u32 %v1442, 4294901760
    %1444 = vmatmul.f32.gmra.mxu0 %v1443
    %v1445 = vpop.f32.mrf.mxu0
    %v1446 = vadd.f32 %v1376, %v1445
    %v1447 = vand.u32 %v85, 4294901760
    %v1448 = vsub.f32 %v85, %v1447
    %v1449 = vand.u32 %v1448, 4294901760
    %1450 = vmatmul.f32.gmra.mxu0 %v1449
    %v1451 = vpop.f32.mrf.mxu0
    %v1452 = vadd.f32 %v1381, %v1451
    %v1453 = vand.u32 %v88, 4294901760
    %v1454 = vsub.f32 %v88, %v1453
    %v1455 = vand.u32 %v1454, 4294901760
    %1456 = vmatmul.f32.gmra.mxu0 %v1455
    %v1457 = vpop.f32.mrf.mxu0
    %v1458 = vadd.f32 %v1386, %v1457
    %v1459 = vand.u32 %v91, 4294901760
    %v1460 = vsub.f32 %v91, %v1459
    %v1461 = vand.u32 %v1460, 4294901760
    %1462 = vmatmul.f32.gmra.mxu0 %v1461
    %v1463 = vpop.f32.mrf.mxu0
    %v1464 = vadd.f32 %v1391, %v1463
    %v1465 = vand.u32 %v94, 4294901760
    %v1466 = vsub.f32 %v94, %v1465
    %v1467 = vand.u32 %v1466, 4294901760
    %1468 = vmatmul.f32.gmra.mxu0 %v1467
    %v1469 = vpop.f32.mrf.mxu0
    %v1470 = vadd.f32 %v1396, %v1469
    %v1471 = vand.u32 %v97, 4294901760
    %v1472 = vsub.f32 %v97, %v1471
    %v1473 = vand.u32 %v1472, 4294901760
    %1474 = vmatmul.f32.gmra.mxu0 %v1473
    %v1475 = vpop.f32.mrf.mxu0
    %v1476 = vadd.f32 %v1401, %v1475
    %v1477 = vand.u32 %v100, 4294901760
    %v1478 = vsub.f32 %v100, %v1477
    %v1479 = vand.u32 %v1478, 4294901760
    %1480 = vmatmul.f32.gmra.mxu0 %v1479
    %v1481 = vpop.f32.mrf.mxu0
    %v1482 = vadd.f32 %v1406, %v1481
    %v1483 = vand.u32 %v103, 4294901760
    %v1484 = vsub.f32 %v103, %v1483
    %v1485 = vand.u32 %v1484, 4294901760
    %1486 = vmatmul.f32.gmra.mxu0 %v1485
    %v1487 = vpop.f32.mrf.mxu0
    %v1488 = vadd.f32 %v1411, %v1487
    %1489 = vdwg.mxu0
    %1490 = vmatpush.msra.mxu0 0.0
    %1491 = vmatpush.msra.mxu0 0.0
    %1492 = vmatpush.msra.mxu0 0.0
    %1493 = vmatpush.msra.mxu0 0.0
    %v1494 = vand.u32 %v113, 4294901760
    %v1495 = vsub.f32 %v113, %v1494
    %v1496 = vand.u32 %v1495, 4294901760
    %1497 = vmatpush.msra.mxu0 %v1496
    %v1498 = vand.u32 %v74, 4294901760
    %v1499 = vsub.f32 %v74, %v1498
    %v1500 = vand.u32 %v1499, 4294901760
    %1501 = vmatpush.msra.mxu0 %v1500
    %v1502 = vand.u32 %v70, 4294901760
    %v1503 = vsub.f32 %v70, %v1502
    %v1504 = vand.u32 %v1503, 4294901760
    %1505 = vmatpush.msra.mxu0 %v1504
    %v1506 = vand.u32 %v66, 4294901760
    %v1507 = vsub.f32 %v66, %v1506
    %v1508 = vand.u32 %v1507, 4294901760
    %1509 = vmatpush.msra.mxu0 %v1508
    %v1510 = vand.u32 %v62, 4294901760
    %v1511 = vsub.f32 %v62, %v1510
    %v1512 = vand.u32 %v1511, 4294901760
    %1513 = vmatpush.msra.mxu0 %v1512
    %v1514 = vand.u32 %v58, 4294901760
    %v1515 = vsub.f32 %v58, %v1514
    %v1516 = vand.u32 %v1515, 4294901760
    %1517 = vmatpush.msra.mxu0 %v1516
    %v1518 = vand.u32 %v54, 4294901760
    %v1519 = vsub.f32 %v54, %v1518
    %v1520 = vand.u32 %v1519, 4294901760
    %1521 = vmatpush.msra.mxu0 %v1520
    %v1522 = vand.u32 %v50, 4294901760
    %v1523 = vsub.f32 %v50, %v1522
    %v1524 = vand.u32 %v1523, 4294901760
    %1525 = vmatpush.msra.mxu0 %v1524
    %v1526 = vand.u32 %v46, 4294901760
    %v1527 = vsub.f32 %v46, %v1526
    %v1528 = vand.u32 %v1527, 4294901760
    %1529 = vmatpush.msra.mxu0 %v1528
    %v1530 = vand.u32 %v42, 4294901760
    %v1531 = vsub.f32 %v42, %v1530
    %v1532 = vand.u32 %v1531, 4294901760
    %1533 = vmatpush.msra.mxu0 %v1532
    %v1534 = vand.u32 %v38, 4294901760
    %v1535 = vsub.f32 %v38, %v1534
    %v1536 = vand.u32 %v1535, 4294901760
    %1537 = vmatpush.msra.mxu0 %v1536
    %v1538 = vand.u32 %v34, 4294901760
    %v1539 = vsub.f32 %v34, %v1538
    %v1540 = vand.u32 %v1539, 4294901760
    %1541 = vmatpush.msra.mxu0 %v1540
    %v1542 = vand.u32 %v82, 4294901760
    %1543 = vmatmul.f32.gmra.mxu0 %v1542
    %v1544 = vpop.f32.mrf.mxu0
    %v1545 = vadd.f32 %v1446, %v1544
    %v1546 = vand.u32 %v85, 4294901760
    %1547 = vmatmul.f32.gmra.mxu0 %v1546
    %v1548 = vpop.f32.mrf.mxu0
    %v1549 = vadd.f32 %v1452, %v1548
    %v1550 = vand.u32 %v88, 4294901760
    %1551 = vmatmul.f32.gmra.mxu0 %v1550
    %v1552 = vpop.f32.mrf.mxu0
    %v1553 = vadd.f32 %v1458, %v1552
    %v1554 = vand.u32 %v91, 4294901760
    %1555 = vmatmul.f32.gmra.mxu0 %v1554
    %v1556 = vpop.f32.mrf.mxu0
    %v1557 = vadd.f32 %v1464, %v1556
    %v1558 = vand.u32 %v94, 4294901760
    %1559 = vmatmul.f32.gmra.mxu0 %v1558
    %v1560 = vpop.f32.mrf.mxu0
    %v1561 = vadd.f32 %v1470, %v1560
    %v1562 = vand.u32 %v97, 4294901760
    %1563 = vmatmul.f32.gmra.mxu0 %v1562
    %v1564 = vpop.f32.mrf.mxu0
    %v1565 = vadd.f32 %v1476, %v1564
    %v1566 = vand.u32 %v100, 4294901760
    %1567 = vmatmul.f32.gmra.mxu0 %v1566
    %v1568 = vpop.f32.mrf.mxu0
    %v1569 = vadd.f32 %v1482, %v1568
    %v1570 = vand.u32 %v103, 4294901760
    %1571 = vmatmul.f32.gmra.mxu0 %v1570
    %v1572 = vpop.f32.mrf.mxu0
    %v1573 = vadd.f32 %v1488, %v1572
    %1574 = vdwg.mxu0
    %1575 = vmatpush.msra.mxu0 0.0
    %1576 = vmatpush.msra.mxu0 0.0
    %1577 = vmatpush.msra.mxu0 0.0
    %1578 = vmatpush.msra.mxu0 0.0
    %v1579 = vand.u32 %v113, 4294901760
    %1580 = vmatpush.msra.mxu0 %v1579
    %v1581 = vand.u32 %v74, 4294901760
    %1582 = vmatpush.msra.mxu0 %v1581
    %v1583 = vand.u32 %v70, 4294901760
    %1584 = vmatpush.msra.mxu0 %v1583
    %v1585 = vand.u32 %v66, 4294901760
    %1586 = vmatpush.msra.mxu0 %v1585
    %v1587 = vand.u32 %v62, 4294901760
    %1588 = vmatpush.msra.mxu0 %v1587
    %v1589 = vand.u32 %v58, 4294901760
    %1590 = vmatpush.msra.mxu0 %v1589
    %v1591 = vand.u32 %v54, 4294901760
    %1592 = vmatpush.msra.mxu0 %v1591
    %v1593 = vand.u32 %v50, 4294901760
    %1594 = vmatpush.msra.mxu0 %v1593
    %v1595 = vand.u32 %v46, 4294901760
    %1596 = vmatpush.msra.mxu0 %v1595
    %v1597 = vand.u32 %v42, 4294901760
    %1598 = vmatpush.msra.mxu0 %v1597
    %v1599 = vand.u32 %v38, 4294901760
    %1600 = vmatpush.msra.mxu0 %v1599
    %v1601 = vand.u32 %v34, 4294901760
    %1602 = vmatpush.msra.mxu0 %v1601
    %v1603 = vand.u32 %v82, 4294901760
    %1604 = vmatmul.f32.gmra.mxu0 %v1603
    %v1605 = vpop.f32.mrf.mxu0
    %v1606 = vadd.f32 %v1545, %v1605
    %v1607 = vand.u32 %v85, 4294901760
    %1608 = vmatmul.f32.gmra.mxu0 %v1607
    %v1609 = vpop.f32.mrf.mxu0
    %v1610 = vadd.f32 %v1549, %v1609
    %v1611 = vand.u32 %v88, 4294901760
    %1612 = vmatmul.f32.gmra.mxu0 %v1611
    %v1613 = vpop.f32.mrf.mxu0
    %v1614 = vadd.f32 %v1553, %v1613
    %v1615 = vand.u32 %v91, 4294901760
    %1616 = vmatmul.f32.gmra.mxu0 %v1615
    %v1617 = vpop.f32.mrf.mxu0
    %v1618 = vadd.f32 %v1557, %v1617
    %v1619 = vand.u32 %v94, 4294901760
    %1620 = vmatmul.f32.gmra.mxu0 %v1619
    %v1621 = vpop.f32.mrf.mxu0
    %v1622 = vadd.f32 %v1561, %v1621
    %v1623 = vand.u32 %v97, 4294901760
    %1624 = vmatmul.f32.gmra.mxu0 %v1623
    %v1625 = vpop.f32.mrf.mxu0
    %v1626 = vadd.f32 %v1565, %v1625
    %v1627 = vand.u32 %v100, 4294901760
    %1628 = vmatmul.f32.gmra.mxu0 %v1627
    %v1629 = vpop.f32.mrf.mxu0
    %v1630 = vadd.f32 %v1569, %v1629
    %v1631 = vand.u32 %v103, 4294901760
    %1632 = vmatmul.f32.gmra.mxu0 %v1631
    %v1633 = vpop.f32.mrf.mxu0
    %v1634 = vadd.f32 %v1573, %v1633
    %1635 = vdwg.mxu0
    %1636 = vmatpush.msra.mxu0 0.0
    %1637 = vmatpush.msra.mxu0 0.0
    %1638 = vmatpush.msra.mxu0 0.0
    %1639 = vmatpush.msra.mxu0 0.0
    %v1640 = vand.u32 %v116, 4294901760
    %1641 = vmatpush.msra.mxu0 %v1640
    %v1642 = vand.u32 %v75, 4294901760
    %1643 = vmatpush.msra.mxu0 %v1642
    %v1644 = vand.u32 %v71, 4294901760
    %1645 = vmatpush.msra.mxu0 %v1644
    %v1646 = vand.u32 %v67, 4294901760
    %1647 = vmatpush.msra.mxu0 %v1646
    %v1648 = vand.u32 %v63, 4294901760
    %1649 = vmatpush.msra.mxu0 %v1648
    %v1650 = vand.u32 %v59, 4294901760
    %1651 = vmatpush.msra.mxu0 %v1650
    %v1652 = vand.u32 %v55, 4294901760
    %1653 = vmatpush.msra.mxu0 %v1652
    %v1654 = vand.u32 %v51, 4294901760
    %1655 = vmatpush.msra.mxu0 %v1654
    %v1656 = vand.u32 %v47, 4294901760
    %1657 = vmatpush.msra.mxu0 %v1656
    %v1658 = vand.u32 %v43, 4294901760
    %1659 = vmatpush.msra.mxu0 %v1658
    %v1660 = vand.u32 %v39, 4294901760
    %1661 = vmatpush.msra.mxu0 %v1660
    %v1662 = vand.u32 %v35, 4294901760
    %1663 = vmatpush.msra.mxu0 %v1662
    %v1664 = vand.u32 %v82, 4294901760
    %v1665 = vsub.f32 %v82, %v1664
    %v1666 = vand.u32 %v1665, 4294901760
    %v1667 = vsub.f32 %v1665, %v1666
    %v1668 = vand.u32 %v1667, 4294901760
    %1669 = vmatmul.f32.gmra.mxu0 %v1668
    %v1670 = vpop.f32.mrf.mxu0
    %v1671 = vadd.f32 0.0, %v1670
    %v1672 = vand.u32 %v85, 4294901760
    %v1673 = vsub.f32 %v85, %v1672
    %v1674 = vand.u32 %v1673, 4294901760
    %v1675 = vsub.f32 %v1673, %v1674
    %v1676 = vand.u32 %v1675, 4294901760
    %1677 = vmatmul.f32.gmra.mxu0 %v1676
    %v1678 = vpop.f32.mrf.mxu0
    %v1679 = vadd.f32 0.0, %v1678
    %v1680 = vand.u32 %v88, 4294901760
    %v1681 = vsub.f32 %v88, %v1680
    %v1682 = vand.u32 %v1681, 4294901760
    %v1683 = vsub.f32 %v1681, %v1682
    %v1684 = vand.u32 %v1683, 4294901760
    %1685 = vmatmul.f32.gmra.mxu0 %v1684
    %v1686 = vpop.f32.mrf.mxu0
    %v1687 = vadd.f32 0.0, %v1686
    %v1688 = vand.u32 %v91, 4294901760
    %v1689 = vsub.f32 %v91, %v1688
    %v1690 = vand.u32 %v1689, 4294901760
    %v1691 = vsub.f32 %v1689, %v1690
    %v1692 = vand.u32 %v1691, 4294901760
    %1693 = vmatmul.f32.gmra.mxu0 %v1692
    %v1694 = vpop.f32.mrf.mxu0
    %v1695 = vadd.f32 0.0, %v1694
    %v1696 = vand.u32 %v94, 4294901760
    %v1697 = vsub.f32 %v94, %v1696
    %v1698 = vand.u32 %v1697, 4294901760
    %v1699 = vsub.f32 %v1697, %v1698
    %v1700 = vand.u32 %v1699, 4294901760
    %1701 = vmatmul.f32.gmra.mxu0 %v1700
    %v1702 = vpop.f32.mrf.mxu0
    %v1703 = vadd.f32 0.0, %v1702
    %v1704 = vand.u32 %v97, 4294901760
    %v1705 = vsub.f32 %v97, %v1704
    %v1706 = vand.u32 %v1705, 4294901760
    %v1707 = vsub.f32 %v1705, %v1706
    %v1708 = vand.u32 %v1707, 4294901760
    %1709 = vmatmul.f32.gmra.mxu0 %v1708
    %v1710 = vpop.f32.mrf.mxu0
    %v1711 = vadd.f32 0.0, %v1710
    %v1712 = vand.u32 %v100, 4294901760
    %v1713 = vsub.f32 %v100, %v1712
    %v1714 = vand.u32 %v1713, 4294901760
    %v1715 = vsub.f32 %v1713, %v1714
    %v1716 = vand.u32 %v1715, 4294901760
    %1717 = vmatmul.f32.gmra.mxu0 %v1716
    %v1718 = vpop.f32.mrf.mxu0
    %v1719 = vadd.f32 0.0, %v1718
    %v1720 = vand.u32 %v103, 4294901760
    %v1721 = vsub.f32 %v103, %v1720
    %v1722 = vand.u32 %v1721, 4294901760
    %v1723 = vsub.f32 %v1721, %v1722
    %v1724 = vand.u32 %v1723, 4294901760
    %1725 = vmatmul.f32.gmra.mxu0 %v1724
    %v1726 = vpop.f32.mrf.mxu0
    %v1727 = vadd.f32 0.0, %v1726
    %1728 = vdwg.mxu0
    %1729 = vmatpush.msra.mxu0 0.0
    %1730 = vmatpush.msra.mxu0 0.0
    %1731 = vmatpush.msra.mxu0 0.0
    %1732 = vmatpush.msra.mxu0 0.0
    %v1733 = vand.u32 %v116, 4294901760
    %v1734 = vsub.f32 %v116, %v1733
    %v1735 = vand.u32 %v1734, 4294901760
    %v1736 = vsub.f32 %v1734, %v1735
    %v1737 = vand.u32 %v1736, 4294901760
    %1738 = vmatpush.msra.mxu0 %v1737
    %v1739 = vand.u32 %v75, 4294901760
    %v1740 = vsub.f32 %v75, %v1739
    %v1741 = vand.u32 %v1740, 4294901760
    %v1742 = vsub.f32 %v1740, %v1741
    %v1743 = vand.u32 %v1742, 4294901760
    %1744 = vmatpush.msra.mxu0 %v1743
    %v1745 = vand.u32 %v71, 4294901760
    %v1746 = vsub.f32 %v71, %v1745
    %v1747 = vand.u32 %v1746, 4294901760
    %v1748 = vsub.f32 %v1746, %v1747
    %v1749 = vand.u32 %v1748, 4294901760
    %1750 = vmatpush.msra.mxu0 %v1749
    %v1751 = vand.u32 %v67, 4294901760
    %v1752 = vsub.f32 %v67, %v1751
    %v1753 = vand.u32 %v1752, 4294901760
    %v1754 = vsub.f32 %v1752, %v1753
    %v1755 = vand.u32 %v1754, 4294901760
    %1756 = vmatpush.msra.mxu0 %v1755
    %v1757 = vand.u32 %v63, 4294901760
    %v1758 = vsub.f32 %v63, %v1757
    %v1759 = vand.u32 %v1758, 4294901760
    %v1760 = vsub.f32 %v1758, %v1759
    %v1761 = vand.u32 %v1760, 4294901760
    %1762 = vmatpush.msra.mxu0 %v1761
    %v1763 = vand.u32 %v59, 4294901760
    %v1764 = vsub.f32 %v59, %v1763
    %v1765 = vand.u32 %v1764, 4294901760
    %v1766 = vsub.f32 %v1764, %v1765
    %v1767 = vand.u32 %v1766, 4294901760
    %1768 = vmatpush.msra.mxu0 %v1767
    %v1769 = vand.u32 %v55, 4294901760
    %v1770 = vsub.f32 %v55, %v1769
    %v1771 = vand.u32 %v1770, 4294901760
    %v1772 = vsub.f32 %v1770, %v1771
    %v1773 = vand.u32 %v1772, 4294901760
    %1774 = vmatpush.msra.mxu0 %v1773
    %v1775 = vand.u32 %v51, 4294901760
    %v1776 = vsub.f32 %v51, %v1775
    %v1777 = vand.u32 %v1776, 4294901760
    %v1778 = vsub.f32 %v1776, %v1777
    %v1779 = vand.u32 %v1778, 4294901760
    %1780 = vmatpush.msra.mxu0 %v1779
    %v1781 = vand.u32 %v47, 4294901760
    %v1782 = vsub.f32 %v47, %v1781
    %v1783 = vand.u32 %v1782, 4294901760
    %v1784 = vsub.f32 %v1782, %v1783
    %v1785 = vand.u32 %v1784, 4294901760
    %1786 = vmatpush.msra.mxu0 %v1785
    %v1787 = vand.u32 %v43, 4294901760
    %v1788 = vsub.f32 %v43, %v1787
    %v1789 = vand.u32 %v1788, 4294901760
    %v1790 = vsub.f32 %v1788, %v1789
    %v1791 = vand.u32 %v1790, 4294901760
    %1792 = vmatpush.msra.mxu0 %v1791
    %v1793 = vand.u32 %v39, 4294901760
    %v1794 = vsub.f32 %v39, %v1793
    %v1795 = vand.u32 %v1794, 4294901760
    %v1796 = vsub.f32 %v1794, %v1795
    %v1797 = vand.u32 %v1796, 4294901760
    %1798 = vmatpush.msra.mxu0 %v1797
    %v1799 = vand.u32 %v35, 4294901760
    %v1800 = vsub.f32 %v35, %v1799
    %v1801 = vand.u32 %v1800, 4294901760
    %v1802 = vsub.f32 %v1800, %v1801
    %v1803 = vand.u32 %v1802, 4294901760
    %1804 = vmatpush.msra.mxu0 %v1803
    %v1805 = vand.u32 %v82, 4294901760
    %1806 = vmatmul.f32.gmra.mxu0 %v1805
    %v1807 = vpop.f32.mrf.mxu0
    %v1808 = vadd.f32 %v1671, %v1807
    %v1809 = vand.u32 %v85, 4294901760
    %1810 = vmatmul.f32.gmra.mxu0 %v1809
    %v1811 = vpop.f32.mrf.mxu0
    %v1812 = vadd.f32 %v1679, %v1811
    %v1813 = vand.u32 %v88, 4294901760
    %1814 = vmatmul.f32.gmra.mxu0 %v1813
    %v1815 = vpop.f32.mrf.mxu0
    %v1816 = vadd.f32 %v1687, %v1815
    %v1817 = vand.u32 %v91, 4294901760
    %1818 = vmatmul.f32.gmra.mxu0 %v1817
    %v1819 = vpop.f32.mrf.mxu0
    %v1820 = vadd.f32 %v1695, %v1819
    %v1821 = vand.u32 %v94, 4294901760
    %1822 = vmatmul.f32.gmra.mxu0 %v1821
    %v1823 = vpop.f32.mrf.mxu0
    %v1824 = vadd.f32 %v1703, %v1823
    %v1825 = vand.u32 %v97, 4294901760
    %1826 = vmatmul.f32.gmra.mxu0 %v1825
    %v1827 = vpop.f32.mrf.mxu0
    %v1828 = vadd.f32 %v1711, %v1827
    %v1829 = vand.u32 %v100, 4294901760
    %1830 = vmatmul.f32.gmra.mxu0 %v1829
    %v1831 = vpop.f32.mrf.mxu0
    %v1832 = vadd.f32 %v1719, %v1831
    %v1833 = vand.u32 %v103, 4294901760
    %1834 = vmatmul.f32.gmra.mxu0 %v1833
    %v1835 = vpop.f32.mrf.mxu0
    %v1836 = vadd.f32 %v1727, %v1835
    %1837 = vdwg.mxu0
    %1838 = vmatpush.msra.mxu0 0.0
    %1839 = vmatpush.msra.mxu0 0.0
    %1840 = vmatpush.msra.mxu0 0.0
    %1841 = vmatpush.msra.mxu0 0.0
    %v1842 = vand.u32 %v116, 4294901760
    %v1843 = vsub.f32 %v116, %v1842
    %1844 = vmatpush.msra.mxu0 %v1843
    %v1845 = vand.u32 %v75, 4294901760
    %v1846 = vsub.f32 %v75, %v1845
    %1847 = vmatpush.msra.mxu0 %v1846
    %v1848 = vand.u32 %v71, 4294901760
    %v1849 = vsub.f32 %v71, %v1848
    %1850 = vmatpush.msra.mxu0 %v1849
    %v1851 = vand.u32 %v67, 4294901760
    %v1852 = vsub.f32 %v67, %v1851
    %1853 = vmatpush.msra.mxu0 %v1852
    %v1854 = vand.u32 %v63, 4294901760
    %v1855 = vsub.f32 %v63, %v1854
    %1856 = vmatpush.msra.mxu0 %v1855
    %v1857 = vand.u32 %v59, 4294901760
    %v1858 = vsub.f32 %v59, %v1857
    %1859 = vmatpush.msra.mxu0 %v1858
    %v1860 = vand.u32 %v55, 4294901760
    %v1861 = vsub.f32 %v55, %v1860
    %1862 = vmatpush.msra.mxu0 %v1861
    %v1863 = vand.u32 %v51, 4294901760
    %v1864 = vsub.f32 %v51, %v1863
    %1865 = vmatpush.msra.mxu0 %v1864
    %v1866 = vand.u32 %v47, 4294901760
    %v1867 = vsub.f32 %v47, %v1866
    %1868 = vmatpush.msra.mxu0 %v1867
    %v1869 = vand.u32 %v43, 4294901760
    %v1870 = vsub.f32 %v43, %v1869
    %1871 = vmatpush.msra.mxu0 %v1870
    %v1872 = vand.u32 %v39, 4294901760
    %v1873 = vsub.f32 %v39, %v1872
    %1874 = vmatpush.msra.mxu0 %v1873
    %v1875 = vand.u32 %v35, 4294901760
    %v1876 = vsub.f32 %v35, %v1875
    %1877 = vmatpush.msra.mxu0 %v1876
    %v1878 = vand.u32 %v82, 4294901760
    %v1879 = vsub.f32 %v82, %v1878
    %1880 = vmatmul.f32.gmra.mxu0 %v1879
    %v1881 = vpop.f32.mrf.mxu0
    %v1882 = vadd.f32 %v1808, %v1881
    %v1883 = vand.u32 %v85, 4294901760
    %v1884 = vsub.f32 %v85, %v1883
    %1885 = vmatmul.f32.gmra.mxu0 %v1884
    %v1886 = vpop.f32.mrf.mxu0
    %v1887 = vadd.f32 %v1812, %v1886
    %v1888 = vand.u32 %v88, 4294901760
    %v1889 = vsub.f32 %v88, %v1888
    %1890 = vmatmul.f32.gmra.mxu0 %v1889
    %v1891 = vpop.f32.mrf.mxu0
    %v1892 = vadd.f32 %v1816, %v1891
    %v1893 = vand.u32 %v91, 4294901760
    %v1894 = vsub.f32 %v91, %v1893
    %1895 = vmatmul.f32.gmra.mxu0 %v1894
    %v1896 = vpop.f32.mrf.mxu0
    %v1897 = vadd.f32 %v1820, %v1896
    %v1898 = vand.u32 %v94, 4294901760
    %v1899 = vsub.f32 %v94, %v1898
    %1900 = vmatmul.f32.gmra.mxu0 %v1899
    %v1901 = vpop.f32.mrf.mxu0
    %v1902 = vadd.f32 %v1824, %v1901
    %v1903 = vand.u32 %v97, 4294901760
    %v1904 = vsub.f32 %v97, %v1903
    %1905 = vmatmul.f32.gmra.mxu0 %v1904
    %v1906 = vpop.f32.mrf.mxu0
    %v1907 = vadd.f32 %v1828, %v1906
    %v1908 = vand.u32 %v100, 4294901760
    %v1909 = vsub.f32 %v100, %v1908
    %1910 = vmatmul.f32.gmra.mxu0 %v1909
    %v1911 = vpop.f32.mrf.mxu0
    %v1912 = vadd.f32 %v1832, %v1911
    %v1913 = vand.u32 %v103, 4294901760
    %v1914 = vsub.f32 %v103, %v1913
    %1915 = vmatmul.f32.gmra.mxu0 %v1914
    %v1916 = vpop.f32.mrf.mxu0
    %v1917 = vadd.f32 %v1836, %v1916
    %1918 = vdwg.mxu0
    %1919 = vmatpush.msra.mxu0 0.0
    %1920 = vmatpush.msra.mxu0 0.0
    %1921 = vmatpush.msra.mxu0 0.0
    %1922 = vmatpush.msra.mxu0 0.0
    %v1923 = vand.u32 %v116, 4294901760
    %1924 = vmatpush.msra.mxu0 %v1923
    %v1925 = vand.u32 %v75, 4294901760
    %1926 = vmatpush.msra.mxu0 %v1925
    %v1927 = vand.u32 %v71, 4294901760
    %1928 = vmatpush.msra.mxu0 %v1927
    %v1929 = vand.u32 %v67, 4294901760
    %1930 = vmatpush.msra.mxu0 %v1929
    %v1931 = vand.u32 %v63, 4294901760
    %1932 = vmatpush.msra.mxu0 %v1931
    %v1933 = vand.u32 %v59, 4294901760
    %1934 = vmatpush.msra.mxu0 %v1933
    %v1935 = vand.u32 %v55, 4294901760
    %1936 = vmatpush.msra.mxu0 %v1935
    %v1937 = vand.u32 %v51, 4294901760
    %1938 = vmatpush.msra.mxu0 %v1937
    %v1939 = vand.u32 %v47, 4294901760
    %1940 = vmatpush.msra.mxu0 %v1939
    %v1941 = vand.u32 %v43, 4294901760
    %1942 = vmatpush.msra.mxu0 %v1941
    %v1943 = vand.u32 %v39, 4294901760
    %1944 = vmatpush.msra.mxu0 %v1943
    %v1945 = vand.u32 %v35, 4294901760
    %1946 = vmatpush.msra.mxu0 %v1945
    %v1947 = vand.u32 %v82, 4294901760
    %v1948 = vsub.f32 %v82, %v1947
    %v1949 = vand.u32 %v1948, 4294901760
    %1950 = vmatmul.f32.gmra.mxu0 %v1949
    %v1951 = vpop.f32.mrf.mxu0
    %v1952 = vadd.f32 %v1882, %v1951
    %v1953 = vand.u32 %v85, 4294901760
    %v1954 = vsub.f32 %v85, %v1953
    %v1955 = vand.u32 %v1954, 4294901760
    %1956 = vmatmul.f32.gmra.mxu0 %v1955
    %v1957 = vpop.f32.mrf.mxu0
    %v1958 = vadd.f32 %v1887, %v1957
    %v1959 = vand.u32 %v88, 4294901760
    %v1960 = vsub.f32 %v88, %v1959
    %v1961 = vand.u32 %v1960, 4294901760
    %1962 = vmatmul.f32.gmra.mxu0 %v1961
    %v1963 = vpop.f32.mrf.mxu0
    %v1964 = vadd.f32 %v1892, %v1963
    %v1965 = vand.u32 %v91, 4294901760
    %v1966 = vsub.f32 %v91, %v1965
    %v1967 = vand.u32 %v1966, 4294901760
    %1968 = vmatmul.f32.gmra.mxu0 %v1967
    %v1969 = vpop.f32.mrf.mxu0
    %v1970 = vadd.f32 %v1897, %v1969
    %v1971 = vand.u32 %v94, 4294901760
    %v1972 = vsub.f32 %v94, %v1971
    %v1973 = vand.u32 %v1972, 4294901760
    %1974 = vmatmul.f32.gmra.mxu0 %v1973
    %v1975 = vpop.f32.mrf.mxu0
    %v1976 = vadd.f32 %v1902, %v1975
    %v1977 = vand.u32 %v97, 4294901760
    %v1978 = vsub.f32 %v97, %v1977
    %v1979 = vand.u32 %v1978, 4294901760
    %1980 = vmatmul.f32.gmra.mxu0 %v1979
    %v1981 = vpop.f32.mrf.mxu0
    %v1982 = vadd.f32 %v1907, %v1981
    %v1983 = vand.u32 %v100, 4294901760
    %v1984 = vsub.f32 %v100, %v1983
    %v1985 = vand.u32 %v1984, 4294901760
    %1986 = vmatmul.f32.gmra.mxu0 %v1985
    %v1987 = vpop.f32.mrf.mxu0
    %v1988 = vadd.f32 %v1912, %v1987
    %v1989 = vand.u32 %v103, 4294901760
    %v1990 = vsub.f32 %v103, %v1989
    %v1991 = vand.u32 %v1990, 4294901760
    %1992 = vmatmul.f32.gmra.mxu0 %v1991
    %v1993 = vpop.f32.mrf.mxu0
    %v1994 = vadd.f32 %v1917, %v1993
    %1995 = vdwg.mxu0
    %1996 = vmatpush.msra.mxu0 0.0
    %1997 = vmatpush.msra.mxu0 0.0
    %1998 = vmatpush.msra.mxu0 0.0
    %1999 = vmatpush.msra.mxu0 0.0
    %v2000 = vand.u32 %v116, 4294901760
    %v2001 = vsub.f32 %v116, %v2000
    %v2002 = vand.u32 %v2001, 4294901760
    %2003 = vmatpush.msra.mxu0 %v2002
    %v2004 = vand.u32 %v75, 4294901760
    %v2005 = vsub.f32 %v75, %v2004
    %v2006 = vand.u32 %v2005, 4294901760
    %2007 = vmatpush.msra.mxu0 %v2006
    %v2008 = vand.u32 %v71, 4294901760
    %v2009 = vsub.f32 %v71, %v2008
    %v2010 = vand.u32 %v2009, 4294901760
    %2011 = vmatpush.msra.mxu0 %v2010
    %v2012 = vand.u32 %v67, 4294901760
    %v2013 = vsub.f32 %v67, %v2012
    %v2014 = vand.u32 %v2013, 4294901760
    %2015 = vmatpush.msra.mxu0 %v2014
    %v2016 = vand.u32 %v63, 4294901760
    %v2017 = vsub.f32 %v63, %v2016
    %v2018 = vand.u32 %v2017, 4294901760
    %2019 = vmatpush.msra.mxu0 %v2018
    %v2020 = vand.u32 %v59, 4294901760
    %v2021 = vsub.f32 %v59, %v2020
    %v2022 = vand.u32 %v2021, 4294901760
    %2023 = vmatpush.msra.mxu0 %v2022
    %v2024 = vand.u32 %v55, 4294901760
    %v2025 = vsub.f32 %v55, %v2024
    %v2026 = vand.u32 %v2025, 4294901760
    %2027 = vmatpush.msra.mxu0 %v2026
    %v2028 = vand.u32 %v51, 4294901760
    %v2029 = vsub.f32 %v51, %v2028
    %v2030 = vand.u32 %v2029, 4294901760
    %2031 = vmatpush.msra.mxu0 %v2030
    %v2032 = vand.u32 %v47, 4294901760
    %v2033 = vsub.f32 %v47, %v2032
    %v2034 = vand.u32 %v2033, 4294901760
    %2035 = vmatpush.msra.mxu0 %v2034
    %v2036 = vand.u32 %v43, 4294901760
    %v2037 = vsub.f32 %v43, %v2036
    %v2038 = vand.u32 %v2037, 4294901760
    %2039 = vmatpush.msra.mxu0 %v2038
    %v2040 = vand.u32 %v39, 4294901760
    %v2041 = vsub.f32 %v39, %v2040
    %v2042 = vand.u32 %v2041, 4294901760
    %2043 = vmatpush.msra.mxu0 %v2042
    %v2044 = vand.u32 %v35, 4294901760
    %v2045 = vsub.f32 %v35, %v2044
    %v2046 = vand.u32 %v2045, 4294901760
    %2047 = vmatpush.msra.mxu0 %v2046
    %v2048 = vand.u32 %v82, 4294901760
    %2049 = vmatmul.f32.gmra.mxu0 %v2048
    %v2050 = vpop.f32.mrf.mxu0
    %v2051 = vadd.f32 %v1952, %v2050
    %v2052 = vand.u32 %v85, 4294901760
    %2053 = vmatmul.f32.gmra.mxu0 %v2052
    %v2054 = vpop.f32.mrf.mxu0
    %v2055 = vadd.f32 %v1958, %v2054
    %v2056 = vand.u32 %v88, 4294901760
    %2057 = vmatmul.f32.gmra.mxu0 %v2056
    %v2058 = vpop.f32.mrf.mxu0
    %v2059 = vadd.f32 %v1964, %v2058
    %v2060 = vand.u32 %v91, 4294901760
    %2061 = vmatmul.f32.gmra.mxu0 %v2060
    %v2062 = vpop.f32.mrf.mxu0
    %v2063 = vadd.f32 %v1970, %v2062
    %v2064 = vand.u32 %v94, 4294901760
    %2065 = vmatmul.f32.gmra.mxu0 %v2064
    %v2066 = vpop.f32.mrf.mxu0
    %v2067 = vadd.f32 %v1976, %v2066
    %v2068 = vand.u32 %v97, 4294901760
    %2069 = vmatmul.f32.gmra.mxu0 %v2068
    %v2070 = vpop.f32.mrf.mxu0
    %v2071 = vadd.f32 %v1982, %v2070
    %v2072 = vand.u32 %v100, 4294901760
    %2073 = vmatmul.f32.gmra.mxu0 %v2072
    %v2074 = vpop.f32.mrf.mxu0
    %v2075 = vadd.f32 %v1988, %v2074
    %v2076 = vand.u32 %v103, 4294901760
    %2077 = vmatmul.f32.gmra.mxu0 %v2076
    %v2078 = vpop.f32.mrf.mxu0
    %v2079 = vadd.f32 %v1994, %v2078
    %2080 = vdwg.mxu0
    %2081 = vmatpush.msra.mxu0 0.0
    %2082 = vmatpush.msra.mxu0 0.0
    %2083 = vmatpush.msra.mxu0 0.0
    %2084 = vmatpush.msra.mxu0 0.0
    %v2085 = vand.u32 %v116, 4294901760
    %2086 = vmatpush.msra.mxu0 %v2085
    %v2087 = vand.u32 %v75, 4294901760
    %2088 = vmatpush.msra.mxu0 %v2087
    %v2089 = vand.u32 %v71, 4294901760
    %2090 = vmatpush.msra.mxu0 %v2089
    %v2091 = vand.u32 %v67, 4294901760
    %2092 = vmatpush.msra.mxu0 %v2091
    %v2093 = vand.u32 %v63, 4294901760
    %2094 = vmatpush.msra.mxu0 %v2093
    %v2095 = vand.u32 %v59, 4294901760
    %2096 = vmatpush.msra.mxu0 %v2095
    %v2097 = vand.u32 %v55, 4294901760
    %2098 = vmatpush.msra.mxu0 %v2097
    %v2099 = vand.u32 %v51, 4294901760
    %2100 = vmatpush.msra.mxu0 %v2099
    %v2101 = vand.u32 %v47, 4294901760
    %2102 = vmatpush.msra.mxu0 %v2101
    %v2103 = vand.u32 %v43, 4294901760
    %2104 = vmatpush.msra.mxu0 %v2103
    %v2105 = vand.u32 %v39, 4294901760
    %2106 = vmatpush.msra.mxu0 %v2105
    %v2107 = vand.u32 %v35, 4294901760
    %2108 = vmatpush.msra.mxu0 %v2107
    %v2109 = vand.u32 %v82, 4294901760
    %2110 = vmatmul.f32.gmra.mxu0 %v2109
    %v2111 = vpop.f32.mrf.mxu0
    %v2112 = vadd.f32 %v2051, %v2111
    %v2113 = vand.u32 %v85, 4294901760
    %2114 = vmatmul.f32.gmra.mxu0 %v2113
    %v2115 = vpop.f32.mrf.mxu0
    %v2116 = vadd.f32 %v2055, %v2115
    %v2117 = vand.u32 %v88, 4294901760
    %2118 = vmatmul.f32.gmra.mxu0 %v2117
    %v2119 = vpop.f32.mrf.mxu0
    %v2120 = vadd.f32 %v2059, %v2119
    %v2121 = vand.u32 %v91, 4294901760
    %2122 = vmatmul.f32.gmra.mxu0 %v2121
    %v2123 = vpop.f32.mrf.mxu0
    %v2124 = vadd.f32 %v2063, %v2123
    %v2125 = vand.u32 %v94, 4294901760
    %2126 = vmatmul.f32.gmra.mxu0 %v2125
    %v2127 = vpop.f32.mrf.mxu0
    %v2128 = vadd.f32 %v2067, %v2127
    %v2129 = vand.u32 %v97, 4294901760
    %2130 = vmatmul.f32.gmra.mxu0 %v2129
    %v2131 = vpop.f32.mrf.mxu0
    %v2132 = vadd.f32 %v2071, %v2131
    %v2133 = vand.u32 %v100, 4294901760
    %2134 = vmatmul.f32.gmra.mxu0 %v2133
    %v2135 = vpop.f32.mrf.mxu0
    %v2136 = vadd.f32 %v2075, %v2135
    %v2137 = vand.u32 %v103, 4294901760
    %2138 = vmatmul.f32.gmra.mxu0 %v2137
    %v2139 = vpop.f32.mrf.mxu0
    %v2140 = vadd.f32 %v2079, %v2139
    %2141 = vdwg.mxu0
    %v2142 = vmax.f32 %v594, 0.0
    %v2143 = vmax.f32 %v1100, 0.0
    %v2144 = vmax.f32 %v1606, 0.0
    %v2145 = vmax.f32 %v2112, 0.0
    %v2146 = vmax.f32 %v598, 0.0
    %v2147 = vmax.f32 %v1104, 0.0
    %v2148 = vmax.f32 %v1610, 0.0
    %v2149 = vmax.f32 %v2116, 0.0
    %v2150 = vmax.f32 %v602, 0.0
    %v2151 = vmax.f32 %v1108, 0.0
    %v2152 = vmax.f32 %v1614, 0.0
    %v2153 = vmax.f32 %v2120, 0.0
    %v2154 = vmax.f32 %v606, 0.0
    %v2155 = vmax.f32 %v1112, 0.0
    %v2156 = vmax.f32 %v1618, 0.0
    %v2157 = vmax.f32 %v2124, 0.0
    %v2158 = vmax.f32 %v610, 0.0
    %v2159 = vmax.f32 %v1116, 0.0
    %v2160 = vmax.f32 %v1622, 0.0
    %v2161 = vmax.f32 %v2128, 0.0
    %v2162 = vmax.f32 %v614, 0.0
    %v2163 = vmax.f32 %v1120, 0.0
    %v2164 = vmax.f32 %v1626, 0.0
    %v2165 = vmax.f32 %v2132, 0.0
    %v2166 = vmax.f32 %v618, 0.0
    %v2167 = vmax.f32 %v1124, 0.0
    %v2168 = vmax.f32 %v1630, 0.0
    %v2169 = vmax.f32 %v2136, 0.0
    %v2170 = vmax.f32 %v622, 0.0
    %v2171 = vmax.f32 %v1128, 0.0
    %v2172 = vmax.f32 %v1634, 0.0
    %v2173 = vmax.f32 %v2140, 0.0
    %v2174 = vmax.f32 %v2142, %v2158
    %v2175 = vmax.f32 %v2143, %v2159
    %v2176 = vmax.f32 %v2144, %v2160
    %v2177 = vmax.f32 %v2145, %v2161
    %v2178 = vmax.f32 %v2146, %v2162
    %v2179 = vmax.f32 %v2147, %v2163
    %v2180 = vmax.f32 %v2148, %v2164
    %v2181 = vmax.f32 %v2149, %v2165
    %v2182 = vmax.f32 %v2150, %v2166
    %v2183 = vmax.f32 %v2151, %v2167
    %v2184 = vmax.f32 %v2152, %v2168
    %v2185 = vmax.f32 %v2153, %v2169
    %v2186 = vmax.f32 %v2154, %v2170
    %v2187 = vmax.f32 %v2155, %v2171
    %v2188 = vmax.f32 %v2156, %v2172
    %v2189 = vmax.f32 %v2157, %v2173
    %v2190 = vmax.f32 %v2174, %v2176
    %v2191 = vmax.f32 %v2175, %v2177
    %v2192 = vmax.f32 %v2178, %v2180
    %v2193 = vmax.f32 %v2179, %v2181
    %v2194 = vmax.f32 %v2182, %v2184
    %v2195 = vmax.f32 %v2183, %v2185
    %v2196 = vmax.f32 %v2186, %v2188
    %v2197 = vmax.f32 %v2187, %v2189
    %v2198 = vld [vmem:[%s2] sm:$0xff]
    %v2199 = vld [vmem:[%s2 + $0x8] sm:$0xff]
    %v2200 = vld [vmem:[%s2 + $0x10] sm:$0xff]
    %v2201 = vld [vmem:[%s2 + $0x18] sm:$0xff]
    %v2202 = vld [vmem:[%s2 + $0x20] sm:$0xff]
    %v2203 = vld [vmem:[%s2 + $0x28] sm:$0xff]
    %v2204 = vld [vmem:[%s2 + $0x30] sm:$0xff]
    %v2205 = vld [vmem:[%s2 + $0x38] sm:$0xff]
    %v2206 = vld [vmem:[%s2 + $0x40] sm:$0xff]
    %v2207 = vld [vmem:[%s2 + $0x48] sm:$0xff]
    %v2208 = vld [vmem:[%s2 + $0x50] sm:$0xff]
    %v2209 = vld [vmem:[%s2 + $0x58] sm:$0xff]
    %v2210 = vld [vmem:[%s2 + $0x60] sm:$0xff]
    %v2211 = vld [vmem:[%s2 + $0x68] sm:$0xff]
    %v2212 = vld [vmem:[%s2 + $0x70] sm:$0xff]
    %v2213 = vld [vmem:[%s2 + $0x78] sm:$0xff]
    %v2214 = vld [vmem:[%s2 + $0x80] sm:$0xff]
    %v2215 = vld [vmem:[%s2 + $0x88] sm:$0xff]
    %v2216 = vld [vmem:[%s2 + $0x90] sm:$0xff]
    %v2217 = vld [vmem:[%s2 + $0x98] sm:$0xff]
    %v2218 = vld [vmem:[%s2 + $0xa0] sm:$0xff]
    %v2219 = vld [vmem:[%s2 + $0xa8] sm:$0xff]
    %v2220 = vld [vmem:[%s2 + $0xb0] sm:$0xff]
    %v2221 = vld [vmem:[%s2 + $0xb8] sm:$0xff]
    %v2222 = vld [vmem:[%s2 + $0xc0] sm:$0xff]
    %v2223 = vld [vmem:[%s2 + $0xc8] sm:$0xff]
    %v2224 = vld [vmem:[%s2 + $0xd0] sm:$0xff]
    %v2225 = vld [vmem:[%s2 + $0xd8] sm:$0xff]
    %v2226 = vld [vmem:[%s2 + $0xe0] sm:$0xff]
    %v2227 = vld [vmem:[%s2 + $0xe8] sm:$0xff]
    %v2228 = vld [vmem:[%s2 + $0xf0] sm:$0xff]
    %v2229 = vld [vmem:[%s2 + $0xf8] sm:$0xff]
    %s2230 = scalar_lea.vmem %s2, 256
    %v2231 = vld [vmem:[%s2230] sm:$0xff]
    %v2232 = vld [vmem:[%s2230 + $0x8] sm:$0xff]
    %v2233 = vld [vmem:[%s2230 + $0x10] sm:$0xff]
    %v2234 = vld [vmem:[%s2230 + $0x18] sm:$0xff]
    %v2235 = vld [vmem:[%s2230 + $0x20] sm:$0xff]
    %v2236 = vld [vmem:[%s2230 + $0x28] sm:$0xff]
    %v2237 = vld [vmem:[%s2230 + $0x30] sm:$0xff]
    %v2238 = vld [vmem:[%s2230 + $0x38] sm:$0xff]
    %v2239 = vld [vmem:[%s2230 + $0x40] sm:$0xff]
    %v2240 = vld [vmem:[%s2230 + $0x48] sm:$0xff]
    %v2241 = vld [vmem:[%s2230 + $0x50] sm:$0xff]
    %v2242 = vld [vmem:[%s2230 + $0x58] sm:$0xff]
    %v2243 = vld [vmem:[%s2230 + $0x60] sm:$0xff]
    %v2244 = vld [vmem:[%s2230 + $0x68] sm:$0xff]
    %v2245 = vld [vmem:[%s2230 + $0x70] sm:$0xff]
    %v2246 = vld [vmem:[%s2230 + $0x78] sm:$0xff]
    %v2247 = vld [vmem:[%s2230 + $0x80] sm:$0xff]
    %v2248 = vld [vmem:[%s2230 + $0x88] sm:$0xff]
    %v2249 = vld [vmem:[%s2230 + $0x90] sm:$0xff]
    %v2250 = vld [vmem:[%s2230 + $0x98] sm:$0xff]
    %v2251 = vld [vmem:[%s2230 + $0xa0] sm:$0xff]
    %v2252 = vld [vmem:[%s2230 + $0xa8] sm:$0xff]
    %v2253 = vld [vmem:[%s2230 + $0xb0] sm:$0xff]
    %v2254 = vld [vmem:[%s2230 + $0xb8] sm:$0xff]
    %v2255 = vld [vmem:[%s2230 + $0xc0] sm:$0xff]
    %v2256 = vld [vmem:[%s2230 + $0xc8] sm:$0xff]
    %v2257 = vld [vmem:[%s2230 + $0xd0] sm:$0xff]
    %v2258 = vld [vmem:[%s2230 + $0xd8] sm:$0xff]
    %v2259 = vld [vmem:[%s2230 + $0xe0] sm:$0xff]
    %v2260 = vld [vmem:[%s2230 + $0xe8] sm:$0xff]
    %v2261 = vld [vmem:[%s2230 + $0xf0] sm:$0xff]
    %v2262 = vld [vmem:[%s2230 + $0xf8] sm:$0xff]
    %v2263 = vand.u32 %v2246, 4294901760
    %2264 = vmatpush.msra.mxu0 %v2263
    %v2265 = vand.u32 %v2245, 4294901760
    %2266 = vmatpush.msra.mxu0 %v2265
    %v2267 = vand.u32 %v2244, 4294901760
    %2268 = vmatpush.msra.mxu0 %v2267
    %v2269 = vand.u32 %v2243, 4294901760
    %2270 = vmatpush.msra.mxu0 %v2269
    %v2271 = vand.u32 %v2242, 4294901760
    %2272 = vmatpush.msra.mxu0 %v2271
    %v2273 = vand.u32 %v2241, 4294901760
    %2274 = vmatpush.msra.mxu0 %v2273
    %v2275 = vand.u32 %v2240, 4294901760
    %2276 = vmatpush.msra.mxu0 %v2275
    %v2277 = vand.u32 %v2239, 4294901760
    %2278 = vmatpush.msra.mxu0 %v2277
    %v2279 = vand.u32 %v2238, 4294901760
    %2280 = vmatpush.msra.mxu0 %v2279
    %v2281 = vand.u32 %v2237, 4294901760
    %2282 = vmatpush.msra.mxu0 %v2281
    %v2283 = vand.u32 %v2236, 4294901760
    %2284 = vmatpush.msra.mxu0 %v2283
    %v2285 = vand.u32 %v2235, 4294901760
    %2286 = vmatpush.msra.mxu0 %v2285
    %v2287 = vand.u32 %v2234, 4294901760
    %2288 = vmatpush.msra.mxu0 %v2287
    %v2289 = vand.u32 %v2233, 4294901760
    %2290 = vmatpush.msra.mxu0 %v2289
    %v2291 = vand.u32 %v2232, 4294901760
    %2292 = vmatpush.msra.mxu0 %v2291
    %v2293 = vand.u32 %v2231, 4294901760
    %2294 = vmatpush.msra.mxu0 %v2293
    %v2295 = vand.u32 %v2194, 4294901760
    %v2296 = vsub.f32 %v2194, %v2295
    %v2297 = vand.u32 %v2296, 4294901760
    %v2298 = vsub.f32 %v2296, %v2297
    %v2299 = vand.u32 %v2298, 4294901760
    %2300 = vmatmul.f32.gmra.mxu0 %v2299
    %v2301 = vpop.f32.mrf.mxu0
    %v2302 = vadd.f32 0.0, %v2301
    %v2303 = vand.u32 %v2196, 4294901760
    %v2304 = vsub.f32 %v2196, %v2303
    %v2305 = vand.u32 %v2304, 4294901760
    %v2306 = vsub.f32 %v2304, %v2305
    %v2307 = vand.u32 %v2306, 4294901760
    %2308 = vmatmul.f32.gmra.mxu0 %v2307
    %v2309 = vpop.f32.mrf.mxu0
    %v2310 = vadd.f32 0.0, %v2309
    %2311 = vdwg.mxu0
    %v2312 = vand.u32 %v2246, 4294901760
    %v2313 = vsub.f32 %v2246, %v2312
    %v2314 = vand.u32 %v2313, 4294901760
    %v2315 = vsub.f32 %v2313, %v2314
    %v2316 = vand.u32 %v2315, 4294901760
    %2317 = vmatpush.msra.mxu0 %v2316
    %v2318 = vand.u32 %v2245, 4294901760
    %v2319 = vsub.f32 %v2245, %v2318
    %v2320 = vand.u32 %v2319, 4294901760
    %v2321 = vsub.f32 %v2319, %v2320
    %v2322 = vand.u32 %v2321, 4294901760
    %2323 = vmatpush.msra.mxu0 %v2322
    %v2324 = vand.u32 %v2244, 4294901760
    %v2325 = vsub.f32 %v2244, %v2324
    %v2326 = vand.u32 %v2325, 4294901760
    %v2327 = vsub.f32 %v2325, %v2326
    %v2328 = vand.u32 %v2327, 4294901760
    %2329 = vmatpush.msra.mxu0 %v2328
    %v2330 = vand.u32 %v2243, 4294901760
    %v2331 = vsub.f32 %v2243, %v2330
    %v2332 = vand.u32 %v2331, 4294901760
    %v2333 = vsub.f32 %v2331, %v2332
    %v2334 = vand.u32 %v2333, 4294901760
    %2335 = vmatpush.msra.mxu0 %v2334
    %v2336 = vand.u32 %v2242, 4294901760
    %v2337 = vsub.f32 %v2242, %v2336
    %v2338 = vand.u32 %v2337, 4294901760
    %v2339 = vsub.f32 %v2337, %v2338
    %v2340 = vand.u32 %v2339, 4294901760
    %2341 = vmatpush.msra.mxu0 %v2340
    %v2342 = vand.u32 %v2241, 4294901760
    %v2343 = vsub.f32 %v2241, %v2342
    %v2344 = vand.u32 %v2343, 4294901760
    %v2345 = vsub.f32 %v2343, %v2344
    %v2346 = vand.u32 %v2345, 4294901760
    %2347 = vmatpush.msra.mxu0 %v2346
    %v2348 = vand.u32 %v2240, 4294901760
    %v2349 = vsub.f32 %v2240, %v2348
    %v2350 = vand.u32 %v2349, 4294901760
    %v2351 = vsub.f32 %v2349, %v2350
    %v2352 = vand.u32 %v2351, 4294901760
    %2353 = vmatpush.msra.mxu0 %v2352
    %v2354 = vand.u32 %v2239, 4294901760
    %v2355 = vsub.f32 %v2239, %v2354
    %v2356 = vand.u32 %v2355, 4294901760
    %v2357 = vsub.f32 %v2355, %v2356
    %v2358 = vand.u32 %v2357, 4294901760
    %2359 = vmatpush.msra.mxu0 %v2358
    %v2360 = vand.u32 %v2238, 4294901760
    %v2361 = vsub.f32 %v2238, %v2360
    %v2362 = vand.u32 %v2361, 4294901760
    %v2363 = vsub.f32 %v2361, %v2362
    %v2364 = vand.u32 %v2363, 4294901760
    %2365 = vmatpush.msra.mxu0 %v2364
    %v2366 = vand.u32 %v2237, 4294901760
    %v2367 = vsub.f32 %v2237, %v2366
    %v2368 = vand.u32 %v2367, 4294901760
    %v2369 = vsub.f32 %v2367, %v2368
    %v2370 = vand.u32 %v2369, 4294901760
    %2371 = vmatpush.msra.mxu0 %v2370
    %v2372 = vand.u32 %v2236, 4294901760
    %v2373 = vsub.f32 %v2236, %v2372
    %v2374 = vand.u32 %v2373, 4294901760
    %v2375 = vsub.f32 %v2373, %v2374
    %v2376 = vand.u32 %v2375, 4294901760
    %2377 = vmatpush.msra.mxu0 %v2376
    %v2378 = vand.u32 %v2235, 4294901760
    %v2379 = vsub.f32 %v2235, %v2378
    %v2380 = vand.u32 %v2379, 4294901760
    %v2381 = vsub.f32 %v2379, %v2380
    %v2382 = vand.u32 %v2381, 4294901760
    %2383 = vmatpush.msra.mxu0 %v2382
    %v2384 = vand.u32 %v2234, 4294901760
    %v2385 = vsub.f32 %v2234, %v2384
    %v2386 = vand.u32 %v2385, 4294901760
    %v2387 = vsub.f32 %v2385, %v2386
    %v2388 = vand.u32 %v2387, 4294901760
    %2389 = vmatpush.msra.mxu0 %v2388
    %v2390 = vand.u32 %v2233, 4294901760
    %v2391 = vsub.f32 %v2233, %v2390
    %v2392 = vand.u32 %v2391, 4294901760
    %v2393 = vsub.f32 %v2391, %v2392
    %v2394 = vand.u32 %v2393, 4294901760
    %2395 = vmatpush.msra.mxu0 %v2394
    %v2396 = vand.u32 %v2232, 4294901760
    %v2397 = vsub.f32 %v2232, %v2396
    %v2398 = vand.u32 %v2397, 4294901760
    %v2399 = vsub.f32 %v2397, %v2398
    %v2400 = vand.u32 %v2399, 4294901760
    %2401 = vmatpush.msra.mxu0 %v2400
    %v2402 = vand.u32 %v2231, 4294901760
    %v2403 = vsub.f32 %v2231, %v2402
    %v2404 = vand.u32 %v2403, 4294901760
    %v2405 = vsub.f32 %v2403, %v2404
    %v2406 = vand.u32 %v2405, 4294901760
    %2407 = vmatpush.msra.mxu0 %v2406
    %v2408 = vand.u32 %v2194, 4294901760
    %2409 = vmatmul.f32.gmra.mxu0 %v2408
    %v2410 = vpop.f32.mrf.mxu0
    %v2411 = vadd.f32 %v2302, %v2410
    %v2412 = vand.u32 %v2196, 4294901760
    %2413 = vmatmul.f32.gmra.mxu0 %v2412
    %v2414 = vpop.f32.mrf.mxu0
    %v2415 = vadd.f32 %v2310, %v2414
    %2416 = vdwg.mxu0
    %v2417 = vand.u32 %v2246, 4294901760
    %v2418 = vsub.f32 %v2246, %v2417
    %2419 = vmatpush.msra.mxu0 %v2418
    %v2420 = vand.u32 %v2245, 4294901760
    %v2421 = vsub.f32 %v2245, %v2420
    %2422 = vmatpush.msra.mxu0 %v2421
    %v2423 = vand.u32 %v2244, 4294901760
    %v2424 = vsub.f32 %v2244, %v2423
    %2425 = vmatpush.msra.mxu0 %v2424
    %v2426 = vand.u32 %v2243, 4294901760
    %v2427 = vsub.f32 %v2243, %v2426
    %2428 = vmatpush.msra.mxu0 %v2427
    %v2429 = vand.u32 %v2242, 4294901760
    %v2430 = vsub.f32 %v2242, %v2429
    %2431 = vmatpush.msra.mxu0 %v2430
    %v2432 = vand.u32 %v2241, 4294901760
    %v2433 = vsub.f32 %v2241, %v2432
    %2434 = vmatpush.msra.mxu0 %v2433
    %v2435 = vand.u32 %v2240, 4294901760
    %v2436 = vsub.f32 %v2240, %v2435
    %2437 = vmatpush.msra.mxu0 %v2436
    %v2438 = vand.u32 %v2239, 4294901760
    %v2439 = vsub.f32 %v2239, %v2438
    %2440 = vmatpush.msra.mxu0 %v2439
    %v2441 = vand.u32 %v2238, 4294901760
    %v2442 = vsub.f32 %v2238, %v2441
    %2443 = vmatpush.msra.mxu0 %v2442
    %v2444 = vand.u32 %v2237, 4294901760
    %v2445 = vsub.f32 %v2237, %v2444
    %2446 = vmatpush.msra.mxu0 %v2445
    %v2447 = vand.u32 %v2236, 4294901760
    %v2448 = vsub.f32 %v2236, %v2447
    %2449 = vmatpush.msra.mxu0 %v2448
    %v2450 = vand.u32 %v2235, 4294901760
    %v2451 = vsub.f32 %v2235, %v2450
    %2452 = vmatpush.msra.mxu0 %v2451
    %v2453 = vand.u32 %v2234, 4294901760
    %v2454 = vsub.f32 %v2234, %v2453
    %2455 = vmatpush.msra.mxu0 %v2454
    %v2456 = vand.u32 %v2233, 4294901760
    %v2457 = vsub.f32 %v2233, %v2456
    %2458 = vmatpush.msra.mxu0 %v2457
    %v2459 = vand.u32 %v2232, 4294901760
    %v2460 = vsub.f32 %v2232, %v2459
    %2461 = vmatpush.msra.mxu0 %v2460
    %v2462 = vand.u32 %v2231, 4294901760
    %v2463 = vsub.f32 %v2231, %v2462
    %2464 = vmatpush.msra.mxu0 %v2463
    %v2465 = vand.u32 %v2194, 4294901760
    %v2466 = vsub.f32 %v2194, %v2465
    %2467 = vmatmul.f32.gmra.mxu0 %v2466
    %v2468 = vpop.f32.mrf.mxu0
    %v2469 = vadd.f32 %v2411, %v2468
    %v2470 = vand.u32 %v2196, 4294901760
    %v2471 = vsub.f32 %v2196, %v2470
    %2472 = vmatmul.f32.gmra.mxu0 %v2471
    %v2473 = vpop.f32.mrf.mxu0
    %v2474 = vadd.f32 %v2415, %v2473
    %2475 = vdwg.mxu0
    %v2476 = vand.u32 %v2246, 4294901760
    %2477 = vmatpush.msra.mxu0 %v2476
    %v2478 = vand.u32 %v2245, 4294901760
    %2479 = vmatpush.msra.mxu0 %v2478
    %v2480 = vand.u32 %v2244, 4294901760
    %2481 = vmatpush.msra.mxu0 %v2480
    %v2482 = vand.u32 %v2243, 4294901760
    %2483 = vmatpush.msra.mxu0 %v2482
    %v2484 = vand.u32 %v2242, 4294901760
    %2485 = vmatpush.msra.mxu0 %v2484
    %v2486 = vand.u32 %v2241, 4294901760
    %2487 = vmatpush.msra.mxu0 %v2486
    %v2488 = vand.u32 %v2240, 4294901760
    %2489 = vmatpush.msra.mxu0 %v2488
    %v2490 = vand.u32 %v2239, 4294901760
    %2491 = vmatpush.msra.mxu0 %v2490
    %v2492 = vand.u32 %v2238, 4294901760
    %2493 = vmatpush.msra.mxu0 %v2492
    %v2494 = vand.u32 %v2237, 4294901760
    %2495 = vmatpush.msra.mxu0 %v2494
    %v2496 = vand.u32 %v2236, 4294901760
    %2497 = vmatpush.msra.mxu0 %v2496
    %v2498 = vand.u32 %v2235, 4294901760
    %2499 = vmatpush.msra.mxu0 %v2498
    %v2500 = vand.u32 %v2234, 4294901760
    %2501 = vmatpush.msra.mxu0 %v2500
    %v2502 = vand.u32 %v2233, 4294901760
    %2503 = vmatpush.msra.mxu0 %v2502
    %v2504 = vand.u32 %v2232, 4294901760
    %2505 = vmatpush.msra.mxu0 %v2504
    %v2506 = vand.u32 %v2231, 4294901760
    %2507 = vmatpush.msra.mxu0 %v2506
    %v2508 = vand.u32 %v2194, 4294901760
    %v2509 = vsub.f32 %v2194, %v2508
    %v2510 = vand.u32 %v2509, 4294901760
    %2511 = vmatmul.f32.gmra.mxu0 %v2510
    %v2512 = vpop.f32.mrf.mxu0
    %v2513 = vadd.f32 %v2469, %v2512
    %v2514 = vand.u32 %v2196, 4294901760
    %v2515 = vsub.f32 %v2196, %v2514
    %v2516 = vand.u32 %v2515, 4294901760
    %2517 = vmatmul.f32.gmra.mxu0 %v2516
    %v2518 = vpop.f32.mrf.mxu0
    %v2519 = vadd.f32 %v2474, %v2518
    %2520 = vdwg.mxu0
    %v2521 = vand.u32 %v2246, 4294901760
    %v2522 = vsub.f32 %v2246, %v2521
    %v2523 = vand.u32 %v2522, 4294901760
    %2524 = vmatpush.msra.mxu0 %v2523
    %v2525 = vand.u32 %v2245, 4294901760
    %v2526 = vsub.f32 %v2245, %v2525
    %v2527 = vand.u32 %v2526, 4294901760
    %2528 = vmatpush.msra.mxu0 %v2527
    %v2529 = vand.u32 %v2244, 4294901760
    %v2530 = vsub.f32 %v2244, %v2529
    %v2531 = vand.u32 %v2530, 4294901760
    %2532 = vmatpush.msra.mxu0 %v2531
    %v2533 = vand.u32 %v2243, 4294901760
    %v2534 = vsub.f32 %v2243, %v2533
    %v2535 = vand.u32 %v2534, 4294901760
    %2536 = vmatpush.msra.mxu0 %v2535
    %v2537 = vand.u32 %v2242, 4294901760
    %v2538 = vsub.f32 %v2242, %v2537
    %v2539 = vand.u32 %v2538, 4294901760
    %2540 = vmatpush.msra.mxu0 %v2539
    %v2541 = vand.u32 %v2241, 4294901760
    %v2542 = vsub.f32 %v2241, %v2541
    %v2543 = vand.u32 %v2542, 4294901760
    %2544 = vmatpush.msra.mxu0 %v2543
    %v2545 = vand.u32 %v2240, 4294901760
    %v2546 = vsub.f32 %v2240, %v2545
    %v2547 = vand.u32 %v2546, 4294901760
    %2548 = vmatpush.msra.mxu0 %v2547
    %v2549 = vand.u32 %v2239, 4294901760
    %v2550 = vsub.f32 %v2239, %v2549
    %v2551 = vand.u32 %v2550, 4294901760
    %2552 = vmatpush.msra.mxu0 %v2551
    %v2553 = vand.u32 %v2238, 4294901760
    %v2554 = vsub.f32 %v2238, %v2553
    %v2555 = vand.u32 %v2554, 4294901760
    %2556 = vmatpush.msra.mxu0 %v2555
    %v2557 = vand.u32 %v2237, 4294901760
    %v2558 = vsub.f32 %v2237, %v2557
    %v2559 = vand.u32 %v2558, 4294901760
    %2560 = vmatpush.msra.mxu0 %v2559
    %v2561 = vand.u32 %v2236, 4294901760
    %v2562 = vsub.f32 %v2236, %v2561
    %v2563 = vand.u32 %v2562, 4294901760
    %2564 = vmatpush.msra.mxu0 %v2563
    %v2565 = vand.u32 %v2235, 4294901760
    %v2566 = vsub.f32 %v2235, %v2565
    %v2567 = vand.u32 %v2566, 4294901760
    %2568 = vmatpush.msra.mxu0 %v2567
    %v2569 = vand.u32 %v2234, 4294901760
    %v2570 = vsub.f32 %v2234, %v2569
    %v2571 = vand.u32 %v2570, 4294901760
    %2572 = vmatpush.msra.mxu0 %v2571
    %v2573 = vand.u32 %v2233, 4294901760
    %v2574 = vsub.f32 %v2233, %v2573
    %v2575 = vand.u32 %v2574, 4294901760
    %2576 = vmatpush.msra.mxu0 %v2575
    %v2577 = vand.u32 %v2232, 4294901760
    %v2578 = vsub.f32 %v2232, %v2577
    %v2579 = vand.u32 %v2578, 4294901760
    %2580 = vmatpush.msra.mxu0 %v2579
    %v2581 = vand.u32 %v2231, 4294901760
    %v2582 = vsub.f32 %v2231, %v2581
    %v2583 = vand.u32 %v2582, 4294901760
    %2584 = vmatpush.msra.mxu0 %v2583
    %v2585 = vand.u32 %v2194, 4294901760
    %2586 = vmatmul.f32.gmra.mxu0 %v2585
    %v2587 = vpop.f32.mrf.mxu0
    %v2588 = vadd.f32 %v2513, %v2587
    %v2589 = vand.u32 %v2196, 4294901760
    %2590 = vmatmul.f32.gmra.mxu0 %v2589
    %v2591 = vpop.f32.mrf.mxu0
    %v2592 = vadd.f32 %v2519, %v2591
    %2593 = vdwg.mxu0
    %v2594 = vand.u32 %v2246, 4294901760
    %2595 = vmatpush.msra.mxu0 %v2594
    %v2596 = vand.u32 %v2245, 4294901760
    %2597 = vmatpush.msra.mxu0 %v2596
    %v2598 = vand.u32 %v2244, 4294901760
    %2599 = vmatpush.msra.mxu0 %v2598
    %v2600 = vand.u32 %v2243, 4294901760
    %2601 = vmatpush.msra.mxu0 %v2600
    %v2602 = vand.u32 %v2242, 4294901760
    %2603 = vmatpush.msra.mxu0 %v2602
    %v2604 = vand.u32 %v2241, 4294901760
    %2605 = vmatpush.msra.mxu0 %v2604
    %v2606 = vand.u32 %v2240, 4294901760
    %2607 = vmatpush.msra.mxu0 %v2606
    %v2608 = vand.u32 %v2239, 4294901760
    %2609 = vmatpush.msra.mxu0 %v2608
    %v2610 = vand.u32 %v2238, 4294901760
    %2611 = vmatpush.msra.mxu0 %v2610
    %v2612 = vand.u32 %v2237, 4294901760
    %2613 = vmatpush.msra.mxu0 %v2612
    %v2614 = vand.u32 %v2236, 4294901760
    %2615 = vmatpush.msra.mxu0 %v2614
    %v2616 = vand.u32 %v2235, 4294901760
    %2617 = vmatpush.msra.mxu0 %v2616
    %v2618 = vand.u32 %v2234, 4294901760
    %2619 = vmatpush.msra.mxu0 %v2618
    %v2620 = vand.u32 %v2233, 4294901760
    %2621 = vmatpush.msra.mxu0 %v2620
    %v2622 = vand.u32 %v2232, 4294901760
    %2623 = vmatpush.msra.mxu0 %v2622
    %v2624 = vand.u32 %v2231, 4294901760
    %2625 = vmatpush.msra.mxu0 %v2624
    %v2626 = vand.u32 %v2194, 4294901760
    %2627 = vmatmul.f32.gmra.mxu0 %v2626
    %v2628 = vpop.f32.mrf.mxu0
    %v2629 = vadd.f32 %v2588, %v2628
    %v2630 = vand.u32 %v2196, 4294901760
    %2631 = vmatmul.f32.gmra.mxu0 %v2630
    %v2632 = vpop.f32.mrf.mxu0
    %v2633 = vadd.f32 %v2592, %v2632
    %2634 = vdwg.mxu0
    %v2635 = vand.u32 %v2262, 4294901760
    %2636 = vmatpush.msra.mxu0 %v2635
    %v2637 = vand.u32 %v2261, 4294901760
    %2638 = vmatpush.msra.mxu0 %v2637
    %v2639 = vand.u32 %v2260, 4294901760
    %2640 = vmatpush.msra.mxu0 %v2639
    %v2641 = vand.u32 %v2259, 4294901760
    %2642 = vmatpush.msra.mxu0 %v2641
    %v2643 = vand.u32 %v2258, 4294901760
    %2644 = vmatpush.msra.mxu0 %v2643
    %v2645 = vand.u32 %v2257, 4294901760
    %2646 = vmatpush.msra.mxu0 %v2645
    %v2647 = vand.u32 %v2256, 4294901760
    %2648 = vmatpush.msra.mxu0 %v2647
    %v2649 = vand.u32 %v2255, 4294901760
    %2650 = vmatpush.msra.mxu0 %v2649
    %v2651 = vand.u32 %v2254, 4294901760
    %2652 = vmatpush.msra.mxu0 %v2651
    %v2653 = vand.u32 %v2253, 4294901760
    %2654 = vmatpush.msra.mxu0 %v2653
    %v2655 = vand.u32 %v2252, 4294901760
    %2656 = vmatpush.msra.mxu0 %v2655
    %v2657 = vand.u32 %v2251, 4294901760
    %2658 = vmatpush.msra.mxu0 %v2657
    %v2659 = vand.u32 %v2250, 4294901760
    %2660 = vmatpush.msra.mxu0 %v2659
    %v2661 = vand.u32 %v2249, 4294901760
    %2662 = vmatpush.msra.mxu0 %v2661
    %v2663 = vand.u32 %v2248, 4294901760
    %2664 = vmatpush.msra.mxu0 %v2663
    %v2665 = vand.u32 %v2247, 4294901760
    %2666 = vmatpush.msra.mxu0 %v2665
    %v2667 = vand.u32 %v2195, 4294901760
    %v2668 = vsub.f32 %v2195, %v2667
    %v2669 = vand.u32 %v2668, 4294901760
    %v2670 = vsub.f32 %v2668, %v2669
    %v2671 = vand.u32 %v2670, 4294901760
    %2672 = vmatmul.f32.gmra.mxu0 %v2671
    %v2673 = vpop.f32.mrf.mxu0
    %v2674 = vadd.f32 %v2629, %v2673
    %v2675 = vand.u32 %v2197, 4294901760
    %v2676 = vsub.f32 %v2197, %v2675
    %v2677 = vand.u32 %v2676, 4294901760
    %v2678 = vsub.f32 %v2676, %v2677
    %v2679 = vand.u32 %v2678, 4294901760
    %2680 = vmatmul.f32.gmra.mxu0 %v2679
    %v2681 = vpop.f32.mrf.mxu0
    %v2682 = vadd.f32 %v2633, %v2681
    %2683 = vdwg.mxu0
    %v2684 = vand.u32 %v2262, 4294901760
    %v2685 = vsub.f32 %v2262, %v2684
    %v2686 = vand.u32 %v2685, 4294901760
    %v2687 = vsub.f32 %v2685, %v2686
    %v2688 = vand.u32 %v2687, 4294901760
    %2689 = vmatpush.msra.mxu0 %v2688
    %v2690 = vand.u32 %v2261, 4294901760
    %v2691 = vsub.f32 %v2261, %v2690
    %v2692 = vand.u32 %v2691, 4294901760
    %v2693 = vsub.f32 %v2691, %v2692
    %v2694 = vand.u32 %v2693, 4294901760
    %2695 = vmatpush.msra.mxu0 %v2694
    %v2696 = vand.u32 %v2260, 4294901760
    %v2697 = vsub.f32 %v2260, %v2696
    %v2698 = vand.u32 %v2697, 4294901760
    %v2699 = vsub.f32 %v2697, %v2698
    %v2700 = vand.u32 %v2699, 4294901760
    %2701 = vmatpush.msra.mxu0 %v2700
    %v2702 = vand.u32 %v2259, 4294901760
    %v2703 = vsub.f32 %v2259, %v2702
    %v2704 = vand.u32 %v2703, 4294901760
    %v2705 = vsub.f32 %v2703, %v2704
    %v2706 = vand.u32 %v2705, 4294901760
    %2707 = vmatpush.msra.mxu0 %v2706
    %v2708 = vand.u32 %v2258, 4294901760
    %v2709 = vsub.f32 %v2258, %v2708
    %v2710 = vand.u32 %v2709, 4294901760
    %v2711 = vsub.f32 %v2709, %v2710
    %v2712 = vand.u32 %v2711, 4294901760
    %2713 = vmatpush.msra.mxu0 %v2712
    %v2714 = vand.u32 %v2257, 4294901760
    %v2715 = vsub.f32 %v2257, %v2714
    %v2716 = vand.u32 %v2715, 4294901760
    %v2717 = vsub.f32 %v2715, %v2716
    %v2718 = vand.u32 %v2717, 4294901760
    %2719 = vmatpush.msra.mxu0 %v2718
    %v2720 = vand.u32 %v2256, 4294901760
    %v2721 = vsub.f32 %v2256, %v2720
    %v2722 = vand.u32 %v2721, 4294901760
    %v2723 = vsub.f32 %v2721, %v2722
    %v2724 = vand.u32 %v2723, 4294901760
    %2725 = vmatpush.msra.mxu0 %v2724
    %v2726 = vand.u32 %v2255, 4294901760
    %v2727 = vsub.f32 %v2255, %v2726
    %v2728 = vand.u32 %v2727, 4294901760
    %v2729 = vsub.f32 %v2727, %v2728
    %v2730 = vand.u32 %v2729, 4294901760
    %2731 = vmatpush.msra.mxu0 %v2730
    %v2732 = vand.u32 %v2254, 4294901760
    %v2733 = vsub.f32 %v2254, %v2732
    %v2734 = vand.u32 %v2733, 4294901760
    %v2735 = vsub.f32 %v2733, %v2734
    %v2736 = vand.u32 %v2735, 4294901760
    %2737 = vmatpush.msra.mxu0 %v2736
    %v2738 = vand.u32 %v2253, 4294901760
    %v2739 = vsub.f32 %v2253, %v2738
    %v2740 = vand.u32 %v2739, 4294901760
    %v2741 = vsub.f32 %v2739, %v2740
    %v2742 = vand.u32 %v2741, 4294901760
    %2743 = vmatpush.msra.mxu0 %v2742
    %v2744 = vand.u32 %v2252, 4294901760
    %v2745 = vsub.f32 %v2252, %v2744
    %v2746 = vand.u32 %v2745, 4294901760
    %v2747 = vsub.f32 %v2745, %v2746
    %v2748 = vand.u32 %v2747, 4294901760
    %2749 = vmatpush.msra.mxu0 %v2748
    %v2750 = vand.u32 %v2251, 4294901760
    %v2751 = vsub.f32 %v2251, %v2750
    %v2752 = vand.u32 %v2751, 4294901760
    %v2753 = vsub.f32 %v2751, %v2752
    %v2754 = vand.u32 %v2753, 4294901760
    %2755 = vmatpush.msra.mxu0 %v2754
    %v2756 = vand.u32 %v2250, 4294901760
    %v2757 = vsub.f32 %v2250, %v2756
    %v2758 = vand.u32 %v2757, 4294901760
    %v2759 = vsub.f32 %v2757, %v2758
    %v2760 = vand.u32 %v2759, 4294901760
    %2761 = vmatpush.msra.mxu0 %v2760
    %v2762 = vand.u32 %v2249, 4294901760
    %v2763 = vsub.f32 %v2249, %v2762
    %v2764 = vand.u32 %v2763, 4294901760
    %v2765 = vsub.f32 %v2763, %v2764
    %v2766 = vand.u32 %v2765, 4294901760
    %2767 = vmatpush.msra.mxu0 %v2766
    %v2768 = vand.u32 %v2248, 4294901760
    %v2769 = vsub.f32 %v2248, %v2768
    %v2770 = vand.u32 %v2769, 4294901760
    %v2771 = vsub.f32 %v2769, %v2770
    %v2772 = vand.u32 %v2771, 4294901760
    %2773 = vmatpush.msra.mxu0 %v2772
    %v2774 = vand.u32 %v2247, 4294901760
    %v2775 = vsub.f32 %v2247, %v2774
    %v2776 = vand.u32 %v2775, 4294901760
    %v2777 = vsub.f32 %v2775, %v2776
    %v2778 = vand.u32 %v2777, 4294901760
    %2779 = vmatpush.msra.mxu0 %v2778
    %v2780 = vand.u32 %v2195, 4294901760
    %2781 = vmatmul.f32.gmra.mxu0 %v2780
    %v2782 = vpop.f32.mrf.mxu0
    %v2783 = vadd.f32 %v2674, %v2782
    %v2784 = vand.u32 %v2197, 4294901760
    %2785 = vmatmul.f32.gmra.mxu0 %v2784
    %v2786 = vpop.f32.mrf.mxu0
    %v2787 = vadd.f32 %v2682, %v2786
    %2788 = vdwg.mxu0
    %v2789 = vand.u32 %v2262, 4294901760
    %v2790 = vsub.f32 %v2262, %v2789
    %2791 = vmatpush.msra.mxu0 %v2790
    %v2792 = vand.u32 %v2261, 4294901760
    %v2793 = vsub.f32 %v2261, %v2792
    %2794 = vmatpush.msra.mxu0 %v2793
    %v2795 = vand.u32 %v2260, 4294901760
    %v2796 = vsub.f32 %v2260, %v2795
    %2797 = vmatpush.msra.mxu0 %v2796
    %v2798 = vand.u32 %v2259, 4294901760
    %v2799 = vsub.f32 %v2259, %v2798
    %2800 = vmatpush.msra.mxu0 %v2799
    %v2801 = vand.u32 %v2258, 4294901760
    %v2802 = vsub.f32 %v2258, %v2801
    %2803 = vmatpush.msra.mxu0 %v2802
    %v2804 = vand.u32 %v2257, 4294901760
    %v2805 = vsub.f32 %v2257, %v2804
    %2806 = vmatpush.msra.mxu0 %v2805
    %v2807 = vand.u32 %v2256, 4294901760
    %v2808 = vsub.f32 %v2256, %v2807
    %2809 = vmatpush.msra.mxu0 %v2808
    %v2810 = vand.u32 %v2255, 4294901760
    %v2811 = vsub.f32 %v2255, %v2810
    %2812 = vmatpush.msra.mxu0 %v2811
    %v2813 = vand.u32 %v2254, 4294901760
    %v2814 = vsub.f32 %v2254, %v2813
    %2815 = vmatpush.msra.mxu0 %v2814
    %v2816 = vand.u32 %v2253, 4294901760
    %v2817 = vsub.f32 %v2253, %v2816
    %2818 = vmatpush.msra.mxu0 %v2817
    %v2819 = vand.u32 %v2252, 4294901760
    %v2820 = vsub.f32 %v2252, %v2819
    %2821 = vmatpush.msra.mxu0 %v2820
    %v2822 = vand.u32 %v2251, 4294901760
    %v2823 = vsub.f32 %v2251, %v2822
    %2824 = vmatpush.msra.mxu0 %v2823
    %v2825 = vand.u32 %v2250, 4294901760
    %v2826 = vsub.f32 %v2250, %v2825
    %2827 = vmatpush.msra.mxu0 %v2826
    %v2828 = vand.u32 %v2249, 4294901760
    %v2829 = vsub.f32 %v2249, %v2828
    %2830 = vmatpush.msra.mxu0 %v2829
    %v2831 = vand.u32 %v2248, 4294901760
    %v2832 = vsub.f32 %v2248, %v2831
    %2833 = vmatpush.msra.mxu0 %v2832
    %v2834 = vand.u32 %v2247, 4294901760
    %v2835 = vsub.f32 %v2247, %v2834
    %2836 = vmatpush.msra.mxu0 %v2835
    %v2837 = vand.u32 %v2195, 4294901760
    %v2838 = vsub.f32 %v2195, %v2837
    %2839 = vmatmul.f32.gmra.mxu0 %v2838
    %v2840 = vpop.f32.mrf.mxu0
    %v2841 = vadd.f32 %v2783, %v2840
    %v2842 = vand.u32 %v2197, 4294901760
    %v2843 = vsub.f32 %v2197, %v2842
    %2844 = vmatmul.f32.gmra.mxu0 %v2843
    %v2845 = vpop.f32.mrf.mxu0
    %v2846 = vadd.f32 %v2787, %v2845
    %2847 = vdwg.mxu0
    %v2848 = vand.u32 %v2262, 4294901760
    %2849 = vmatpush.msra.mxu0 %v2848
    %v2850 = vand.u32 %v2261, 4294901760
    %2851 = vmatpush.msra.mxu0 %v2850
    %v2852 = vand.u32 %v2260, 4294901760
    %2853 = vmatpush.msra.mxu0 %v2852
    %v2854 = vand.u32 %v2259, 4294901760
    %2855 = vmatpush.msra.mxu0 %v2854
    %v2856 = vand.u32 %v2258, 4294901760
    %2857 = vmatpush.msra.mxu0 %v2856
    %v2858 = vand.u32 %v2257, 4294901760
    %2859 = vmatpush.msra.mxu0 %v2858
    %v2860 = vand.u32 %v2256, 4294901760
    %2861 = vmatpush.msra.mxu0 %v2860
    %v2862 = vand.u32 %v2255, 4294901760
    %2863 = vmatpush.msra.mxu0 %v2862
    %v2864 = vand.u32 %v2254, 4294901760
    %2865 = vmatpush.msra.mxu0 %v2864
    %v2866 = vand.u32 %v2253, 4294901760
    %2867 = vmatpush.msra.mxu0 %v2866
    %v2868 = vand.u32 %v2252, 4294901760
    %2869 = vmatpush.msra.mxu0 %v2868
    %v2870 = vand.u32 %v2251, 4294901760
    %2871 = vmatpush.msra.mxu0 %v2870
    %v2872 = vand.u32 %v2250, 4294901760
    %2873 = vmatpush.msra.mxu0 %v2872
    %v2874 = vand.u32 %v2249, 4294901760
    %2875 = vmatpush.msra.mxu0 %v2874
    %v2876 = vand.u32 %v2248, 4294901760
    %2877 = vmatpush.msra.mxu0 %v2876
    %v2878 = vand.u32 %v2247, 4294901760
    %2879 = vmatpush.msra.mxu0 %v2878
    %v2880 = vand.u32 %v2195, 4294901760
    %v2881 = vsub.f32 %v2195, %v2880
    %v2882 = vand.u32 %v2881, 4294901760
    %2883 = vmatmul.f32.gmra.mxu0 %v2882
    %v2884 = vpop.f32.mrf.mxu0
    %v2885 = vadd.f32 %v2841, %v2884
    %v2886 = vand.u32 %v2197, 4294901760
    %v2887 = vsub.f32 %v2197, %v2886
    %v2888 = vand.u32 %v2887, 4294901760
    %2889 = vmatmul.f32.gmra.mxu0 %v2888
    %v2890 = vpop.f32.mrf.mxu0
    %v2891 = vadd.f32 %v2846, %v2890
    %2892 = vdwg.mxu0
    %v2893 = vand.u32 %v2262, 4294901760
    %v2894 = vsub.f32 %v2262, %v2893
    %v2895 = vand.u32 %v2894, 4294901760
    %2896 = vmatpush.msra.mxu0 %v2895
    %v2897 = vand.u32 %v2261, 4294901760
    %v2898 = vsub.f32 %v2261, %v2897
    %v2899 = vand.u32 %v2898, 4294901760
    %2900 = vmatpush.msra.mxu0 %v2899
    %v2901 = vand.u32 %v2260, 4294901760
    %v2902 = vsub.f32 %v2260, %v2901
    %v2903 = vand.u32 %v2902, 4294901760
    %2904 = vmatpush.msra.mxu0 %v2903
    %v2905 = vand.u32 %v2259, 4294901760
    %v2906 = vsub.f32 %v2259, %v2905
    %v2907 = vand.u32 %v2906, 4294901760
    %2908 = vmatpush.msra.mxu0 %v2907
    %v2909 = vand.u32 %v2258, 4294901760
    %v2910 = vsub.f32 %v2258, %v2909
    %v2911 = vand.u32 %v2910, 4294901760
    %2912 = vmatpush.msra.mxu0 %v2911
    %v2913 = vand.u32 %v2257, 4294901760
    %v2914 = vsub.f32 %v2257, %v2913
    %v2915 = vand.u32 %v2914, 4294901760
    %2916 = vmatpush.msra.mxu0 %v2915
    %v2917 = vand.u32 %v2256, 4294901760
    %v2918 = vsub.f32 %v2256, %v2917
    %v2919 = vand.u32 %v2918, 4294901760
    %2920 = vmatpush.msra.mxu0 %v2919
    %v2921 = vand.u32 %v2255, 4294901760
    %v2922 = vsub.f32 %v2255, %v2921
    %v2923 = vand.u32 %v2922, 4294901760
    %2924 = vmatpush.msra.mxu0 %v2923
    %v2925 = vand.u32 %v2254, 4294901760
    %v2926 = vsub.f32 %v2254, %v2925
    %v2927 = vand.u32 %v2926, 4294901760
    %2928 = vmatpush.msra.mxu0 %v2927
    %v2929 = vand.u32 %v2253, 4294901760
    %v2930 = vsub.f32 %v2253, %v2929
    %v2931 = vand.u32 %v2930, 4294901760
    %2932 = vmatpush.msra.mxu0 %v2931
    %v2933 = vand.u32 %v2252, 4294901760
    %v2934 = vsub.f32 %v2252, %v2933
    %v2935 = vand.u32 %v2934, 4294901760
    %2936 = vmatpush.msra.mxu0 %v2935
    %v2937 = vand.u32 %v2251, 4294901760
    %v2938 = vsub.f32 %v2251, %v2937
    %v2939 = vand.u32 %v2938, 4294901760
    %2940 = vmatpush.msra.mxu0 %v2939
    %v2941 = vand.u32 %v2250, 4294901760
    %v2942 = vsub.f32 %v2250, %v2941
    %v2943 = vand.u32 %v2942, 4294901760
    %2944 = vmatpush.msra.mxu0 %v2943
    %v2945 = vand.u32 %v2249, 4294901760
    %v2946 = vsub.f32 %v2249, %v2945
    %v2947 = vand.u32 %v2946, 4294901760
    %2948 = vmatpush.msra.mxu0 %v2947
    %v2949 = vand.u32 %v2248, 4294901760
    %v2950 = vsub.f32 %v2248, %v2949
    %v2951 = vand.u32 %v2950, 4294901760
    %2952 = vmatpush.msra.mxu0 %v2951
    %v2953 = vand.u32 %v2247, 4294901760
    %v2954 = vsub.f32 %v2247, %v2953
    %v2955 = vand.u32 %v2954, 4294901760
    %2956 = vmatpush.msra.mxu0 %v2955
    %v2957 = vand.u32 %v2195, 4294901760
    %2958 = vmatmul.f32.gmra.mxu0 %v2957
    %v2959 = vpop.f32.mrf.mxu0
    %v2960 = vadd.f32 %v2885, %v2959
    %v2961 = vand.u32 %v2197, 4294901760
    %2962 = vmatmul.f32.gmra.mxu0 %v2961
    %v2963 = vpop.f32.mrf.mxu0
    %v2964 = vadd.f32 %v2891, %v2963
    %2965 = vdwg.mxu0
    %v2966 = vand.u32 %v2262, 4294901760
    %2967 = vmatpush.msra.mxu0 %v2966
    %v2968 = vand.u32 %v2261, 4294901760
    %2969 = vmatpush.msra.mxu0 %v2968
    %v2970 = vand.u32 %v2260, 4294901760
    %2971 = vmatpush.msra.mxu0 %v2970
    %v2972 = vand.u32 %v2259, 4294901760
    %2973 = vmatpush.msra.mxu0 %v2972
    %v2974 = vand.u32 %v2258, 4294901760
    %2975 = vmatpush.msra.mxu0 %v2974
    %v2976 = vand.u32 %v2257, 4294901760
    %2977 = vmatpush.msra.mxu0 %v2976
    %v2978 = vand.u32 %v2256, 4294901760
    %2979 = vmatpush.msra.mxu0 %v2978
    %v2980 = vand.u32 %v2255, 4294901760
    %2981 = vmatpush.msra.mxu0 %v2980
    %v2982 = vand.u32 %v2254, 4294901760
    %2983 = vmatpush.msra.mxu0 %v2982
    %v2984 = vand.u32 %v2253, 4294901760
    %2985 = vmatpush.msra.mxu0 %v2984
    %v2986 = vand.u32 %v2252, 4294901760
    %2987 = vmatpush.msra.mxu0 %v2986
    %v2988 = vand.u32 %v2251, 4294901760
    %2989 = vmatpush.msra.mxu0 %v2988
    %v2990 = vand.u32 %v2250, 4294901760
    %2991 = vmatpush.msra.mxu0 %v2990
    %v2992 = vand.u32 %v2249, 4294901760
    %2993 = vmatpush.msra.mxu0 %v2992
    %v2994 = vand.u32 %v2248, 4294901760
    %2995 = vmatpush.msra.mxu0 %v2994
    %v2996 = vand.u32 %v2247, 4294901760
    %2997 = vmatpush.msra.mxu0 %v2996
    %v2998 = vand.u32 %v2195, 4294901760
    %2999 = vmatmul.f32.gmra.mxu0 %v2998
    %v3000 = vpop.f32.mrf.mxu0
    %v3001 = vadd.f32 %v2960, %v3000
    %v3002 = vand.u32 %v2197, 4294901760
    %3003 = vmatmul.f32.gmra.mxu0 %v3002
    %v3004 = vpop.f32.mrf.mxu0
    %v3005 = vadd.f32 %v2964, %v3004
    %3006 = vdwg.mxu0
    %v3007 = vand.u32 %v2213, 4294901760
    %3008 = vmatpush.msra.mxu0 %v3007
    %v3009 = vand.u32 %v2212, 4294901760
    %3010 = vmatpush.msra.mxu0 %v3009
    %v3011 = vand.u32 %v2211, 4294901760
    %3012 = vmatpush.msra.mxu0 %v3011
    %v3013 = vand.u32 %v2210, 4294901760
    %3014 = vmatpush.msra.mxu0 %v3013
    %v3015 = vand.u32 %v2209, 4294901760
    %3016 = vmatpush.msra.mxu0 %v3015
    %v3017 = vand.u32 %v2208, 4294901760
    %3018 = vmatpush.msra.mxu0 %v3017
    %v3019 = vand.u32 %v2207, 4294901760
    %3020 = vmatpush.msra.mxu0 %v3019
    %v3021 = vand.u32 %v2206, 4294901760
    %3022 = vmatpush.msra.mxu0 %v3021
    %v3023 = vand.u32 %v2205, 4294901760
    %3024 = vmatpush.msra.mxu0 %v3023
    %v3025 = vand.u32 %v2204, 4294901760
    %3026 = vmatpush.msra.mxu0 %v3025
    %v3027 = vand.u32 %v2203, 4294901760
    %3028 = vmatpush.msra.mxu0 %v3027
    %v3029 = vand.u32 %v2202, 4294901760
    %3030 = vmatpush.msra.mxu0 %v3029
    %v3031 = vand.u32 %v2201, 4294901760
    %3032 = vmatpush.msra.mxu0 %v3031
    %v3033 = vand.u32 %v2200, 4294901760
    %3034 = vmatpush.msra.mxu0 %v3033
    %v3035 = vand.u32 %v2199, 4294901760
    %3036 = vmatpush.msra.mxu0 %v3035
    %v3037 = vand.u32 %v2198, 4294901760
    %3038 = vmatpush.msra.mxu0 %v3037
    %v3039 = vand.u32 %v2190, 4294901760
    %v3040 = vsub.f32 %v2190, %v3039
    %v3041 = vand.u32 %v3040, 4294901760
    %v3042 = vsub.f32 %v3040, %v3041
    %v3043 = vand.u32 %v3042, 4294901760
    %3044 = vmatmul.f32.gmra.mxu0 %v3043
    %v3045 = vpop.f32.mrf.mxu0
    %v3046 = vadd.f32 %v3001, %v3045
    %v3047 = vand.u32 %v2192, 4294901760
    %v3048 = vsub.f32 %v2192, %v3047
    %v3049 = vand.u32 %v3048, 4294901760
    %v3050 = vsub.f32 %v3048, %v3049
    %v3051 = vand.u32 %v3050, 4294901760
    %3052 = vmatmul.f32.gmra.mxu0 %v3051
    %v3053 = vpop.f32.mrf.mxu0
    %v3054 = vadd.f32 %v3005, %v3053
    %3055 = vdwg.mxu0
    %v3056 = vand.u32 %v2213, 4294901760
    %v3057 = vsub.f32 %v2213, %v3056
    %v3058 = vand.u32 %v3057, 4294901760
    %v3059 = vsub.f32 %v3057, %v3058
    %v3060 = vand.u32 %v3059, 4294901760
    %3061 = vmatpush.msra.mxu0 %v3060
    %v3062 = vand.u32 %v2212, 4294901760
    %v3063 = vsub.f32 %v2212, %v3062
    %v3064 = vand.u32 %v3063, 4294901760
    %v3065 = vsub.f32 %v3063, %v3064
    %v3066 = vand.u32 %v3065, 4294901760
    %3067 = vmatpush.msra.mxu0 %v3066
    %v3068 = vand.u32 %v2211, 4294901760
    %v3069 = vsub.f32 %v2211, %v3068
    %v3070 = vand.u32 %v3069, 4294901760
    %v3071 = vsub.f32 %v3069, %v3070
    %v3072 = vand.u32 %v3071, 4294901760
    %3073 = vmatpush.msra.mxu0 %v3072
    %v3074 = vand.u32 %v2210, 4294901760
    %v3075 = vsub.f32 %v2210, %v3074
    %v3076 = vand.u32 %v3075, 4294901760
    %v3077 = vsub.f32 %v3075, %v3076
    %v3078 = vand.u32 %v3077, 4294901760
    %3079 = vmatpush.msra.mxu0 %v3078
    %v3080 = vand.u32 %v2209, 4294901760
    %v3081 = vsub.f32 %v2209, %v3080
    %v3082 = vand.u32 %v3081, 4294901760
    %v3083 = vsub.f32 %v3081, %v3082
    %v3084 = vand.u32 %v3083, 4294901760
    %3085 = vmatpush.msra.mxu0 %v3084
    %v3086 = vand.u32 %v2208, 4294901760
    %v3087 = vsub.f32 %v2208, %v3086
    %v3088 = vand.u32 %v3087, 4294901760
    %v3089 = vsub.f32 %v3087, %v3088
    %v3090 = vand.u32 %v3089, 4294901760
    %3091 = vmatpush.msra.mxu0 %v3090
    %v3092 = vand.u32 %v2207, 4294901760
    %v3093 = vsub.f32 %v2207, %v3092
    %v3094 = vand.u32 %v3093, 4294901760
    %v3095 = vsub.f32 %v3093, %v3094
    %v3096 = vand.u32 %v3095, 4294901760
    %3097 = vmatpush.msra.mxu0 %v3096
    %v3098 = vand.u32 %v2206, 4294901760
    %v3099 = vsub.f32 %v2206, %v3098
    %v3100 = vand.u32 %v3099, 4294901760
    %v3101 = vsub.f32 %v3099, %v3100
    %v3102 = vand.u32 %v3101, 4294901760
    %3103 = vmatpush.msra.mxu0 %v3102
    %v3104 = vand.u32 %v2205, 4294901760
    %v3105 = vsub.f32 %v2205, %v3104
    %v3106 = vand.u32 %v3105, 4294901760
    %v3107 = vsub.f32 %v3105, %v3106
    %v3108 = vand.u32 %v3107, 4294901760
    %3109 = vmatpush.msra.mxu0 %v3108
    %v3110 = vand.u32 %v2204, 4294901760
    %v3111 = vsub.f32 %v2204, %v3110
    %v3112 = vand.u32 %v3111, 4294901760
    %v3113 = vsub.f32 %v3111, %v3112
    %v3114 = vand.u32 %v3113, 4294901760
    %3115 = vmatpush.msra.mxu0 %v3114
    %v3116 = vand.u32 %v2203, 4294901760
    %v3117 = vsub.f32 %v2203, %v3116
    %v3118 = vand.u32 %v3117, 4294901760
    %v3119 = vsub.f32 %v3117, %v3118
    %v3120 = vand.u32 %v3119, 4294901760
    %3121 = vmatpush.msra.mxu0 %v3120
    %v3122 = vand.u32 %v2202, 4294901760
    %v3123 = vsub.f32 %v2202, %v3122
    %v3124 = vand.u32 %v3123, 4294901760
    %v3125 = vsub.f32 %v3123, %v3124
    %v3126 = vand.u32 %v3125, 4294901760
    %3127 = vmatpush.msra.mxu0 %v3126
    %v3128 = vand.u32 %v2201, 4294901760
    %v3129 = vsub.f32 %v2201, %v3128
    %v3130 = vand.u32 %v3129, 4294901760
    %v3131 = vsub.f32 %v3129, %v3130
    %v3132 = vand.u32 %v3131, 4294901760
    %3133 = vmatpush.msra.mxu0 %v3132
    %v3134 = vand.u32 %v2200, 4294901760
    %v3135 = vsub.f32 %v2200, %v3134
    %v3136 = vand.u32 %v3135, 4294901760
    %v3137 = vsub.f32 %v3135, %v3136
    %v3138 = vand.u32 %v3137, 4294901760
    %3139 = vmatpush.msra.mxu0 %v3138
    %v3140 = vand.u32 %v2199, 4294901760
    %v3141 = vsub.f32 %v2199, %v3140
    %v3142 = vand.u32 %v3141, 4294901760
    %v3143 = vsub.f32 %v3141, %v3142
    %v3144 = vand.u32 %v3143, 4294901760
    %3145 = vmatpush.msra.mxu0 %v3144
    %v3146 = vand.u32 %v2198, 4294901760
    %v3147 = vsub.f32 %v2198, %v3146
    %v3148 = vand.u32 %v3147, 4294901760
    %v3149 = vsub.f32 %v3147, %v3148
    %v3150 = vand.u32 %v3149, 4294901760
    %3151 = vmatpush.msra.mxu0 %v3150
    %v3152 = vand.u32 %v2190, 4294901760
    %3153 = vmatmul.f32.gmra.mxu0 %v3152
    %v3154 = vpop.f32.mrf.mxu0
    %v3155 = vadd.f32 %v3046, %v3154
    %v3156 = vand.u32 %v2192, 4294901760
    %3157 = vmatmul.f32.gmra.mxu0 %v3156
    %v3158 = vpop.f32.mrf.mxu0
    %v3159 = vadd.f32 %v3054, %v3158
    %3160 = vdwg.mxu0
    %v3161 = vand.u32 %v2213, 4294901760
    %v3162 = vsub.f32 %v2213, %v3161
    %3163 = vmatpush.msra.mxu0 %v3162
    %v3164 = vand.u32 %v2212, 4294901760
    %v3165 = vsub.f32 %v2212, %v3164
    %3166 = vmatpush.msra.mxu0 %v3165
    %v3167 = vand.u32 %v2211, 4294901760
    %v3168 = vsub.f32 %v2211, %v3167
    %3169 = vmatpush.msra.mxu0 %v3168
    %v3170 = vand.u32 %v2210, 4294901760
    %v3171 = vsub.f32 %v2210, %v3170
    %3172 = vmatpush.msra.mxu0 %v3171
    %v3173 = vand.u32 %v2209, 4294901760
    %v3174 = vsub.f32 %v2209, %v3173
    %3175 = vmatpush.msra.mxu0 %v3174
    %v3176 = vand.u32 %v2208, 4294901760
    %v3177 = vsub.f32 %v2208, %v3176
    %3178 = vmatpush.msra.mxu0 %v3177
    %v3179 = vand.u32 %v2207, 4294901760
    %v3180 = vsub.f32 %v2207, %v3179
    %3181 = vmatpush.msra.mxu0 %v3180
    %v3182 = vand.u32 %v2206, 4294901760
    %v3183 = vsub.f32 %v2206, %v3182
    %3184 = vmatpush.msra.mxu0 %v3183
    %v3185 = vand.u32 %v2205, 4294901760
    %v3186 = vsub.f32 %v2205, %v3185
    %3187 = vmatpush.msra.mxu0 %v3186
    %v3188 = vand.u32 %v2204, 4294901760
    %v3189 = vsub.f32 %v2204, %v3188
    %3190 = vmatpush.msra.mxu0 %v3189
    %v3191 = vand.u32 %v2203, 4294901760
    %v3192 = vsub.f32 %v2203, %v3191
    %3193 = vmatpush.msra.mxu0 %v3192
    %v3194 = vand.u32 %v2202, 4294901760
    %v3195 = vsub.f32 %v2202, %v3194
    %3196 = vmatpush.msra.mxu0 %v3195
    %v3197 = vand.u32 %v2201, 4294901760
    %v3198 = vsub.f32 %v2201, %v3197
    %3199 = vmatpush.msra.mxu0 %v3198
    %v3200 = vand.u32 %v2200, 4294901760
    %v3201 = vsub.f32 %v2200, %v3200
    %3202 = vmatpush.msra.mxu0 %v3201
    %v3203 = vand.u32 %v2199, 4294901760
    %v3204 = vsub.f32 %v2199, %v3203
    %3205 = vmatpush.msra.mxu0 %v3204
    %v3206 = vand.u32 %v2198, 4294901760
    %v3207 = vsub.f32 %v2198, %v3206
    %3208 = vmatpush.msra.mxu0 %v3207
    %v3209 = vand.u32 %v2190, 4294901760
    %v3210 = vsub.f32 %v2190, %v3209
    %3211 = vmatmul.f32.gmra.mxu0 %v3210
    %v3212 = vpop.f32.mrf.mxu0
    %v3213 = vadd.f32 %v3155, %v3212
    %v3214 = vand.u32 %v2192, 4294901760
    %v3215 = vsub.f32 %v2192, %v3214
    %3216 = vmatmul.f32.gmra.mxu0 %v3215
    %v3217 = vpop.f32.mrf.mxu0
    %v3218 = vadd.f32 %v3159, %v3217
    %3219 = vdwg.mxu0
    %v3220 = vand.u32 %v2213, 4294901760
    %3221 = vmatpush.msra.mxu0 %v3220
    %v3222 = vand.u32 %v2212, 4294901760
    %3223 = vmatpush.msra.mxu0 %v3222
    %v3224 = vand.u32 %v2211, 4294901760
    %3225 = vmatpush.msra.mxu0 %v3224
    %v3226 = vand.u32 %v2210, 4294901760
    %3227 = vmatpush.msra.mxu0 %v3226
    %v3228 = vand.u32 %v2209, 4294901760
    %3229 = vmatpush.msra.mxu0 %v3228
    %v3230 = vand.u32 %v2208, 4294901760
    %3231 = vmatpush.msra.mxu0 %v3230
    %v3232 = vand.u32 %v2207, 4294901760
    %3233 = vmatpush.msra.mxu0 %v3232
    %v3234 = vand.u32 %v2206, 4294901760
    %3235 = vmatpush.msra.mxu0 %v3234
    %v3236 = vand.u32 %v2205, 4294901760
    %3237 = vmatpush.msra.mxu0 %v3236
    %v3238 = vand.u32 %v2204, 4294901760
    %3239 = vmatpush.msra.mxu0 %v3238
    %v3240 = vand.u32 %v2203, 4294901760
    %3241 = vmatpush.msra.mxu0 %v3240
    %v3242 = vand.u32 %v2202, 4294901760
    %3243 = vmatpush.msra.mxu0 %v3242
    %v3244 = vand.u32 %v2201, 4294901760
    %3245 = vmatpush.msra.mxu0 %v3244
    %v3246 = vand.u32 %v2200, 4294901760
    %3247 = vmatpush.msra.mxu0 %v3246
    %v3248 = vand.u32 %v2199, 4294901760
    %3249 = vmatpush.msra.mxu0 %v3248
    %v3250 = vand.u32 %v2198, 4294901760
    %3251 = vmatpush.msra.mxu0 %v3250
    %v3252 = vand.u32 %v2190, 4294901760
    %v3253 = vsub.f32 %v2190, %v3252
    %v3254 = vand.u32 %v3253, 4294901760
    %3255 = vmatmul.f32.gmra.mxu0 %v3254
    %v3256 = vpop.f32.mrf.mxu0
    %v3257 = vadd.f32 %v3213, %v3256
    %v3258 = vand.u32 %v2192, 4294901760
    %v3259 = vsub.f32 %v2192, %v3258
    %v3260 = vand.u32 %v3259, 4294901760
    %3261 = vmatmul.f32.gmra.mxu0 %v3260
    %v3262 = vpop.f32.mrf.mxu0
    %v3263 = vadd.f32 %v3218, %v3262
    %3264 = vdwg.mxu0
    %v3265 = vand.u32 %v2213, 4294901760
    %v3266 = vsub.f32 %v2213, %v3265
    %v3267 = vand.u32 %v3266, 4294901760
    %3268 = vmatpush.msra.mxu0 %v3267
    %v3269 = vand.u32 %v2212, 4294901760
    %v3270 = vsub.f32 %v2212, %v3269
    %v3271 = vand.u32 %v3270, 4294901760
    %3272 = vmatpush.msra.mxu0 %v3271
    %v3273 = vand.u32 %v2211, 4294901760
    %v3274 = vsub.f32 %v2211, %v3273
    %v3275 = vand.u32 %v3274, 4294901760
    %3276 = vmatpush.msra.mxu0 %v3275
    %v3277 = vand.u32 %v2210, 4294901760
    %v3278 = vsub.f32 %v2210, %v3277
    %v3279 = vand.u32 %v3278, 4294901760
    %3280 = vmatpush.msra.mxu0 %v3279
    %v3281 = vand.u32 %v2209, 4294901760
    %v3282 = vsub.f32 %v2209, %v3281
    %v3283 = vand.u32 %v3282, 4294901760
    %3284 = vmatpush.msra.mxu0 %v3283
    %v3285 = vand.u32 %v2208, 4294901760
    %v3286 = vsub.f32 %v2208, %v3285
    %v3287 = vand.u32 %v3286, 4294901760
    %3288 = vmatpush.msra.mxu0 %v3287
    %v3289 = vand.u32 %v2207, 4294901760
    %v3290 = vsub.f32 %v2207, %v3289
    %v3291 = vand.u32 %v3290, 4294901760
    %3292 = vmatpush.msra.mxu0 %v3291
    %v3293 = vand.u32 %v2206, 4294901760
    %v3294 = vsub.f32 %v2206, %v3293
    %v3295 = vand.u32 %v3294, 4294901760
    %3296 = vmatpush.msra.mxu0 %v3295
    %v3297 = vand.u32 %v2205, 4294901760
    %v3298 = vsub.f32 %v2205, %v3297
    %v3299 = vand.u32 %v3298, 4294901760
    %3300 = vmatpush.msra.mxu0 %v3299
    %v3301 = vand.u32 %v2204, 4294901760
    %v3302 = vsub.f32 %v2204, %v3301
    %v3303 = vand.u32 %v3302, 4294901760
    %3304 = vmatpush.msra.mxu0 %v3303
    %v3305 = vand.u32 %v2203, 4294901760
    %v3306 = vsub.f32 %v2203, %v3305
    %v3307 = vand.u32 %v3306, 4294901760
    %3308 = vmatpush.msra.mxu0 %v3307
    %v3309 = vand.u32 %v2202, 4294901760
    %v3310 = vsub.f32 %v2202, %v3309
    %v3311 = vand.u32 %v3310, 4294901760
    %3312 = vmatpush.msra.mxu0 %v3311
    %v3313 = vand.u32 %v2201, 4294901760
    %v3314 = vsub.f32 %v2201, %v3313
    %v3315 = vand.u32 %v3314, 4294901760
    %3316 = vmatpush.msra.mxu0 %v3315
    %v3317 = vand.u32 %v2200, 4294901760
    %v3318 = vsub.f32 %v2200, %v3317
    %v3319 = vand.u32 %v3318, 4294901760
    %3320 = vmatpush.msra.mxu0 %v3319
    %v3321 = vand.u32 %v2199, 4294901760
    %v3322 = vsub.f32 %v2199, %v3321
    %v3323 = vand.u32 %v3322, 4294901760
    %3324 = vmatpush.msra.mxu0 %v3323
    %v3325 = vand.u32 %v2198, 4294901760
    %v3326 = vsub.f32 %v2198, %v3325
    %v3327 = vand.u32 %v3326, 4294901760
    %3328 = vmatpush.msra.mxu0 %v3327
    %v3329 = vand.u32 %v2190, 4294901760
    %3330 = vmatmul.f32.gmra.mxu0 %v3329
    %v3331 = vpop.f32.mrf.mxu0
    %v3332 = vadd.f32 %v3257, %v3331
    %v3333 = vand.u32 %v2192, 4294901760
    %3334 = vmatmul.f32.gmra.mxu0 %v3333
    %v3335 = vpop.f32.mrf.mxu0
    %v3336 = vadd.f32 %v3263, %v3335
    %3337 = vdwg.mxu0
    %v3338 = vand.u32 %v2213, 4294901760
    %3339 = vmatpush.msra.mxu0 %v3338
    %v3340 = vand.u32 %v2212, 4294901760
    %3341 = vmatpush.msra.mxu0 %v3340
    %v3342 = vand.u32 %v2211, 4294901760
    %3343 = vmatpush.msra.mxu0 %v3342
    %v3344 = vand.u32 %v2210, 4294901760
    %3345 = vmatpush.msra.mxu0 %v3344
    %v3346 = vand.u32 %v2209, 4294901760
    %3347 = vmatpush.msra.mxu0 %v3346
    %v3348 = vand.u32 %v2208, 4294901760
    %3349 = vmatpush.msra.mxu0 %v3348
    %v3350 = vand.u32 %v2207, 4294901760
    %3351 = vmatpush.msra.mxu0 %v3350
    %v3352 = vand.u32 %v2206, 4294901760
    %3353 = vmatpush.msra.mxu0 %v3352
    %v3354 = vand.u32 %v2205, 4294901760
    %3355 = vmatpush.msra.mxu0 %v3354
    %v3356 = vand.u32 %v2204, 4294901760
    %3357 = vmatpush.msra.mxu0 %v3356
    %v3358 = vand.u32 %v2203, 4294901760
    %3359 = vmatpush.msra.mxu0 %v3358
    %v3360 = vand.u32 %v2202, 4294901760
    %3361 = vmatpush.msra.mxu0 %v3360
    %v3362 = vand.u32 %v2201, 4294901760
    %3363 = vmatpush.msra.mxu0 %v3362
    %v3364 = vand.u32 %v2200, 4294901760
    %3365 = vmatpush.msra.mxu0 %v3364
    %v3366 = vand.u32 %v2199, 4294901760
    %3367 = vmatpush.msra.mxu0 %v3366
    %v3368 = vand.u32 %v2198, 4294901760
    %3369 = vmatpush.msra.mxu0 %v3368
    %v3370 = vand.u32 %v2190, 4294901760
    %3371 = vmatmul.f32.gmra.mxu0 %v3370
    %v3372 = vpop.f32.mrf.mxu0
    %v3373 = vadd.f32 %v3332, %v3372
    %v3374 = vand.u32 %v2192, 4294901760
    %3375 = vmatmul.f32.gmra.mxu0 %v3374
    %v3376 = vpop.f32.mrf.mxu0
    %v3377 = vadd.f32 %v3336, %v3376
    %3378 = vdwg.mxu0
    %v3379 = vand.u32 %v2229, 4294901760
    %3380 = vmatpush.msra.mxu0 %v3379
    %v3381 = vand.u32 %v2228, 4294901760
    %3382 = vmatpush.msra.mxu0 %v3381
    %v3383 = vand.u32 %v2227, 4294901760
    %3384 = vmatpush.msra.mxu0 %v3383
    %v3385 = vand.u32 %v2226, 4294901760
    %3386 = vmatpush.msra.mxu0 %v3385
    %v3387 = vand.u32 %v2225, 4294901760
    %3388 = vmatpush.msra.mxu0 %v3387
    %v3389 = vand.u32 %v2224, 4294901760
    %3390 = vmatpush.msra.mxu0 %v3389
    %v3391 = vand.u32 %v2223, 4294901760
    %3392 = vmatpush.msra.mxu0 %v3391
    %v3393 = vand.u32 %v2222, 4294901760
    %3394 = vmatpush.msra.mxu0 %v3393
    %v3395 = vand.u32 %v2221, 4294901760
    %3396 = vmatpush.msra.mxu0 %v3395
    %v3397 = vand.u32 %v2220, 4294901760
    %3398 = vmatpush.msra.mxu0 %v3397
    %v3399 = vand.u32 %v2219, 4294901760
    %3400 = vmatpush.msra.mxu0 %v3399
    %v3401 = vand.u32 %v2218, 4294901760
    %3402 = vmatpush.msra.mxu0 %v3401
    %v3403 = vand.u32 %v2217, 4294901760
    %3404 = vmatpush.msra.mxu0 %v3403
    %v3405 = vand.u32 %v2216, 4294901760
    %3406 = vmatpush.msra.mxu0 %v3405
    %v3407 = vand.u32 %v2215, 4294901760
    %3408 = vmatpush.msra.mxu0 %v3407
    %v3409 = vand.u32 %v2214, 4294901760
    %3410 = vmatpush.msra.mxu0 %v3409
    %v3411 = vand.u32 %v2191, 4294901760
    %v3412 = vsub.f32 %v2191, %v3411
    %v3413 = vand.u32 %v3412, 4294901760
    %v3414 = vsub.f32 %v3412, %v3413
    %v3415 = vand.u32 %v3414, 4294901760
    %3416 = vmatmul.f32.gmra.mxu0 %v3415
    %v3417 = vpop.f32.mrf.mxu0
    %v3418 = vadd.f32 %v3373, %v3417
    %v3419 = vand.u32 %v2193, 4294901760
    %v3420 = vsub.f32 %v2193, %v3419
    %v3421 = vand.u32 %v3420, 4294901760
    %v3422 = vsub.f32 %v3420, %v3421
    %v3423 = vand.u32 %v3422, 4294901760
    %3424 = vmatmul.f32.gmra.mxu0 %v3423
    %v3425 = vpop.f32.mrf.mxu0
    %v3426 = vadd.f32 %v3377, %v3425
    %3427 = vdwg.mxu0
    %v3428 = vand.u32 %v2229, 4294901760
    %v3429 = vsub.f32 %v2229, %v3428
    %v3430 = vand.u32 %v3429, 4294901760
    %v3431 = vsub.f32 %v3429, %v3430
    %v3432 = vand.u32 %v3431, 4294901760
    %3433 = vmatpush.msra.mxu0 %v3432
    %v3434 = vand.u32 %v2228, 4294901760
    %v3435 = vsub.f32 %v2228, %v3434
    %v3436 = vand.u32 %v3435, 4294901760
    %v3437 = vsub.f32 %v3435, %v3436
    %v3438 = vand.u32 %v3437, 4294901760
    %3439 = vmatpush.msra.mxu0 %v3438
    %v3440 = vand.u32 %v2227, 4294901760
    %v3441 = vsub.f32 %v2227, %v3440
    %v3442 = vand.u32 %v3441, 4294901760
    %v3443 = vsub.f32 %v3441, %v3442
    %v3444 = vand.u32 %v3443, 4294901760
    %3445 = vmatpush.msra.mxu0 %v3444
    %v3446 = vand.u32 %v2226, 4294901760
    %v3447 = vsub.f32 %v2226, %v3446
    %v3448 = vand.u32 %v3447, 4294901760
    %v3449 = vsub.f32 %v3447, %v3448
    %v3450 = vand.u32 %v3449, 4294901760
    %3451 = vmatpush.msra.mxu0 %v3450
    %v3452 = vand.u32 %v2225, 4294901760
    %v3453 = vsub.f32 %v2225, %v3452
    %v3454 = vand.u32 %v3453, 4294901760
    %v3455 = vsub.f32 %v3453, %v3454
    %v3456 = vand.u32 %v3455, 4294901760
    %3457 = vmatpush.msra.mxu0 %v3456
    %v3458 = vand.u32 %v2224, 4294901760
    %v3459 = vsub.f32 %v2224, %v3458
    %v3460 = vand.u32 %v3459, 4294901760
    %v3461 = vsub.f32 %v3459, %v3460
    %v3462 = vand.u32 %v3461, 4294901760
    %3463 = vmatpush.msra.mxu0 %v3462
    %v3464 = vand.u32 %v2223, 4294901760
    %v3465 = vsub.f32 %v2223, %v3464
    %v3466 = vand.u32 %v3465, 4294901760
    %v3467 = vsub.f32 %v3465, %v3466
    %v3468 = vand.u32 %v3467, 4294901760
    %3469 = vmatpush.msra.mxu0 %v3468
    %v3470 = vand.u32 %v2222, 4294901760
    %v3471 = vsub.f32 %v2222, %v3470
    %v3472 = vand.u32 %v3471, 4294901760
    %v3473 = vsub.f32 %v3471, %v3472
    %v3474 = vand.u32 %v3473, 4294901760
    %3475 = vmatpush.msra.mxu0 %v3474
    %v3476 = vand.u32 %v2221, 4294901760
    %v3477 = vsub.f32 %v2221, %v3476
    %v3478 = vand.u32 %v3477, 4294901760
    %v3479 = vsub.f32 %v3477, %v3478
    %v3480 = vand.u32 %v3479, 4294901760
    %3481 = vmatpush.msra.mxu0 %v3480
    %v3482 = vand.u32 %v2220, 4294901760
    %v3483 = vsub.f32 %v2220, %v3482
    %v3484 = vand.u32 %v3483, 4294901760
    %v3485 = vsub.f32 %v3483, %v3484
    %v3486 = vand.u32 %v3485, 4294901760
    %3487 = vmatpush.msra.mxu0 %v3486
    %v3488 = vand.u32 %v2219, 4294901760
    %v3489 = vsub.f32 %v2219, %v3488
    %v3490 = vand.u32 %v3489, 4294901760
    %v3491 = vsub.f32 %v3489, %v3490
    %v3492 = vand.u32 %v3491, 4294901760
    %3493 = vmatpush.msra.mxu0 %v3492
    %v3494 = vand.u32 %v2218, 4294901760
    %v3495 = vsub.f32 %v2218, %v3494
    %v3496 = vand.u32 %v3495, 4294901760
    %v3497 = vsub.f32 %v3495, %v3496
    %v3498 = vand.u32 %v3497, 4294901760
    %3499 = vmatpush.msra.mxu0 %v3498
    %v3500 = vand.u32 %v2217, 4294901760
    %v3501 = vsub.f32 %v2217, %v3500
    %v3502 = vand.u32 %v3501, 4294901760
    %v3503 = vsub.f32 %v3501, %v3502
    %v3504 = vand.u32 %v3503, 4294901760
    %3505 = vmatpush.msra.mxu0 %v3504
    %v3506 = vand.u32 %v2216, 4294901760
    %v3507 = vsub.f32 %v2216, %v3506
    %v3508 = vand.u32 %v3507, 4294901760
    %v3509 = vsub.f32 %v3507, %v3508
    %v3510 = vand.u32 %v3509, 4294901760
    %3511 = vmatpush.msra.mxu0 %v3510
    %v3512 = vand.u32 %v2215, 4294901760
    %v3513 = vsub.f32 %v2215, %v3512
    %v3514 = vand.u32 %v3513, 4294901760
    %v3515 = vsub.f32 %v3513, %v3514
    %v3516 = vand.u32 %v3515, 4294901760
    %3517 = vmatpush.msra.mxu0 %v3516
    %v3518 = vand.u32 %v2214, 4294901760
    %v3519 = vsub.f32 %v2214, %v3518
    %v3520 = vand.u32 %v3519, 4294901760
    %v3521 = vsub.f32 %v3519, %v3520
    %v3522 = vand.u32 %v3521, 4294901760
    %3523 = vmatpush.msra.mxu0 %v3522
    %v3524 = vand.u32 %v2191, 4294901760
    %3525 = vmatmul.f32.gmra.mxu0 %v3524
    %v3526 = vpop.f32.mrf.mxu0
    %v3527 = vadd.f32 %v3418, %v3526
    %v3528 = vand.u32 %v2193, 4294901760
    %3529 = vmatmul.f32.gmra.mxu0 %v3528
    %v3530 = vpop.f32.mrf.mxu0
    %v3531 = vadd.f32 %v3426, %v3530
    %3532 = vdwg.mxu0
    %v3533 = vand.u32 %v2229, 4294901760
    %v3534 = vsub.f32 %v2229, %v3533
    %3535 = vmatpush.msra.mxu0 %v3534
    %v3536 = vand.u32 %v2228, 4294901760
    %v3537 = vsub.f32 %v2228, %v3536
    %3538 = vmatpush.msra.mxu0 %v3537
    %v3539 = vand.u32 %v2227, 4294901760
    %v3540 = vsub.f32 %v2227, %v3539
    %3541 = vmatpush.msra.mxu0 %v3540
    %v3542 = vand.u32 %v2226, 4294901760
    %v3543 = vsub.f32 %v2226, %v3542
    %3544 = vmatpush.msra.mxu0 %v3543
    %v3545 = vand.u32 %v2225, 4294901760
    %v3546 = vsub.f32 %v2225, %v3545
    %3547 = vmatpush.msra.mxu0 %v3546
    %v3548 = vand.u32 %v2224, 4294901760
    %v3549 = vsub.f32 %v2224, %v3548
    %3550 = vmatpush.msra.mxu0 %v3549
    %v3551 = vand.u32 %v2223, 4294901760
    %v3552 = vsub.f32 %v2223, %v3551
    %3553 = vmatpush.msra.mxu0 %v3552
    %v3554 = vand.u32 %v2222, 4294901760
    %v3555 = vsub.f32 %v2222, %v3554
    %3556 = vmatpush.msra.mxu0 %v3555
    %v3557 = vand.u32 %v2221, 4294901760
    %v3558 = vsub.f32 %v2221, %v3557
    %3559 = vmatpush.msra.mxu0 %v3558
    %v3560 = vand.u32 %v2220, 4294901760
    %v3561 = vsub.f32 %v2220, %v3560
    %3562 = vmatpush.msra.mxu0 %v3561
    %v3563 = vand.u32 %v2219, 4294901760
    %v3564 = vsub.f32 %v2219, %v3563
    %3565 = vmatpush.msra.mxu0 %v3564
    %v3566 = vand.u32 %v2218, 4294901760
    %v3567 = vsub.f32 %v2218, %v3566
    %3568 = vmatpush.msra.mxu0 %v3567
    %v3569 = vand.u32 %v2217, 4294901760
    %v3570 = vsub.f32 %v2217, %v3569
    %3571 = vmatpush.msra.mxu0 %v3570
    %v3572 = vand.u32 %v2216, 4294901760
    %v3573 = vsub.f32 %v2216, %v3572
    %3574 = vmatpush.msra.mxu0 %v3573
    %v3575 = vand.u32 %v2215, 4294901760
    %v3576 = vsub.f32 %v2215, %v3575
    %3577 = vmatpush.msra.mxu0 %v3576
    %v3578 = vand.u32 %v2214, 4294901760
    %v3579 = vsub.f32 %v2214, %v3578
    %3580 = vmatpush.msra.mxu0 %v3579
    %v3581 = vand.u32 %v2191, 4294901760
    %v3582 = vsub.f32 %v2191, %v3581
    %3583 = vmatmul.f32.gmra.mxu0 %v3582
    %v3584 = vpop.f32.mrf.mxu0
    %v3585 = vadd.f32 %v3527, %v3584
    %v3586 = vand.u32 %v2193, 4294901760
    %v3587 = vsub.f32 %v2193, %v3586
    %3588 = vmatmul.f32.gmra.mxu0 %v3587
    %v3589 = vpop.f32.mrf.mxu0
    %v3590 = vadd.f32 %v3531, %v3589
    %3591 = vdwg.mxu0
    %v3592 = vand.u32 %v2229, 4294901760
    %3593 = vmatpush.msra.mxu0 %v3592
    %v3594 = vand.u32 %v2228, 4294901760
    %3595 = vmatpush.msra.mxu0 %v3594
    %v3596 = vand.u32 %v2227, 4294901760
    %3597 = vmatpush.msra.mxu0 %v3596
    %v3598 = vand.u32 %v2226, 4294901760
    %3599 = vmatpush.msra.mxu0 %v3598
    %v3600 = vand.u32 %v2225, 4294901760
    %3601 = vmatpush.msra.mxu0 %v3600
    %v3602 = vand.u32 %v2224, 4294901760
    %3603 = vmatpush.msra.mxu0 %v3602
    %v3604 = vand.u32 %v2223, 4294901760
    %3605 = vmatpush.msra.mxu0 %v3604
    %v3606 = vand.u32 %v2222, 4294901760
    %3607 = vmatpush.msra.mxu0 %v3606
    %v3608 = vand.u32 %v2221, 4294901760
    %3609 = vmatpush.msra.mxu0 %v3608
    %v3610 = vand.u32 %v2220, 4294901760
    %3611 = vmatpush.msra.mxu0 %v3610
    %v3612 = vand.u32 %v2219, 4294901760
    %3613 = vmatpush.msra.mxu0 %v3612
    %v3614 = vand.u32 %v2218, 4294901760
    %3615 = vmatpush.msra.mxu0 %v3614
    %v3616 = vand.u32 %v2217, 4294901760
    %3617 = vmatpush.msra.mxu0 %v3616
    %v3618 = vand.u32 %v2216, 4294901760
    %3619 = vmatpush.msra.mxu0 %v3618
    %v3620 = vand.u32 %v2215, 4294901760
    %3621 = vmatpush.msra.mxu0 %v3620
    %v3622 = vand.u32 %v2214, 4294901760
    %3623 = vmatpush.msra.mxu0 %v3622
    %v3624 = vand.u32 %v2191, 4294901760
    %v3625 = vsub.f32 %v2191, %v3624
    %v3626 = vand.u32 %v3625, 4294901760
    %3627 = vmatmul.f32.gmra.mxu0 %v3626
    %v3628 = vpop.f32.mrf.mxu0
    %v3629 = vadd.f32 %v3585, %v3628
    %v3630 = vand.u32 %v2193, 4294901760
    %v3631 = vsub.f32 %v2193, %v3630
    %v3632 = vand.u32 %v3631, 4294901760
    %3633 = vmatmul.f32.gmra.mxu0 %v3632
    %v3634 = vpop.f32.mrf.mxu0
    %v3635 = vadd.f32 %v3590, %v3634
    %3636 = vdwg.mxu0
    %v3637 = vand.u32 %v2229, 4294901760
    %v3638 = vsub.f32 %v2229, %v3637
    %v3639 = vand.u32 %v3638, 4294901760
    %3640 = vmatpush.msra.mxu0 %v3639
    %v3641 = vand.u32 %v2228, 4294901760
    %v3642 = vsub.f32 %v2228, %v3641
    %v3643 = vand.u32 %v3642, 4294901760
    %3644 = vmatpush.msra.mxu0 %v3643
    %v3645 = vand.u32 %v2227, 4294901760
    %v3646 = vsub.f32 %v2227, %v3645
    %v3647 = vand.u32 %v3646, 4294901760
    %3648 = vmatpush.msra.mxu0 %v3647
    %v3649 = vand.u32 %v2226, 4294901760
    %v3650 = vsub.f32 %v2226, %v3649
    %v3651 = vand.u32 %v3650, 4294901760
    %3652 = vmatpush.msra.mxu0 %v3651
    %v3653 = vand.u32 %v2225, 4294901760
    %v3654 = vsub.f32 %v2225, %v3653
    %v3655 = vand.u32 %v3654, 4294901760
    %3656 = vmatpush.msra.mxu0 %v3655
    %v3657 = vand.u32 %v2224, 4294901760
    %v3658 = vsub.f32 %v2224, %v3657
    %v3659 = vand.u32 %v3658, 4294901760
    %3660 = vmatpush.msra.mxu0 %v3659
    %v3661 = vand.u32 %v2223, 4294901760
    %v3662 = vsub.f32 %v2223, %v3661
    %v3663 = vand.u32 %v3662, 4294901760
    %3664 = vmatpush.msra.mxu0 %v3663
    %v3665 = vand.u32 %v2222, 4294901760
    %v3666 = vsub.f32 %v2222, %v3665
    %v3667 = vand.u32 %v3666, 4294901760
    %3668 = vmatpush.msra.mxu0 %v3667
    %v3669 = vand.u32 %v2221, 4294901760
    %v3670 = vsub.f32 %v2221, %v3669
    %v3671 = vand.u32 %v3670, 4294901760
    %3672 = vmatpush.msra.mxu0 %v3671
    %v3673 = vand.u32 %v2220, 4294901760
    %v3674 = vsub.f32 %v2220, %v3673
    %v3675 = vand.u32 %v3674, 4294901760
    %3676 = vmatpush.msra.mxu0 %v3675
    %v3677 = vand.u32 %v2219, 4294901760
    %v3678 = vsub.f32 %v2219, %v3677
    %v3679 = vand.u32 %v3678, 4294901760
    %3680 = vmatpush.msra.mxu0 %v3679
    %v3681 = vand.u32 %v2218, 4294901760
    %v3682 = vsub.f32 %v2218, %v3681
    %v3683 = vand.u32 %v3682, 4294901760
    %3684 = vmatpush.msra.mxu0 %v3683
    %v3685 = vand.u32 %v2217, 4294901760
    %v3686 = vsub.f32 %v2217, %v3685
    %v3687 = vand.u32 %v3686, 4294901760
    %3688 = vmatpush.msra.mxu0 %v3687
    %v3689 = vand.u32 %v2216, 4294901760
    %v3690 = vsub.f32 %v2216, %v3689
    %v3691 = vand.u32 %v3690, 4294901760
    %3692 = vmatpush.msra.mxu0 %v3691
    %v3693 = vand.u32 %v2215, 4294901760
    %v3694 = vsub.f32 %v2215, %v3693
    %v3695 = vand.u32 %v3694, 4294901760
    %3696 = vmatpush.msra.mxu0 %v3695
    %v3697 = vand.u32 %v2214, 4294901760
    %v3698 = vsub.f32 %v2214, %v3697
    %v3699 = vand.u32 %v3698, 4294901760
    %3700 = vmatpush.msra.mxu0 %v3699
    %v3701 = vand.u32 %v2191, 4294901760
    %3702 = vmatmul.f32.gmra.mxu0 %v3701
    %v3703 = vpop.f32.mrf.mxu0
    %v3704 = vadd.f32 %v3629, %v3703
    %v3705 = vand.u32 %v2193, 4294901760
    %3706 = vmatmul.f32.gmra.mxu0 %v3705
    %v3707 = vpop.f32.mrf.mxu0
    %v3708 = vadd.f32 %v3635, %v3707
    %3709 = vdwg.mxu0
    %v3710 = vand.u32 %v2229, 4294901760
    %3711 = vmatpush.msra.mxu0 %v3710
    %v3712 = vand.u32 %v2228, 4294901760
    %3713 = vmatpush.msra.mxu0 %v3712
    %v3714 = vand.u32 %v2227, 4294901760
    %3715 = vmatpush.msra.mxu0 %v3714
    %v3716 = vand.u32 %v2226, 4294901760
    %3717 = vmatpush.msra.mxu0 %v3716
    %v3718 = vand.u32 %v2225, 4294901760
    %3719 = vmatpush.msra.mxu0 %v3718
    %v3720 = vand.u32 %v2224, 4294901760
    %3721 = vmatpush.msra.mxu0 %v3720
    %v3722 = vand.u32 %v2223, 4294901760
    %3723 = vmatpush.msra.mxu0 %v3722
    %v3724 = vand.u32 %v2222, 4294901760
    %3725 = vmatpush.msra.mxu0 %v3724
    %v3726 = vand.u32 %v2221, 4294901760
    %3727 = vmatpush.msra.mxu0 %v3726
    %v3728 = vand.u32 %v2220, 4294901760
    %3729 = vmatpush.msra.mxu0 %v3728
    %v3730 = vand.u32 %v2219, 4294901760
    %3731 = vmatpush.msra.mxu0 %v3730
    %v3732 = vand.u32 %v2218, 4294901760
    %3733 = vmatpush.msra.mxu0 %v3732
    %v3734 = vand.u32 %v2217, 4294901760
    %3735 = vmatpush.msra.mxu0 %v3734
    %v3736 = vand.u32 %v2216, 4294901760
    %3737 = vmatpush.msra.mxu0 %v3736
    %v3738 = vand.u32 %v2215, 4294901760
    %3739 = vmatpush.msra.mxu0 %v3738
    %v3740 = vand.u32 %v2214, 4294901760
    %3741 = vmatpush.msra.mxu0 %v3740
    %v3742 = vand.u32 %v2191, 4294901760
    %3743 = vmatmul.f32.gmra.mxu0 %v3742
    %v3744 = vpop.f32.mrf.mxu0
    %v3745 = vadd.f32 %v3704, %v3744
    %v3746 = vand.u32 %v2193, 4294901760
    %3747 = vmatmul.f32.gmra.mxu0 %v3746
    %v3748 = vpop.f32.mrf.mxu0
    %v3749 = vadd.f32 %v3708, %v3748
    %3750 = vdwg.mxu0
    %s3751 = scalar_lea.vmem %s2, 512
    %v3752 = vld [vmem:[%s3751] sm:$0xff]
    %v3753 = vld [vmem:[%s3751 + $0x8] sm:$0xff]
    %v3754 = vld [vmem:[%s3751 + $0x10] sm:$0xff]
    %v3755 = vld [vmem:[%s3751 + $0x18] sm:$0xff]
    %v3756 = vld [vmem:[%s3751 + $0x20] sm:$0xff]
    %v3757 = vld [vmem:[%s3751 + $0x28] sm:$0xff]
    %v3758 = vld [vmem:[%s3751 + $0x30] sm:$0xff]
    %v3759 = vld [vmem:[%s3751 + $0x38] sm:$0xff]
    %v3760 = vld [vmem:[%s3751 + $0x40] sm:$0xff]
    %v3761 = vld [vmem:[%s3751 + $0x48] sm:$0xff]
    %v3762 = vld [vmem:[%s3751 + $0x50] sm:$0xff]
    %v3763 = vld [vmem:[%s3751 + $0x58] sm:$0xff]
    %v3764 = vld [vmem:[%s3751 + $0x60] sm:$0xff]
    %v3765 = vld [vmem:[%s3751 + $0x68] sm:$0xff]
    %v3766 = vld [vmem:[%s3751 + $0x70] sm:$0xff]
    %v3767 = vld [vmem:[%s3751 + $0x78] sm:$0xff]
    %v3768 = vld [vmem:[%s3751 + $0x80] sm:$0xff]
    %v3769 = vld [vmem:[%s3751 + $0x88] sm:$0xff]
    %v3770 = vld [vmem:[%s3751 + $0x90] sm:$0xff]
    %v3771 = vld [vmem:[%s3751 + $0x98] sm:$0xff]
    %v3772 = vld [vmem:[%s3751 + $0xa0] sm:$0xff]
    %v3773 = vld [vmem:[%s3751 + $0xa8] sm:$0xff]
    %v3774 = vld [vmem:[%s3751 + $0xb0] sm:$0xff]
    %v3775 = vld [vmem:[%s3751 + $0xb8] sm:$0xff]
    %v3776 = vld [vmem:[%s3751 + $0xc0] sm:$0xff]
    %v3777 = vld [vmem:[%s3751 + $0xc8] sm:$0xff]
    %v3778 = vld [vmem:[%s3751 + $0xd0] sm:$0xff]
    %v3779 = vld [vmem:[%s3751 + $0xd8] sm:$0xff]
    %v3780 = vld [vmem:[%s3751 + $0xe0] sm:$0xff]
    %v3781 = vld [vmem:[%s3751 + $0xe8] sm:$0xff]
    %v3782 = vld [vmem:[%s3751 + $0xf0] sm:$0xff]
    %v3783 = vld [vmem:[%s3751 + $0xf8] sm:$0xff]
    %vm3788 = vcmask 1045504
    %v3789 = vrot.slane %v2190, 2
    %v3790 = vrot.slane %v2192, 2
    %v3791 = vsel %vm3788, %v3789, %v3790
    %v3792 = vrot.slane %v2191, 2
    %v3793 = vrot.slane %v2193, 2
    %v3794 = vsel %vm3788, %v3792, %v3793
    %v3799 = vand.u32 %v3767, 4294901760
    %3800 = vmatpush.msra.mxu0 %v3799
    %v3801 = vand.u32 %v3766, 4294901760
    %3802 = vmatpush.msra.mxu0 %v3801
    %v3803 = vand.u32 %v3765, 4294901760
    %3804 = vmatpush.msra.mxu0 %v3803
    %v3805 = vand.u32 %v3764, 4294901760
    %3806 = vmatpush.msra.mxu0 %v3805
    %v3807 = vand.u32 %v3763, 4294901760
    %3808 = vmatpush.msra.mxu0 %v3807
    %v3809 = vand.u32 %v3762, 4294901760
    %3810 = vmatpush.msra.mxu0 %v3809
    %v3811 = vand.u32 %v3761, 4294901760
    %3812 = vmatpush.msra.mxu0 %v3811
    %v3813 = vand.u32 %v3760, 4294901760
    %3814 = vmatpush.msra.mxu0 %v3813
    %v3815 = vand.u32 %v3759, 4294901760
    %3816 = vmatpush.msra.mxu0 %v3815
    %v3817 = vand.u32 %v3758, 4294901760
    %3818 = vmatpush.msra.mxu0 %v3817
    %v3819 = vand.u32 %v3757, 4294901760
    %3820 = vmatpush.msra.mxu0 %v3819
    %v3821 = vand.u32 %v3756, 4294901760
    %3822 = vmatpush.msra.mxu0 %v3821
    %v3823 = vand.u32 %v3755, 4294901760
    %3824 = vmatpush.msra.mxu0 %v3823
    %v3825 = vand.u32 %v3754, 4294901760
    %3826 = vmatpush.msra.mxu0 %v3825
    %v3827 = vand.u32 %v3753, 4294901760
    %3828 = vmatpush.msra.mxu0 %v3827
    %v3829 = vand.u32 %v3752, 4294901760
    %3830 = vmatpush.msra.mxu0 %v3829
    %v3831 = vand.u32 %v3791, 4294901760
    %v3832 = vsub.f32 %v3791, %v3831
    %v3833 = vand.u32 %v3832, 4294901760
    %v3834 = vsub.f32 %v3832, %v3833
    %v3835 = vand.u32 %v3834, 4294901760
    %3836 = vmatmul.f32.gmra.mxu0 %v3835
    %v3837 = vpop.f32.mrf.mxu0
    %v3838 = vadd.f32 0.0, %v3837
    %v3839 = vand.u32 %v3790, 4294901760
    %v3840 = vsub.f32 %v3790, %v3839
    %v3841 = vand.u32 %v3840, 4294901760
    %v3842 = vsub.f32 %v3840, %v3841
    %v3843 = vand.u32 %v3842, 4294901760
    %3844 = vmatmul.f32.gmra.mxu0 %v3843
    %v3845 = vpop.f32.mrf.mxu0
    %v3846 = vadd.f32 0.0, %v3845
    %3847 = vdwg.mxu0
    %v3848 = vand.u32 %v3767, 4294901760
    %v3849 = vsub.f32 %v3767, %v3848
    %v3850 = vand.u32 %v3849, 4294901760
    %v3851 = vsub.f32 %v3849, %v3850
    %v3852 = vand.u32 %v3851, 4294901760
    %3853 = vmatpush.msra.mxu0 %v3852
    %v3854 = vand.u32 %v3766, 4294901760
    %v3855 = vsub.f32 %v3766, %v3854
    %v3856 = vand.u32 %v3855, 4294901760
    %v3857 = vsub.f32 %v3855, %v3856
    %v3858 = vand.u32 %v3857, 4294901760
    %3859 = vmatpush.msra.mxu0 %v3858
    %v3860 = vand.u32 %v3765, 4294901760
    %v3861 = vsub.f32 %v3765, %v3860
    %v3862 = vand.u32 %v3861, 4294901760
    %v3863 = vsub.f32 %v3861, %v3862
    %v3864 = vand.u32 %v3863, 4294901760
    %3865 = vmatpush.msra.mxu0 %v3864
    %v3866 = vand.u32 %v3764, 4294901760
    %v3867 = vsub.f32 %v3764, %v3866
    %v3868 = vand.u32 %v3867, 4294901760
    %v3869 = vsub.f32 %v3867, %v3868
    %v3870 = vand.u32 %v3869, 4294901760
    %3871 = vmatpush.msra.mxu0 %v3870
    %v3872 = vand.u32 %v3763, 4294901760
    %v3873 = vsub.f32 %v3763, %v3872
    %v3874 = vand.u32 %v3873, 4294901760
    %v3875 = vsub.f32 %v3873, %v3874
    %v3876 = vand.u32 %v3875, 4294901760
    %3877 = vmatpush.msra.mxu0 %v3876
    %v3878 = vand.u32 %v3762, 4294901760
    %v3879 = vsub.f32 %v3762, %v3878
    %v3880 = vand.u32 %v3879, 4294901760
    %v3881 = vsub.f32 %v3879, %v3880
    %v3882 = vand.u32 %v3881, 4294901760
    %3883 = vmatpush.msra.mxu0 %v3882
    %v3884 = vand.u32 %v3761, 4294901760
    %v3885 = vsub.f32 %v3761, %v3884
    %v3886 = vand.u32 %v3885, 4294901760
    %v3887 = vsub.f32 %v3885, %v3886
    %v3888 = vand.u32 %v3887, 4294901760
    %3889 = vmatpush.msra.mxu0 %v3888
    %v3890 = vand.u32 %v3760, 4294901760
    %v3891 = vsub.f32 %v3760, %v3890
    %v3892 = vand.u32 %v3891, 4294901760
    %v3893 = vsub.f32 %v3891, %v3892
    %v3894 = vand.u32 %v3893, 4294901760
    %3895 = vmatpush.msra.mxu0 %v3894
    %v3896 = vand.u32 %v3759, 4294901760
    %v3897 = vsub.f32 %v3759, %v3896
    %v3898 = vand.u32 %v3897, 4294901760
    %v3899 = vsub.f32 %v3897, %v3898
    %v3900 = vand.u32 %v3899, 4294901760
    %3901 = vmatpush.msra.mxu0 %v3900
    %v3902 = vand.u32 %v3758, 4294901760
    %v3903 = vsub.f32 %v3758, %v3902
    %v3904 = vand.u32 %v3903, 4294901760
    %v3905 = vsub.f32 %v3903, %v3904
    %v3906 = vand.u32 %v3905, 4294901760
    %3907 = vmatpush.msra.mxu0 %v3906
    %v3908 = vand.u32 %v3757, 4294901760
    %v3909 = vsub.f32 %v3757, %v3908
    %v3910 = vand.u32 %v3909, 4294901760
    %v3911 = vsub.f32 %v3909, %v3910
    %v3912 = vand.u32 %v3911, 4294901760
    %3913 = vmatpush.msra.mxu0 %v3912
    %v3914 = vand.u32 %v3756, 4294901760
    %v3915 = vsub.f32 %v3756, %v3914
    %v3916 = vand.u32 %v3915, 4294901760
    %v3917 = vsub.f32 %v3915, %v3916
    %v3918 = vand.u32 %v3917, 4294901760
    %3919 = vmatpush.msra.mxu0 %v3918
    %v3920 = vand.u32 %v3755, 4294901760
    %v3921 = vsub.f32 %v3755, %v3920
    %v3922 = vand.u32 %v3921, 4294901760
    %v3923 = vsub.f32 %v3921, %v3922
    %v3924 = vand.u32 %v3923, 4294901760
    %3925 = vmatpush.msra.mxu0 %v3924
    %v3926 = vand.u32 %v3754, 4294901760
    %v3927 = vsub.f32 %v3754, %v3926
    %v3928 = vand.u32 %v3927, 4294901760
    %v3929 = vsub.f32 %v3927, %v3928
    %v3930 = vand.u32 %v3929, 4294901760
    %3931 = vmatpush.msra.mxu0 %v3930
    %v3932 = vand.u32 %v3753, 4294901760
    %v3933 = vsub.f32 %v3753, %v3932
    %v3934 = vand.u32 %v3933, 4294901760
    %v3935 = vsub.f32 %v3933, %v3934
    %v3936 = vand.u32 %v3935, 4294901760
    %3937 = vmatpush.msra.mxu0 %v3936
    %v3938 = vand.u32 %v3752, 4294901760
    %v3939 = vsub.f32 %v3752, %v3938
    %v3940 = vand.u32 %v3939, 4294901760
    %v3941 = vsub.f32 %v3939, %v3940
    %v3942 = vand.u32 %v3941, 4294901760
    %3943 = vmatpush.msra.mxu0 %v3942
    %v3944 = vand.u32 %v3791, 4294901760
    %3945 = vmatmul.f32.gmra.mxu0 %v3944
    %v3946 = vpop.f32.mrf.mxu0
    %v3947 = vadd.f32 %v3838, %v3946
    %v3948 = vand.u32 %v3790, 4294901760
    %3949 = vmatmul.f32.gmra.mxu0 %v3948
    %v3950 = vpop.f32.mrf.mxu0
    %v3951 = vadd.f32 %v3846, %v3950
    %3952 = vdwg.mxu0
    %v3953 = vand.u32 %v3767, 4294901760
    %v3954 = vsub.f32 %v3767, %v3953
    %3955 = vmatpush.msra.mxu0 %v3954
    %v3956 = vand.u32 %v3766, 4294901760
    %v3957 = vsub.f32 %v3766, %v3956
    %3958 = vmatpush.msra.mxu0 %v3957
    %v3959 = vand.u32 %v3765, 4294901760
    %v3960 = vsub.f32 %v3765, %v3959
    %3961 = vmatpush.msra.mxu0 %v3960
    %v3962 = vand.u32 %v3764, 4294901760
    %v3963 = vsub.f32 %v3764, %v3962
    %3964 = vmatpush.msra.mxu0 %v3963
    %v3965 = vand.u32 %v3763, 4294901760
    %v3966 = vsub.f32 %v3763, %v3965
    %3967 = vmatpush.msra.mxu0 %v3966
    %v3968 = vand.u32 %v3762, 4294901760
    %v3969 = vsub.f32 %v3762, %v3968
    %3970 = vmatpush.msra.mxu0 %v3969
    %v3971 = vand.u32 %v3761, 4294901760
    %v3972 = vsub.f32 %v3761, %v3971
    %3973 = vmatpush.msra.mxu0 %v3972
    %v3974 = vand.u32 %v3760, 4294901760
    %v3975 = vsub.f32 %v3760, %v3974
    %3976 = vmatpush.msra.mxu0 %v3975
    %v3977 = vand.u32 %v3759, 4294901760
    %v3978 = vsub.f32 %v3759, %v3977
    %3979 = vmatpush.msra.mxu0 %v3978
    %v3980 = vand.u32 %v3758, 4294901760
    %v3981 = vsub.f32 %v3758, %v3980
    %3982 = vmatpush.msra.mxu0 %v3981
    %v3983 = vand.u32 %v3757, 4294901760
    %v3984 = vsub.f32 %v3757, %v3983
    %3985 = vmatpush.msra.mxu0 %v3984
    %v3986 = vand.u32 %v3756, 4294901760
    %v3987 = vsub.f32 %v3756, %v3986
    %3988 = vmatpush.msra.mxu0 %v3987
    %v3989 = vand.u32 %v3755, 4294901760
    %v3990 = vsub.f32 %v3755, %v3989
    %3991 = vmatpush.msra.mxu0 %v3990
    %v3992 = vand.u32 %v3754, 4294901760
    %v3993 = vsub.f32 %v3754, %v3992
    %3994 = vmatpush.msra.mxu0 %v3993
    %v3995 = vand.u32 %v3753, 4294901760
    %v3996 = vsub.f32 %v3753, %v3995
    %3997 = vmatpush.msra.mxu0 %v3996
    %v3998 = vand.u32 %v3752, 4294901760
    %v3999 = vsub.f32 %v3752, %v3998
    %4000 = vmatpush.msra.mxu0 %v3999
    %v4001 = vand.u32 %v3791, 4294901760
    %v4002 = vsub.f32 %v3791, %v4001
    %4003 = vmatmul.f32.gmra.mxu0 %v4002
    %v4004 = vpop.f32.mrf.mxu0
    %v4005 = vadd.f32 %v3947, %v4004
    %v4006 = vand.u32 %v3790, 4294901760
    %v4007 = vsub.f32 %v3790, %v4006
    %4008 = vmatmul.f32.gmra.mxu0 %v4007
    %v4009 = vpop.f32.mrf.mxu0
    %v4010 = vadd.f32 %v3951, %v4009
    %4011 = vdwg.mxu0
    %v4012 = vand.u32 %v3767, 4294901760
    %4013 = vmatpush.msra.mxu0 %v4012
    %v4014 = vand.u32 %v3766, 4294901760
    %4015 = vmatpush.msra.mxu0 %v4014
    %v4016 = vand.u32 %v3765, 4294901760
    %4017 = vmatpush.msra.mxu0 %v4016
    %v4018 = vand.u32 %v3764, 4294901760
    %4019 = vmatpush.msra.mxu0 %v4018
    %v4020 = vand.u32 %v3763, 4294901760
    %4021 = vmatpush.msra.mxu0 %v4020
    %v4022 = vand.u32 %v3762, 4294901760
    %4023 = vmatpush.msra.mxu0 %v4022
    %v4024 = vand.u32 %v3761, 4294901760
    %4025 = vmatpush.msra.mxu0 %v4024
    %v4026 = vand.u32 %v3760, 4294901760
    %4027 = vmatpush.msra.mxu0 %v4026
    %v4028 = vand.u32 %v3759, 4294901760
    %4029 = vmatpush.msra.mxu0 %v4028
    %v4030 = vand.u32 %v3758, 4294901760
    %4031 = vmatpush.msra.mxu0 %v4030
    %v4032 = vand.u32 %v3757, 4294901760
    %4033 = vmatpush.msra.mxu0 %v4032
    %v4034 = vand.u32 %v3756, 4294901760
    %4035 = vmatpush.msra.mxu0 %v4034
    %v4036 = vand.u32 %v3755, 4294901760
    %4037 = vmatpush.msra.mxu0 %v4036
    %v4038 = vand.u32 %v3754, 4294901760
    %4039 = vmatpush.msra.mxu0 %v4038
    %v4040 = vand.u32 %v3753, 4294901760
    %4041 = vmatpush.msra.mxu0 %v4040
    %v4042 = vand.u32 %v3752, 4294901760
    %4043 = vmatpush.msra.mxu0 %v4042
    %v4044 = vand.u32 %v3791, 4294901760
    %v4045 = vsub.f32 %v3791, %v4044
    %v4046 = vand.u32 %v4045, 4294901760
    %4047 = vmatmul.f32.gmra.mxu0 %v4046
    %v4048 = vpop.f32.mrf.mxu0
    %v4049 = vadd.f32 %v4005, %v4048
    %v4050 = vand.u32 %v3790, 4294901760
    %v4051 = vsub.f32 %v3790, %v4050
    %v4052 = vand.u32 %v4051, 4294901760
    %4053 = vmatmul.f32.gmra.mxu0 %v4052
    %v4054 = vpop.f32.mrf.mxu0
    %v4055 = vadd.f32 %v4010, %v4054
    %4056 = vdwg.mxu0
    %v4057 = vand.u32 %v3767, 4294901760
    %v4058 = vsub.f32 %v3767, %v4057
    %v4059 = vand.u32 %v4058, 4294901760
    %4060 = vmatpush.msra.mxu0 %v4059
    %v4061 = vand.u32 %v3766, 4294901760
    %v4062 = vsub.f32 %v3766, %v4061
    %v4063 = vand.u32 %v4062, 4294901760
    %4064 = vmatpush.msra.mxu0 %v4063
    %v4065 = vand.u32 %v3765, 4294901760
    %v4066 = vsub.f32 %v3765, %v4065
    %v4067 = vand.u32 %v4066, 4294901760
    %4068 = vmatpush.msra.mxu0 %v4067
    %v4069 = vand.u32 %v3764, 4294901760
    %v4070 = vsub.f32 %v3764, %v4069
    %v4071 = vand.u32 %v4070, 4294901760
    %4072 = vmatpush.msra.mxu0 %v4071
    %v4073 = vand.u32 %v3763, 4294901760
    %v4074 = vsub.f32 %v3763, %v4073
    %v4075 = vand.u32 %v4074, 4294901760
    %4076 = vmatpush.msra.mxu0 %v4075
    %v4077 = vand.u32 %v3762, 4294901760
    %v4078 = vsub.f32 %v3762, %v4077
    %v4079 = vand.u32 %v4078, 4294901760
    %4080 = vmatpush.msra.mxu0 %v4079
    %v4081 = vand.u32 %v3761, 4294901760
    %v4082 = vsub.f32 %v3761, %v4081
    %v4083 = vand.u32 %v4082, 4294901760
    %4084 = vmatpush.msra.mxu0 %v4083
    %v4085 = vand.u32 %v3760, 4294901760
    %v4086 = vsub.f32 %v3760, %v4085
    %v4087 = vand.u32 %v4086, 4294901760
    %4088 = vmatpush.msra.mxu0 %v4087
    %v4089 = vand.u32 %v3759, 4294901760
    %v4090 = vsub.f32 %v3759, %v4089
    %v4091 = vand.u32 %v4090, 4294901760
    %4092 = vmatpush.msra.mxu0 %v4091
    %v4093 = vand.u32 %v3758, 4294901760
    %v4094 = vsub.f32 %v3758, %v4093
    %v4095 = vand.u32 %v4094, 4294901760
    %4096 = vmatpush.msra.mxu0 %v4095
    %v4097 = vand.u32 %v3757, 4294901760
    %v4098 = vsub.f32 %v3757, %v4097
    %v4099 = vand.u32 %v4098, 4294901760
    %4100 = vmatpush.msra.mxu0 %v4099
    %v4101 = vand.u32 %v3756, 4294901760
    %v4102 = vsub.f32 %v3756, %v4101
    %v4103 = vand.u32 %v4102, 4294901760
    %4104 = vmatpush.msra.mxu0 %v4103
    %v4105 = vand.u32 %v3755, 4294901760
    %v4106 = vsub.f32 %v3755, %v4105
    %v4107 = vand.u32 %v4106, 4294901760
    %4108 = vmatpush.msra.mxu0 %v4107
    %v4109 = vand.u32 %v3754, 4294901760
    %v4110 = vsub.f32 %v3754, %v4109
    %v4111 = vand.u32 %v4110, 4294901760
    %4112 = vmatpush.msra.mxu0 %v4111
    %v4113 = vand.u32 %v3753, 4294901760
    %v4114 = vsub.f32 %v3753, %v4113
    %v4115 = vand.u32 %v4114, 4294901760
    %4116 = vmatpush.msra.mxu0 %v4115
    %v4117 = vand.u32 %v3752, 4294901760
    %v4118 = vsub.f32 %v3752, %v4117
    %v4119 = vand.u32 %v4118, 4294901760
    %4120 = vmatpush.msra.mxu0 %v4119
    %v4121 = vand.u32 %v3791, 4294901760
    %4122 = vmatmul.f32.gmra.mxu0 %v4121
    %v4123 = vpop.f32.mrf.mxu0
    %v4124 = vadd.f32 %v4049, %v4123
    %v4125 = vand.u32 %v3790, 4294901760
    %4126 = vmatmul.f32.gmra.mxu0 %v4125
    %v4127 = vpop.f32.mrf.mxu0
    %v4128 = vadd.f32 %v4055, %v4127
    %4129 = vdwg.mxu0
    %v4130 = vand.u32 %v3767, 4294901760
    %4131 = vmatpush.msra.mxu0 %v4130
    %v4132 = vand.u32 %v3766, 4294901760
    %4133 = vmatpush.msra.mxu0 %v4132
    %v4134 = vand.u32 %v3765, 4294901760
    %4135 = vmatpush.msra.mxu0 %v4134
    %v4136 = vand.u32 %v3764, 4294901760
    %4137 = vmatpush.msra.mxu0 %v4136
    %v4138 = vand.u32 %v3763, 4294901760
    %4139 = vmatpush.msra.mxu0 %v4138
    %v4140 = vand.u32 %v3762, 4294901760
    %4141 = vmatpush.msra.mxu0 %v4140
    %v4142 = vand.u32 %v3761, 4294901760
    %4143 = vmatpush.msra.mxu0 %v4142
    %v4144 = vand.u32 %v3760, 4294901760
    %4145 = vmatpush.msra.mxu0 %v4144
    %v4146 = vand.u32 %v3759, 4294901760
    %4147 = vmatpush.msra.mxu0 %v4146
    %v4148 = vand.u32 %v3758, 4294901760
    %4149 = vmatpush.msra.mxu0 %v4148
    %v4150 = vand.u32 %v3757, 4294901760
    %4151 = vmatpush.msra.mxu0 %v4150
    %v4152 = vand.u32 %v3756, 4294901760
    %4153 = vmatpush.msra.mxu0 %v4152
    %v4154 = vand.u32 %v3755, 4294901760
    %4155 = vmatpush.msra.mxu0 %v4154
    %v4156 = vand.u32 %v3754, 4294901760
    %4157 = vmatpush.msra.mxu0 %v4156
    %v4158 = vand.u32 %v3753, 4294901760
    %4159 = vmatpush.msra.mxu0 %v4158
    %v4160 = vand.u32 %v3752, 4294901760
    %4161 = vmatpush.msra.mxu0 %v4160
    %v4162 = vand.u32 %v3791, 4294901760
    %4163 = vmatmul.f32.gmra.mxu0 %v4162
    %v4164 = vpop.f32.mrf.mxu0
    %v4165 = vadd.f32 %v4124, %v4164
    %v4166 = vand.u32 %v3790, 4294901760
    %4167 = vmatmul.f32.gmra.mxu0 %v4166
    %v4168 = vpop.f32.mrf.mxu0
    %v4169 = vadd.f32 %v4128, %v4168
    %4170 = vdwg.mxu0
    %v4171 = vand.u32 %v3783, 4294901760
    %4172 = vmatpush.msra.mxu0 %v4171
    %v4173 = vand.u32 %v3782, 4294901760
    %4174 = vmatpush.msra.mxu0 %v4173
    %v4175 = vand.u32 %v3781, 4294901760
    %4176 = vmatpush.msra.mxu0 %v4175
    %v4177 = vand.u32 %v3780, 4294901760
    %4178 = vmatpush.msra.mxu0 %v4177
    %v4179 = vand.u32 %v3779, 4294901760
    %4180 = vmatpush.msra.mxu0 %v4179
    %v4181 = vand.u32 %v3778, 4294901760
    %4182 = vmatpush.msra.mxu0 %v4181
    %v4183 = vand.u32 %v3777, 4294901760
    %4184 = vmatpush.msra.mxu0 %v4183
    %v4185 = vand.u32 %v3776, 4294901760
    %4186 = vmatpush.msra.mxu0 %v4185
    %v4187 = vand.u32 %v3775, 4294901760
    %4188 = vmatpush.msra.mxu0 %v4187
    %v4189 = vand.u32 %v3774, 4294901760
    %4190 = vmatpush.msra.mxu0 %v4189
    %v4191 = vand.u32 %v3773, 4294901760
    %4192 = vmatpush.msra.mxu0 %v4191
    %v4193 = vand.u32 %v3772, 4294901760
    %4194 = vmatpush.msra.mxu0 %v4193
    %v4195 = vand.u32 %v3771, 4294901760
    %4196 = vmatpush.msra.mxu0 %v4195
    %v4197 = vand.u32 %v3770, 4294901760
    %4198 = vmatpush.msra.mxu0 %v4197
    %v4199 = vand.u32 %v3769, 4294901760
    %4200 = vmatpush.msra.mxu0 %v4199
    %v4201 = vand.u32 %v3768, 4294901760
    %4202 = vmatpush.msra.mxu0 %v4201
    %v4203 = vand.u32 %v3794, 4294901760
    %v4204 = vsub.f32 %v3794, %v4203
    %v4205 = vand.u32 %v4204, 4294901760
    %v4206 = vsub.f32 %v4204, %v4205
    %v4207 = vand.u32 %v4206, 4294901760
    %4208 = vmatmul.f32.gmra.mxu0 %v4207
    %v4209 = vpop.f32.mrf.mxu0
    %v4210 = vadd.f32 %v4165, %v4209
    %v4211 = vand.u32 %v3793, 4294901760
    %v4212 = vsub.f32 %v3793, %v4211
    %v4213 = vand.u32 %v4212, 4294901760
    %v4214 = vsub.f32 %v4212, %v4213
    %v4215 = vand.u32 %v4214, 4294901760
    %4216 = vmatmul.f32.gmra.mxu0 %v4215
    %v4217 = vpop.f32.mrf.mxu0
    %v4218 = vadd.f32 %v4169, %v4217
    %4219 = vdwg.mxu0
    %v4220 = vand.u32 %v3783, 4294901760
    %v4221 = vsub.f32 %v3783, %v4220
    %v4222 = vand.u32 %v4221, 4294901760
    %v4223 = vsub.f32 %v4221, %v4222
    %v4224 = vand.u32 %v4223, 4294901760
    %4225 = vmatpush.msra.mxu0 %v4224
    %v4226 = vand.u32 %v3782, 4294901760
    %v4227 = vsub.f32 %v3782, %v4226
    %v4228 = vand.u32 %v4227, 4294901760
    %v4229 = vsub.f32 %v4227, %v4228
    %v4230 = vand.u32 %v4229, 4294901760
    %4231 = vmatpush.msra.mxu0 %v4230
    %v4232 = vand.u32 %v3781, 4294901760
    %v4233 = vsub.f32 %v3781, %v4232
    %v4234 = vand.u32 %v4233, 4294901760
    %v4235 = vsub.f32 %v4233, %v4234
    %v4236 = vand.u32 %v4235, 4294901760
    %4237 = vmatpush.msra.mxu0 %v4236
    %v4238 = vand.u32 %v3780, 4294901760
    %v4239 = vsub.f32 %v3780, %v4238
    %v4240 = vand.u32 %v4239, 4294901760
    %v4241 = vsub.f32 %v4239, %v4240
    %v4242 = vand.u32 %v4241, 4294901760
    %4243 = vmatpush.msra.mxu0 %v4242
    %v4244 = vand.u32 %v3779, 4294901760
    %v4245 = vsub.f32 %v3779, %v4244
    %v4246 = vand.u32 %v4245, 4294901760
    %v4247 = vsub.f32 %v4245, %v4246
    %v4248 = vand.u32 %v4247, 4294901760
    %4249 = vmatpush.msra.mxu0 %v4248
    %v4250 = vand.u32 %v3778, 4294901760
    %v4251 = vsub.f32 %v3778, %v4250
    %v4252 = vand.u32 %v4251, 4294901760
    %v4253 = vsub.f32 %v4251, %v4252
    %v4254 = vand.u32 %v4253, 4294901760
    %4255 = vmatpush.msra.mxu0 %v4254
    %v4256 = vand.u32 %v3777, 4294901760
    %v4257 = vsub.f32 %v3777, %v4256
    %v4258 = vand.u32 %v4257, 4294901760
    %v4259 = vsub.f32 %v4257, %v4258
    %v4260 = vand.u32 %v4259, 4294901760
    %4261 = vmatpush.msra.mxu0 %v4260
    %v4262 = vand.u32 %v3776, 4294901760
    %v4263 = vsub.f32 %v3776, %v4262
    %v4264 = vand.u32 %v4263, 4294901760
    %v4265 = vsub.f32 %v4263, %v4264
    %v4266 = vand.u32 %v4265, 4294901760
    %4267 = vmatpush.msra.mxu0 %v4266
    %v4268 = vand.u32 %v3775, 4294901760
    %v4269 = vsub.f32 %v3775, %v4268
    %v4270 = vand.u32 %v4269, 4294901760
    %v4271 = vsub.f32 %v4269, %v4270
    %v4272 = vand.u32 %v4271, 4294901760
    %4273 = vmatpush.msra.mxu0 %v4272
    %v4274 = vand.u32 %v3774, 4294901760
    %v4275 = vsub.f32 %v3774, %v4274
    %v4276 = vand.u32 %v4275, 4294901760
    %v4277 = vsub.f32 %v4275, %v4276
    %v4278 = vand.u32 %v4277, 4294901760
    %4279 = vmatpush.msra.mxu0 %v4278
    %v4280 = vand.u32 %v3773, 4294901760
    %v4281 = vsub.f32 %v3773, %v4280
    %v4282 = vand.u32 %v4281, 4294901760
    %v4283 = vsub.f32 %v4281, %v4282
    %v4284 = vand.u32 %v4283, 4294901760
    %4285 = vmatpush.msra.mxu0 %v4284
    %v4286 = vand.u32 %v3772, 4294901760
    %v4287 = vsub.f32 %v3772, %v4286
    %v4288 = vand.u32 %v4287, 4294901760
    %v4289 = vsub.f32 %v4287, %v4288
    %v4290 = vand.u32 %v4289, 4294901760
    %4291 = vmatpush.msra.mxu0 %v4290
    %v4292 = vand.u32 %v3771, 4294901760
    %v4293 = vsub.f32 %v3771, %v4292
    %v4294 = vand.u32 %v4293, 4294901760
    %v4295 = vsub.f32 %v4293, %v4294
    %v4296 = vand.u32 %v4295, 4294901760
    %4297 = vmatpush.msra.mxu0 %v4296
    %v4298 = vand.u32 %v3770, 4294901760
    %v4299 = vsub.f32 %v3770, %v4298
    %v4300 = vand.u32 %v4299, 4294901760
    %v4301 = vsub.f32 %v4299, %v4300
    %v4302 = vand.u32 %v4301, 4294901760
    %4303 = vmatpush.msra.mxu0 %v4302
    %v4304 = vand.u32 %v3769, 4294901760
    %v4305 = vsub.f32 %v3769, %v4304
    %v4306 = vand.u32 %v4305, 4294901760
    %v4307 = vsub.f32 %v4305, %v4306
    %v4308 = vand.u32 %v4307, 4294901760
    %4309 = vmatpush.msra.mxu0 %v4308
    %v4310 = vand.u32 %v3768, 4294901760
    %v4311 = vsub.f32 %v3768, %v4310
    %v4312 = vand.u32 %v4311, 4294901760
    %v4313 = vsub.f32 %v4311, %v4312
    %v4314 = vand.u32 %v4313, 4294901760
    %4315 = vmatpush.msra.mxu0 %v4314
    %v4316 = vand.u32 %v3794, 4294901760
    %4317 = vmatmul.f32.gmra.mxu0 %v4316
    %v4318 = vpop.f32.mrf.mxu0
    %v4319 = vadd.f32 %v4210, %v4318
    %v4320 = vand.u32 %v3793, 4294901760
    %4321 = vmatmul.f32.gmra.mxu0 %v4320
    %v4322 = vpop.f32.mrf.mxu0
    %v4323 = vadd.f32 %v4218, %v4322
    %4324 = vdwg.mxu0
    %v4325 = vand.u32 %v3783, 4294901760
    %v4326 = vsub.f32 %v3783, %v4325
    %4327 = vmatpush.msra.mxu0 %v4326
    %v4328 = vand.u32 %v3782, 4294901760
    %v4329 = vsub.f32 %v3782, %v4328
    %4330 = vmatpush.msra.mxu0 %v4329
    %v4331 = vand.u32 %v3781, 4294901760
    %v4332 = vsub.f32 %v3781, %v4331
    %4333 = vmatpush.msra.mxu0 %v4332
    %v4334 = vand.u32 %v3780, 4294901760
    %v4335 = vsub.f32 %v3780, %v4334
    %4336 = vmatpush.msra.mxu0 %v4335
    %v4337 = vand.u32 %v3779, 4294901760
    %v4338 = vsub.f32 %v3779, %v4337
    %4339 = vmatpush.msra.mxu0 %v4338
    %v4340 = vand.u32 %v3778, 4294901760
    %v4341 = vsub.f32 %v3778, %v4340
    %4342 = vmatpush.msra.mxu0 %v4341
    %v4343 = vand.u32 %v3777, 4294901760
    %v4344 = vsub.f32 %v3777, %v4343
    %4345 = vmatpush.msra.mxu0 %v4344
    %v4346 = vand.u32 %v3776, 4294901760
    %v4347 = vsub.f32 %v3776, %v4346
    %4348 = vmatpush.msra.mxu0 %v4347
    %v4349 = vand.u32 %v3775, 4294901760
    %v4350 = vsub.f32 %v3775, %v4349
    %4351 = vmatpush.msra.mxu0 %v4350
    %v4352 = vand.u32 %v3774, 4294901760
    %v4353 = vsub.f32 %v3774, %v4352
    %4354 = vmatpush.msra.mxu0 %v4353
    %v4355 = vand.u32 %v3773, 4294901760
    %v4356 = vsub.f32 %v3773, %v4355
    %4357 = vmatpush.msra.mxu0 %v4356
    %v4358 = vand.u32 %v3772, 4294901760
    %v4359 = vsub.f32 %v3772, %v4358
    %4360 = vmatpush.msra.mxu0 %v4359
    %v4361 = vand.u32 %v3771, 4294901760
    %v4362 = vsub.f32 %v3771, %v4361
    %4363 = vmatpush.msra.mxu0 %v4362
    %v4364 = vand.u32 %v3770, 4294901760
    %v4365 = vsub.f32 %v3770, %v4364
    %4366 = vmatpush.msra.mxu0 %v4365
    %v4367 = vand.u32 %v3769, 4294901760
    %v4368 = vsub.f32 %v3769, %v4367
    %4369 = vmatpush.msra.mxu0 %v4368
    %v4370 = vand.u32 %v3768, 4294901760
    %v4371 = vsub.f32 %v3768, %v4370
    %4372 = vmatpush.msra.mxu0 %v4371
    %v4373 = vand.u32 %v3794, 4294901760
    %v4374 = vsub.f32 %v3794, %v4373
    %4375 = vmatmul.f32.gmra.mxu0 %v4374
    %v4376 = vpop.f32.mrf.mxu0
    %v4377 = vadd.f32 %v4319, %v4376
    %v4378 = vand.u32 %v3793, 4294901760
    %v4379 = vsub.f32 %v3793, %v4378
    %4380 = vmatmul.f32.gmra.mxu0 %v4379
    %v4381 = vpop.f32.mrf.mxu0
    %v4382 = vadd.f32 %v4323, %v4381
    %4383 = vdwg.mxu0
    %v4384 = vand.u32 %v3783, 4294901760
    %4385 = vmatpush.msra.mxu0 %v4384
    %v4386 = vand.u32 %v3782, 4294901760
    %4387 = vmatpush.msra.mxu0 %v4386
    %v4388 = vand.u32 %v3781, 4294901760
    %4389 = vmatpush.msra.mxu0 %v4388
    %v4390 = vand.u32 %v3780, 4294901760
    %4391 = vmatpush.msra.mxu0 %v4390
    %v4392 = vand.u32 %v3779, 4294901760
    %4393 = vmatpush.msra.mxu0 %v4392
    %v4394 = vand.u32 %v3778, 4294901760
    %4395 = vmatpush.msra.mxu0 %v4394
    %v4396 = vand.u32 %v3777, 4294901760
    %4397 = vmatpush.msra.mxu0 %v4396
    %v4398 = vand.u32 %v3776, 4294901760
    %4399 = vmatpush.msra.mxu0 %v4398
    %v4400 = vand.u32 %v3775, 4294901760
    %4401 = vmatpush.msra.mxu0 %v4400
    %v4402 = vand.u32 %v3774, 4294901760
    %4403 = vmatpush.msra.mxu0 %v4402
    %v4404 = vand.u32 %v3773, 4294901760
    %4405 = vmatpush.msra.mxu0 %v4404
    %v4406 = vand.u32 %v3772, 4294901760
    %4407 = vmatpush.msra.mxu0 %v4406
    %v4408 = vand.u32 %v3771, 4294901760
    %4409 = vmatpush.msra.mxu0 %v4408
    %v4410 = vand.u32 %v3770, 4294901760
    %4411 = vmatpush.msra.mxu0 %v4410
    %v4412 = vand.u32 %v3769, 4294901760
    %4413 = vmatpush.msra.mxu0 %v4412
    %v4414 = vand.u32 %v3768, 4294901760
    %4415 = vmatpush.msra.mxu0 %v4414
    %v4416 = vand.u32 %v3794, 4294901760
    %v4417 = vsub.f32 %v3794, %v4416
    %v4418 = vand.u32 %v4417, 4294901760
    %4419 = vmatmul.f32.gmra.mxu0 %v4418
    %v4420 = vpop.f32.mrf.mxu0
    %v4421 = vadd.f32 %v4377, %v4420
    %v4422 = vand.u32 %v3793, 4294901760
    %v4423 = vsub.f32 %v3793, %v4422
    %v4424 = vand.u32 %v4423, 4294901760
    %4425 = vmatmul.f32.gmra.mxu0 %v4424
    %v4426 = vpop.f32.mrf.mxu0
    %v4427 = vadd.f32 %v4382, %v4426
    %4428 = vdwg.mxu0
    %v4429 = vand.u32 %v3783, 4294901760
    %v4430 = vsub.f32 %v3783, %v4429
    %v4431 = vand.u32 %v4430, 4294901760
    %4432 = vmatpush.msra.mxu0 %v4431
    %v4433 = vand.u32 %v3782, 4294901760
    %v4434 = vsub.f32 %v3782, %v4433
    %v4435 = vand.u32 %v4434, 4294901760
    %4436 = vmatpush.msra.mxu0 %v4435
    %v4437 = vand.u32 %v3781, 4294901760
    %v4438 = vsub.f32 %v3781, %v4437
    %v4439 = vand.u32 %v4438, 4294901760
    %4440 = vmatpush.msra.mxu0 %v4439
    %v4441 = vand.u32 %v3780, 4294901760
    %v4442 = vsub.f32 %v3780, %v4441
    %v4443 = vand.u32 %v4442, 4294901760
    %4444 = vmatpush.msra.mxu0 %v4443
    %v4445 = vand.u32 %v3779, 4294901760
    %v4446 = vsub.f32 %v3779, %v4445
    %v4447 = vand.u32 %v4446, 4294901760
    %4448 = vmatpush.msra.mxu0 %v4447
    %v4449 = vand.u32 %v3778, 4294901760
    %v4450 = vsub.f32 %v3778, %v4449
    %v4451 = vand.u32 %v4450, 4294901760
    %4452 = vmatpush.msra.mxu0 %v4451
    %v4453 = vand.u32 %v3777, 4294901760
    %v4454 = vsub.f32 %v3777, %v4453
    %v4455 = vand.u32 %v4454, 4294901760
    %4456 = vmatpush.msra.mxu0 %v4455
    %v4457 = vand.u32 %v3776, 4294901760
    %v4458 = vsub.f32 %v3776, %v4457
    %v4459 = vand.u32 %v4458, 4294901760
    %4460 = vmatpush.msra.mxu0 %v4459
    %v4461 = vand.u32 %v3775, 4294901760
    %v4462 = vsub.f32 %v3775, %v4461
    %v4463 = vand.u32 %v4462, 4294901760
    %4464 = vmatpush.msra.mxu0 %v4463
    %v4465 = vand.u32 %v3774, 4294901760
    %v4466 = vsub.f32 %v3774, %v4465
    %v4467 = vand.u32 %v4466, 4294901760
    %4468 = vmatpush.msra.mxu0 %v4467
    %v4469 = vand.u32 %v3773, 4294901760
    %v4470 = vsub.f32 %v3773, %v4469
    %v4471 = vand.u32 %v4470, 4294901760
    %4472 = vmatpush.msra.mxu0 %v4471
    %v4473 = vand.u32 %v3772, 4294901760
    %v4474 = vsub.f32 %v3772, %v4473
    %v4475 = vand.u32 %v4474, 4294901760
    %4476 = vmatpush.msra.mxu0 %v4475
    %v4477 = vand.u32 %v3771, 4294901760
    %v4478 = vsub.f32 %v3771, %v4477
    %v4479 = vand.u32 %v4478, 4294901760
    %4480 = vmatpush.msra.mxu0 %v4479
    %v4481 = vand.u32 %v3770, 4294901760
    %v4482 = vsub.f32 %v3770, %v4481
    %v4483 = vand.u32 %v4482, 4294901760
    %4484 = vmatpush.msra.mxu0 %v4483
    %v4485 = vand.u32 %v3769, 4294901760
    %v4486 = vsub.f32 %v3769, %v4485
    %v4487 = vand.u32 %v4486, 4294901760
    %4488 = vmatpush.msra.mxu0 %v4487
    %v4489 = vand.u32 %v3768, 4294901760
    %v4490 = vsub.f32 %v3768, %v4489
    %v4491 = vand.u32 %v4490, 4294901760
    %4492 = vmatpush.msra.mxu0 %v4491
    %v4493 = vand.u32 %v3794, 4294901760
    %4494 = vmatmul.f32.gmra.mxu0 %v4493
    %v4495 = vpop.f32.mrf.mxu0
    %v4496 = vadd.f32 %v4421, %v4495
    %v4497 = vand.u32 %v3793, 4294901760
    %4498 = vmatmul.f32.gmra.mxu0 %v4497
    %v4499 = vpop.f32.mrf.mxu0
    %v4500 = vadd.f32 %v4427, %v4499
    %4501 = vdwg.mxu0
    %v4502 = vand.u32 %v3783, 4294901760
    %4503 = vmatpush.msra.mxu0 %v4502
    %v4504 = vand.u32 %v3782, 4294901760
    %4505 = vmatpush.msra.mxu0 %v4504
    %v4506 = vand.u32 %v3781, 4294901760
    %4507 = vmatpush.msra.mxu0 %v4506
    %v4508 = vand.u32 %v3780, 4294901760
    %4509 = vmatpush.msra.mxu0 %v4508
    %v4510 = vand.u32 %v3779, 4294901760
    %4511 = vmatpush.msra.mxu0 %v4510
    %v4512 = vand.u32 %v3778, 4294901760
    %4513 = vmatpush.msra.mxu0 %v4512
    %v4514 = vand.u32 %v3777, 4294901760
    %4515 = vmatpush.msra.mxu0 %v4514
    %v4516 = vand.u32 %v3776, 4294901760
    %4517 = vmatpush.msra.mxu0 %v4516
    %v4518 = vand.u32 %v3775, 4294901760
    %4519 = vmatpush.msra.mxu0 %v4518
    %v4520 = vand.u32 %v3774, 4294901760
    %4521 = vmatpush.msra.mxu0 %v4520
    %v4522 = vand.u32 %v3773, 4294901760
    %4523 = vmatpush.msra.mxu0 %v4522
    %v4524 = vand.u32 %v3772, 4294901760
    %4525 = vmatpush.msra.mxu0 %v4524
    %v4526 = vand.u32 %v3771, 4294901760
    %4527 = vmatpush.msra.mxu0 %v4526
    %v4528 = vand.u32 %v3770, 4294901760
    %4529 = vmatpush.msra.mxu0 %v4528
    %v4530 = vand.u32 %v3769, 4294901760
    %4531 = vmatpush.msra.mxu0 %v4530
    %v4532 = vand.u32 %v3768, 4294901760
    %4533 = vmatpush.msra.mxu0 %v4532
    %v4534 = vand.u32 %v3794, 4294901760
    %4535 = vmatmul.f32.gmra.mxu0 %v4534
    %v4536 = vpop.f32.mrf.mxu0
    %v4537 = vadd.f32 %v4496, %v4536
    %v4538 = vand.u32 %v3793, 4294901760
    %4539 = vmatmul.f32.gmra.mxu0 %v4538
    %v4540 = vpop.f32.mrf.mxu0
    %v4541 = vadd.f32 %v4500, %v4540
    %4542 = vdwg.mxu0
    %v4543 = vadd.f32 %v3745, %v4537
    %v4544 = vadd.f32 %v3749, %v4541
    %v4545 = vand.u32 %v2246, 4294901760
    %4546 = vmatpush.msra.mxu0 %v4545
    %v4547 = vand.u32 %v2245, 4294901760
    %4548 = vmatpush.msra.mxu0 %v4547
    %v4549 = vand.u32 %v2244, 4294901760
    %4550 = vmatpush.msra.mxu0 %v4549
    %v4551 = vand.u32 %v2243, 4294901760
    %4552 = vmatpush.msra.mxu0 %v4551
    %v4553 = vand.u32 %v2242, 4294901760
    %4554 = vmatpush.msra.mxu0 %v4553
    %v4555 = vand.u32 %v2241, 4294901760
    %4556 = vmatpush.msra.mxu0 %v4555
    %v4557 = vand.u32 %v2240, 4294901760
    %4558 = vmatpush.msra.mxu0 %v4557
    %v4559 = vand.u32 %v2239, 4294901760
    %4560 = vmatpush.msra.mxu0 %v4559
    %v4561 = vand.u32 %v2238, 4294901760
    %4562 = vmatpush.msra.mxu0 %v4561
    %v4563 = vand.u32 %v2237, 4294901760
    %4564 = vmatpush.msra.mxu0 %v4563
    %v4565 = vand.u32 %v2236, 4294901760
    %4566 = vmatpush.msra.mxu0 %v4565
    %v4567 = vand.u32 %v2235, 4294901760
    %4568 = vmatpush.msra.mxu0 %v4567
    %v4569 = vand.u32 %v2234, 4294901760
    %4570 = vmatpush.msra.mxu0 %v4569
    %v4571 = vand.u32 %v2233, 4294901760
    %4572 = vmatpush.msra.mxu0 %v4571
    %v4573 = vand.u32 %v2232, 4294901760
    %4574 = vmatpush.msra.mxu0 %v4573
    %v4575 = vand.u32 %v2231, 4294901760
    %4576 = vmatpush.msra.mxu0 %v4575
    %v4577 = vand.u32 %v3791, 4294901760
    %v4578 = vsub.f32 %v3791, %v4577
    %v4579 = vand.u32 %v4578, 4294901760
    %v4580 = vsub.f32 %v4578, %v4579
    %v4581 = vand.u32 %v4580, 4294901760
    %4582 = vmatmul.f32.gmra.mxu0 %v4581
    %v4583 = vpop.f32.mrf.mxu0
    %v4584 = vadd.f32 0.0, %v4583
    %v4585 = vand.u32 %v3790, 4294901760
    %v4586 = vsub.f32 %v3790, %v4585
    %v4587 = vand.u32 %v4586, 4294901760
    %v4588 = vsub.f32 %v4586, %v4587
    %v4589 = vand.u32 %v4588, 4294901760
    %4590 = vmatmul.f32.gmra.mxu0 %v4589
    %v4591 = vpop.f32.mrf.mxu0
    %v4592 = vadd.f32 0.0, %v4591
    %4593 = vdwg.mxu0
    %v4594 = vand.u32 %v2246, 4294901760
    %v4595 = vsub.f32 %v2246, %v4594
    %v4596 = vand.u32 %v4595, 4294901760
    %v4597 = vsub.f32 %v4595, %v4596
    %v4598 = vand.u32 %v4597, 4294901760
    %4599 = vmatpush.msra.mxu0 %v4598
    %v4600 = vand.u32 %v2245, 4294901760
    %v4601 = vsub.f32 %v2245, %v4600
    %v4602 = vand.u32 %v4601, 4294901760
    %v4603 = vsub.f32 %v4601, %v4602
    %v4604 = vand.u32 %v4603, 4294901760
    %4605 = vmatpush.msra.mxu0 %v4604
    %v4606 = vand.u32 %v2244, 4294901760
    %v4607 = vsub.f32 %v2244, %v4606
    %v4608 = vand.u32 %v4607, 4294901760
    %v4609 = vsub.f32 %v4607, %v4608
    %v4610 = vand.u32 %v4609, 4294901760
    %4611 = vmatpush.msra.mxu0 %v4610
    %v4612 = vand.u32 %v2243, 4294901760
    %v4613 = vsub.f32 %v2243, %v4612
    %v4614 = vand.u32 %v4613, 4294901760
    %v4615 = vsub.f32 %v4613, %v4614
    %v4616 = vand.u32 %v4615, 4294901760
    %4617 = vmatpush.msra.mxu0 %v4616
    %v4618 = vand.u32 %v2242, 4294901760
    %v4619 = vsub.f32 %v2242, %v4618
    %v4620 = vand.u32 %v4619, 4294901760
    %v4621 = vsub.f32 %v4619, %v4620
    %v4622 = vand.u32 %v4621, 4294901760
    %4623 = vmatpush.msra.mxu0 %v4622
    %v4624 = vand.u32 %v2241, 4294901760
    %v4625 = vsub.f32 %v2241, %v4624
    %v4626 = vand.u32 %v4625, 4294901760
    %v4627 = vsub.f32 %v4625, %v4626
    %v4628 = vand.u32 %v4627, 4294901760
    %4629 = vmatpush.msra.mxu0 %v4628
    %v4630 = vand.u32 %v2240, 4294901760
    %v4631 = vsub.f32 %v2240, %v4630
    %v4632 = vand.u32 %v4631, 4294901760
    %v4633 = vsub.f32 %v4631, %v4632
    %v4634 = vand.u32 %v4633, 4294901760
    %4635 = vmatpush.msra.mxu0 %v4634
    %v4636 = vand.u32 %v2239, 4294901760
    %v4637 = vsub.f32 %v2239, %v4636
    %v4638 = vand.u32 %v4637, 4294901760
    %v4639 = vsub.f32 %v4637, %v4638
    %v4640 = vand.u32 %v4639, 4294901760
    %4641 = vmatpush.msra.mxu0 %v4640
    %v4642 = vand.u32 %v2238, 4294901760
    %v4643 = vsub.f32 %v2238, %v4642
    %v4644 = vand.u32 %v4643, 4294901760
    %v4645 = vsub.f32 %v4643, %v4644
    %v4646 = vand.u32 %v4645, 4294901760
    %4647 = vmatpush.msra.mxu0 %v4646
    %v4648 = vand.u32 %v2237, 4294901760
    %v4649 = vsub.f32 %v2237, %v4648
    %v4650 = vand.u32 %v4649, 4294901760
    %v4651 = vsub.f32 %v4649, %v4650
    %v4652 = vand.u32 %v4651, 4294901760
    %4653 = vmatpush.msra.mxu0 %v4652
    %v4654 = vand.u32 %v2236, 4294901760
    %v4655 = vsub.f32 %v2236, %v4654
    %v4656 = vand.u32 %v4655, 4294901760
    %v4657 = vsub.f32 %v4655, %v4656
    %v4658 = vand.u32 %v4657, 4294901760
    %4659 = vmatpush.msra.mxu0 %v4658
    %v4660 = vand.u32 %v2235, 4294901760
    %v4661 = vsub.f32 %v2235, %v4660
    %v4662 = vand.u32 %v4661, 4294901760
    %v4663 = vsub.f32 %v4661, %v4662
    %v4664 = vand.u32 %v4663, 4294901760
    %4665 = vmatpush.msra.mxu0 %v4664
    %v4666 = vand.u32 %v2234, 4294901760
    %v4667 = vsub.f32 %v2234, %v4666
    %v4668 = vand.u32 %v4667, 4294901760
    %v4669 = vsub.f32 %v4667, %v4668
    %v4670 = vand.u32 %v4669, 4294901760
    %4671 = vmatpush.msra.mxu0 %v4670
    %v4672 = vand.u32 %v2233, 4294901760
    %v4673 = vsub.f32 %v2233, %v4672
    %v4674 = vand.u32 %v4673, 4294901760
    %v4675 = vsub.f32 %v4673, %v4674
    %v4676 = vand.u32 %v4675, 4294901760
    %4677 = vmatpush.msra.mxu0 %v4676
    %v4678 = vand.u32 %v2232, 4294901760
    %v4679 = vsub.f32 %v2232, %v4678
    %v4680 = vand.u32 %v4679, 4294901760
    %v4681 = vsub.f32 %v4679, %v4680
    %v4682 = vand.u32 %v4681, 4294901760
    %4683 = vmatpush.msra.mxu0 %v4682
    %v4684 = vand.u32 %v2231, 4294901760
    %v4685 = vsub.f32 %v2231, %v4684
    %v4686 = vand.u32 %v4685, 4294901760
    %v4687 = vsub.f32 %v4685, %v4686
    %v4688 = vand.u32 %v4687, 4294901760
    %4689 = vmatpush.msra.mxu0 %v4688
    %v4690 = vand.u32 %v3791, 4294901760
    %4691 = vmatmul.f32.gmra.mxu0 %v4690
    %v4692 = vpop.f32.mrf.mxu0
    %v4693 = vadd.f32 %v4584, %v4692
    %v4694 = vand.u32 %v3790, 4294901760
    %4695 = vmatmul.f32.gmra.mxu0 %v4694
    %v4696 = vpop.f32.mrf.mxu0
    %v4697 = vadd.f32 %v4592, %v4696
    %4698 = vdwg.mxu0
    %v4699 = vand.u32 %v2246, 4294901760
    %v4700 = vsub.f32 %v2246, %v4699
    %4701 = vmatpush.msra.mxu0 %v4700
    %v4702 = vand.u32 %v2245, 4294901760
    %v4703 = vsub.f32 %v2245, %v4702
    %4704 = vmatpush.msra.mxu0 %v4703
    %v4705 = vand.u32 %v2244, 4294901760
    %v4706 = vsub.f32 %v2244, %v4705
    %4707 = vmatpush.msra.mxu0 %v4706
    %v4708 = vand.u32 %v2243, 4294901760
    %v4709 = vsub.f32 %v2243, %v4708
    %4710 = vmatpush.msra.mxu0 %v4709
    %v4711 = vand.u32 %v2242, 4294901760
    %v4712 = vsub.f32 %v2242, %v4711
    %4713 = vmatpush.msra.mxu0 %v4712
    %v4714 = vand.u32 %v2241, 4294901760
    %v4715 = vsub.f32 %v2241, %v4714
    %4716 = vmatpush.msra.mxu0 %v4715
    %v4717 = vand.u32 %v2240, 4294901760
    %v4718 = vsub.f32 %v2240, %v4717
    %4719 = vmatpush.msra.mxu0 %v4718
    %v4720 = vand.u32 %v2239, 4294901760
    %v4721 = vsub.f32 %v2239, %v4720
    %4722 = vmatpush.msra.mxu0 %v4721
    %v4723 = vand.u32 %v2238, 4294901760
    %v4724 = vsub.f32 %v2238, %v4723
    %4725 = vmatpush.msra.mxu0 %v4724
    %v4726 = vand.u32 %v2237, 4294901760
    %v4727 = vsub.f32 %v2237, %v4726
    %4728 = vmatpush.msra.mxu0 %v4727
    %v4729 = vand.u32 %v2236, 4294901760
    %v4730 = vsub.f32 %v2236, %v4729
    %4731 = vmatpush.msra.mxu0 %v4730
    %v4732 = vand.u32 %v2235, 4294901760
    %v4733 = vsub.f32 %v2235, %v4732
    %4734 = vmatpush.msra.mxu0 %v4733
    %v4735 = vand.u32 %v2234, 4294901760
    %v4736 = vsub.f32 %v2234, %v4735
    %4737 = vmatpush.msra.mxu0 %v4736
    %v4738 = vand.u32 %v2233, 4294901760
    %v4739 = vsub.f32 %v2233, %v4738
    %4740 = vmatpush.msra.mxu0 %v4739
    %v4741 = vand.u32 %v2232, 4294901760
    %v4742 = vsub.f32 %v2232, %v4741
    %4743 = vmatpush.msra.mxu0 %v4742
    %v4744 = vand.u32 %v2231, 4294901760
    %v4745 = vsub.f32 %v2231, %v4744
    %4746 = vmatpush.msra.mxu0 %v4745
    %v4747 = vand.u32 %v3791, 4294901760
    %v4748 = vsub.f32 %v3791, %v4747
    %4749 = vmatmul.f32.gmra.mxu0 %v4748
    %v4750 = vpop.f32.mrf.mxu0
    %v4751 = vadd.f32 %v4693, %v4750
    %v4752 = vand.u32 %v3790, 4294901760
    %v4753 = vsub.f32 %v3790, %v4752
    %4754 = vmatmul.f32.gmra.mxu0 %v4753
    %v4755 = vpop.f32.mrf.mxu0
    %v4756 = vadd.f32 %v4697, %v4755
    %4757 = vdwg.mxu0
    %v4758 = vand.u32 %v2246, 4294901760
    %4759 = vmatpush.msra.mxu0 %v4758
    %v4760 = vand.u32 %v2245, 4294901760
    %4761 = vmatpush.msra.mxu0 %v4760
    %v4762 = vand.u32 %v2244, 4294901760
    %4763 = vmatpush.msra.mxu0 %v4762
    %v4764 = vand.u32 %v2243, 4294901760
    %4765 = vmatpush.msra.mxu0 %v4764
    %v4766 = vand.u32 %v2242, 4294901760
    %4767 = vmatpush.msra.mxu0 %v4766
    %v4768 = vand.u32 %v2241, 4294901760
    %4769 = vmatpush.msra.mxu0 %v4768
    %v4770 = vand.u32 %v2240, 4294901760
    %4771 = vmatpush.msra.mxu0 %v4770
    %v4772 = vand.u32 %v2239, 4294901760
    %4773 = vmatpush.msra.mxu0 %v4772
    %v4774 = vand.u32 %v2238, 4294901760
    %4775 = vmatpush.msra.mxu0 %v4774
    %v4776 = vand.u32 %v2237, 4294901760
    %4777 = vmatpush.msra.mxu0 %v4776
    %v4778 = vand.u32 %v2236, 4294901760
    %4779 = vmatpush.msra.mxu0 %v4778
    %v4780 = vand.u32 %v2235, 4294901760
    %4781 = vmatpush.msra.mxu0 %v4780
    %v4782 = vand.u32 %v2234, 4294901760
    %4783 = vmatpush.msra.mxu0 %v4782
    %v4784 = vand.u32 %v2233, 4294901760
    %4785 = vmatpush.msra.mxu0 %v4784
    %v4786 = vand.u32 %v2232, 4294901760
    %4787 = vmatpush.msra.mxu0 %v4786
    %v4788 = vand.u32 %v2231, 4294901760
    %4789 = vmatpush.msra.mxu0 %v4788
    %v4790 = vand.u32 %v3791, 4294901760
    %v4791 = vsub.f32 %v3791, %v4790
    %v4792 = vand.u32 %v4791, 4294901760
    %4793 = vmatmul.f32.gmra.mxu0 %v4792
    %v4794 = vpop.f32.mrf.mxu0
    %v4795 = vadd.f32 %v4751, %v4794
    %v4796 = vand.u32 %v3790, 4294901760
    %v4797 = vsub.f32 %v3790, %v4796
    %v4798 = vand.u32 %v4797, 4294901760
    %4799 = vmatmul.f32.gmra.mxu0 %v4798
    %v4800 = vpop.f32.mrf.mxu0
    %v4801 = vadd.f32 %v4756, %v4800
    %4802 = vdwg.mxu0
    %v4803 = vand.u32 %v2246, 4294901760
    %v4804 = vsub.f32 %v2246, %v4803
    %v4805 = vand.u32 %v4804, 4294901760
    %4806 = vmatpush.msra.mxu0 %v4805
    %v4807 = vand.u32 %v2245, 4294901760
    %v4808 = vsub.f32 %v2245, %v4807
    %v4809 = vand.u32 %v4808, 4294901760
    %4810 = vmatpush.msra.mxu0 %v4809
    %v4811 = vand.u32 %v2244, 4294901760
    %v4812 = vsub.f32 %v2244, %v4811
    %v4813 = vand.u32 %v4812, 4294901760
    %4814 = vmatpush.msra.mxu0 %v4813
    %v4815 = vand.u32 %v2243, 4294901760
    %v4816 = vsub.f32 %v2243, %v4815
    %v4817 = vand.u32 %v4816, 4294901760
    %4818 = vmatpush.msra.mxu0 %v4817
    %v4819 = vand.u32 %v2242, 4294901760
    %v4820 = vsub.f32 %v2242, %v4819
    %v4821 = vand.u32 %v4820, 4294901760
    %4822 = vmatpush.msra.mxu0 %v4821
    %v4823 = vand.u32 %v2241, 4294901760
    %v4824 = vsub.f32 %v2241, %v4823
    %v4825 = vand.u32 %v4824, 4294901760
    %4826 = vmatpush.msra.mxu0 %v4825
    %v4827 = vand.u32 %v2240, 4294901760
    %v4828 = vsub.f32 %v2240, %v4827
    %v4829 = vand.u32 %v4828, 4294901760
    %4830 = vmatpush.msra.mxu0 %v4829
    %v4831 = vand.u32 %v2239, 4294901760
    %v4832 = vsub.f32 %v2239, %v4831
    %v4833 = vand.u32 %v4832, 4294901760
    %4834 = vmatpush.msra.mxu0 %v4833
    %v4835 = vand.u32 %v2238, 4294901760
    %v4836 = vsub.f32 %v2238, %v4835
    %v4837 = vand.u32 %v4836, 4294901760
    %4838 = vmatpush.msra.mxu0 %v4837
    %v4839 = vand.u32 %v2237, 4294901760
    %v4840 = vsub.f32 %v2237, %v4839
    %v4841 = vand.u32 %v4840, 4294901760
    %4842 = vmatpush.msra.mxu0 %v4841
    %v4843 = vand.u32 %v2236, 4294901760
    %v4844 = vsub.f32 %v2236, %v4843
    %v4845 = vand.u32 %v4844, 4294901760
    %4846 = vmatpush.msra.mxu0 %v4845
    %v4847 = vand.u32 %v2235, 4294901760
    %v4848 = vsub.f32 %v2235, %v4847
    %v4849 = vand.u32 %v4848, 4294901760
    %4850 = vmatpush.msra.mxu0 %v4849
    %v4851 = vand.u32 %v2234, 4294901760
    %v4852 = vsub.f32 %v2234, %v4851
    %v4853 = vand.u32 %v4852, 4294901760
    %4854 = vmatpush.msra.mxu0 %v4853
    %v4855 = vand.u32 %v2233, 4294901760
    %v4856 = vsub.f32 %v2233, %v4855
    %v4857 = vand.u32 %v4856, 4294901760
    %4858 = vmatpush.msra.mxu0 %v4857
    %v4859 = vand.u32 %v2232, 4294901760
    %v4860 = vsub.f32 %v2232, %v4859
    %v4861 = vand.u32 %v4860, 4294901760
    %4862 = vmatpush.msra.mxu0 %v4861
    %v4863 = vand.u32 %v2231, 4294901760
    %v4864 = vsub.f32 %v2231, %v4863
    %v4865 = vand.u32 %v4864, 4294901760
    %4866 = vmatpush.msra.mxu0 %v4865
    %v4867 = vand.u32 %v3791, 4294901760
    %4868 = vmatmul.f32.gmra.mxu0 %v4867
    %v4869 = vpop.f32.mrf.mxu0
    %v4870 = vadd.f32 %v4795, %v4869
    %v4871 = vand.u32 %v3790, 4294901760
    %4872 = vmatmul.f32.gmra.mxu0 %v4871
    %v4873 = vpop.f32.mrf.mxu0
    %v4874 = vadd.f32 %v4801, %v4873
    %4875 = vdwg.mxu0
    %v4876 = vand.u32 %v2246, 4294901760
    %4877 = vmatpush.msra.mxu0 %v4876
    %v4878 = vand.u32 %v2245, 4294901760
    %4879 = vmatpush.msra.mxu0 %v4878
    %v4880 = vand.u32 %v2244, 4294901760
    %4881 = vmatpush.msra.mxu0 %v4880
    %v4882 = vand.u32 %v2243, 4294901760
    %4883 = vmatpush.msra.mxu0 %v4882
    %v4884 = vand.u32 %v2242, 4294901760
    %4885 = vmatpush.msra.mxu0 %v4884
    %v4886 = vand.u32 %v2241, 4294901760
    %4887 = vmatpush.msra.mxu0 %v4886
    %v4888 = vand.u32 %v2240, 4294901760
    %4889 = vmatpush.msra.mxu0 %v4888
    %v4890 = vand.u32 %v2239, 4294901760
    %4891 = vmatpush.msra.mxu0 %v4890
    %v4892 = vand.u32 %v2238, 4294901760
    %4893 = vmatpush.msra.mxu0 %v4892
    %v4894 = vand.u32 %v2237, 4294901760
    %4895 = vmatpush.msra.mxu0 %v4894
    %v4896 = vand.u32 %v2236, 4294901760
    %4897 = vmatpush.msra.mxu0 %v4896
    %v4898 = vand.u32 %v2235, 4294901760
    %4899 = vmatpush.msra.mxu0 %v4898
    %v4900 = vand.u32 %v2234, 4294901760
    %4901 = vmatpush.msra.mxu0 %v4900
    %v4902 = vand.u32 %v2233, 4294901760
    %4903 = vmatpush.msra.mxu0 %v4902
    %v4904 = vand.u32 %v2232, 4294901760
    %4905 = vmatpush.msra.mxu0 %v4904
    %v4906 = vand.u32 %v2231, 4294901760
    %4907 = vmatpush.msra.mxu0 %v4906
    %v4908 = vand.u32 %v3791, 4294901760
    %4909 = vmatmul.f32.gmra.mxu0 %v4908
    %v4910 = vpop.f32.mrf.mxu0
    %v4911 = vadd.f32 %v4870, %v4910
    %v4912 = vand.u32 %v3790, 4294901760
    %4913 = vmatmul.f32.gmra.mxu0 %v4912
    %v4914 = vpop.f32.mrf.mxu0
    %v4915 = vadd.f32 %v4874, %v4914
    %4916 = vdwg.mxu0
    %v4917 = vand.u32 %v2262, 4294901760
    %4918 = vmatpush.msra.mxu0 %v4917
    %v4919 = vand.u32 %v2261, 4294901760
    %4920 = vmatpush.msra.mxu0 %v4919
    %v4921 = vand.u32 %v2260, 4294901760
    %4922 = vmatpush.msra.mxu0 %v4921
    %v4923 = vand.u32 %v2259, 4294901760
    %4924 = vmatpush.msra.mxu0 %v4923
    %v4925 = vand.u32 %v2258, 4294901760
    %4926 = vmatpush.msra.mxu0 %v4925
    %v4927 = vand.u32 %v2257, 4294901760
    %4928 = vmatpush.msra.mxu0 %v4927
    %v4929 = vand.u32 %v2256, 4294901760
    %4930 = vmatpush.msra.mxu0 %v4929
    %v4931 = vand.u32 %v2255, 4294901760
    %4932 = vmatpush.msra.mxu0 %v4931
    %v4933 = vand.u32 %v2254, 4294901760
    %4934 = vmatpush.msra.mxu0 %v4933
    %v4935 = vand.u32 %v2253, 4294901760
    %4936 = vmatpush.msra.mxu0 %v4935
    %v4937 = vand.u32 %v2252, 4294901760
    %4938 = vmatpush.msra.mxu0 %v4937
    %v4939 = vand.u32 %v2251, 4294901760
    %4940 = vmatpush.msra.mxu0 %v4939
    %v4941 = vand.u32 %v2250, 4294901760
    %4942 = vmatpush.msra.mxu0 %v4941
    %v4943 = vand.u32 %v2249, 4294901760
    %4944 = vmatpush.msra.mxu0 %v4943
    %v4945 = vand.u32 %v2248, 4294901760
    %4946 = vmatpush.msra.mxu0 %v4945
    %v4947 = vand.u32 %v2247, 4294901760
    %4948 = vmatpush.msra.mxu0 %v4947
    %v4949 = vand.u32 %v3794, 4294901760
    %v4950 = vsub.f32 %v3794, %v4949
    %v4951 = vand.u32 %v4950, 4294901760
    %v4952 = vsub.f32 %v4950, %v4951
    %v4953 = vand.u32 %v4952, 4294901760
    %4954 = vmatmul.f32.gmra.mxu0 %v4953
    %v4955 = vpop.f32.mrf.mxu0
    %v4956 = vadd.f32 %v4911, %v4955
    %v4957 = vand.u32 %v3793, 4294901760
    %v4958 = vsub.f32 %v3793, %v4957
    %v4959 = vand.u32 %v4958, 4294901760
    %v4960 = vsub.f32 %v4958, %v4959
    %v4961 = vand.u32 %v4960, 4294901760
    %4962 = vmatmul.f32.gmra.mxu0 %v4961
    %v4963 = vpop.f32.mrf.mxu0
    %v4964 = vadd.f32 %v4915, %v4963
    %4965 = vdwg.mxu0
    %v4966 = vand.u32 %v2262, 4294901760
    %v4967 = vsub.f32 %v2262, %v4966
    %v4968 = vand.u32 %v4967, 4294901760
    %v4969 = vsub.f32 %v4967, %v4968
    %v4970 = vand.u32 %v4969, 4294901760
    %4971 = vmatpush.msra.mxu0 %v4970
    %v4972 = vand.u32 %v2261, 4294901760
    %v4973 = vsub.f32 %v2261, %v4972
    %v4974 = vand.u32 %v4973, 4294901760
    %v4975 = vsub.f32 %v4973, %v4974
    %v4976 = vand.u32 %v4975, 4294901760
    %4977 = vmatpush.msra.mxu0 %v4976
    %v4978 = vand.u32 %v2260, 4294901760
    %v4979 = vsub.f32 %v2260, %v4978
    %v4980 = vand.u32 %v4979, 4294901760
    %v4981 = vsub.f32 %v4979, %v4980
    %v4982 = vand.u32 %v4981, 4294901760
    %4983 = vmatpush.msra.mxu0 %v4982
    %v4984 = vand.u32 %v2259, 4294901760
    %v4985 = vsub.f32 %v2259, %v4984
    %v4986 = vand.u32 %v4985, 4294901760
    %v4987 = vsub.f32 %v4985, %v4986
    %v4988 = vand.u32 %v4987, 4294901760
    %4989 = vmatpush.msra.mxu0 %v4988
    %v4990 = vand.u32 %v2258, 4294901760
    %v4991 = vsub.f32 %v2258, %v4990
    %v4992 = vand.u32 %v4991, 4294901760
    %v4993 = vsub.f32 %v4991, %v4992
    %v4994 = vand.u32 %v4993, 4294901760
    %4995 = vmatpush.msra.mxu0 %v4994
    %v4996 = vand.u32 %v2257, 4294901760
    %v4997 = vsub.f32 %v2257, %v4996
    %v4998 = vand.u32 %v4997, 4294901760
    %v4999 = vsub.f32 %v4997, %v4998
    %v5000 = vand.u32 %v4999, 4294901760
    %5001 = vmatpush.msra.mxu0 %v5000
    %v5002 = vand.u32 %v2256, 4294901760
    %v5003 = vsub.f32 %v2256, %v5002
    %v5004 = vand.u32 %v5003, 4294901760
    %v5005 = vsub.f32 %v5003, %v5004
    %v5006 = vand.u32 %v5005, 4294901760
    %5007 = vmatpush.msra.mxu0 %v5006
    %v5008 = vand.u32 %v2255, 4294901760
    %v5009 = vsub.f32 %v2255, %v5008
    %v5010 = vand.u32 %v5009, 4294901760
    %v5011 = vsub.f32 %v5009, %v5010
    %v5012 = vand.u32 %v5011, 4294901760
    %5013 = vmatpush.msra.mxu0 %v5012
    %v5014 = vand.u32 %v2254, 4294901760
    %v5015 = vsub.f32 %v2254, %v5014
    %v5016 = vand.u32 %v5015, 4294901760
    %v5017 = vsub.f32 %v5015, %v5016
    %v5018 = vand.u32 %v5017, 4294901760
    %5019 = vmatpush.msra.mxu0 %v5018
    %v5020 = vand.u32 %v2253, 4294901760
    %v5021 = vsub.f32 %v2253, %v5020
    %v5022 = vand.u32 %v5021, 4294901760
    %v5023 = vsub.f32 %v5021, %v5022
    %v5024 = vand.u32 %v5023, 4294901760
    %5025 = vmatpush.msra.mxu0 %v5024
    %v5026 = vand.u32 %v2252, 4294901760
    %v5027 = vsub.f32 %v2252, %v5026
    %v5028 = vand.u32 %v5027, 4294901760
    %v5029 = vsub.f32 %v5027, %v5028
    %v5030 = vand.u32 %v5029, 4294901760
    %5031 = vmatpush.msra.mxu0 %v5030
    %v5032 = vand.u32 %v2251, 4294901760
    %v5033 = vsub.f32 %v2251, %v5032
    %v5034 = vand.u32 %v5033, 4294901760
    %v5035 = vsub.f32 %v5033, %v5034
    %v5036 = vand.u32 %v5035, 4294901760
    %5037 = vmatpush.msra.mxu0 %v5036
    %v5038 = vand.u32 %v2250, 4294901760
    %v5039 = vsub.f32 %v2250, %v5038
    %v5040 = vand.u32 %v5039, 4294901760
    %v5041 = vsub.f32 %v5039, %v5040
    %v5042 = vand.u32 %v5041, 4294901760
    %5043 = vmatpush.msra.mxu0 %v5042
    %v5044 = vand.u32 %v2249, 4294901760
    %v5045 = vsub.f32 %v2249, %v5044
    %v5046 = vand.u32 %v5045, 4294901760
    %v5047 = vsub.f32 %v5045, %v5046
    %v5048 = vand.u32 %v5047, 4294901760
    %5049 = vmatpush.msra.mxu0 %v5048
    %v5050 = vand.u32 %v2248, 4294901760
    %v5051 = vsub.f32 %v2248, %v5050
    %v5052 = vand.u32 %v5051, 4294901760
    %v5053 = vsub.f32 %v5051, %v5052
    %v5054 = vand.u32 %v5053, 4294901760
    %5055 = vmatpush.msra.mxu0 %v5054
    %v5056 = vand.u32 %v2247, 4294901760
    %v5057 = vsub.f32 %v2247, %v5056
    %v5058 = vand.u32 %v5057, 4294901760
    %v5059 = vsub.f32 %v5057, %v5058
    %v5060 = vand.u32 %v5059, 4294901760
    %5061 = vmatpush.msra.mxu0 %v5060
    %v5062 = vand.u32 %v3794, 4294901760
    %5063 = vmatmul.f32.gmra.mxu0 %v5062
    %v5064 = vpop.f32.mrf.mxu0
    %v5065 = vadd.f32 %v4956, %v5064
    %v5066 = vand.u32 %v3793, 4294901760
    %5067 = vmatmul.f32.gmra.mxu0 %v5066
    %v5068 = vpop.f32.mrf.mxu0
    %v5069 = vadd.f32 %v4964, %v5068
    %5070 = vdwg.mxu0
    %v5071 = vand.u32 %v2262, 4294901760
    %v5072 = vsub.f32 %v2262, %v5071
    %5073 = vmatpush.msra.mxu0 %v5072
    %v5074 = vand.u32 %v2261, 4294901760
    %v5075 = vsub.f32 %v2261, %v5074
    %5076 = vmatpush.msra.mxu0 %v5075
    %v5077 = vand.u32 %v2260, 4294901760
    %v5078 = vsub.f32 %v2260, %v5077
    %5079 = vmatpush.msra.mxu0 %v5078
    %v5080 = vand.u32 %v2259, 4294901760
    %v5081 = vsub.f32 %v2259, %v5080
    %5082 = vmatpush.msra.mxu0 %v5081
    %v5083 = vand.u32 %v2258, 4294901760
    %v5084 = vsub.f32 %v2258, %v5083
    %5085 = vmatpush.msra.mxu0 %v5084
    %v5086 = vand.u32 %v2257, 4294901760
    %v5087 = vsub.f32 %v2257, %v5086
    %5088 = vmatpush.msra.mxu0 %v5087
    %v5089 = vand.u32 %v2256, 4294901760
    %v5090 = vsub.f32 %v2256, %v5089
    %5091 = vmatpush.msra.mxu0 %v5090
    %v5092 = vand.u32 %v2255, 4294901760
    %v5093 = vsub.f32 %v2255, %v5092
    %5094 = vmatpush.msra.mxu0 %v5093
    %v5095 = vand.u32 %v2254, 4294901760
    %v5096 = vsub.f32 %v2254, %v5095
    %5097 = vmatpush.msra.mxu0 %v5096
    %v5098 = vand.u32 %v2253, 4294901760
    %v5099 = vsub.f32 %v2253, %v5098
    %5100 = vmatpush.msra.mxu0 %v5099
    %v5101 = vand.u32 %v2252, 4294901760
    %v5102 = vsub.f32 %v2252, %v5101
    %5103 = vmatpush.msra.mxu0 %v5102
    %v5104 = vand.u32 %v2251, 4294901760
    %v5105 = vsub.f32 %v2251, %v5104
    %5106 = vmatpush.msra.mxu0 %v5105
    %v5107 = vand.u32 %v2250, 4294901760
    %v5108 = vsub.f32 %v2250, %v5107
    %5109 = vmatpush.msra.mxu0 %v5108
    %v5110 = vand.u32 %v2249, 4294901760
    %v5111 = vsub.f32 %v2249, %v5110
    %5112 = vmatpush.msra.mxu0 %v5111
    %v5113 = vand.u32 %v2248, 4294901760
    %v5114 = vsub.f32 %v2248, %v5113
    %5115 = vmatpush.msra.mxu0 %v5114
    %v5116 = vand.u32 %v2247, 4294901760
    %v5117 = vsub.f32 %v2247, %v5116
    %5118 = vmatpush.msra.mxu0 %v5117
    %v5119 = vand.u32 %v3794, 4294901760
    %v5120 = vsub.f32 %v3794, %v5119
    %5121 = vmatmul.f32.gmra.mxu0 %v5120
    %v5122 = vpop.f32.mrf.mxu0
    %v5123 = vadd.f32 %v5065, %v5122
    %v5124 = vand.u32 %v3793, 4294901760
    %v5125 = vsub.f32 %v3793, %v5124
    %5126 = vmatmul.f32.gmra.mxu0 %v5125
    %v5127 = vpop.f32.mrf.mxu0
    %v5128 = vadd.f32 %v5069, %v5127
    %5129 = vdwg.mxu0
    %v5130 = vand.u32 %v2262, 4294901760
    %5131 = vmatpush.msra.mxu0 %v5130
    %v5132 = vand.u32 %v2261, 4294901760
    %5133 = vmatpush.msra.mxu0 %v5132
    %v5134 = vand.u32 %v2260, 4294901760
    %5135 = vmatpush.msra.mxu0 %v5134
    %v5136 = vand.u32 %v2259, 4294901760
    %5137 = vmatpush.msra.mxu0 %v5136
    %v5138 = vand.u32 %v2258, 4294901760
    %5139 = vmatpush.msra.mxu0 %v5138
    %v5140 = vand.u32 %v2257, 4294901760
    %5141 = vmatpush.msra.mxu0 %v5140
    %v5142 = vand.u32 %v2256, 4294901760
    %5143 = vmatpush.msra.mxu0 %v5142
    %v5144 = vand.u32 %v2255, 4294901760
    %5145 = vmatpush.msra.mxu0 %v5144
    %v5146 = vand.u32 %v2254, 4294901760
    %5147 = vmatpush.msra.mxu0 %v5146
    %v5148 = vand.u32 %v2253, 4294901760
    %5149 = vmatpush.msra.mxu0 %v5148
    %v5150 = vand.u32 %v2252, 4294901760
    %5151 = vmatpush.msra.mxu0 %v5150
    %v5152 = vand.u32 %v2251, 4294901760
    %5153 = vmatpush.msra.mxu0 %v5152
    %v5154 = vand.u32 %v2250, 4294901760
    %5155 = vmatpush.msra.mxu0 %v5154
    %v5156 = vand.u32 %v2249, 4294901760
    %5157 = vmatpush.msra.mxu0 %v5156
    %v5158 = vand.u32 %v2248, 4294901760
    %5159 = vmatpush.msra.mxu0 %v5158
    %v5160 = vand.u32 %v2247, 4294901760
    %5161 = vmatpush.msra.mxu0 %v5160
    %v5162 = vand.u32 %v3794, 4294901760
    %v5163 = vsub.f32 %v3794, %v5162
    %v5164 = vand.u32 %v5163, 4294901760
    %5165 = vmatmul.f32.gmra.mxu0 %v5164
    %v5166 = vpop.f32.mrf.mxu0
    %v5167 = vadd.f32 %v5123, %v5166
    %v5168 = vand.u32 %v3793, 4294901760
    %v5169 = vsub.f32 %v3793, %v5168
    %v5170 = vand.u32 %v5169, 4294901760
    %5171 = vmatmul.f32.gmra.mxu0 %v5170
    %v5172 = vpop.f32.mrf.mxu0
    %v5173 = vadd.f32 %v5128, %v5172
    %5174 = vdwg.mxu0
    %v5175 = vand.u32 %v2262, 4294901760
    %v5176 = vsub.f32 %v2262, %v5175
    %v5177 = vand.u32 %v5176, 4294901760
    %5178 = vmatpush.msra.mxu0 %v5177
    %v5179 = vand.u32 %v2261, 4294901760
    %v5180 = vsub.f32 %v2261, %v5179
    %v5181 = vand.u32 %v5180, 4294901760
    %5182 = vmatpush.msra.mxu0 %v5181
    %v5183 = vand.u32 %v2260, 4294901760
    %v5184 = vsub.f32 %v2260, %v5183
    %v5185 = vand.u32 %v5184, 4294901760
    %5186 = vmatpush.msra.mxu0 %v5185
    %v5187 = vand.u32 %v2259, 4294901760
    %v5188 = vsub.f32 %v2259, %v5187
    %v5189 = vand.u32 %v5188, 4294901760
    %5190 = vmatpush.msra.mxu0 %v5189
    %v5191 = vand.u32 %v2258, 4294901760
    %v5192 = vsub.f32 %v2258, %v5191
    %v5193 = vand.u32 %v5192, 4294901760
    %5194 = vmatpush.msra.mxu0 %v5193
    %v5195 = vand.u32 %v2257, 4294901760
    %v5196 = vsub.f32 %v2257, %v5195
    %v5197 = vand.u32 %v5196, 4294901760
    %5198 = vmatpush.msra.mxu0 %v5197
    %v5199 = vand.u32 %v2256, 4294901760
    %v5200 = vsub.f32 %v2256, %v5199
    %v5201 = vand.u32 %v5200, 4294901760
    %5202 = vmatpush.msra.mxu0 %v5201
    %v5203 = vand.u32 %v2255, 4294901760
    %v5204 = vsub.f32 %v2255, %v5203
    %v5205 = vand.u32 %v5204, 4294901760
    %5206 = vmatpush.msra.mxu0 %v5205
    %v5207 = vand.u32 %v2254, 4294901760
    %v5208 = vsub.f32 %v2254, %v5207
    %v5209 = vand.u32 %v5208, 4294901760
    %5210 = vmatpush.msra.mxu0 %v5209
    %v5211 = vand.u32 %v2253, 4294901760
    %v5212 = vsub.f32 %v2253, %v5211
    %v5213 = vand.u32 %v5212, 4294901760
    %5214 = vmatpush.msra.mxu0 %v5213
    %v5215 = vand.u32 %v2252, 4294901760
    %v5216 = vsub.f32 %v2252, %v5215
    %v5217 = vand.u32 %v5216, 4294901760
    %5218 = vmatpush.msra.mxu0 %v5217
    %v5219 = vand.u32 %v2251, 4294901760
    %v5220 = vsub.f32 %v2251, %v5219
    %v5221 = vand.u32 %v5220, 4294901760
    %5222 = vmatpush.msra.mxu0 %v5221
    %v5223 = vand.u32 %v2250, 4294901760
    %v5224 = vsub.f32 %v2250, %v5223
    %v5225 = vand.u32 %v5224, 4294901760
    %5226 = vmatpush.msra.mxu0 %v5225
    %v5227 = vand.u32 %v2249, 4294901760
    %v5228 = vsub.f32 %v2249, %v5227
    %v5229 = vand.u32 %v5228, 4294901760
    %5230 = vmatpush.msra.mxu0 %v5229
    %v5231 = vand.u32 %v2248, 4294901760
    %v5232 = vsub.f32 %v2248, %v5231
    %v5233 = vand.u32 %v5232, 4294901760
    %5234 = vmatpush.msra.mxu0 %v5233
    %v5235 = vand.u32 %v2247, 4294901760
    %v5236 = vsub.f32 %v2247, %v5235
    %v5237 = vand.u32 %v5236, 4294901760
    %5238 = vmatpush.msra.mxu0 %v5237
    %v5239 = vand.u32 %v3794, 4294901760
    %5240 = vmatmul.f32.gmra.mxu0 %v5239
    %v5241 = vpop.f32.mrf.mxu0
    %v5242 = vadd.f32 %v5167, %v5241
    %v5243 = vand.u32 %v3793, 4294901760
    %5244 = vmatmul.f32.gmra.mxu0 %v5243
    %v5245 = vpop.f32.mrf.mxu0
    %v5246 = vadd.f32 %v5173, %v5245
    %5247 = vdwg.mxu0
    %v5248 = vand.u32 %v2262, 4294901760
    %5249 = vmatpush.msra.mxu0 %v5248
    %v5250 = vand.u32 %v2261, 4294901760
    %5251 = vmatpush.msra.mxu0 %v5250
    %v5252 = vand.u32 %v2260, 4294901760
    %5253 = vmatpush.msra.mxu0 %v5252
    %v5254 = vand.u32 %v2259, 4294901760
    %5255 = vmatpush.msra.mxu0 %v5254
    %v5256 = vand.u32 %v2258, 4294901760
    %5257 = vmatpush.msra.mxu0 %v5256
    %v5258 = vand.u32 %v2257, 4294901760
    %5259 = vmatpush.msra.mxu0 %v5258
    %v5260 = vand.u32 %v2256, 4294901760
    %5261 = vmatpush.msra.mxu0 %v5260
    %v5262 = vand.u32 %v2255, 4294901760
    %5263 = vmatpush.msra.mxu0 %v5262
    %v5264 = vand.u32 %v2254, 4294901760
    %5265 = vmatpush.msra.mxu0 %v5264
    %v5266 = vand.u32 %v2253, 4294901760
    %5267 = vmatpush.msra.mxu0 %v5266
    %v5268 = vand.u32 %v2252, 4294901760
    %5269 = vmatpush.msra.mxu0 %v5268
    %v5270 = vand.u32 %v2251, 4294901760
    %5271 = vmatpush.msra.mxu0 %v5270
    %v5272 = vand.u32 %v2250, 4294901760
    %5273 = vmatpush.msra.mxu0 %v5272
    %v5274 = vand.u32 %v2249, 4294901760
    %5275 = vmatpush.msra.mxu0 %v5274
    %v5276 = vand.u32 %v2248, 4294901760
    %5277 = vmatpush.msra.mxu0 %v5276
    %v5278 = vand.u32 %v2247, 4294901760
    %5279 = vmatpush.msra.mxu0 %v5278
    %v5280 = vand.u32 %v3794, 4294901760
    %5281 = vmatmul.f32.gmra.mxu0 %v5280
    %v5282 = vpop.f32.mrf.mxu0
    %v5283 = vadd.f32 %v5242, %v5282
    %v5284 = vand.u32 %v3793, 4294901760
    %5285 = vmatmul.f32.gmra.mxu0 %v5284
    %v5286 = vpop.f32.mrf.mxu0
    %v5287 = vadd.f32 %v5246, %v5286
    %5288 = vdwg.mxu0
    %v5289 = vand.u32 %v2213, 4294901760
    %5290 = vmatpush.msra.mxu0 %v5289
    %v5291 = vand.u32 %v2212, 4294901760
    %5292 = vmatpush.msra.mxu0 %v5291
    %v5293 = vand.u32 %v2211, 4294901760
    %5294 = vmatpush.msra.mxu0 %v5293
    %v5295 = vand.u32 %v2210, 4294901760
    %5296 = vmatpush.msra.mxu0 %v5295
    %v5297 = vand.u32 %v2209, 4294901760
    %5298 = vmatpush.msra.mxu0 %v5297
    %v5299 = vand.u32 %v2208, 4294901760
    %5300 = vmatpush.msra.mxu0 %v5299
    %v5301 = vand.u32 %v2207, 4294901760
    %5302 = vmatpush.msra.mxu0 %v5301
    %v5303 = vand.u32 %v2206, 4294901760
    %5304 = vmatpush.msra.mxu0 %v5303
    %v5305 = vand.u32 %v2205, 4294901760
    %5306 = vmatpush.msra.mxu0 %v5305
    %v5307 = vand.u32 %v2204, 4294901760
    %5308 = vmatpush.msra.mxu0 %v5307
    %v5309 = vand.u32 %v2203, 4294901760
    %5310 = vmatpush.msra.mxu0 %v5309
    %v5311 = vand.u32 %v2202, 4294901760
    %5312 = vmatpush.msra.mxu0 %v5311
    %v5313 = vand.u32 %v2201, 4294901760
    %5314 = vmatpush.msra.mxu0 %v5313
    %v5315 = vand.u32 %v2200, 4294901760
    %5316 = vmatpush.msra.mxu0 %v5315
    %v5317 = vand.u32 %v2199, 4294901760
    %5318 = vmatpush.msra.mxu0 %v5317
    %v5319 = vand.u32 %v2198, 4294901760
    %5320 = vmatpush.msra.mxu0 %v5319
    %v5321 = vand.u32 %v2194, 4294901760
    %v5322 = vsub.f32 %v2194, %v5321
    %v5323 = vand.u32 %v5322, 4294901760
    %v5324 = vsub.f32 %v5322, %v5323
    %v5325 = vand.u32 %v5324, 4294901760
    %5326 = vmatmul.f32.gmra.mxu0 %v5325
    %v5327 = vpop.f32.mrf.mxu0
    %v5328 = vadd.f32 %v5283, %v5327
    %v5329 = vand.u32 %v2196, 4294901760
    %v5330 = vsub.f32 %v2196, %v5329
    %v5331 = vand.u32 %v5330, 4294901760
    %v5332 = vsub.f32 %v5330, %v5331
    %v5333 = vand.u32 %v5332, 4294901760
    %5334 = vmatmul.f32.gmra.mxu0 %v5333
    %v5335 = vpop.f32.mrf.mxu0
    %v5336 = vadd.f32 %v5287, %v5335
    %5337 = vdwg.mxu0
    %v5338 = vand.u32 %v2213, 4294901760
    %v5339 = vsub.f32 %v2213, %v5338
    %v5340 = vand.u32 %v5339, 4294901760
    %v5341 = vsub.f32 %v5339, %v5340
    %v5342 = vand.u32 %v5341, 4294901760
    %5343 = vmatpush.msra.mxu0 %v5342
    %v5344 = vand.u32 %v2212, 4294901760
    %v5345 = vsub.f32 %v2212, %v5344
    %v5346 = vand.u32 %v5345, 4294901760
    %v5347 = vsub.f32 %v5345, %v5346
    %v5348 = vand.u32 %v5347, 4294901760
    %5349 = vmatpush.msra.mxu0 %v5348
    %v5350 = vand.u32 %v2211, 4294901760
    %v5351 = vsub.f32 %v2211, %v5350
    %v5352 = vand.u32 %v5351, 4294901760
    %v5353 = vsub.f32 %v5351, %v5352
    %v5354 = vand.u32 %v5353, 4294901760
    %5355 = vmatpush.msra.mxu0 %v5354
    %v5356 = vand.u32 %v2210, 4294901760
    %v5357 = vsub.f32 %v2210, %v5356
    %v5358 = vand.u32 %v5357, 4294901760
    %v5359 = vsub.f32 %v5357, %v5358
    %v5360 = vand.u32 %v5359, 4294901760
    %5361 = vmatpush.msra.mxu0 %v5360
    %v5362 = vand.u32 %v2209, 4294901760
    %v5363 = vsub.f32 %v2209, %v5362
    %v5364 = vand.u32 %v5363, 4294901760
    %v5365 = vsub.f32 %v5363, %v5364
    %v5366 = vand.u32 %v5365, 4294901760
    %5367 = vmatpush.msra.mxu0 %v5366
    %v5368 = vand.u32 %v2208, 4294901760
    %v5369 = vsub.f32 %v2208, %v5368
    %v5370 = vand.u32 %v5369, 4294901760
    %v5371 = vsub.f32 %v5369, %v5370
    %v5372 = vand.u32 %v5371, 4294901760
    %5373 = vmatpush.msra.mxu0 %v5372
    %v5374 = vand.u32 %v2207, 4294901760
    %v5375 = vsub.f32 %v2207, %v5374
    %v5376 = vand.u32 %v5375, 4294901760
    %v5377 = vsub.f32 %v5375, %v5376
    %v5378 = vand.u32 %v5377, 4294901760
    %5379 = vmatpush.msra.mxu0 %v5378
    %v5380 = vand.u32 %v2206, 4294901760
    %v5381 = vsub.f32 %v2206, %v5380
    %v5382 = vand.u32 %v5381, 4294901760
    %v5383 = vsub.f32 %v5381, %v5382
    %v5384 = vand.u32 %v5383, 4294901760
    %5385 = vmatpush.msra.mxu0 %v5384
    %v5386 = vand.u32 %v2205, 4294901760
    %v5387 = vsub.f32 %v2205, %v5386
    %v5388 = vand.u32 %v5387, 4294901760
    %v5389 = vsub.f32 %v5387, %v5388
    %v5390 = vand.u32 %v5389, 4294901760
    %5391 = vmatpush.msra.mxu0 %v5390
    %v5392 = vand.u32 %v2204, 4294901760
    %v5393 = vsub.f32 %v2204, %v5392
    %v5394 = vand.u32 %v5393, 4294901760
    %v5395 = vsub.f32 %v5393, %v5394
    %v5396 = vand.u32 %v5395, 4294901760
    %5397 = vmatpush.msra.mxu0 %v5396
    %v5398 = vand.u32 %v2203, 4294901760
    %v5399 = vsub.f32 %v2203, %v5398
    %v5400 = vand.u32 %v5399, 4294901760
    %v5401 = vsub.f32 %v5399, %v5400
    %v5402 = vand.u32 %v5401, 4294901760
    %5403 = vmatpush.msra.mxu0 %v5402
    %v5404 = vand.u32 %v2202, 4294901760
    %v5405 = vsub.f32 %v2202, %v5404
    %v5406 = vand.u32 %v5405, 4294901760
    %v5407 = vsub.f32 %v5405, %v5406
    %v5408 = vand.u32 %v5407, 4294901760
    %5409 = vmatpush.msra.mxu0 %v5408
    %v5410 = vand.u32 %v2201, 4294901760
    %v5411 = vsub.f32 %v2201, %v5410
    %v5412 = vand.u32 %v5411, 4294901760
    %v5413 = vsub.f32 %v5411, %v5412
    %v5414 = vand.u32 %v5413, 4294901760
    %5415 = vmatpush.msra.mxu0 %v5414
    %v5416 = vand.u32 %v2200, 4294901760
    %v5417 = vsub.f32 %v2200, %v5416
    %v5418 = vand.u32 %v5417, 4294901760
    %v5419 = vsub.f32 %v5417, %v5418
    %v5420 = vand.u32 %v5419, 4294901760
    %5421 = vmatpush.msra.mxu0 %v5420
    %v5422 = vand.u32 %v2199, 4294901760
    %v5423 = vsub.f32 %v2199, %v5422
    %v5424 = vand.u32 %v5423, 4294901760
    %v5425 = vsub.f32 %v5423, %v5424
    %v5426 = vand.u32 %v5425, 4294901760
    %5427 = vmatpush.msra.mxu0 %v5426
    %v5428 = vand.u32 %v2198, 4294901760
    %v5429 = vsub.f32 %v2198, %v5428
    %v5430 = vand.u32 %v5429, 4294901760
    %v5431 = vsub.f32 %v5429, %v5430
    %v5432 = vand.u32 %v5431, 4294901760
    %5433 = vmatpush.msra.mxu0 %v5432
    %v5434 = vand.u32 %v2194, 4294901760
    %5435 = vmatmul.f32.gmra.mxu0 %v5434
    %v5436 = vpop.f32.mrf.mxu0
    %v5437 = vadd.f32 %v5328, %v5436
    %v5438 = vand.u32 %v2196, 4294901760
    %5439 = vmatmul.f32.gmra.mxu0 %v5438
    %v5440 = vpop.f32.mrf.mxu0
    %v5441 = vadd.f32 %v5336, %v5440
    %5442 = vdwg.mxu0
    %v5443 = vand.u32 %v2213, 4294901760
    %v5444 = vsub.f32 %v2213, %v5443
    %5445 = vmatpush.msra.mxu0 %v5444
    %v5446 = vand.u32 %v2212, 4294901760
    %v5447 = vsub.f32 %v2212, %v5446
    %5448 = vmatpush.msra.mxu0 %v5447
    %v5449 = vand.u32 %v2211, 4294901760
    %v5450 = vsub.f32 %v2211, %v5449
    %5451 = vmatpush.msra.mxu0 %v5450
    %v5452 = vand.u32 %v2210, 4294901760
    %v5453 = vsub.f32 %v2210, %v5452
    %5454 = vmatpush.msra.mxu0 %v5453
    %v5455 = vand.u32 %v2209, 4294901760
    %v5456 = vsub.f32 %v2209, %v5455
    %5457 = vmatpush.msra.mxu0 %v5456
    %v5458 = vand.u32 %v2208, 4294901760
    %v5459 = vsub.f32 %v2208, %v5458
    %5460 = vmatpush.msra.mxu0 %v5459
    %v5461 = vand.u32 %v2207, 4294901760
    %v5462 = vsub.f32 %v2207, %v5461
    %5463 = vmatpush.msra.mxu0 %v5462
    %v5464 = vand.u32 %v2206, 4294901760
    %v5465 = vsub.f32 %v2206, %v5464
    %5466 = vmatpush.msra.mxu0 %v5465
    %v5467 = vand.u32 %v2205, 4294901760
    %v5468 = vsub.f32 %v2205, %v5467
    %5469 = vmatpush.msra.mxu0 %v5468
    %v5470 = vand.u32 %v2204, 4294901760
    %v5471 = vsub.f32 %v2204, %v5470
    %5472 = vmatpush.msra.mxu0 %v5471
    %v5473 = vand.u32 %v2203, 4294901760
    %v5474 = vsub.f32 %v2203, %v5473
    %5475 = vmatpush.msra.mxu0 %v5474
    %v5476 = vand.u32 %v2202, 4294901760
    %v5477 = vsub.f32 %v2202, %v5476
    %5478 = vmatpush.msra.mxu0 %v5477
    %v5479 = vand.u32 %v2201, 4294901760
    %v5480 = vsub.f32 %v2201, %v5479
    %5481 = vmatpush.msra.mxu0 %v5480
    %v5482 = vand.u32 %v2200, 4294901760
    %v5483 = vsub.f32 %v2200, %v5482
    %5484 = vmatpush.msra.mxu0 %v5483
    %v5485 = vand.u32 %v2199, 4294901760
    %v5486 = vsub.f32 %v2199, %v5485
    %5487 = vmatpush.msra.mxu0 %v5486
    %v5488 = vand.u32 %v2198, 4294901760
    %v5489 = vsub.f32 %v2198, %v5488
    %5490 = vmatpush.msra.mxu0 %v5489
    %v5491 = vand.u32 %v2194, 4294901760
    %v5492 = vsub.f32 %v2194, %v5491
    %5493 = vmatmul.f32.gmra.mxu0 %v5492
    %v5494 = vpop.f32.mrf.mxu0
    %v5495 = vadd.f32 %v5437, %v5494
    %v5496 = vand.u32 %v2196, 4294901760
    %v5497 = vsub.f32 %v2196, %v5496
    %5498 = vmatmul.f32.gmra.mxu0 %v5497
    %v5499 = vpop.f32.mrf.mxu0
    %v5500 = vadd.f32 %v5441, %v5499
    %5501 = vdwg.mxu0
    %v5502 = vand.u32 %v2213, 4294901760
    %5503 = vmatpush.msra.mxu0 %v5502
    %v5504 = vand.u32 %v2212, 4294901760
    %5505 = vmatpush.msra.mxu0 %v5504
    %v5506 = vand.u32 %v2211, 4294901760
    %5507 = vmatpush.msra.mxu0 %v5506
    %v5508 = vand.u32 %v2210, 4294901760
    %5509 = vmatpush.msra.mxu0 %v5508
    %v5510 = vand.u32 %v2209, 4294901760
    %5511 = vmatpush.msra.mxu0 %v5510
    %v5512 = vand.u32 %v2208, 4294901760
    %5513 = vmatpush.msra.mxu0 %v5512
    %v5514 = vand.u32 %v2207, 4294901760
    %5515 = vmatpush.msra.mxu0 %v5514
    %v5516 = vand.u32 %v2206, 4294901760
    %5517 = vmatpush.msra.mxu0 %v5516
    %v5518 = vand.u32 %v2205, 4294901760
    %5519 = vmatpush.msra.mxu0 %v5518
    %v5520 = vand.u32 %v2204, 4294901760
    %5521 = vmatpush.msra.mxu0 %v5520
    %v5522 = vand.u32 %v2203, 4294901760
    %5523 = vmatpush.msra.mxu0 %v5522
    %v5524 = vand.u32 %v2202, 4294901760
    %5525 = vmatpush.msra.mxu0 %v5524
    %v5526 = vand.u32 %v2201, 4294901760
    %5527 = vmatpush.msra.mxu0 %v5526
    %v5528 = vand.u32 %v2200, 4294901760
    %5529 = vmatpush.msra.mxu0 %v5528
    %v5530 = vand.u32 %v2199, 4294901760
    %5531 = vmatpush.msra.mxu0 %v5530
    %v5532 = vand.u32 %v2198, 4294901760
    %5533 = vmatpush.msra.mxu0 %v5532
    %v5534 = vand.u32 %v2194, 4294901760
    %v5535 = vsub.f32 %v2194, %v5534
    %v5536 = vand.u32 %v5535, 4294901760
    %5537 = vmatmul.f32.gmra.mxu0 %v5536
    %v5538 = vpop.f32.mrf.mxu0
    %v5539 = vadd.f32 %v5495, %v5538
    %v5540 = vand.u32 %v2196, 4294901760
    %v5541 = vsub.f32 %v2196, %v5540
    %v5542 = vand.u32 %v5541, 4294901760
    %5543 = vmatmul.f32.gmra.mxu0 %v5542
    %v5544 = vpop.f32.mrf.mxu0
    %v5545 = vadd.f32 %v5500, %v5544
    %5546 = vdwg.mxu0
    %v5547 = vand.u32 %v2213, 4294901760
    %v5548 = vsub.f32 %v2213, %v5547
    %v5549 = vand.u32 %v5548, 4294901760
    %5550 = vmatpush.msra.mxu0 %v5549
    %v5551 = vand.u32 %v2212, 4294901760
    %v5552 = vsub.f32 %v2212, %v5551
    %v5553 = vand.u32 %v5552, 4294901760
    %5554 = vmatpush.msra.mxu0 %v5553
    %v5555 = vand.u32 %v2211, 4294901760
    %v5556 = vsub.f32 %v2211, %v5555
    %v5557 = vand.u32 %v5556, 4294901760
    %5558 = vmatpush.msra.mxu0 %v5557
    %v5559 = vand.u32 %v2210, 4294901760
    %v5560 = vsub.f32 %v2210, %v5559
    %v5561 = vand.u32 %v5560, 4294901760
    %5562 = vmatpush.msra.mxu0 %v5561
    %v5563 = vand.u32 %v2209, 4294901760
    %v5564 = vsub.f32 %v2209, %v5563
    %v5565 = vand.u32 %v5564, 4294901760
    %5566 = vmatpush.msra.mxu0 %v5565
    %v5567 = vand.u32 %v2208, 4294901760
    %v5568 = vsub.f32 %v2208, %v5567
    %v5569 = vand.u32 %v5568, 4294901760
    %5570 = vmatpush.msra.mxu0 %v5569
    %v5571 = vand.u32 %v2207, 4294901760
    %v5572 = vsub.f32 %v2207, %v5571
    %v5573 = vand.u32 %v5572, 4294901760
    %5574 = vmatpush.msra.mxu0 %v5573
    %v5575 = vand.u32 %v2206, 4294901760
    %v5576 = vsub.f32 %v2206, %v5575
    %v5577 = vand.u32 %v5576, 4294901760
    %5578 = vmatpush.msra.mxu0 %v5577
    %v5579 = vand.u32 %v2205, 4294901760
    %v5580 = vsub.f32 %v2205, %v5579
    %v5581 = vand.u32 %v5580, 4294901760
    %5582 = vmatpush.msra.mxu0 %v5581
    %v5583 = vand.u32 %v2204, 4294901760
    %v5584 = vsub.f32 %v2204, %v5583
    %v5585 = vand.u32 %v5584, 4294901760
    %5586 = vmatpush.msra.mxu0 %v5585
    %v5587 = vand.u32 %v2203, 4294901760
    %v5588 = vsub.f32 %v2203, %v5587
    %v5589 = vand.u32 %v5588, 4294901760
    %5590 = vmatpush.msra.mxu0 %v5589
    %v5591 = vand.u32 %v2202, 4294901760
    %v5592 = vsub.f32 %v2202, %v5591
    %v5593 = vand.u32 %v5592, 4294901760
    %5594 = vmatpush.msra.mxu0 %v5593
    %v5595 = vand.u32 %v2201, 4294901760
    %v5596 = vsub.f32 %v2201, %v5595
    %v5597 = vand.u32 %v5596, 4294901760
    %5598 = vmatpush.msra.mxu0 %v5597
    %v5599 = vand.u32 %v2200, 4294901760
    %v5600 = vsub.f32 %v2200, %v5599
    %v5601 = vand.u32 %v5600, 4294901760
    %5602 = vmatpush.msra.mxu0 %v5601
    %v5603 = vand.u32 %v2199, 4294901760
    %v5604 = vsub.f32 %v2199, %v5603
    %v5605 = vand.u32 %v5604, 4294901760
    %5606 = vmatpush.msra.mxu0 %v5605
    %v5607 = vand.u32 %v2198, 4294901760
    %v5608 = vsub.f32 %v2198, %v5607
    %v5609 = vand.u32 %v5608, 4294901760
    %5610 = vmatpush.msra.mxu0 %v5609
    %v5611 = vand.u32 %v2194, 4294901760
    %5612 = vmatmul.f32.gmra.mxu0 %v5611
    %v5613 = vpop.f32.mrf.mxu0
    %v5614 = vadd.f32 %v5539, %v5613
    %v5615 = vand.u32 %v2196, 4294901760
    %5616 = vmatmul.f32.gmra.mxu0 %v5615
    %v5617 = vpop.f32.mrf.mxu0
    %v5618 = vadd.f32 %v5545, %v5617
    %5619 = vdwg.mxu0
    %v5620 = vand.u32 %v2213, 4294901760
    %5621 = vmatpush.msra.mxu0 %v5620
    %v5622 = vand.u32 %v2212, 4294901760
    %5623 = vmatpush.msra.mxu0 %v5622
    %v5624 = vand.u32 %v2211, 4294901760
    %5625 = vmatpush.msra.mxu0 %v5624
    %v5626 = vand.u32 %v2210, 4294901760
    %5627 = vmatpush.msra.mxu0 %v5626
    %v5628 = vand.u32 %v2209, 4294901760
    %5629 = vmatpush.msra.mxu0 %v5628
    %v5630 = vand.u32 %v2208, 4294901760
    %5631 = vmatpush.msra.mxu0 %v5630
    %v5632 = vand.u32 %v2207, 4294901760
    %5633 = vmatpush.msra.mxu0 %v5632
    %v5634 = vand.u32 %v2206, 4294901760
    %5635 = vmatpush.msra.mxu0 %v5634
    %v5636 = vand.u32 %v2205, 4294901760
    %5637 = vmatpush.msra.mxu0 %v5636
    %v5638 = vand.u32 %v2204, 4294901760
    %5639 = vmatpush.msra.mxu0 %v5638
    %v5640 = vand.u32 %v2203, 4294901760
    %5641 = vmatpush.msra.mxu0 %v5640
    %v5642 = vand.u32 %v2202, 4294901760
    %5643 = vmatpush.msra.mxu0 %v5642
    %v5644 = vand.u32 %v2201, 4294901760
    %5645 = vmatpush.msra.mxu0 %v5644
    %v5646 = vand.u32 %v2200, 4294901760
    %5647 = vmatpush.msra.mxu0 %v5646
    %v5648 = vand.u32 %v2199, 4294901760
    %5649 = vmatpush.msra.mxu0 %v5648
    %v5650 = vand.u32 %v2198, 4294901760
    %5651 = vmatpush.msra.mxu0 %v5650
    %v5652 = vand.u32 %v2194, 4294901760
    %5653 = vmatmul.f32.gmra.mxu0 %v5652
    %v5654 = vpop.f32.mrf.mxu0
    %v5655 = vadd.f32 %v5614, %v5654
    %v5656 = vand.u32 %v2196, 4294901760
    %5657 = vmatmul.f32.gmra.mxu0 %v5656
    %v5658 = vpop.f32.mrf.mxu0
    %v5659 = vadd.f32 %v5618, %v5658
    %5660 = vdwg.mxu0
    %v5661 = vand.u32 %v2229, 4294901760
    %5662 = vmatpush.msra.mxu0 %v5661
    %v5663 = vand.u32 %v2228, 4294901760
    %5664 = vmatpush.msra.mxu0 %v5663
    %v5665 = vand.u32 %v2227, 4294901760
    %5666 = vmatpush.msra.mxu0 %v5665
    %v5667 = vand.u32 %v2226, 4294901760
    %5668 = vmatpush.msra.mxu0 %v5667
    %v5669 = vand.u32 %v2225, 4294901760
    %5670 = vmatpush.msra.mxu0 %v5669
    %v5671 = vand.u32 %v2224, 4294901760
    %5672 = vmatpush.msra.mxu0 %v5671
    %v5673 = vand.u32 %v2223, 4294901760
    %5674 = vmatpush.msra.mxu0 %v5673
    %v5675 = vand.u32 %v2222, 4294901760
    %5676 = vmatpush.msra.mxu0 %v5675
    %v5677 = vand.u32 %v2221, 4294901760
    %5678 = vmatpush.msra.mxu0 %v5677
    %v5679 = vand.u32 %v2220, 4294901760
    %5680 = vmatpush.msra.mxu0 %v5679
    %v5681 = vand.u32 %v2219, 4294901760
    %5682 = vmatpush.msra.mxu0 %v5681
    %v5683 = vand.u32 %v2218, 4294901760
    %5684 = vmatpush.msra.mxu0 %v5683
    %v5685 = vand.u32 %v2217, 4294901760
    %5686 = vmatpush.msra.mxu0 %v5685
    %v5687 = vand.u32 %v2216, 4294901760
    %5688 = vmatpush.msra.mxu0 %v5687
    %v5689 = vand.u32 %v2215, 4294901760
    %5690 = vmatpush.msra.mxu0 %v5689
    %v5691 = vand.u32 %v2214, 4294901760
    %5692 = vmatpush.msra.mxu0 %v5691
    %v5693 = vand.u32 %v2195, 4294901760
    %v5694 = vsub.f32 %v2195, %v5693
    %v5695 = vand.u32 %v5694, 4294901760
    %v5696 = vsub.f32 %v5694, %v5695
    %v5697 = vand.u32 %v5696, 4294901760
    %5698 = vmatmul.f32.gmra.mxu0 %v5697
    %v5699 = vpop.f32.mrf.mxu0
    %v5700 = vadd.f32 %v5655, %v5699
    %v5701 = vand.u32 %v2197, 4294901760
    %v5702 = vsub.f32 %v2197, %v5701
    %v5703 = vand.u32 %v5702, 4294901760
    %v5704 = vsub.f32 %v5702, %v5703
    %v5705 = vand.u32 %v5704, 4294901760
    %5706 = vmatmul.f32.gmra.mxu0 %v5705
    %v5707 = vpop.f32.mrf.mxu0
    %v5708 = vadd.f32 %v5659, %v5707
    %5709 = vdwg.mxu0
    %v5710 = vand.u32 %v2229, 4294901760
    %v5711 = vsub.f32 %v2229, %v5710
    %v5712 = vand.u32 %v5711, 4294901760
    %v5713 = vsub.f32 %v5711, %v5712
    %v5714 = vand.u32 %v5713, 4294901760
    %5715 = vmatpush.msra.mxu0 %v5714
    %v5716 = vand.u32 %v2228, 4294901760
    %v5717 = vsub.f32 %v2228, %v5716
    %v5718 = vand.u32 %v5717, 4294901760
    %v5719 = vsub.f32 %v5717, %v5718
    %v5720 = vand.u32 %v5719, 4294901760
    %5721 = vmatpush.msra.mxu0 %v5720
    %v5722 = vand.u32 %v2227, 4294901760
    %v5723 = vsub.f32 %v2227, %v5722
    %v5724 = vand.u32 %v5723, 4294901760
    %v5725 = vsub.f32 %v5723, %v5724
    %v5726 = vand.u32 %v5725, 4294901760
    %5727 = vmatpush.msra.mxu0 %v5726
    %v5728 = vand.u32 %v2226, 4294901760
    %v5729 = vsub.f32 %v2226, %v5728
    %v5730 = vand.u32 %v5729, 4294901760
    %v5731 = vsub.f32 %v5729, %v5730
    %v5732 = vand.u32 %v5731, 4294901760
    %5733 = vmatpush.msra.mxu0 %v5732
    %v5734 = vand.u32 %v2225, 4294901760
    %v5735 = vsub.f32 %v2225, %v5734
    %v5736 = vand.u32 %v5735, 4294901760
    %v5737 = vsub.f32 %v5735, %v5736
    %v5738 = vand.u32 %v5737, 4294901760
    %5739 = vmatpush.msra.mxu0 %v5738
    %v5740 = vand.u32 %v2224, 4294901760
    %v5741 = vsub.f32 %v2224, %v5740
    %v5742 = vand.u32 %v5741, 4294901760
    %v5743 = vsub.f32 %v5741, %v5742
    %v5744 = vand.u32 %v5743, 4294901760
    %5745 = vmatpush.msra.mxu0 %v5744
    %v5746 = vand.u32 %v2223, 4294901760
    %v5747 = vsub.f32 %v2223, %v5746
    %v5748 = vand.u32 %v5747, 4294901760
    %v5749 = vsub.f32 %v5747, %v5748
    %v5750 = vand.u32 %v5749, 4294901760
    %5751 = vmatpush.msra.mxu0 %v5750
    %v5752 = vand.u32 %v2222, 4294901760
    %v5753 = vsub.f32 %v2222, %v5752
    %v5754 = vand.u32 %v5753, 4294901760
    %v5755 = vsub.f32 %v5753, %v5754
    %v5756 = vand.u32 %v5755, 4294901760
    %5757 = vmatpush.msra.mxu0 %v5756
    %v5758 = vand.u32 %v2221, 4294901760
    %v5759 = vsub.f32 %v2221, %v5758
    %v5760 = vand.u32 %v5759, 4294901760
    %v5761 = vsub.f32 %v5759, %v5760
    %v5762 = vand.u32 %v5761, 4294901760
    %5763 = vmatpush.msra.mxu0 %v5762
    %v5764 = vand.u32 %v2220, 4294901760
    %v5765 = vsub.f32 %v2220, %v5764
    %v5766 = vand.u32 %v5765, 4294901760
    %v5767 = vsub.f32 %v5765, %v5766
    %v5768 = vand.u32 %v5767, 4294901760
    %5769 = vmatpush.msra.mxu0 %v5768
    %v5770 = vand.u32 %v2219, 4294901760
    %v5771 = vsub.f32 %v2219, %v5770
    %v5772 = vand.u32 %v5771, 4294901760
    %v5773 = vsub.f32 %v5771, %v5772
    %v5774 = vand.u32 %v5773, 4294901760
    %5775 = vmatpush.msra.mxu0 %v5774
    %v5776 = vand.u32 %v2218, 4294901760
    %v5777 = vsub.f32 %v2218, %v5776
    %v5778 = vand.u32 %v5777, 4294901760
    %v5779 = vsub.f32 %v5777, %v5778
    %v5780 = vand.u32 %v5779, 4294901760
    %5781 = vmatpush.msra.mxu0 %v5780
    %v5782 = vand.u32 %v2217, 4294901760
    %v5783 = vsub.f32 %v2217, %v5782
    %v5784 = vand.u32 %v5783, 4294901760
    %v5785 = vsub.f32 %v5783, %v5784
    %v5786 = vand.u32 %v5785, 4294901760
    %5787 = vmatpush.msra.mxu0 %v5786
    %v5788 = vand.u32 %v2216, 4294901760
    %v5789 = vsub.f32 %v2216, %v5788
    %v5790 = vand.u32 %v5789, 4294901760
    %v5791 = vsub.f32 %v5789, %v5790
    %v5792 = vand.u32 %v5791, 4294901760
    %5793 = vmatpush.msra.mxu0 %v5792
    %v5794 = vand.u32 %v2215, 4294901760
    %v5795 = vsub.f32 %v2215, %v5794
    %v5796 = vand.u32 %v5795, 4294901760
    %v5797 = vsub.f32 %v5795, %v5796
    %v5798 = vand.u32 %v5797, 4294901760
    %5799 = vmatpush.msra.mxu0 %v5798
    %v5800 = vand.u32 %v2214, 4294901760
    %v5801 = vsub.f32 %v2214, %v5800
    %v5802 = vand.u32 %v5801, 4294901760
    %v5803 = vsub.f32 %v5801, %v5802
    %v5804 = vand.u32 %v5803, 4294901760
    %5805 = vmatpush.msra.mxu0 %v5804
    %v5806 = vand.u32 %v2195, 4294901760
    %5807 = vmatmul.f32.gmra.mxu0 %v5806
    %v5808 = vpop.f32.mrf.mxu0
    %v5809 = vadd.f32 %v5700, %v5808
    %v5810 = vand.u32 %v2197, 4294901760
    %5811 = vmatmul.f32.gmra.mxu0 %v5810
    %v5812 = vpop.f32.mrf.mxu0
    %v5813 = vadd.f32 %v5708, %v5812
    %5814 = vdwg.mxu0
    %v5815 = vand.u32 %v2229, 4294901760
    %v5816 = vsub.f32 %v2229, %v5815
    %5817 = vmatpush.msra.mxu0 %v5816
    %v5818 = vand.u32 %v2228, 4294901760
    %v5819 = vsub.f32 %v2228, %v5818
    %5820 = vmatpush.msra.mxu0 %v5819
    %v5821 = vand.u32 %v2227, 4294901760
    %v5822 = vsub.f32 %v2227, %v5821
    %5823 = vmatpush.msra.mxu0 %v5822
    %v5824 = vand.u32 %v2226, 4294901760
    %v5825 = vsub.f32 %v2226, %v5824
    %5826 = vmatpush.msra.mxu0 %v5825
    %v5827 = vand.u32 %v2225, 4294901760
    %v5828 = vsub.f32 %v2225, %v5827
    %5829 = vmatpush.msra.mxu0 %v5828
    %v5830 = vand.u32 %v2224, 4294901760
    %v5831 = vsub.f32 %v2224, %v5830
    %5832 = vmatpush.msra.mxu0 %v5831
    %v5833 = vand.u32 %v2223, 4294901760
    %v5834 = vsub.f32 %v2223, %v5833
    %5835 = vmatpush.msra.mxu0 %v5834
    %v5836 = vand.u32 %v2222, 4294901760
    %v5837 = vsub.f32 %v2222, %v5836
    %5838 = vmatpush.msra.mxu0 %v5837
    %v5839 = vand.u32 %v2221, 4294901760
    %v5840 = vsub.f32 %v2221, %v5839
    %5841 = vmatpush.msra.mxu0 %v5840
    %v5842 = vand.u32 %v2220, 4294901760
    %v5843 = vsub.f32 %v2220, %v5842
    %5844 = vmatpush.msra.mxu0 %v5843
    %v5845 = vand.u32 %v2219, 4294901760
    %v5846 = vsub.f32 %v2219, %v5845
    %5847 = vmatpush.msra.mxu0 %v5846
    %v5848 = vand.u32 %v2218, 4294901760
    %v5849 = vsub.f32 %v2218, %v5848
    %5850 = vmatpush.msra.mxu0 %v5849
    %v5851 = vand.u32 %v2217, 4294901760
    %v5852 = vsub.f32 %v2217, %v5851
    %5853 = vmatpush.msra.mxu0 %v5852
    %v5854 = vand.u32 %v2216, 4294901760
    %v5855 = vsub.f32 %v2216, %v5854
    %5856 = vmatpush.msra.mxu0 %v5855
    %v5857 = vand.u32 %v2215, 4294901760
    %v5858 = vsub.f32 %v2215, %v5857
    %5859 = vmatpush.msra.mxu0 %v5858
    %v5860 = vand.u32 %v2214, 4294901760
    %v5861 = vsub.f32 %v2214, %v5860
    %5862 = vmatpush.msra.mxu0 %v5861
    %v5863 = vand.u32 %v2195, 4294901760
    %v5864 = vsub.f32 %v2195, %v5863
    %5865 = vmatmul.f32.gmra.mxu0 %v5864
    %v5866 = vpop.f32.mrf.mxu0
    %v5867 = vadd.f32 %v5809, %v5866
    %v5868 = vand.u32 %v2197, 4294901760
    %v5869 = vsub.f32 %v2197, %v5868
    %5870 = vmatmul.f32.gmra.mxu0 %v5869
    %v5871 = vpop.f32.mrf.mxu0
    %v5872 = vadd.f32 %v5813, %v5871
    %5873 = vdwg.mxu0
    %v5874 = vand.u32 %v2229, 4294901760
    %5875 = vmatpush.msra.mxu0 %v5874
    %v5876 = vand.u32 %v2228, 4294901760
    %5877 = vmatpush.msra.mxu0 %v5876
    %v5878 = vand.u32 %v2227, 4294901760
    %5879 = vmatpush.msra.mxu0 %v5878
    %v5880 = vand.u32 %v2226, 4294901760
    %5881 = vmatpush.msra.mxu0 %v5880
    %v5882 = vand.u32 %v2225, 4294901760
    %5883 = vmatpush.msra.mxu0 %v5882
    %v5884 = vand.u32 %v2224, 4294901760
    %5885 = vmatpush.msra.mxu0 %v5884
    %v5886 = vand.u32 %v2223, 4294901760
    %5887 = vmatpush.msra.mxu0 %v5886
    %v5888 = vand.u32 %v2222, 4294901760
    %5889 = vmatpush.msra.mxu0 %v5888
    %v5890 = vand.u32 %v2221, 4294901760
    %5891 = vmatpush.msra.mxu0 %v5890
    %v5892 = vand.u32 %v2220, 4294901760
    %5893 = vmatpush.msra.mxu0 %v5892
    %v5894 = vand.u32 %v2219, 4294901760
    %5895 = vmatpush.msra.mxu0 %v5894
    %v5896 = vand.u32 %v2218, 4294901760
    %5897 = vmatpush.msra.mxu0 %v5896
    %v5898 = vand.u32 %v2217, 4294901760
    %5899 = vmatpush.msra.mxu0 %v5898
    %v5900 = vand.u32 %v2216, 4294901760
    %5901 = vmatpush.msra.mxu0 %v5900
    %v5902 = vand.u32 %v2215, 4294901760
    %5903 = vmatpush.msra.mxu0 %v5902
    %v5904 = vand.u32 %v2214, 4294901760
    %5905 = vmatpush.msra.mxu0 %v5904
    %v5906 = vand.u32 %v2195, 4294901760
    %v5907 = vsub.f32 %v2195, %v5906
    %v5908 = vand.u32 %v5907, 4294901760
    %5909 = vmatmul.f32.gmra.mxu0 %v5908
    %v5910 = vpop.f32.mrf.mxu0
    %v5911 = vadd.f32 %v5867, %v5910
    %v5912 = vand.u32 %v2197, 4294901760
    %v5913 = vsub.f32 %v2197, %v5912
    %v5914 = vand.u32 %v5913, 4294901760
    %5915 = vmatmul.f32.gmra.mxu0 %v5914
    %v5916 = vpop.f32.mrf.mxu0
    %v5917 = vadd.f32 %v5872, %v5916
    %5918 = vdwg.mxu0
    %v5919 = vand.u32 %v2229, 4294901760
    %v5920 = vsub.f32 %v2229, %v5919
    %v5921 = vand.u32 %v5920, 4294901760
    %5922 = vmatpush.msra.mxu0 %v5921
    %v5923 = vand.u32 %v2228, 4294901760
    %v5924 = vsub.f32 %v2228, %v5923
    %v5925 = vand.u32 %v5924, 4294901760
    %5926 = vmatpush.msra.mxu0 %v5925
    %v5927 = vand.u32 %v2227, 4294901760
    %v5928 = vsub.f32 %v2227, %v5927
    %v5929 = vand.u32 %v5928, 4294901760
    %5930 = vmatpush.msra.mxu0 %v5929
    %v5931 = vand.u32 %v2226, 4294901760
    %v5932 = vsub.f32 %v2226, %v5931
    %v5933 = vand.u32 %v5932, 4294901760
    %5934 = vmatpush.msra.mxu0 %v5933
    %v5935 = vand.u32 %v2225, 4294901760
    %v5936 = vsub.f32 %v2225, %v5935
    %v5937 = vand.u32 %v5936, 4294901760
    %5938 = vmatpush.msra.mxu0 %v5937
    %v5939 = vand.u32 %v2224, 4294901760
    %v5940 = vsub.f32 %v2224, %v5939
    %v5941 = vand.u32 %v5940, 4294901760
    %5942 = vmatpush.msra.mxu0 %v5941
    %v5943 = vand.u32 %v2223, 4294901760
    %v5944 = vsub.f32 %v2223, %v5943
    %v5945 = vand.u32 %v5944, 4294901760
    %5946 = vmatpush.msra.mxu0 %v5945
    %v5947 = vand.u32 %v2222, 4294901760
    %v5948 = vsub.f32 %v2222, %v5947
    %v5949 = vand.u32 %v5948, 4294901760
    %5950 = vmatpush.msra.mxu0 %v5949
    %v5951 = vand.u32 %v2221, 4294901760
    %v5952 = vsub.f32 %v2221, %v5951
    %v5953 = vand.u32 %v5952, 4294901760
    %5954 = vmatpush.msra.mxu0 %v5953
    %v5955 = vand.u32 %v2220, 4294901760
    %v5956 = vsub.f32 %v2220, %v5955
    %v5957 = vand.u32 %v5956, 4294901760
    %5958 = vmatpush.msra.mxu0 %v5957
    %v5959 = vand.u32 %v2219, 4294901760
    %v5960 = vsub.f32 %v2219, %v5959
    %v5961 = vand.u32 %v5960, 4294901760
    %5962 = vmatpush.msra.mxu0 %v5961
    %v5963 = vand.u32 %v2218, 4294901760
    %v5964 = vsub.f32 %v2218, %v5963
    %v5965 = vand.u32 %v5964, 4294901760
    %5966 = vmatpush.msra.mxu0 %v5965
    %v5967 = vand.u32 %v2217, 4294901760
    %v5968 = vsub.f32 %v2217, %v5967
    %v5969 = vand.u32 %v5968, 4294901760
    %5970 = vmatpush.msra.mxu0 %v5969
    %v5971 = vand.u32 %v2216, 4294901760
    %v5972 = vsub.f32 %v2216, %v5971
    %v5973 = vand.u32 %v5972, 4294901760
    %5974 = vmatpush.msra.mxu0 %v5973
    %v5975 = vand.u32 %v2215, 4294901760
    %v5976 = vsub.f32 %v2215, %v5975
    %v5977 = vand.u32 %v5976, 4294901760
    %5978 = vmatpush.msra.mxu0 %v5977
    %v5979 = vand.u32 %v2214, 4294901760
    %v5980 = vsub.f32 %v2214, %v5979
    %v5981 = vand.u32 %v5980, 4294901760
    %5982 = vmatpush.msra.mxu0 %v5981
    %v5983 = vand.u32 %v2195, 4294901760
    %5984 = vmatmul.f32.gmra.mxu0 %v5983
    %v5985 = vpop.f32.mrf.mxu0
    %v5986 = vadd.f32 %v5911, %v5985
    %v5987 = vand.u32 %v2197, 4294901760
    %5988 = vmatmul.f32.gmra.mxu0 %v5987
    %v5989 = vpop.f32.mrf.mxu0
    %v5990 = vadd.f32 %v5917, %v5989
    %5991 = vdwg.mxu0
    %v5992 = vand.u32 %v2229, 4294901760
    %5993 = vmatpush.msra.mxu0 %v5992
    %v5994 = vand.u32 %v2228, 4294901760
    %5995 = vmatpush.msra.mxu0 %v5994
    %v5996 = vand.u32 %v2227, 4294901760
    %5997 = vmatpush.msra.mxu0 %v5996
    %v5998 = vand.u32 %v2226, 4294901760
    %5999 = vmatpush.msra.mxu0 %v5998
    %v6000 = vand.u32 %v2225, 4294901760
    %6001 = vmatpush.msra.mxu0 %v6000
    %v6002 = vand.u32 %v2224, 4294901760
    %6003 = vmatpush.msra.mxu0 %v6002
    %v6004 = vand.u32 %v2223, 4294901760
    %6005 = vmatpush.msra.mxu0 %v6004
    %v6006 = vand.u32 %v2222, 4294901760
    %6007 = vmatpush.msra.mxu0 %v6006
    %v6008 = vand.u32 %v2221, 4294901760
    %6009 = vmatpush.msra.mxu0 %v6008
    %v6010 = vand.u32 %v2220, 4294901760
    %6011 = vmatpush.msra.mxu0 %v6010
    %v6012 = vand.u32 %v2219, 4294901760
    %6013 = vmatpush.msra.mxu0 %v6012
    %v6014 = vand.u32 %v2218, 4294901760
    %6015 = vmatpush.msra.mxu0 %v6014
    %v6016 = vand.u32 %v2217, 4294901760
    %6017 = vmatpush.msra.mxu0 %v6016
    %v6018 = vand.u32 %v2216, 4294901760
    %6019 = vmatpush.msra.mxu0 %v6018
    %v6020 = vand.u32 %v2215, 4294901760
    %6021 = vmatpush.msra.mxu0 %v6020
    %v6022 = vand.u32 %v2214, 4294901760
    %6023 = vmatpush.msra.mxu0 %v6022
    %v6024 = vand.u32 %v2195, 4294901760
    %6025 = vmatmul.f32.gmra.mxu0 %v6024
    %v6026 = vpop.f32.mrf.mxu0
    %v6027 = vadd.f32 %v5986, %v6026
    %v6028 = vand.u32 %v2197, 4294901760
    %6029 = vmatmul.f32.gmra.mxu0 %v6028
    %v6030 = vpop.f32.mrf.mxu0
    %v6031 = vadd.f32 %v5990, %v6030
    %6032 = vdwg.mxu0
    %v6037 = vrot.slane %v2194, 2
    %v6038 = vrot.slane %v2196, 2
    %v6039 = vsel %vm3788, %v6037, %v6038
    %v6040 = vrot.slane %v2195, 2
    %v6041 = vrot.slane %v2197, 2
    %v6042 = vsel %vm3788, %v6040, %v6041
    %v6047 = vand.u32 %v3767, 4294901760
    %6048 = vmatpush.msra.mxu0 %v6047
    %v6049 = vand.u32 %v3766, 4294901760
    %6050 = vmatpush.msra.mxu0 %v6049
    %v6051 = vand.u32 %v3765, 4294901760
    %6052 = vmatpush.msra.mxu0 %v6051
    %v6053 = vand.u32 %v3764, 4294901760
    %6054 = vmatpush.msra.mxu0 %v6053
    %v6055 = vand.u32 %v3763, 4294901760
    %6056 = vmatpush.msra.mxu0 %v6055
    %v6057 = vand.u32 %v3762, 4294901760
    %6058 = vmatpush.msra.mxu0 %v6057
    %v6059 = vand.u32 %v3761, 4294901760
    %6060 = vmatpush.msra.mxu0 %v6059
    %v6061 = vand.u32 %v3760, 4294901760
    %6062 = vmatpush.msra.mxu0 %v6061
    %v6063 = vand.u32 %v3759, 4294901760
    %6064 = vmatpush.msra.mxu0 %v6063
    %v6065 = vand.u32 %v3758, 4294901760
    %6066 = vmatpush.msra.mxu0 %v6065
    %v6067 = vand.u32 %v3757, 4294901760
    %6068 = vmatpush.msra.mxu0 %v6067
    %v6069 = vand.u32 %v3756, 4294901760
    %6070 = vmatpush.msra.mxu0 %v6069
    %v6071 = vand.u32 %v3755, 4294901760
    %6072 = vmatpush.msra.mxu0 %v6071
    %v6073 = vand.u32 %v3754, 4294901760
    %6074 = vmatpush.msra.mxu0 %v6073
    %v6075 = vand.u32 %v3753, 4294901760
    %6076 = vmatpush.msra.mxu0 %v6075
    %v6077 = vand.u32 %v3752, 4294901760
    %6078 = vmatpush.msra.mxu0 %v6077
    %v6079 = vand.u32 %v6039, 4294901760
    %v6080 = vsub.f32 %v6039, %v6079
    %v6081 = vand.u32 %v6080, 4294901760
    %v6082 = vsub.f32 %v6080, %v6081
    %v6083 = vand.u32 %v6082, 4294901760
    %6084 = vmatmul.f32.gmra.mxu0 %v6083
    %v6085 = vpop.f32.mrf.mxu0
    %v6086 = vadd.f32 0.0, %v6085
    %v6087 = vand.u32 %v6038, 4294901760
    %v6088 = vsub.f32 %v6038, %v6087
    %v6089 = vand.u32 %v6088, 4294901760
    %v6090 = vsub.f32 %v6088, %v6089
    %v6091 = vand.u32 %v6090, 4294901760
    %6092 = vmatmul.f32.gmra.mxu0 %v6091
    %v6093 = vpop.f32.mrf.mxu0
    %v6094 = vadd.f32 0.0, %v6093
    %6095 = vdwg.mxu0
    %v6096 = vand.u32 %v3767, 4294901760
    %v6097 = vsub.f32 %v3767, %v6096
    %v6098 = vand.u32 %v6097, 4294901760
    %v6099 = vsub.f32 %v6097, %v6098
    %v6100 = vand.u32 %v6099, 4294901760
    %6101 = vmatpush.msra.mxu0 %v6100
    %v6102 = vand.u32 %v3766, 4294901760
    %v6103 = vsub.f32 %v3766, %v6102
    %v6104 = vand.u32 %v6103, 4294901760
    %v6105 = vsub.f32 %v6103, %v6104
    %v6106 = vand.u32 %v6105, 4294901760
    %6107 = vmatpush.msra.mxu0 %v6106
    %v6108 = vand.u32 %v3765, 4294901760
    %v6109 = vsub.f32 %v3765, %v6108
    %v6110 = vand.u32 %v6109, 4294901760
    %v6111 = vsub.f32 %v6109, %v6110
    %v6112 = vand.u32 %v6111, 4294901760
    %6113 = vmatpush.msra.mxu0 %v6112
    %v6114 = vand.u32 %v3764, 4294901760
    %v6115 = vsub.f32 %v3764, %v6114
    %v6116 = vand.u32 %v6115, 4294901760
    %v6117 = vsub.f32 %v6115, %v6116
    %v6118 = vand.u32 %v6117, 4294901760
    %6119 = vmatpush.msra.mxu0 %v6118
    %v6120 = vand.u32 %v3763, 4294901760
    %v6121 = vsub.f32 %v3763, %v6120
    %v6122 = vand.u32 %v6121, 4294901760
    %v6123 = vsub.f32 %v6121, %v6122
    %v6124 = vand.u32 %v6123, 4294901760
    %6125 = vmatpush.msra.mxu0 %v6124
    %v6126 = vand.u32 %v3762, 4294901760
    %v6127 = vsub.f32 %v3762, %v6126
    %v6128 = vand.u32 %v6127, 4294901760
    %v6129 = vsub.f32 %v6127, %v6128
    %v6130 = vand.u32 %v6129, 4294901760
    %6131 = vmatpush.msra.mxu0 %v6130
    %v6132 = vand.u32 %v3761, 4294901760
    %v6133 = vsub.f32 %v3761, %v6132
    %v6134 = vand.u32 %v6133, 4294901760
    %v6135 = vsub.f32 %v6133, %v6134
    %v6136 = vand.u32 %v6135, 4294901760
    %6137 = vmatpush.msra.mxu0 %v6136
    %v6138 = vand.u32 %v3760, 4294901760
    %v6139 = vsub.f32 %v3760, %v6138
    %v6140 = vand.u32 %v6139, 4294901760
    %v6141 = vsub.f32 %v6139, %v6140
    %v6142 = vand.u32 %v6141, 4294901760
    %6143 = vmatpush.msra.mxu0 %v6142
    %v6144 = vand.u32 %v3759, 4294901760
    %v6145 = vsub.f32 %v3759, %v6144
    %v6146 = vand.u32 %v6145, 4294901760
    %v6147 = vsub.f32 %v6145, %v6146
    %v6148 = vand.u32 %v6147, 4294901760
    %6149 = vmatpush.msra.mxu0 %v6148
    %v6150 = vand.u32 %v3758, 4294901760
    %v6151 = vsub.f32 %v3758, %v6150
    %v6152 = vand.u32 %v6151, 4294901760
    %v6153 = vsub.f32 %v6151, %v6152
    %v6154 = vand.u32 %v6153, 4294901760
    %6155 = vmatpush.msra.mxu0 %v6154
    %v6156 = vand.u32 %v3757, 4294901760
    %v6157 = vsub.f32 %v3757, %v6156
    %v6158 = vand.u32 %v6157, 4294901760
    %v6159 = vsub.f32 %v6157, %v6158
    %v6160 = vand.u32 %v6159, 4294901760
    %6161 = vmatpush.msra.mxu0 %v6160
    %v6162 = vand.u32 %v3756, 4294901760
    %v6163 = vsub.f32 %v3756, %v6162
    %v6164 = vand.u32 %v6163, 4294901760
    %v6165 = vsub.f32 %v6163, %v6164
    %v6166 = vand.u32 %v6165, 4294901760
    %6167 = vmatpush.msra.mxu0 %v6166
    %v6168 = vand.u32 %v3755, 4294901760
    %v6169 = vsub.f32 %v3755, %v6168
    %v6170 = vand.u32 %v6169, 4294901760
    %v6171 = vsub.f32 %v6169, %v6170
    %v6172 = vand.u32 %v6171, 4294901760
    %6173 = vmatpush.msra.mxu0 %v6172
    %v6174 = vand.u32 %v3754, 4294901760
    %v6175 = vsub.f32 %v3754, %v6174
    %v6176 = vand.u32 %v6175, 4294901760
    %v6177 = vsub.f32 %v6175, %v6176
    %v6178 = vand.u32 %v6177, 4294901760
    %6179 = vmatpush.msra.mxu0 %v6178
    %v6180 = vand.u32 %v3753, 4294901760
    %v6181 = vsub.f32 %v3753, %v6180
    %v6182 = vand.u32 %v6181, 4294901760
    %v6183 = vsub.f32 %v6181, %v6182
    %v6184 = vand.u32 %v6183, 4294901760
    %6185 = vmatpush.msra.mxu0 %v6184
    %v6186 = vand.u32 %v3752, 4294901760
    %v6187 = vsub.f32 %v3752, %v6186
    %v6188 = vand.u32 %v6187, 4294901760
    %v6189 = vsub.f32 %v6187, %v6188
    %v6190 = vand.u32 %v6189, 4294901760
    %6191 = vmatpush.msra.mxu0 %v6190
    %v6192 = vand.u32 %v6039, 4294901760
    %6193 = vmatmul.f32.gmra.mxu0 %v6192
    %v6194 = vpop.f32.mrf.mxu0
    %v6195 = vadd.f32 %v6086, %v6194
    %v6196 = vand.u32 %v6038, 4294901760
    %6197 = vmatmul.f32.gmra.mxu0 %v6196
    %v6198 = vpop.f32.mrf.mxu0
    %v6199 = vadd.f32 %v6094, %v6198
    %6200 = vdwg.mxu0
    %v6201 = vand.u32 %v3767, 4294901760
    %v6202 = vsub.f32 %v3767, %v6201
    %6203 = vmatpush.msra.mxu0 %v6202
    %v6204 = vand.u32 %v3766, 4294901760
    %v6205 = vsub.f32 %v3766, %v6204
    %6206 = vmatpush.msra.mxu0 %v6205
    %v6207 = vand.u32 %v3765, 4294901760
    %v6208 = vsub.f32 %v3765, %v6207
    %6209 = vmatpush.msra.mxu0 %v6208
    %v6210 = vand.u32 %v3764, 4294901760
    %v6211 = vsub.f32 %v3764, %v6210
    %6212 = vmatpush.msra.mxu0 %v6211
    %v6213 = vand.u32 %v3763, 4294901760
    %v6214 = vsub.f32 %v3763, %v6213
    %6215 = vmatpush.msra.mxu0 %v6214
    %v6216 = vand.u32 %v3762, 4294901760
    %v6217 = vsub.f32 %v3762, %v6216
    %6218 = vmatpush.msra.mxu0 %v6217
    %v6219 = vand.u32 %v3761, 4294901760
    %v6220 = vsub.f32 %v3761, %v6219
    %6221 = vmatpush.msra.mxu0 %v6220
    %v6222 = vand.u32 %v3760, 4294901760
    %v6223 = vsub.f32 %v3760, %v6222
    %6224 = vmatpush.msra.mxu0 %v6223
    %v6225 = vand.u32 %v3759, 4294901760
    %v6226 = vsub.f32 %v3759, %v6225
    %6227 = vmatpush.msra.mxu0 %v6226
    %v6228 = vand.u32 %v3758, 4294901760
    %v6229 = vsub.f32 %v3758, %v6228
    %6230 = vmatpush.msra.mxu0 %v6229
    %v6231 = vand.u32 %v3757, 4294901760
    %v6232 = vsub.f32 %v3757, %v6231
    %6233 = vmatpush.msra.mxu0 %v6232
    %v6234 = vand.u32 %v3756, 4294901760
    %v6235 = vsub.f32 %v3756, %v6234
    %6236 = vmatpush.msra.mxu0 %v6235
    %v6237 = vand.u32 %v3755, 4294901760
    %v6238 = vsub.f32 %v3755, %v6237
    %6239 = vmatpush.msra.mxu0 %v6238
    %v6240 = vand.u32 %v3754, 4294901760
    %v6241 = vsub.f32 %v3754, %v6240
    %6242 = vmatpush.msra.mxu0 %v6241
    %v6243 = vand.u32 %v3753, 4294901760
    %v6244 = vsub.f32 %v3753, %v6243
    %6245 = vmatpush.msra.mxu0 %v6244
    %v6246 = vand.u32 %v3752, 4294901760
    %v6247 = vsub.f32 %v3752, %v6246
    %6248 = vmatpush.msra.mxu0 %v6247
    %v6249 = vand.u32 %v6039, 4294901760
    %v6250 = vsub.f32 %v6039, %v6249
    %6251 = vmatmul.f32.gmra.mxu0 %v6250
    %v6252 = vpop.f32.mrf.mxu0
    %v6253 = vadd.f32 %v6195, %v6252
    %v6254 = vand.u32 %v6038, 4294901760
    %v6255 = vsub.f32 %v6038, %v6254
    %6256 = vmatmul.f32.gmra.mxu0 %v6255
    %v6257 = vpop.f32.mrf.mxu0
    %v6258 = vadd.f32 %v6199, %v6257
    %6259 = vdwg.mxu0
    %v6260 = vand.u32 %v3767, 4294901760
    %6261 = vmatpush.msra.mxu0 %v6260
    %v6262 = vand.u32 %v3766, 4294901760
    %6263 = vmatpush.msra.mxu0 %v6262
    %v6264 = vand.u32 %v3765, 4294901760
    %6265 = vmatpush.msra.mxu0 %v6264
    %v6266 = vand.u32 %v3764, 4294901760
    %6267 = vmatpush.msra.mxu0 %v6266
    %v6268 = vand.u32 %v3763, 4294901760
    %6269 = vmatpush.msra.mxu0 %v6268
    %v6270 = vand.u32 %v3762, 4294901760
    %6271 = vmatpush.msra.mxu0 %v6270
    %v6272 = vand.u32 %v3761, 4294901760
    %6273 = vmatpush.msra.mxu0 %v6272
    %v6274 = vand.u32 %v3760, 4294901760
    %6275 = vmatpush.msra.mxu0 %v6274
    %v6276 = vand.u32 %v3759, 4294901760
    %6277 = vmatpush.msra.mxu0 %v6276
    %v6278 = vand.u32 %v3758, 4294901760
    %6279 = vmatpush.msra.mxu0 %v6278
    %v6280 = vand.u32 %v3757, 4294901760
    %6281 = vmatpush.msra.mxu0 %v6280
    %v6282 = vand.u32 %v3756, 4294901760
    %6283 = vmatpush.msra.mxu0 %v6282
    %v6284 = vand.u32 %v3755, 4294901760
    %6285 = vmatpush.msra.mxu0 %v6284
    %v6286 = vand.u32 %v3754, 4294901760
    %6287 = vmatpush.msra.mxu0 %v6286
    %v6288 = vand.u32 %v3753, 4294901760
    %6289 = vmatpush.msra.mxu0 %v6288
    %v6290 = vand.u32 %v3752, 4294901760
    %6291 = vmatpush.msra.mxu0 %v6290
    %v6292 = vand.u32 %v6039, 4294901760
    %v6293 = vsub.f32 %v6039, %v6292
    %v6294 = vand.u32 %v6293, 4294901760
    %6295 = vmatmul.f32.gmra.mxu0 %v6294
    %v6296 = vpop.f32.mrf.mxu0
    %v6297 = vadd.f32 %v6253, %v6296
    %v6298 = vand.u32 %v6038, 4294901760
    %v6299 = vsub.f32 %v6038, %v6298
    %v6300 = vand.u32 %v6299, 4294901760
    %6301 = vmatmul.f32.gmra.mxu0 %v6300
    %v6302 = vpop.f32.mrf.mxu0
    %v6303 = vadd.f32 %v6258, %v6302
    %6304 = vdwg.mxu0
    %v6305 = vand.u32 %v3767, 4294901760
    %v6306 = vsub.f32 %v3767, %v6305
    %v6307 = vand.u32 %v6306, 4294901760
    %6308 = vmatpush.msra.mxu0 %v6307
    %v6309 = vand.u32 %v3766, 4294901760
    %v6310 = vsub.f32 %v3766, %v6309
    %v6311 = vand.u32 %v6310, 4294901760
    %6312 = vmatpush.msra.mxu0 %v6311
    %v6313 = vand.u32 %v3765, 4294901760
    %v6314 = vsub.f32 %v3765, %v6313
    %v6315 = vand.u32 %v6314, 4294901760
    %6316 = vmatpush.msra.mxu0 %v6315
    %v6317 = vand.u32 %v3764, 4294901760
    %v6318 = vsub.f32 %v3764, %v6317
    %v6319 = vand.u32 %v6318, 4294901760
    %6320 = vmatpush.msra.mxu0 %v6319
    %v6321 = vand.u32 %v3763, 4294901760
    %v6322 = vsub.f32 %v3763, %v6321
    %v6323 = vand.u32 %v6322, 4294901760
    %6324 = vmatpush.msra.mxu0 %v6323
    %v6325 = vand.u32 %v3762, 4294901760
    %v6326 = vsub.f32 %v3762, %v6325
    %v6327 = vand.u32 %v6326, 4294901760
    %6328 = vmatpush.msra.mxu0 %v6327
    %v6329 = vand.u32 %v3761, 4294901760
    %v6330 = vsub.f32 %v3761, %v6329
    %v6331 = vand.u32 %v6330, 4294901760
    %6332 = vmatpush.msra.mxu0 %v6331
    %v6333 = vand.u32 %v3760, 4294901760
    %v6334 = vsub.f32 %v3760, %v6333
    %v6335 = vand.u32 %v6334, 4294901760
    %6336 = vmatpush.msra.mxu0 %v6335
    %v6337 = vand.u32 %v3759, 4294901760
    %v6338 = vsub.f32 %v3759, %v6337
    %v6339 = vand.u32 %v6338, 4294901760
    %6340 = vmatpush.msra.mxu0 %v6339
    %v6341 = vand.u32 %v3758, 4294901760
    %v6342 = vsub.f32 %v3758, %v6341
    %v6343 = vand.u32 %v6342, 4294901760
    %6344 = vmatpush.msra.mxu0 %v6343
    %v6345 = vand.u32 %v3757, 4294901760
    %v6346 = vsub.f32 %v3757, %v6345
    %v6347 = vand.u32 %v6346, 4294901760
    %6348 = vmatpush.msra.mxu0 %v6347
    %v6349 = vand.u32 %v3756, 4294901760
    %v6350 = vsub.f32 %v3756, %v6349
    %v6351 = vand.u32 %v6350, 4294901760
    %6352 = vmatpush.msra.mxu0 %v6351
    %v6353 = vand.u32 %v3755, 4294901760
    %v6354 = vsub.f32 %v3755, %v6353
    %v6355 = vand.u32 %v6354, 4294901760
    %6356 = vmatpush.msra.mxu0 %v6355
    %v6357 = vand.u32 %v3754, 4294901760
    %v6358 = vsub.f32 %v3754, %v6357
    %v6359 = vand.u32 %v6358, 4294901760
    %6360 = vmatpush.msra.mxu0 %v6359
    %v6361 = vand.u32 %v3753, 4294901760
    %v6362 = vsub.f32 %v3753, %v6361
    %v6363 = vand.u32 %v6362, 4294901760
    %6364 = vmatpush.msra.mxu0 %v6363
    %v6365 = vand.u32 %v3752, 4294901760
    %v6366 = vsub.f32 %v3752, %v6365
    %v6367 = vand.u32 %v6366, 4294901760
    %6368 = vmatpush.msra.mxu0 %v6367
    %v6369 = vand.u32 %v6039, 4294901760
    %6370 = vmatmul.f32.gmra.mxu0 %v6369
    %v6371 = vpop.f32.mrf.mxu0
    %v6372 = vadd.f32 %v6297, %v6371
    %v6373 = vand.u32 %v6038, 4294901760
    %6374 = vmatmul.f32.gmra.mxu0 %v6373
    %v6375 = vpop.f32.mrf.mxu0
    %v6376 = vadd.f32 %v6303, %v6375
    %6377 = vdwg.mxu0
    %v6378 = vand.u32 %v3767, 4294901760
    %6379 = vmatpush.msra.mxu0 %v6378
    %v6380 = vand.u32 %v3766, 4294901760
    %6381 = vmatpush.msra.mxu0 %v6380
    %v6382 = vand.u32 %v3765, 4294901760
    %6383 = vmatpush.msra.mxu0 %v6382
    %v6384 = vand.u32 %v3764, 4294901760
    %6385 = vmatpush.msra.mxu0 %v6384
    %v6386 = vand.u32 %v3763, 4294901760
    %6387 = vmatpush.msra.mxu0 %v6386
    %v6388 = vand.u32 %v3762, 4294901760
    %6389 = vmatpush.msra.mxu0 %v6388
    %v6390 = vand.u32 %v3761, 4294901760
    %6391 = vmatpush.msra.mxu0 %v6390
    %v6392 = vand.u32 %v3760, 4294901760
    %6393 = vmatpush.msra.mxu0 %v6392
    %v6394 = vand.u32 %v3759, 4294901760
    %6395 = vmatpush.msra.mxu0 %v6394
    %v6396 = vand.u32 %v3758, 4294901760
    %6397 = vmatpush.msra.mxu0 %v6396
    %v6398 = vand.u32 %v3757, 4294901760
    %6399 = vmatpush.msra.mxu0 %v6398
    %v6400 = vand.u32 %v3756, 4294901760
    %6401 = vmatpush.msra.mxu0 %v6400
    %v6402 = vand.u32 %v3755, 4294901760
    %6403 = vmatpush.msra.mxu0 %v6402
    %v6404 = vand.u32 %v3754, 4294901760
    %6405 = vmatpush.msra.mxu0 %v6404
    %v6406 = vand.u32 %v3753, 4294901760
    %6407 = vmatpush.msra.mxu0 %v6406
    %v6408 = vand.u32 %v3752, 4294901760
    %6409 = vmatpush.msra.mxu0 %v6408
    %v6410 = vand.u32 %v6039, 4294901760
    %6411 = vmatmul.f32.gmra.mxu0 %v6410
    %v6412 = vpop.f32.mrf.mxu0
    %v6413 = vadd.f32 %v6372, %v6412
    %v6414 = vand.u32 %v6038, 4294901760
    %6415 = vmatmul.f32.gmra.mxu0 %v6414
    %v6416 = vpop.f32.mrf.mxu0
    %v6417 = vadd.f32 %v6376, %v6416
    %6418 = vdwg.mxu0
    %v6419 = vand.u32 %v3783, 4294901760
    %6420 = vmatpush.msra.mxu0 %v6419
    %v6421 = vand.u32 %v3782, 4294901760
    %6422 = vmatpush.msra.mxu0 %v6421
    %v6423 = vand.u32 %v3781, 4294901760
    %6424 = vmatpush.msra.mxu0 %v6423
    %v6425 = vand.u32 %v3780, 4294901760
    %6426 = vmatpush.msra.mxu0 %v6425
    %v6427 = vand.u32 %v3779, 4294901760
    %6428 = vmatpush.msra.mxu0 %v6427
    %v6429 = vand.u32 %v3778, 4294901760
    %6430 = vmatpush.msra.mxu0 %v6429
    %v6431 = vand.u32 %v3777, 4294901760
    %6432 = vmatpush.msra.mxu0 %v6431
    %v6433 = vand.u32 %v3776, 4294901760
    %6434 = vmatpush.msra.mxu0 %v6433
    %v6435 = vand.u32 %v3775, 4294901760
    %6436 = vmatpush.msra.mxu0 %v6435
    %v6437 = vand.u32 %v3774, 4294901760
    %6438 = vmatpush.msra.mxu0 %v6437
    %v6439 = vand.u32 %v3773, 4294901760
    %6440 = vmatpush.msra.mxu0 %v6439
    %v6441 = vand.u32 %v3772, 4294901760
    %6442 = vmatpush.msra.mxu0 %v6441
    %v6443 = vand.u32 %v3771, 4294901760
    %6444 = vmatpush.msra.mxu0 %v6443
    %v6445 = vand.u32 %v3770, 4294901760
    %6446 = vmatpush.msra.mxu0 %v6445
    %v6447 = vand.u32 %v3769, 4294901760
    %6448 = vmatpush.msra.mxu0 %v6447
    %v6449 = vand.u32 %v3768, 4294901760
    %6450 = vmatpush.msra.mxu0 %v6449
    %v6451 = vand.u32 %v6042, 4294901760
    %v6452 = vsub.f32 %v6042, %v6451
    %v6453 = vand.u32 %v6452, 4294901760
    %v6454 = vsub.f32 %v6452, %v6453
    %v6455 = vand.u32 %v6454, 4294901760
    %6456 = vmatmul.f32.gmra.mxu0 %v6455
    %v6457 = vpop.f32.mrf.mxu0
    %v6458 = vadd.f32 %v6413, %v6457
    %v6459 = vand.u32 %v6041, 4294901760
    %v6460 = vsub.f32 %v6041, %v6459
    %v6461 = vand.u32 %v6460, 4294901760
    %v6462 = vsub.f32 %v6460, %v6461
    %v6463 = vand.u32 %v6462, 4294901760
    %6464 = vmatmul.f32.gmra.mxu0 %v6463
    %v6465 = vpop.f32.mrf.mxu0
    %v6466 = vadd.f32 %v6417, %v6465
    %6467 = vdwg.mxu0
    %v6468 = vand.u32 %v3783, 4294901760
    %v6469 = vsub.f32 %v3783, %v6468
    %v6470 = vand.u32 %v6469, 4294901760
    %v6471 = vsub.f32 %v6469, %v6470
    %v6472 = vand.u32 %v6471, 4294901760
    %6473 = vmatpush.msra.mxu0 %v6472
    %v6474 = vand.u32 %v3782, 4294901760
    %v6475 = vsub.f32 %v3782, %v6474
    %v6476 = vand.u32 %v6475, 4294901760
    %v6477 = vsub.f32 %v6475, %v6476
    %v6478 = vand.u32 %v6477, 4294901760
    %6479 = vmatpush.msra.mxu0 %v6478
    %v6480 = vand.u32 %v3781, 4294901760
    %v6481 = vsub.f32 %v3781, %v6480
    %v6482 = vand.u32 %v6481, 4294901760
    %v6483 = vsub.f32 %v6481, %v6482
    %v6484 = vand.u32 %v6483, 4294901760
    %6485 = vmatpush.msra.mxu0 %v6484
    %v6486 = vand.u32 %v3780, 4294901760
    %v6487 = vsub.f32 %v3780, %v6486
    %v6488 = vand.u32 %v6487, 4294901760
    %v6489 = vsub.f32 %v6487, %v6488
    %v6490 = vand.u32 %v6489, 4294901760
    %6491 = vmatpush.msra.mxu0 %v6490
    %v6492 = vand.u32 %v3779, 4294901760
    %v6493 = vsub.f32 %v3779, %v6492
    %v6494 = vand.u32 %v6493, 4294901760
    %v6495 = vsub.f32 %v6493, %v6494
    %v6496 = vand.u32 %v6495, 4294901760
    %6497 = vmatpush.msra.mxu0 %v6496
    %v6498 = vand.u32 %v3778, 4294901760
    %v6499 = vsub.f32 %v3778, %v6498
    %v6500 = vand.u32 %v6499, 4294901760
    %v6501 = vsub.f32 %v6499, %v6500
    %v6502 = vand.u32 %v6501, 4294901760
    %6503 = vmatpush.msra.mxu0 %v6502
    %v6504 = vand.u32 %v3777, 4294901760
    %v6505 = vsub.f32 %v3777, %v6504
    %v6506 = vand.u32 %v6505, 4294901760
    %v6507 = vsub.f32 %v6505, %v6506
    %v6508 = vand.u32 %v6507, 4294901760
    %6509 = vmatpush.msra.mxu0 %v6508
    %v6510 = vand.u32 %v3776, 4294901760
    %v6511 = vsub.f32 %v3776, %v6510
    %v6512 = vand.u32 %v6511, 4294901760
    %v6513 = vsub.f32 %v6511, %v6512
    %v6514 = vand.u32 %v6513, 4294901760
    %6515 = vmatpush.msra.mxu0 %v6514
    %v6516 = vand.u32 %v3775, 4294901760
    %v6517 = vsub.f32 %v3775, %v6516
    %v6518 = vand.u32 %v6517, 4294901760
    %v6519 = vsub.f32 %v6517, %v6518
    %v6520 = vand.u32 %v6519, 4294901760
    %6521 = vmatpush.msra.mxu0 %v6520
    %v6522 = vand.u32 %v3774, 4294901760
    %v6523 = vsub.f32 %v3774, %v6522
    %v6524 = vand.u32 %v6523, 4294901760
    %v6525 = vsub.f32 %v6523, %v6524
    %v6526 = vand.u32 %v6525, 4294901760
    %6527 = vmatpush.msra.mxu0 %v6526
    %v6528 = vand.u32 %v3773, 4294901760
    %v6529 = vsub.f32 %v3773, %v6528
    %v6530 = vand.u32 %v6529, 4294901760
    %v6531 = vsub.f32 %v6529, %v6530
    %v6532 = vand.u32 %v6531, 4294901760
    %6533 = vmatpush.msra.mxu0 %v6532
    %v6534 = vand.u32 %v3772, 4294901760
    %v6535 = vsub.f32 %v3772, %v6534
    %v6536 = vand.u32 %v6535, 4294901760
    %v6537 = vsub.f32 %v6535, %v6536
    %v6538 = vand.u32 %v6537, 4294901760
    %6539 = vmatpush.msra.mxu0 %v6538
    %v6540 = vand.u32 %v3771, 4294901760
    %v6541 = vsub.f32 %v3771, %v6540
    %v6542 = vand.u32 %v6541, 4294901760
    %v6543 = vsub.f32 %v6541, %v6542
    %v6544 = vand.u32 %v6543, 4294901760
    %6545 = vmatpush.msra.mxu0 %v6544
    %v6546 = vand.u32 %v3770, 4294901760
    %v6547 = vsub.f32 %v3770, %v6546
    %v6548 = vand.u32 %v6547, 4294901760
    %v6549 = vsub.f32 %v6547, %v6548
    %v6550 = vand.u32 %v6549, 4294901760
    %6551 = vmatpush.msra.mxu0 %v6550
    %v6552 = vand.u32 %v3769, 4294901760
    %v6553 = vsub.f32 %v3769, %v6552
    %v6554 = vand.u32 %v6553, 4294901760
    %v6555 = vsub.f32 %v6553, %v6554
    %v6556 = vand.u32 %v6555, 4294901760
    %6557 = vmatpush.msra.mxu0 %v6556
    %v6558 = vand.u32 %v3768, 4294901760
    %v6559 = vsub.f32 %v3768, %v6558
    %v6560 = vand.u32 %v6559, 4294901760
    %v6561 = vsub.f32 %v6559, %v6560
    %v6562 = vand.u32 %v6561, 4294901760
    %6563 = vmatpush.msra.mxu0 %v6562
    %v6564 = vand.u32 %v6042, 4294901760
    %6565 = vmatmul.f32.gmra.mxu0 %v6564
    %v6566 = vpop.f32.mrf.mxu0
    %v6567 = vadd.f32 %v6458, %v6566
    %v6568 = vand.u32 %v6041, 4294901760
    %6569 = vmatmul.f32.gmra.mxu0 %v6568
    %v6570 = vpop.f32.mrf.mxu0
    %v6571 = vadd.f32 %v6466, %v6570
    %6572 = vdwg.mxu0
    %v6573 = vand.u32 %v3783, 4294901760
    %v6574 = vsub.f32 %v3783, %v6573
    %6575 = vmatpush.msra.mxu0 %v6574
    %v6576 = vand.u32 %v3782, 4294901760
    %v6577 = vsub.f32 %v3782, %v6576
    %6578 = vmatpush.msra.mxu0 %v6577
    %v6579 = vand.u32 %v3781, 4294901760
    %v6580 = vsub.f32 %v3781, %v6579
    %6581 = vmatpush.msra.mxu0 %v6580
    %v6582 = vand.u32 %v3780, 4294901760
    %v6583 = vsub.f32 %v3780, %v6582
    %6584 = vmatpush.msra.mxu0 %v6583
    %v6585 = vand.u32 %v3779, 4294901760
    %v6586 = vsub.f32 %v3779, %v6585
    %6587 = vmatpush.msra.mxu0 %v6586
    %v6588 = vand.u32 %v3778, 4294901760
    %v6589 = vsub.f32 %v3778, %v6588
    %6590 = vmatpush.msra.mxu0 %v6589
    %v6591 = vand.u32 %v3777, 4294901760
    %v6592 = vsub.f32 %v3777, %v6591
    %6593 = vmatpush.msra.mxu0 %v6592
    %v6594 = vand.u32 %v3776, 4294901760
    %v6595 = vsub.f32 %v3776, %v6594
    %6596 = vmatpush.msra.mxu0 %v6595
    %v6597 = vand.u32 %v3775, 4294901760
    %v6598 = vsub.f32 %v3775, %v6597
    %6599 = vmatpush.msra.mxu0 %v6598
    %v6600 = vand.u32 %v3774, 4294901760
    %v6601 = vsub.f32 %v3774, %v6600
    %6602 = vmatpush.msra.mxu0 %v6601
    %v6603 = vand.u32 %v3773, 4294901760
    %v6604 = vsub.f32 %v3773, %v6603
    %6605 = vmatpush.msra.mxu0 %v6604
    %v6606 = vand.u32 %v3772, 4294901760
    %v6607 = vsub.f32 %v3772, %v6606
    %6608 = vmatpush.msra.mxu0 %v6607
    %v6609 = vand.u32 %v3771, 4294901760
    %v6610 = vsub.f32 %v3771, %v6609
    %6611 = vmatpush.msra.mxu0 %v6610
    %v6612 = vand.u32 %v3770, 4294901760
    %v6613 = vsub.f32 %v3770, %v6612
    %6614 = vmatpush.msra.mxu0 %v6613
    %v6615 = vand.u32 %v3769, 4294901760
    %v6616 = vsub.f32 %v3769, %v6615
    %6617 = vmatpush.msra.mxu0 %v6616
    %v6618 = vand.u32 %v3768, 4294901760
    %v6619 = vsub.f32 %v3768, %v6618
    %6620 = vmatpush.msra.mxu0 %v6619
    %v6621 = vand.u32 %v6042, 4294901760
    %v6622 = vsub.f32 %v6042, %v6621
    %6623 = vmatmul.f32.gmra.mxu0 %v6622
    %v6624 = vpop.f32.mrf.mxu0
    %v6625 = vadd.f32 %v6567, %v6624
    %v6626 = vand.u32 %v6041, 4294901760
    %v6627 = vsub.f32 %v6041, %v6626
    %6628 = vmatmul.f32.gmra.mxu0 %v6627
    %v6629 = vpop.f32.mrf.mxu0
    %v6630 = vadd.f32 %v6571, %v6629
    %6631 = vdwg.mxu0
    %v6632 = vand.u32 %v3783, 4294901760
    %6633 = vmatpush.msra.mxu0 %v6632
    %v6634 = vand.u32 %v3782, 4294901760
    %6635 = vmatpush.msra.mxu0 %v6634
    %v6636 = vand.u32 %v3781, 4294901760
    %6637 = vmatpush.msra.mxu0 %v6636
    %v6638 = vand.u32 %v3780, 4294901760
    %6639 = vmatpush.msra.mxu0 %v6638
    %v6640 = vand.u32 %v3779, 4294901760
    %6641 = vmatpush.msra.mxu0 %v6640
    %v6642 = vand.u32 %v3778, 4294901760
    %6643 = vmatpush.msra.mxu0 %v6642
    %v6644 = vand.u32 %v3777, 4294901760
    %6645 = vmatpush.msra.mxu0 %v6644
    %v6646 = vand.u32 %v3776, 4294901760
    %6647 = vmatpush.msra.mxu0 %v6646
    %v6648 = vand.u32 %v3775, 4294901760
    %6649 = vmatpush.msra.mxu0 %v6648
    %v6650 = vand.u32 %v3774, 4294901760
    %6651 = vmatpush.msra.mxu0 %v6650
    %v6652 = vand.u32 %v3773, 4294901760
    %6653 = vmatpush.msra.mxu0 %v6652
    %v6654 = vand.u32 %v3772, 4294901760
    %6655 = vmatpush.msra.mxu0 %v6654
    %v6656 = vand.u32 %v3771, 4294901760
    %6657 = vmatpush.msra.mxu0 %v6656
    %v6658 = vand.u32 %v3770, 4294901760
    %6659 = vmatpush.msra.mxu0 %v6658
    %v6660 = vand.u32 %v3769, 4294901760
    %6661 = vmatpush.msra.mxu0 %v6660
    %v6662 = vand.u32 %v3768, 4294901760
    %6663 = vmatpush.msra.mxu0 %v6662
    %v6664 = vand.u32 %v6042, 4294901760
    %v6665 = vsub.f32 %v6042, %v6664
    %v6666 = vand.u32 %v6665, 4294901760
    %6667 = vmatmul.f32.gmra.mxu0 %v6666
    %v6668 = vpop.f32.mrf.mxu0
    %v6669 = vadd.f32 %v6625, %v6668
    %v6670 = vand.u32 %v6041, 4294901760
    %v6671 = vsub.f32 %v6041, %v6670
    %v6672 = vand.u32 %v6671, 4294901760
    %6673 = vmatmul.f32.gmra.mxu0 %v6672
    %v6674 = vpop.f32.mrf.mxu0
    %v6675 = vadd.f32 %v6630, %v6674
    %6676 = vdwg.mxu0
    %v6677 = vand.u32 %v3783, 4294901760
    %v6678 = vsub.f32 %v3783, %v6677
    %v6679 = vand.u32 %v6678, 4294901760
    %6680 = vmatpush.msra.mxu0 %v6679
    %v6681 = vand.u32 %v3782, 4294901760
    %v6682 = vsub.f32 %v3782, %v6681
    %v6683 = vand.u32 %v6682, 4294901760
    %6684 = vmatpush.msra.mxu0 %v6683
    %v6685 = vand.u32 %v3781, 4294901760
    %v6686 = vsub.f32 %v3781, %v6685
    %v6687 = vand.u32 %v6686, 4294901760
    %6688 = vmatpush.msra.mxu0 %v6687
    %v6689 = vand.u32 %v3780, 4294901760
    %v6690 = vsub.f32 %v3780, %v6689
    %v6691 = vand.u32 %v6690, 4294901760
    %6692 = vmatpush.msra.mxu0 %v6691
    %v6693 = vand.u32 %v3779, 4294901760
    %v6694 = vsub.f32 %v3779, %v6693
    %v6695 = vand.u32 %v6694, 4294901760
    %6696 = vmatpush.msra.mxu0 %v6695
    %v6697 = vand.u32 %v3778, 4294901760
    %v6698 = vsub.f32 %v3778, %v6697
    %v6699 = vand.u32 %v6698, 4294901760
    %6700 = vmatpush.msra.mxu0 %v6699
    %v6701 = vand.u32 %v3777, 4294901760
    %v6702 = vsub.f32 %v3777, %v6701
    %v6703 = vand.u32 %v6702, 4294901760
    %6704 = vmatpush.msra.mxu0 %v6703
    %v6705 = vand.u32 %v3776, 4294901760
    %v6706 = vsub.f32 %v3776, %v6705
    %v6707 = vand.u32 %v6706, 4294901760
    %6708 = vmatpush.msra.mxu0 %v6707
    %v6709 = vand.u32 %v3775, 4294901760
    %v6710 = vsub.f32 %v3775, %v6709
    %v6711 = vand.u32 %v6710, 4294901760
    %6712 = vmatpush.msra.mxu0 %v6711
    %v6713 = vand.u32 %v3774, 4294901760
    %v6714 = vsub.f32 %v3774, %v6713
    %v6715 = vand.u32 %v6714, 4294901760
    %6716 = vmatpush.msra.mxu0 %v6715
    %v6717 = vand.u32 %v3773, 4294901760
    %v6718 = vsub.f32 %v3773, %v6717
    %v6719 = vand.u32 %v6718, 4294901760
    %6720 = vmatpush.msra.mxu0 %v6719
    %v6721 = vand.u32 %v3772, 4294901760
    %v6722 = vsub.f32 %v3772, %v6721
    %v6723 = vand.u32 %v6722, 4294901760
    %6724 = vmatpush.msra.mxu0 %v6723
    %v6725 = vand.u32 %v3771, 4294901760
    %v6726 = vsub.f32 %v3771, %v6725
    %v6727 = vand.u32 %v6726, 4294901760
    %6728 = vmatpush.msra.mxu0 %v6727
    %v6729 = vand.u32 %v3770, 4294901760
    %v6730 = vsub.f32 %v3770, %v6729
    %v6731 = vand.u32 %v6730, 4294901760
    %6732 = vmatpush.msra.mxu0 %v6731
    %v6733 = vand.u32 %v3769, 4294901760
    %v6734 = vsub.f32 %v3769, %v6733
    %v6735 = vand.u32 %v6734, 4294901760
    %6736 = vmatpush.msra.mxu0 %v6735
    %v6737 = vand.u32 %v3768, 4294901760
    %v6738 = vsub.f32 %v3768, %v6737
    %v6739 = vand.u32 %v6738, 4294901760
    %6740 = vmatpush.msra.mxu0 %v6739
    %v6741 = vand.u32 %v6042, 4294901760
    %6742 = vmatmul.f32.gmra.mxu0 %v6741
    %v6743 = vpop.f32.mrf.mxu0
    %v6744 = vadd.f32 %v6669, %v6743
    %v6745 = vand.u32 %v6041, 4294901760
    %6746 = vmatmul.f32.gmra.mxu0 %v6745
    %v6747 = vpop.f32.mrf.mxu0
    %v6748 = vadd.f32 %v6675, %v6747
    %6749 = vdwg.mxu0
    %v6750 = vand.u32 %v3783, 4294901760
    %6751 = vmatpush.msra.mxu0 %v6750
    %v6752 = vand.u32 %v3782, 4294901760
    %6753 = vmatpush.msra.mxu0 %v6752
    %v6754 = vand.u32 %v3781, 4294901760
    %6755 = vmatpush.msra.mxu0 %v6754
    %v6756 = vand.u32 %v3780, 4294901760
    %6757 = vmatpush.msra.mxu0 %v6756
    %v6758 = vand.u32 %v3779, 4294901760
    %6759 = vmatpush.msra.mxu0 %v6758
    %v6760 = vand.u32 %v3778, 4294901760
    %6761 = vmatpush.msra.mxu0 %v6760
    %v6762 = vand.u32 %v3777, 4294901760
    %6763 = vmatpush.msra.mxu0 %v6762
    %v6764 = vand.u32 %v3776, 4294901760
    %6765 = vmatpush.msra.mxu0 %v6764
    %v6766 = vand.u32 %v3775, 4294901760
    %6767 = vmatpush.msra.mxu0 %v6766
    %v6768 = vand.u32 %v3774, 4294901760
    %6769 = vmatpush.msra.mxu0 %v6768
    %v6770 = vand.u32 %v3773, 4294901760
    %6771 = vmatpush.msra.mxu0 %v6770
    %v6772 = vand.u32 %v3772, 4294901760
    %6773 = vmatpush.msra.mxu0 %v6772
    %v6774 = vand.u32 %v3771, 4294901760
    %6775 = vmatpush.msra.mxu0 %v6774
    %v6776 = vand.u32 %v3770, 4294901760
    %6777 = vmatpush.msra.mxu0 %v6776
    %v6778 = vand.u32 %v3769, 4294901760
    %6779 = vmatpush.msra.mxu0 %v6778
    %v6780 = vand.u32 %v3768, 4294901760
    %6781 = vmatpush.msra.mxu0 %v6780
    %v6782 = vand.u32 %v6042, 4294901760
    %6783 = vmatmul.f32.gmra.mxu0 %v6782
    %v6784 = vpop.f32.mrf.mxu0
    %v6785 = vadd.f32 %v6744, %v6784
    %v6786 = vand.u32 %v6041, 4294901760
    %6787 = vmatmul.f32.gmra.mxu0 %v6786
    %v6788 = vpop.f32.mrf.mxu0
    %v6789 = vadd.f32 %v6748, %v6788
    %6790 = vdwg.mxu0
    %v6791 = vadd.f32 %v6027, %v6785
    %v6792 = vadd.f32 %v6031, %v6789
    %v6793 = vld [vmem:[%s3] sm:$0x1]
    %v6795 = vperm.slane %v6793, 0
    %v6797 = vadd.f32 %v4543, %v6795
    %v6798 = vadd.f32 %v4544, %v6795
    %v6799 = vmax.f32 %v6797, 0.0
    %v6800 = vmax.f32 %v6798, 0.0
    %v6801 = vadd.f32 %v6791, %v6795
    %v6802 = vadd.f32 %v6792, %v6795
    %v6803 = vmax.f32 %v6801, 0.0
    %v6804 = vmax.f32 %v6802, 0.0
    %v6805 = vmax.f32 %v6799, %v6803
    %v6806 = vmax.f32 %v6800, %v6804
    %6809 = vrot.lane.b32.xlu0 %v6805, 100
    %v6810 = vpop.permute.xlu0 %6809
    %6811 = vrot.lane.b32.xlu0 %v6806, 100
    %v6812 = vpop.permute.xlu0 %6811
    %v6815 = vmax.f32 %v6805, %v6810
    %v6816 = vmax.f32 %v6806, %v6812
    %v6817 = vld [vmem:[%s4] sm:$0xff]
    %v6818 = vld [vmem:[%s4 + $0x8] sm:$0xff]
    %v6819 = vld [vmem:[%s4 + $0x10] sm:$0xff]
    %v6820 = vld [vmem:[%s4 + $0x18] sm:$0xf]
    %s6821 = scalar_lea.vmem %s4, 32
    %v6822 = vld [vmem:[%s6821] sm:$0xff]
    %v6823 = vld [vmem:[%s6821 + $0x8] sm:$0xff]
    %v6824 = vld [vmem:[%s6821 + $0x10] sm:$0xff]
    %v6825 = vld [vmem:[%s6821 + $0x18] sm:$0xf]
    %v6827 = vrot.slane %v6815, 2
    %vm6828 = vcmask 228352
    %v6829 = vsel %vm6828, %v6827, 0
    %vm6831 = vcmask 1043456
    %v6833 = vsel %vm6831, %v6825, 0
    %6835 = vmatpush.msra.mxu0 0.0
    %6836 = vmatpush.msra.mxu0 0.0
    %6837 = vmatpush.msra.mxu0 0.0
    %6838 = vmatpush.msra.mxu0 0.0
    %6839 = vmatpush.msra.mxu0 0.0
    %6840 = vmatpush.msra.mxu0 0.0
    %6841 = vmatpush.msra.mxu0 0.0
    %6842 = vmatpush.msra.mxu0 0.0
    %6843 = vmatpush.msra.mxu0 0.0
    %6844 = vmatpush.msra.mxu0 0.0
    %6845 = vmatpush.msra.mxu0 0.0
    %6846 = vmatpush.msra.mxu0 0.0
    %v6847 = vand.u32 %v6833, 4294901760
    %6848 = vmatpush.msra.mxu0 %v6847
    %v6849 = vand.u32 %v6824, 4294901760
    %6850 = vmatpush.msra.mxu0 %v6849
    %v6851 = vand.u32 %v6823, 4294901760
    %6852 = vmatpush.msra.mxu0 %v6851
    %v6853 = vand.u32 %v6822, 4294901760
    %6854 = vmatpush.msra.mxu0 %v6853
    %v6855 = vand.u32 %v6829, 4294901760
    %v6856 = vsub.f32 %v6829, %v6855
    %v6857 = vand.u32 %v6856, 4294901760
    %v6858 = vsub.f32 %v6856, %v6857
    %v6859 = vand.u32 %v6858, 4294901760
    %6860 = vmatmul.f32.gmra.mxu0 %v6859
    %v6861 = vpop.f32.mrf.mxu0
    %v6862 = vadd.f32 0.0, %v6861
    %6863 = vdwg.mxu0
    %6864 = vmatpush.msra.mxu0 0.0
    %6865 = vmatpush.msra.mxu0 0.0
    %6866 = vmatpush.msra.mxu0 0.0
    %6867 = vmatpush.msra.mxu0 0.0
    %6868 = vmatpush.msra.mxu0 0.0
    %6869 = vmatpush.msra.mxu0 0.0
    %6870 = vmatpush.msra.mxu0 0.0
    %6871 = vmatpush.msra.mxu0 0.0
    %6872 = vmatpush.msra.mxu0 0.0
    %6873 = vmatpush.msra.mxu0 0.0
    %6874 = vmatpush.msra.mxu0 0.0
    %6875 = vmatpush.msra.mxu0 0.0
    %v6876 = vand.u32 %v6833, 4294901760
    %v6877 = vsub.f32 %v6833, %v6876
    %v6878 = vand.u32 %v6877, 4294901760
    %v6879 = vsub.f32 %v6877, %v6878
    %v6880 = vand.u32 %v6879, 4294901760
    %6881 = vmatpush.msra.mxu0 %v6880
    %v6882 = vand.u32 %v6824, 4294901760
    %v6883 = vsub.f32 %v6824, %v6882
    %v6884 = vand.u32 %v6883, 4294901760
    %v6885 = vsub.f32 %v6883, %v6884
    %v6886 = vand.u32 %v6885, 4294901760
    %6887 = vmatpush.msra.mxu0 %v6886
    %v6888 = vand.u32 %v6823, 4294901760
    %v6889 = vsub.f32 %v6823, %v6888
    %v6890 = vand.u32 %v6889, 4294901760
    %v6891 = vsub.f32 %v6889, %v6890
    %v6892 = vand.u32 %v6891, 4294901760
    %6893 = vmatpush.msra.mxu0 %v6892
    %v6894 = vand.u32 %v6822, 4294901760
    %v6895 = vsub.f32 %v6822, %v6894
    %v6896 = vand.u32 %v6895, 4294901760
    %v6897 = vsub.f32 %v6895, %v6896
    %v6898 = vand.u32 %v6897, 4294901760
    %6899 = vmatpush.msra.mxu0 %v6898
    %v6900 = vand.u32 %v6829, 4294901760
    %6901 = vmatmul.f32.gmra.mxu0 %v6900
    %v6902 = vpop.f32.mrf.mxu0
    %v6903 = vadd.f32 %v6862, %v6902
    %6904 = vdwg.mxu0
    %6905 = vmatpush.msra.mxu0 0.0
    %6906 = vmatpush.msra.mxu0 0.0
    %6907 = vmatpush.msra.mxu0 0.0
    %6908 = vmatpush.msra.mxu0 0.0
    %6909 = vmatpush.msra.mxu0 0.0
    %6910 = vmatpush.msra.mxu0 0.0
    %6911 = vmatpush.msra.mxu0 0.0
    %6912 = vmatpush.msra.mxu0 0.0
    %6913 = vmatpush.msra.mxu0 0.0
    %6914 = vmatpush.msra.mxu0 0.0
    %6915 = vmatpush.msra.mxu0 0.0
    %6916 = vmatpush.msra.mxu0 0.0
    %v6917 = vand.u32 %v6833, 4294901760
    %v6918 = vsub.f32 %v6833, %v6917
    %6919 = vmatpush.msra.mxu0 %v6918
    %v6920 = vand.u32 %v6824, 4294901760
    %v6921 = vsub.f32 %v6824, %v6920
    %6922 = vmatpush.msra.mxu0 %v6921
    %v6923 = vand.u32 %v6823, 4294901760
    %v6924 = vsub.f32 %v6823, %v6923
    %6925 = vmatpush.msra.mxu0 %v6924
    %v6926 = vand.u32 %v6822, 4294901760
    %v6927 = vsub.f32 %v6822, %v6926
    %6928 = vmatpush.msra.mxu0 %v6927
    %v6929 = vand.u32 %v6829, 4294901760
    %v6930 = vsub.f32 %v6829, %v6929
    %6931 = vmatmul.f32.gmra.mxu0 %v6930
    %v6932 = vpop.f32.mrf.mxu0
    %v6933 = vadd.f32 %v6903, %v6932
    %6934 = vdwg.mxu0
    %6935 = vmatpush.msra.mxu0 0.0
    %6936 = vmatpush.msra.mxu0 0.0
    %6937 = vmatpush.msra.mxu0 0.0
    %6938 = vmatpush.msra.mxu0 0.0
    %6939 = vmatpush.msra.mxu0 0.0
    %6940 = vmatpush.msra.mxu0 0.0
    %6941 = vmatpush.msra.mxu0 0.0
    %6942 = vmatpush.msra.mxu0 0.0
    %6943 = vmatpush.msra.mxu0 0.0
    %6944 = vmatpush.msra.mxu0 0.0
    %6945 = vmatpush.msra.mxu0 0.0
    %6946 = vmatpush.msra.mxu0 0.0
    %v6947 = vand.u32 %v6833, 4294901760
    %6948 = vmatpush.msra.mxu0 %v6947
    %v6949 = vand.u32 %v6824, 4294901760
    %6950 = vmatpush.msra.mxu0 %v6949
    %v6951 = vand.u32 %v6823, 4294901760
    %6952 = vmatpush.msra.mxu0 %v6951
    %v6953 = vand.u32 %v6822, 4294901760
    %6954 = vmatpush.msra.mxu0 %v6953
    %v6955 = vand.u32 %v6829, 4294901760
    %v6956 = vsub.f32 %v6829, %v6955
    %v6957 = vand.u32 %v6956, 4294901760
    %6958 = vmatmul.f32.gmra.mxu0 %v6957
    %v6959 = vpop.f32.mrf.mxu0
    %v6960 = vadd.f32 %v6933, %v6959
    %6961 = vdwg.mxu0
    %6962 = vmatpush.msra.mxu0 0.0
    %6963 = vmatpush.msra.mxu0 0.0
    %6964 = vmatpush.msra.mxu0 0.0
    %6965 = vmatpush.msra.mxu0 0.0
    %6966 = vmatpush.msra.mxu0 0.0
    %6967 = vmatpush.msra.mxu0 0.0
    %6968 = vmatpush.msra.mxu0 0.0
    %6969 = vmatpush.msra.mxu0 0.0
    %6970 = vmatpush.msra.mxu0 0.0
    %6971 = vmatpush.msra.mxu0 0.0
    %6972 = vmatpush.msra.mxu0 0.0
    %6973 = vmatpush.msra.mxu0 0.0
    %v6974 = vand.u32 %v6833, 4294901760
    %v6975 = vsub.f32 %v6833, %v6974
    %v6976 = vand.u32 %v6975, 4294901760
    %6977 = vmatpush.msra.mxu0 %v6976
    %v6978 = vand.u32 %v6824, 4294901760
    %v6979 = vsub.f32 %v6824, %v6978
    %v6980 = vand.u32 %v6979, 4294901760
    %6981 = vmatpush.msra.mxu0 %v6980
    %v6982 = vand.u32 %v6823, 4294901760
    %v6983 = vsub.f32 %v6823, %v6982
    %v6984 = vand.u32 %v6983, 4294901760
    %6985 = vmatpush.msra.mxu0 %v6984
    %v6986 = vand.u32 %v6822, 4294901760
    %v6987 = vsub.f32 %v6822, %v6986
    %v6988 = vand.u32 %v6987, 4294901760
    %6989 = vmatpush.msra.mxu0 %v6988
    %v6990 = vand.u32 %v6829, 4294901760
    %6991 = vmatmul.f32.gmra.mxu0 %v6990
    %v6992 = vpop.f32.mrf.mxu0
    %v6993 = vadd.f32 %v6960, %v6992
    %6994 = vdwg.mxu0
    %6995 = vmatpush.msra.mxu0 0.0
    %6996 = vmatpush.msra.mxu0 0.0
    %6997 = vmatpush.msra.mxu0 0.0
    %6998 = vmatpush.msra.mxu0 0.0
    %6999 = vmatpush.msra.mxu0 0.0
    %7000 = vmatpush.msra.mxu0 0.0
    %7001 = vmatpush.msra.mxu0 0.0
    %7002 = vmatpush.msra.mxu0 0.0
    %7003 = vmatpush.msra.mxu0 0.0
    %7004 = vmatpush.msra.mxu0 0.0
    %7005 = vmatpush.msra.mxu0 0.0
    %7006 = vmatpush.msra.mxu0 0.0
    %v7007 = vand.u32 %v6833, 4294901760
    %7008 = vmatpush.msra.mxu0 %v7007
    %v7009 = vand.u32 %v6824, 4294901760
    %7010 = vmatpush.msra.mxu0 %v7009
    %v7011 = vand.u32 %v6823, 4294901760
    %7012 = vmatpush.msra.mxu0 %v7011
    %v7013 = vand.u32 %v6822, 4294901760
    %7014 = vmatpush.msra.mxu0 %v7013
    %v7015 = vand.u32 %v6829, 4294901760
    %7016 = vmatmul.f32.gmra.mxu0 %v7015
    %v7017 = vpop.f32.mrf.mxu0
    %v7018 = vadd.f32 %v6993, %v7017
    %7019 = vdwg.mxu0
    %v7020 = vsel %vm6828, %v6815, 0
    %v7023 = vsel %vm6831, %v6820, 0
    %7025 = vmatpush.msra.mxu0 0.0
    %7026 = vmatpush.msra.mxu0 0.0
    %7027 = vmatpush.msra.mxu0 0.0
    %7028 = vmatpush.msra.mxu0 0.0
    %7029 = vmatpush.msra.mxu0 0.0
    %7030 = vmatpush.msra.mxu0 0.0
    %7031 = vmatpush.msra.mxu0 0.0
    %7032 = vmatpush.msra.mxu0 0.0
    %7033 = vmatpush.msra.mxu0 0.0
    %7034 = vmatpush.msra.mxu0 0.0
    %7035 = vmatpush.msra.mxu0 0.0
    %7036 = vmatpush.msra.mxu0 0.0
    %v7037 = vand.u32 %v7023, 4294901760
    %7038 = vmatpush.msra.mxu0 %v7037
    %v7039 = vand.u32 %v6819, 4294901760
    %7040 = vmatpush.msra.mxu0 %v7039
    %v7041 = vand.u32 %v6818, 4294901760
    %7042 = vmatpush.msra.mxu0 %v7041
    %v7043 = vand.u32 %v6817, 4294901760
    %7044 = vmatpush.msra.mxu0 %v7043
    %v7045 = vand.u32 %v7020, 4294901760
    %v7046 = vsub.f32 %v7020, %v7045
    %v7047 = vand.u32 %v7046, 4294901760
    %v7048 = vsub.f32 %v7046, %v7047
    %v7049 = vand.u32 %v7048, 4294901760
    %7050 = vmatmul.f32.gmra.mxu0 %v7049
    %v7051 = vpop.f32.mrf.mxu0
    %v7052 = vadd.f32 %v7018, %v7051
    %7053 = vdwg.mxu0
    %7054 = vmatpush.msra.mxu0 0.0
    %7055 = vmatpush.msra.mxu0 0.0
    %7056 = vmatpush.msra.mxu0 0.0
    %7057 = vmatpush.msra.mxu0 0.0
    %7058 = vmatpush.msra.mxu0 0.0
    %7059 = vmatpush.msra.mxu0 0.0
    %7060 = vmatpush.msra.mxu0 0.0
    %7061 = vmatpush.msra.mxu0 0.0
    %7062 = vmatpush.msra.mxu0 0.0
    %7063 = vmatpush.msra.mxu0 0.0
    %7064 = vmatpush.msra.mxu0 0.0
    %7065 = vmatpush.msra.mxu0 0.0
    %v7066 = vand.u32 %v7023, 4294901760
    %v7067 = vsub.f32 %v7023, %v7066
    %v7068 = vand.u32 %v7067, 4294901760
    %v7069 = vsub.f32 %v7067, %v7068
    %v7070 = vand.u32 %v7069, 4294901760
    %7071 = vmatpush.msra.mxu0 %v7070
    %v7072 = vand.u32 %v6819, 4294901760
    %v7073 = vsub.f32 %v6819, %v7072
    %v7074 = vand.u32 %v7073, 4294901760
    %v7075 = vsub.f32 %v7073, %v7074
    %v7076 = vand.u32 %v7075, 4294901760
    %7077 = vmatpush.msra.mxu0 %v7076
    %v7078 = vand.u32 %v6818, 4294901760
    %v7079 = vsub.f32 %v6818, %v7078
    %v7080 = vand.u32 %v7079, 4294901760
    %v7081 = vsub.f32 %v7079, %v7080
    %v7082 = vand.u32 %v7081, 4294901760
    %7083 = vmatpush.msra.mxu0 %v7082
    %v7084 = vand.u32 %v6817, 4294901760
    %v7085 = vsub.f32 %v6817, %v7084
    %v7086 = vand.u32 %v7085, 4294901760
    %v7087 = vsub.f32 %v7085, %v7086
    %v7088 = vand.u32 %v7087, 4294901760
    %7089 = vmatpush.msra.mxu0 %v7088
    %v7090 = vand.u32 %v7020, 4294901760
    %7091 = vmatmul.f32.gmra.mxu0 %v7090
    %v7092 = vpop.f32.mrf.mxu0
    %v7093 = vadd.f32 %v7052, %v7092
    %7094 = vdwg.mxu0
    %7095 = vmatpush.msra.mxu0 0.0
    %7096 = vmatpush.msra.mxu0 0.0
    %7097 = vmatpush.msra.mxu0 0.0
    %7098 = vmatpush.msra.mxu0 0.0
    %7099 = vmatpush.msra.mxu0 0.0
    %7100 = vmatpush.msra.mxu0 0.0
    %7101 = vmatpush.msra.mxu0 0.0
    %7102 = vmatpush.msra.mxu0 0.0
    %7103 = vmatpush.msra.mxu0 0.0
    %7104 = vmatpush.msra.mxu0 0.0
    %7105 = vmatpush.msra.mxu0 0.0
    %7106 = vmatpush.msra.mxu0 0.0
    %v7107 = vand.u32 %v7023, 4294901760
    %v7108 = vsub.f32 %v7023, %v7107
    %7109 = vmatpush.msra.mxu0 %v7108
    %v7110 = vand.u32 %v6819, 4294901760
    %v7111 = vsub.f32 %v6819, %v7110
    %7112 = vmatpush.msra.mxu0 %v7111
    %v7113 = vand.u32 %v6818, 4294901760
    %v7114 = vsub.f32 %v6818, %v7113
    %7115 = vmatpush.msra.mxu0 %v7114
    %v7116 = vand.u32 %v6817, 4294901760
    %v7117 = vsub.f32 %v6817, %v7116
    %7118 = vmatpush.msra.mxu0 %v7117
    %v7119 = vand.u32 %v7020, 4294901760
    %v7120 = vsub.f32 %v7020, %v7119
    %7121 = vmatmul.f32.gmra.mxu0 %v7120
    %v7122 = vpop.f32.mrf.mxu0
    %v7123 = vadd.f32 %v7093, %v7122
    %7124 = vdwg.mxu0
    %7125 = vmatpush.msra.mxu0 0.0
    %7126 = vmatpush.msra.mxu0 0.0
    %7127 = vmatpush.msra.mxu0 0.0
    %7128 = vmatpush.msra.mxu0 0.0
    %7129 = vmatpush.msra.mxu0 0.0
    %7130 = vmatpush.msra.mxu0 0.0
    %7131 = vmatpush.msra.mxu0 0.0
    %7132 = vmatpush.msra.mxu0 0.0
    %7133 = vmatpush.msra.mxu0 0.0
    %7134 = vmatpush.msra.mxu0 0.0
    %7135 = vmatpush.msra.mxu0 0.0
    %7136 = vmatpush.msra.mxu0 0.0
    %v7137 = vand.u32 %v7023, 4294901760
    %7138 = vmatpush.msra.mxu0 %v7137
    %v7139 = vand.u32 %v6819, 4294901760
    %7140 = vmatpush.msra.mxu0 %v7139
    %v7141 = vand.u32 %v6818, 4294901760
    %7142 = vmatpush.msra.mxu0 %v7141
    %v7143 = vand.u32 %v6817, 4294901760
    %7144 = vmatpush.msra.mxu0 %v7143
    %v7145 = vand.u32 %v7020, 4294901760
    %v7146 = vsub.f32 %v7020, %v7145
    %v7147 = vand.u32 %v7146, 4294901760
    %7148 = vmatmul.f32.gmra.mxu0 %v7147
    %v7149 = vpop.f32.mrf.mxu0
    %v7150 = vadd.f32 %v7123, %v7149
    %7151 = vdwg.mxu0
    %7152 = vmatpush.msra.mxu0 0.0
    %7153 = vmatpush.msra.mxu0 0.0
    %7154 = vmatpush.msra.mxu0 0.0
    %7155 = vmatpush.msra.mxu0 0.0
    %7156 = vmatpush.msra.mxu0 0.0
    %7157 = vmatpush.msra.mxu0 0.0
    %7158 = vmatpush.msra.mxu0 0.0
    %7159 = vmatpush.msra.mxu0 0.0
    %7160 = vmatpush.msra.mxu0 0.0
    %7161 = vmatpush.msra.mxu0 0.0
    %7162 = vmatpush.msra.mxu0 0.0
    %7163 = vmatpush.msra.mxu0 0.0
    %v7164 = vand.u32 %v7023, 4294901760
    %v7165 = vsub.f32 %v7023, %v7164
    %v7166 = vand.u32 %v7165, 4294901760
    %7167 = vmatpush.msra.mxu0 %v7166
    %v7168 = vand.u32 %v6819, 4294901760
    %v7169 = vsub.f32 %v6819, %v7168
    %v7170 = vand.u32 %v7169, 4294901760
    %7171 = vmatpush.msra.mxu0 %v7170
    %v7172 = vand.u32 %v6818, 4294901760
    %v7173 = vsub.f32 %v6818, %v7172
    %v7174 = vand.u32 %v7173, 4294901760
    %7175 = vmatpush.msra.mxu0 %v7174
    %v7176 = vand.u32 %v6817, 4294901760
    %v7177 = vsub.f32 %v6817, %v7176
    %v7178 = vand.u32 %v7177, 4294901760
    %7179 = vmatpush.msra.mxu0 %v7178
    %v7180 = vand.u32 %v7020, 4294901760
    %7181 = vmatmul.f32.gmra.mxu0 %v7180
    %v7182 = vpop.f32.mrf.mxu0
    %v7183 = vadd.f32 %v7150, %v7182
    %7184 = vdwg.mxu0
    %7185 = vmatpush.msra.mxu0 0.0
    %7186 = vmatpush.msra.mxu0 0.0
    %7187 = vmatpush.msra.mxu0 0.0
    %7188 = vmatpush.msra.mxu0 0.0
    %7189 = vmatpush.msra.mxu0 0.0
    %7190 = vmatpush.msra.mxu0 0.0
    %7191 = vmatpush.msra.mxu0 0.0
    %7192 = vmatpush.msra.mxu0 0.0
    %7193 = vmatpush.msra.mxu0 0.0
    %7194 = vmatpush.msra.mxu0 0.0
    %7195 = vmatpush.msra.mxu0 0.0
    %7196 = vmatpush.msra.mxu0 0.0
    %v7197 = vand.u32 %v7023, 4294901760
    %7198 = vmatpush.msra.mxu0 %v7197
    %v7199 = vand.u32 %v6819, 4294901760
    %7200 = vmatpush.msra.mxu0 %v7199
    %v7201 = vand.u32 %v6818, 4294901760
    %7202 = vmatpush.msra.mxu0 %v7201
    %v7203 = vand.u32 %v6817, 4294901760
    %7204 = vmatpush.msra.mxu0 %v7203
    %v7205 = vand.u32 %v7020, 4294901760
    %7206 = vmatmul.f32.gmra.mxu0 %v7205
    %v7207 = vpop.f32.mrf.mxu0
    %v7208 = vadd.f32 %v7183, %v7207
    %7209 = vdwg.mxu0
    %s7210 = scalar_lea.vmem %s4, 64
    %v7211 = vld [vmem:[%s7210] sm:$0xff]
    %v7212 = vld [vmem:[%s7210 + $0x8] sm:$0xff]
    %v7213 = vld [vmem:[%s7210 + $0x10] sm:$0xff]
    %v7214 = vld [vmem:[%s7210 + $0x18] sm:$0xf]
    %v7215 = vrot.slane %v6815, 4
    %v7216 = vsel %vm6828, %v7215, 0
    %v7219 = vsel %vm6831, %v7214, 0
    %7221 = vmatpush.msra.mxu0 0.0
    %7222 = vmatpush.msra.mxu0 0.0
    %7223 = vmatpush.msra.mxu0 0.0
    %7224 = vmatpush.msra.mxu0 0.0
    %7225 = vmatpush.msra.mxu0 0.0
    %7226 = vmatpush.msra.mxu0 0.0
    %7227 = vmatpush.msra.mxu0 0.0
    %7228 = vmatpush.msra.mxu0 0.0
    %7229 = vmatpush.msra.mxu0 0.0
    %7230 = vmatpush.msra.mxu0 0.0
    %7231 = vmatpush.msra.mxu0 0.0
    %7232 = vmatpush.msra.mxu0 0.0
    %v7233 = vand.u32 %v7219, 4294901760
    %7234 = vmatpush.msra.mxu0 %v7233
    %v7235 = vand.u32 %v7213, 4294901760
    %7236 = vmatpush.msra.mxu0 %v7235
    %v7237 = vand.u32 %v7212, 4294901760
    %7238 = vmatpush.msra.mxu0 %v7237
    %v7239 = vand.u32 %v7211, 4294901760
    %7240 = vmatpush.msra.mxu0 %v7239
    %v7241 = vand.u32 %v7216, 4294901760
    %v7242 = vsub.f32 %v7216, %v7241
    %v7243 = vand.u32 %v7242, 4294901760
    %v7244 = vsub.f32 %v7242, %v7243
    %v7245 = vand.u32 %v7244, 4294901760
    %7246 = vmatmul.f32.gmra.mxu0 %v7245
    %v7247 = vpop.f32.mrf.mxu0
    %v7248 = vadd.f32 0.0, %v7247
    %7249 = vdwg.mxu0
    %7250 = vmatpush.msra.mxu0 0.0
    %7251 = vmatpush.msra.mxu0 0.0
    %7252 = vmatpush.msra.mxu0 0.0
    %7253 = vmatpush.msra.mxu0 0.0
    %7254 = vmatpush.msra.mxu0 0.0
    %7255 = vmatpush.msra.mxu0 0.0
    %7256 = vmatpush.msra.mxu0 0.0
    %7257 = vmatpush.msra.mxu0 0.0
    %7258 = vmatpush.msra.mxu0 0.0
    %7259 = vmatpush.msra.mxu0 0.0
    %7260 = vmatpush.msra.mxu0 0.0
    %7261 = vmatpush.msra.mxu0 0.0
    %v7262 = vand.u32 %v7219, 4294901760
    %v7263 = vsub.f32 %v7219, %v7262
    %v7264 = vand.u32 %v7263, 4294901760
    %v7265 = vsub.f32 %v7263, %v7264
    %v7266 = vand.u32 %v7265, 4294901760
    %7267 = vmatpush.msra.mxu0 %v7266
    %v7268 = vand.u32 %v7213, 4294901760
    %v7269 = vsub.f32 %v7213, %v7268
    %v7270 = vand.u32 %v7269, 4294901760
    %v7271 = vsub.f32 %v7269, %v7270
    %v7272 = vand.u32 %v7271, 4294901760
    %7273 = vmatpush.msra.mxu0 %v7272
    %v7274 = vand.u32 %v7212, 4294901760
    %v7275 = vsub.f32 %v7212, %v7274
    %v7276 = vand.u32 %v7275, 4294901760
    %v7277 = vsub.f32 %v7275, %v7276
    %v7278 = vand.u32 %v7277, 4294901760
    %7279 = vmatpush.msra.mxu0 %v7278
    %v7280 = vand.u32 %v7211, 4294901760
    %v7281 = vsub.f32 %v7211, %v7280
    %v7282 = vand.u32 %v7281, 4294901760
    %v7283 = vsub.f32 %v7281, %v7282
    %v7284 = vand.u32 %v7283, 4294901760
    %7285 = vmatpush.msra.mxu0 %v7284
    %v7286 = vand.u32 %v7216, 4294901760
    %7287 = vmatmul.f32.gmra.mxu0 %v7286
    %v7288 = vpop.f32.mrf.mxu0
    %v7289 = vadd.f32 %v7248, %v7288
    %7290 = vdwg.mxu0
    %7291 = vmatpush.msra.mxu0 0.0
    %7292 = vmatpush.msra.mxu0 0.0
    %7293 = vmatpush.msra.mxu0 0.0
    %7294 = vmatpush.msra.mxu0 0.0
    %7295 = vmatpush.msra.mxu0 0.0
    %7296 = vmatpush.msra.mxu0 0.0
    %7297 = vmatpush.msra.mxu0 0.0
    %7298 = vmatpush.msra.mxu0 0.0
    %7299 = vmatpush.msra.mxu0 0.0
    %7300 = vmatpush.msra.mxu0 0.0
    %7301 = vmatpush.msra.mxu0 0.0
    %7302 = vmatpush.msra.mxu0 0.0
    %v7303 = vand.u32 %v7219, 4294901760
    %v7304 = vsub.f32 %v7219, %v7303
    %7305 = vmatpush.msra.mxu0 %v7304
    %v7306 = vand.u32 %v7213, 4294901760
    %v7307 = vsub.f32 %v7213, %v7306
    %7308 = vmatpush.msra.mxu0 %v7307
    %v7309 = vand.u32 %v7212, 4294901760
    %v7310 = vsub.f32 %v7212, %v7309
    %7311 = vmatpush.msra.mxu0 %v7310
    %v7312 = vand.u32 %v7211, 4294901760
    %v7313 = vsub.f32 %v7211, %v7312
    %7314 = vmatpush.msra.mxu0 %v7313
    %v7315 = vand.u32 %v7216, 4294901760
    %v7316 = vsub.f32 %v7216, %v7315
    %7317 = vmatmul.f32.gmra.mxu0 %v7316
    %v7318 = vpop.f32.mrf.mxu0
    %v7319 = vadd.f32 %v7289, %v7318
    %7320 = vdwg.mxu0
    %7321 = vmatpush.msra.mxu0 0.0
    %7322 = vmatpush.msra.mxu0 0.0
    %7323 = vmatpush.msra.mxu0 0.0
    %7324 = vmatpush.msra.mxu0 0.0
    %7325 = vmatpush.msra.mxu0 0.0
    %7326 = vmatpush.msra.mxu0 0.0
    %7327 = vmatpush.msra.mxu0 0.0
    %7328 = vmatpush.msra.mxu0 0.0
    %7329 = vmatpush.msra.mxu0 0.0
    %7330 = vmatpush.msra.mxu0 0.0
    %7331 = vmatpush.msra.mxu0 0.0
    %7332 = vmatpush.msra.mxu0 0.0
    %v7333 = vand.u32 %v7219, 4294901760
    %7334 = vmatpush.msra.mxu0 %v7333
    %v7335 = vand.u32 %v7213, 4294901760
    %7336 = vmatpush.msra.mxu0 %v7335
    %v7337 = vand.u32 %v7212, 4294901760
    %7338 = vmatpush.msra.mxu0 %v7337
    %v7339 = vand.u32 %v7211, 4294901760
    %7340 = vmatpush.msra.mxu0 %v7339
    %v7341 = vand.u32 %v7216, 4294901760
    %v7342 = vsub.f32 %v7216, %v7341
    %v7343 = vand.u32 %v7342, 4294901760
    %7344 = vmatmul.f32.gmra.mxu0 %v7343
    %v7345 = vpop.f32.mrf.mxu0
    %v7346 = vadd.f32 %v7319, %v7345
    %7347 = vdwg.mxu0
    %7348 = vmatpush.msra.mxu0 0.0
    %7349 = vmatpush.msra.mxu0 0.0
    %7350 = vmatpush.msra.mxu0 0.0
    %7351 = vmatpush.msra.mxu0 0.0
    %7352 = vmatpush.msra.mxu0 0.0
    %7353 = vmatpush.msra.mxu0 0.0
    %7354 = vmatpush.msra.mxu0 0.0
    %7355 = vmatpush.msra.mxu0 0.0
    %7356 = vmatpush.msra.mxu0 0.0
    %7357 = vmatpush.msra.mxu0 0.0
    %7358 = vmatpush.msra.mxu0 0.0
    %7359 = vmatpush.msra.mxu0 0.0
    %v7360 = vand.u32 %v7219, 4294901760
    %v7361 = vsub.f32 %v7219, %v7360
    %v7362 = vand.u32 %v7361, 4294901760
    %7363 = vmatpush.msra.mxu0 %v7362
    %v7364 = vand.u32 %v7213, 4294901760
    %v7365 = vsub.f32 %v7213, %v7364
    %v7366 = vand.u32 %v7365, 4294901760
    %7367 = vmatpush.msra.mxu0 %v7366
    %v7368 = vand.u32 %v7212, 4294901760
    %v7369 = vsub.f32 %v7212, %v7368
    %v7370 = vand.u32 %v7369, 4294901760
    %7371 = vmatpush.msra.mxu0 %v7370
    %v7372 = vand.u32 %v7211, 4294901760
    %v7373 = vsub.f32 %v7211, %v7372
    %v7374 = vand.u32 %v7373, 4294901760
    %7375 = vmatpush.msra.mxu0 %v7374
    %v7376 = vand.u32 %v7216, 4294901760
    %7377 = vmatmul.f32.gmra.mxu0 %v7376
    %v7378 = vpop.f32.mrf.mxu0
    %v7379 = vadd.f32 %v7346, %v7378
    %7380 = vdwg.mxu0
    %7381 = vmatpush.msra.mxu0 0.0
    %7382 = vmatpush.msra.mxu0 0.0
    %7383 = vmatpush.msra.mxu0 0.0
    %7384 = vmatpush.msra.mxu0 0.0
    %7385 = vmatpush.msra.mxu0 0.0
    %7386 = vmatpush.msra.mxu0 0.0
    %7387 = vmatpush.msra.mxu0 0.0
    %7388 = vmatpush.msra.mxu0 0.0
    %7389 = vmatpush.msra.mxu0 0.0
    %7390 = vmatpush.msra.mxu0 0.0
    %7391 = vmatpush.msra.mxu0 0.0
    %7392 = vmatpush.msra.mxu0 0.0
    %v7393 = vand.u32 %v7219, 4294901760
    %7394 = vmatpush.msra.mxu0 %v7393
    %v7395 = vand.u32 %v7213, 4294901760
    %7396 = vmatpush.msra.mxu0 %v7395
    %v7397 = vand.u32 %v7212, 4294901760
    %7398 = vmatpush.msra.mxu0 %v7397
    %v7399 = vand.u32 %v7211, 4294901760
    %7400 = vmatpush.msra.mxu0 %v7399
    %v7401 = vand.u32 %v7216, 4294901760
    %7402 = vmatmul.f32.gmra.mxu0 %v7401
    %v7403 = vpop.f32.mrf.mxu0
    %v7404 = vadd.f32 %v7379, %v7403
    %7405 = vdwg.mxu0
    %v7406 = vadd.f32 %v7208, %v7404
    %s7407 = scalar_lea.vmem %s4, 96
    %v7408 = vld [vmem:[%s7407] sm:$0xff]
    %v7409 = vld [vmem:[%s7407 + $0x8] sm:$0xff]
    %v7410 = vld [vmem:[%s7407 + $0x10] sm:$0xff]
    %v7411 = vld [vmem:[%s7407 + $0x18] sm:$0xf]
    %v7412 = vrot.slane %v6815, 6
    %v7413 = vsel %vm6828, %v7412, 0
    %v7416 = vsel %vm6831, %v7411, 0
    %7418 = vmatpush.msra.mxu0 0.0
    %7419 = vmatpush.msra.mxu0 0.0
    %7420 = vmatpush.msra.mxu0 0.0
    %7421 = vmatpush.msra.mxu0 0.0
    %7422 = vmatpush.msra.mxu0 0.0
    %7423 = vmatpush.msra.mxu0 0.0
    %7424 = vmatpush.msra.mxu0 0.0
    %7425 = vmatpush.msra.mxu0 0.0
    %7426 = vmatpush.msra.mxu0 0.0
    %7427 = vmatpush.msra.mxu0 0.0
    %7428 = vmatpush.msra.mxu0 0.0
    %7429 = vmatpush.msra.mxu0 0.0
    %v7430 = vand.u32 %v7416, 4294901760
    %7431 = vmatpush.msra.mxu0 %v7430
    %v7432 = vand.u32 %v7410, 4294901760
    %7433 = vmatpush.msra.mxu0 %v7432
    %v7434 = vand.u32 %v7409, 4294901760
    %7435 = vmatpush.msra.mxu0 %v7434
    %v7436 = vand.u32 %v7408, 4294901760
    %7437 = vmatpush.msra.mxu0 %v7436
    %v7438 = vand.u32 %v7413, 4294901760
    %v7439 = vsub.f32 %v7413, %v7438
    %v7440 = vand.u32 %v7439, 4294901760
    %v7441 = vsub.f32 %v7439, %v7440
    %v7442 = vand.u32 %v7441, 4294901760
    %7443 = vmatmul.f32.gmra.mxu0 %v7442
    %v7444 = vpop.f32.mrf.mxu0
    %v7445 = vadd.f32 0.0, %v7444
    %7446 = vdwg.mxu0
    %7447 = vmatpush.msra.mxu0 0.0
    %7448 = vmatpush.msra.mxu0 0.0
    %7449 = vmatpush.msra.mxu0 0.0
    %7450 = vmatpush.msra.mxu0 0.0
    %7451 = vmatpush.msra.mxu0 0.0
    %7452 = vmatpush.msra.mxu0 0.0
    %7453 = vmatpush.msra.mxu0 0.0
    %7454 = vmatpush.msra.mxu0 0.0
    %7455 = vmatpush.msra.mxu0 0.0
    %7456 = vmatpush.msra.mxu0 0.0
    %7457 = vmatpush.msra.mxu0 0.0
    %7458 = vmatpush.msra.mxu0 0.0
    %v7459 = vand.u32 %v7416, 4294901760
    %v7460 = vsub.f32 %v7416, %v7459
    %v7461 = vand.u32 %v7460, 4294901760
    %v7462 = vsub.f32 %v7460, %v7461
    %v7463 = vand.u32 %v7462, 4294901760
    %7464 = vmatpush.msra.mxu0 %v7463
    %v7465 = vand.u32 %v7410, 4294901760
    %v7466 = vsub.f32 %v7410, %v7465
    %v7467 = vand.u32 %v7466, 4294901760
    %v7468 = vsub.f32 %v7466, %v7467
    %v7469 = vand.u32 %v7468, 4294901760
    %7470 = vmatpush.msra.mxu0 %v7469
    %v7471 = vand.u32 %v7409, 4294901760
    %v7472 = vsub.f32 %v7409, %v7471
    %v7473 = vand.u32 %v7472, 4294901760
    %v7474 = vsub.f32 %v7472, %v7473
    %v7475 = vand.u32 %v7474, 4294901760
    %7476 = vmatpush.msra.mxu0 %v7475
    %v7477 = vand.u32 %v7408, 4294901760
    %v7478 = vsub.f32 %v7408, %v7477
    %v7479 = vand.u32 %v7478, 4294901760
    %v7480 = vsub.f32 %v7478, %v7479
    %v7481 = vand.u32 %v7480, 4294901760
    %7482 = vmatpush.msra.mxu0 %v7481
    %v7483 = vand.u32 %v7413, 4294901760
    %7484 = vmatmul.f32.gmra.mxu0 %v7483
    %v7485 = vpop.f32.mrf.mxu0
    %v7486 = vadd.f32 %v7445, %v7485
    %7487 = vdwg.mxu0
    %7488 = vmatpush.msra.mxu0 0.0
    %7489 = vmatpush.msra.mxu0 0.0
    %7490 = vmatpush.msra.mxu0 0.0
    %7491 = vmatpush.msra.mxu0 0.0
    %7492 = vmatpush.msra.mxu0 0.0
    %7493 = vmatpush.msra.mxu0 0.0
    %7494 = vmatpush.msra.mxu0 0.0
    %7495 = vmatpush.msra.mxu0 0.0
    %7496 = vmatpush.msra.mxu0 0.0
    %7497 = vmatpush.msra.mxu0 0.0
    %7498 = vmatpush.msra.mxu0 0.0
    %7499 = vmatpush.msra.mxu0 0.0
    %v7500 = vand.u32 %v7416, 4294901760
    %v7501 = vsub.f32 %v7416, %v7500
    %7502 = vmatpush.msra.mxu0 %v7501
    %v7503 = vand.u32 %v7410, 4294901760
    %v7504 = vsub.f32 %v7410, %v7503
    %7505 = vmatpush.msra.mxu0 %v7504
    %v7506 = vand.u32 %v7409, 4294901760
    %v7507 = vsub.f32 %v7409, %v7506
    %7508 = vmatpush.msra.mxu0 %v7507
    %v7509 = vand.u32 %v7408, 4294901760
    %v7510 = vsub.f32 %v7408, %v7509
    %7511 = vmatpush.msra.mxu0 %v7510
    %v7512 = vand.u32 %v7413, 4294901760
    %v7513 = vsub.f32 %v7413, %v7512
    %7514 = vmatmul.f32.gmra.mxu0 %v7513
    %v7515 = vpop.f32.mrf.mxu0
    %v7516 = vadd.f32 %v7486, %v7515
    %7517 = vdwg.mxu0
    %7518 = vmatpush.msra.mxu0 0.0
    %7519 = vmatpush.msra.mxu0 0.0
    %7520 = vmatpush.msra.mxu0 0.0
    %7521 = vmatpush.msra.mxu0 0.0
    %7522 = vmatpush.msra.mxu0 0.0
    %7523 = vmatpush.msra.mxu0 0.0
    %7524 = vmatpush.msra.mxu0 0.0
    %7525 = vmatpush.msra.mxu0 0.0
    %7526 = vmatpush.msra.mxu0 0.0
    %7527 = vmatpush.msra.mxu0 0.0
    %7528 = vmatpush.msra.mxu0 0.0
    %7529 = vmatpush.msra.mxu0 0.0
    %v7530 = vand.u32 %v7416, 4294901760
    %7531 = vmatpush.msra.mxu0 %v7530
    %v7532 = vand.u32 %v7410, 4294901760
    %7533 = vmatpush.msra.mxu0 %v7532
    %v7534 = vand.u32 %v7409, 4294901760
    %7535 = vmatpush.msra.mxu0 %v7534
    %v7536 = vand.u32 %v7408, 4294901760
    %7537 = vmatpush.msra.mxu0 %v7536
    %v7538 = vand.u32 %v7413, 4294901760
    %v7539 = vsub.f32 %v7413, %v7538
    %v7540 = vand.u32 %v7539, 4294901760
    %7541 = vmatmul.f32.gmra.mxu0 %v7540
    %v7542 = vpop.f32.mrf.mxu0
    %v7543 = vadd.f32 %v7516, %v7542
    %7544 = vdwg.mxu0
    %7545 = vmatpush.msra.mxu0 0.0
    %7546 = vmatpush.msra.mxu0 0.0
    %7547 = vmatpush.msra.mxu0 0.0
    %7548 = vmatpush.msra.mxu0 0.0
    %7549 = vmatpush.msra.mxu0 0.0
    %7550 = vmatpush.msra.mxu0 0.0
    %7551 = vmatpush.msra.mxu0 0.0
    %7552 = vmatpush.msra.mxu0 0.0
    %7553 = vmatpush.msra.mxu0 0.0
    %7554 = vmatpush.msra.mxu0 0.0
    %7555 = vmatpush.msra.mxu0 0.0
    %7556 = vmatpush.msra.mxu0 0.0
    %v7557 = vand.u32 %v7416, 4294901760
    %v7558 = vsub.f32 %v7416, %v7557
    %v7559 = vand.u32 %v7558, 4294901760
    %7560 = vmatpush.msra.mxu0 %v7559
    %v7561 = vand.u32 %v7410, 4294901760
    %v7562 = vsub.f32 %v7410, %v7561
    %v7563 = vand.u32 %v7562, 4294901760
    %7564 = vmatpush.msra.mxu0 %v7563
    %v7565 = vand.u32 %v7409, 4294901760
    %v7566 = vsub.f32 %v7409, %v7565
    %v7567 = vand.u32 %v7566, 4294901760
    %7568 = vmatpush.msra.mxu0 %v7567
    %v7569 = vand.u32 %v7408, 4294901760
    %v7570 = vsub.f32 %v7408, %v7569
    %v7571 = vand.u32 %v7570, 4294901760
    %7572 = vmatpush.msra.mxu0 %v7571
    %v7573 = vand.u32 %v7413, 4294901760
    %7574 = vmatmul.f32.gmra.mxu0 %v7573
    %v7575 = vpop.f32.mrf.mxu0
    %v7576 = vadd.f32 %v7543, %v7575
    %7577 = vdwg.mxu0
    %7578 = vmatpush.msra.mxu0 0.0
    %7579 = vmatpush.msra.mxu0 0.0
    %7580 = vmatpush.msra.mxu0 0.0
    %7581 = vmatpush.msra.mxu0 0.0
    %7582 = vmatpush.msra.mxu0 0.0
    %7583 = vmatpush.msra.mxu0 0.0
    %7584 = vmatpush.msra.mxu0 0.0
    %7585 = vmatpush.msra.mxu0 0.0
    %7586 = vmatpush.msra.mxu0 0.0
    %7587 = vmatpush.msra.mxu0 0.0
    %7588 = vmatpush.msra.mxu0 0.0
    %7589 = vmatpush.msra.mxu0 0.0
    %v7590 = vand.u32 %v7416, 4294901760
    %7591 = vmatpush.msra.mxu0 %v7590
    %v7592 = vand.u32 %v7410, 4294901760
    %7593 = vmatpush.msra.mxu0 %v7592
    %v7594 = vand.u32 %v7409, 4294901760
    %7595 = vmatpush.msra.mxu0 %v7594
    %v7596 = vand.u32 %v7408, 4294901760
    %7597 = vmatpush.msra.mxu0 %v7596
    %v7598 = vand.u32 %v7413, 4294901760
    %7599 = vmatmul.f32.gmra.mxu0 %v7598
    %v7600 = vpop.f32.mrf.mxu0
    %v7601 = vadd.f32 %v7576, %v7600
    %7602 = vdwg.mxu0
    %v7603 = vadd.f32 %v7406, %v7601
    %s7604 = scalar_lea.vmem %s4, 128
    %v7605 = vld [vmem:[%s7604] sm:$0xff]
    %v7606 = vld [vmem:[%s7604 + $0x8] sm:$0xff]
    %v7607 = vld [vmem:[%s7604 + $0x10] sm:$0xff]
    %v7608 = vld [vmem:[%s7604 + $0x18] sm:$0xf]
    %v7610 = vsel %vm6828, %v6816, 0
    %v7613 = vsel %vm6831, %v7608, 0
    %7615 = vmatpush.msra.mxu0 0.0
    %7616 = vmatpush.msra.mxu0 0.0
    %7617 = vmatpush.msra.mxu0 0.0
    %7618 = vmatpush.msra.mxu0 0.0
    %7619 = vmatpush.msra.mxu0 0.0
    %7620 = vmatpush.msra.mxu0 0.0
    %7621 = vmatpush.msra.mxu0 0.0
    %7622 = vmatpush.msra.mxu0 0.0
    %7623 = vmatpush.msra.mxu0 0.0
    %7624 = vmatpush.msra.mxu0 0.0
    %7625 = vmatpush.msra.mxu0 0.0
    %7626 = vmatpush.msra.mxu0 0.0
    %v7627 = vand.u32 %v7613, 4294901760
    %7628 = vmatpush.msra.mxu0 %v7627
    %v7629 = vand.u32 %v7607, 4294901760
    %7630 = vmatpush.msra.mxu0 %v7629
    %v7631 = vand.u32 %v7606, 4294901760
    %7632 = vmatpush.msra.mxu0 %v7631
    %v7633 = vand.u32 %v7605, 4294901760
    %7634 = vmatpush.msra.mxu0 %v7633
    %v7635 = vand.u32 %v7610, 4294901760
    %v7636 = vsub.f32 %v7610, %v7635
    %v7637 = vand.u32 %v7636, 4294901760
    %v7638 = vsub.f32 %v7636, %v7637
    %v7639 = vand.u32 %v7638, 4294901760
    %7640 = vmatmul.f32.gmra.mxu0 %v7639
    %v7641 = vpop.f32.mrf.mxu0
    %v7642 = vadd.f32 0.0, %v7641
    %7643 = vdwg.mxu0
    %7644 = vmatpush.msra.mxu0 0.0
    %7645 = vmatpush.msra.mxu0 0.0
    %7646 = vmatpush.msra.mxu0 0.0
    %7647 = vmatpush.msra.mxu0 0.0
    %7648 = vmatpush.msra.mxu0 0.0
    %7649 = vmatpush.msra.mxu0 0.0
    %7650 = vmatpush.msra.mxu0 0.0
    %7651 = vmatpush.msra.mxu0 0.0
    %7652 = vmatpush.msra.mxu0 0.0
    %7653 = vmatpush.msra.mxu0 0.0
    %7654 = vmatpush.msra.mxu0 0.0
    %7655 = vmatpush.msra.mxu0 0.0
    %v7656 = vand.u32 %v7613, 4294901760
    %v7657 = vsub.f32 %v7613, %v7656
    %v7658 = vand.u32 %v7657, 4294901760
    %v7659 = vsub.f32 %v7657, %v7658
    %v7660 = vand.u32 %v7659, 4294901760
    %7661 = vmatpush.msra.mxu0 %v7660
    %v7662 = vand.u32 %v7607, 4294901760
    %v7663 = vsub.f32 %v7607, %v7662
    %v7664 = vand.u32 %v7663, 4294901760
    %v7665 = vsub.f32 %v7663, %v7664
    %v7666 = vand.u32 %v7665, 4294901760
    %7667 = vmatpush.msra.mxu0 %v7666
    %v7668 = vand.u32 %v7606, 4294901760
    %v7669 = vsub.f32 %v7606, %v7668
    %v7670 = vand.u32 %v7669, 4294901760
    %v7671 = vsub.f32 %v7669, %v7670
    %v7672 = vand.u32 %v7671, 4294901760
    %7673 = vmatpush.msra.mxu0 %v7672
    %v7674 = vand.u32 %v7605, 4294901760
    %v7675 = vsub.f32 %v7605, %v7674
    %v7676 = vand.u32 %v7675, 4294901760
    %v7677 = vsub.f32 %v7675, %v7676
    %v7678 = vand.u32 %v7677, 4294901760
    %7679 = vmatpush.msra.mxu0 %v7678
    %v7680 = vand.u32 %v7610, 4294901760
    %7681 = vmatmul.f32.gmra.mxu0 %v7680
    %v7682 = vpop.f32.mrf.mxu0
    %v7683 = vadd.f32 %v7642, %v7682
    %7684 = vdwg.mxu0
    %7685 = vmatpush.msra.mxu0 0.0
    %7686 = vmatpush.msra.mxu0 0.0
    %7687 = vmatpush.msra.mxu0 0.0
    %7688 = vmatpush.msra.mxu0 0.0
    %7689 = vmatpush.msra.mxu0 0.0
    %7690 = vmatpush.msra.mxu0 0.0
    %7691 = vmatpush.msra.mxu0 0.0
    %7692 = vmatpush.msra.mxu0 0.0
    %7693 = vmatpush.msra.mxu0 0.0
    %7694 = vmatpush.msra.mxu0 0.0
    %7695 = vmatpush.msra.mxu0 0.0
    %7696 = vmatpush.msra.mxu0 0.0
    %v7697 = vand.u32 %v7613, 4294901760
    %v7698 = vsub.f32 %v7613, %v7697
    %7699 = vmatpush.msra.mxu0 %v7698
    %v7700 = vand.u32 %v7607, 4294901760
    %v7701 = vsub.f32 %v7607, %v7700
    %7702 = vmatpush.msra.mxu0 %v7701
    %v7703 = vand.u32 %v7606, 4294901760
    %v7704 = vsub.f32 %v7606, %v7703
    %7705 = vmatpush.msra.mxu0 %v7704
    %v7706 = vand.u32 %v7605, 4294901760
    %v7707 = vsub.f32 %v7605, %v7706
    %7708 = vmatpush.msra.mxu0 %v7707
    %v7709 = vand.u32 %v7610, 4294901760
    %v7710 = vsub.f32 %v7610, %v7709
    %7711 = vmatmul.f32.gmra.mxu0 %v7710
    %v7712 = vpop.f32.mrf.mxu0
    %v7713 = vadd.f32 %v7683, %v7712
    %7714 = vdwg.mxu0
    %7715 = vmatpush.msra.mxu0 0.0
    %7716 = vmatpush.msra.mxu0 0.0
    %7717 = vmatpush.msra.mxu0 0.0
    %7718 = vmatpush.msra.mxu0 0.0
    %7719 = vmatpush.msra.mxu0 0.0
    %7720 = vmatpush.msra.mxu0 0.0
    %7721 = vmatpush.msra.mxu0 0.0
    %7722 = vmatpush.msra.mxu0 0.0
    %7723 = vmatpush.msra.mxu0 0.0
    %7724 = vmatpush.msra.mxu0 0.0
    %7725 = vmatpush.msra.mxu0 0.0
    %7726 = vmatpush.msra.mxu0 0.0
    %v7727 = vand.u32 %v7613, 4294901760
    %7728 = vmatpush.msra.mxu0 %v7727
    %v7729 = vand.u32 %v7607, 4294901760
    %7730 = vmatpush.msra.mxu0 %v7729
    %v7731 = vand.u32 %v7606, 4294901760
    %7732 = vmatpush.msra.mxu0 %v7731
    %v7733 = vand.u32 %v7605, 4294901760
    %7734 = vmatpush.msra.mxu0 %v7733
    %v7735 = vand.u32 %v7610, 4294901760
    %v7736 = vsub.f32 %v7610, %v7735
    %v7737 = vand.u32 %v7736, 4294901760
    %7738 = vmatmul.f32.gmra.mxu0 %v7737
    %v7739 = vpop.f32.mrf.mxu0
    %v7740 = vadd.f32 %v7713, %v7739
    %7741 = vdwg.mxu0
    %7742 = vmatpush.msra.mxu0 0.0
    %7743 = vmatpush.msra.mxu0 0.0
    %7744 = vmatpush.msra.mxu0 0.0
    %7745 = vmatpush.msra.mxu0 0.0
    %7746 = vmatpush.msra.mxu0 0.0
    %7747 = vmatpush.msra.mxu0 0.0
    %7748 = vmatpush.msra.mxu0 0.0
    %7749 = vmatpush.msra.mxu0 0.0
    %7750 = vmatpush.msra.mxu0 0.0
    %7751 = vmatpush.msra.mxu0 0.0
    %7752 = vmatpush.msra.mxu0 0.0
    %7753 = vmatpush.msra.mxu0 0.0
    %v7754 = vand.u32 %v7613, 4294901760
    %v7755 = vsub.f32 %v7613, %v7754
    %v7756 = vand.u32 %v7755, 4294901760
    %7757 = vmatpush.msra.mxu0 %v7756
    %v7758 = vand.u32 %v7607, 4294901760
    %v7759 = vsub.f32 %v7607, %v7758
    %v7760 = vand.u32 %v7759, 4294901760
    %7761 = vmatpush.msra.mxu0 %v7760
    %v7762 = vand.u32 %v7606, 4294901760
    %v7763 = vsub.f32 %v7606, %v7762
    %v7764 = vand.u32 %v7763, 4294901760
    %7765 = vmatpush.msra.mxu0 %v7764
    %v7766 = vand.u32 %v7605, 4294901760
    %v7767 = vsub.f32 %v7605, %v7766
    %v7768 = vand.u32 %v7767, 4294901760
    %7769 = vmatpush.msra.mxu0 %v7768
    %v7770 = vand.u32 %v7610, 4294901760
    %7771 = vmatmul.f32.gmra.mxu0 %v7770
    %v7772 = vpop.f32.mrf.mxu0
    %v7773 = vadd.f32 %v7740, %v7772
    %7774 = vdwg.mxu0
    %7775 = vmatpush.msra.mxu0 0.0
    %7776 = vmatpush.msra.mxu0 0.0
    %7777 = vmatpush.msra.mxu0 0.0
    %7778 = vmatpush.msra.mxu0 0.0
    %7779 = vmatpush.msra.mxu0 0.0
    %7780 = vmatpush.msra.mxu0 0.0
    %7781 = vmatpush.msra.mxu0 0.0
    %7782 = vmatpush.msra.mxu0 0.0
    %7783 = vmatpush.msra.mxu0 0.0
    %7784 = vmatpush.msra.mxu0 0.0
    %7785 = vmatpush.msra.mxu0 0.0
    %7786 = vmatpush.msra.mxu0 0.0
    %v7787 = vand.u32 %v7613, 4294901760
    %7788 = vmatpush.msra.mxu0 %v7787
    %v7789 = vand.u32 %v7607, 4294901760
    %7790 = vmatpush.msra.mxu0 %v7789
    %v7791 = vand.u32 %v7606, 4294901760
    %7792 = vmatpush.msra.mxu0 %v7791
    %v7793 = vand.u32 %v7605, 4294901760
    %7794 = vmatpush.msra.mxu0 %v7793
    %v7795 = vand.u32 %v7610, 4294901760
    %7796 = vmatmul.f32.gmra.mxu0 %v7795
    %v7797 = vpop.f32.mrf.mxu0
    %v7798 = vadd.f32 %v7773, %v7797
    %7799 = vdwg.mxu0
    %v7800 = vadd.f32 %v7603, %v7798
    %s7801 = scalar_lea.vmem %s4, 160
    %v7802 = vld [vmem:[%s7801] sm:$0xff]
    %v7803 = vld [vmem:[%s7801 + $0x8] sm:$0xff]
    %v7804 = vld [vmem:[%s7801 + $0x10] sm:$0xff]
    %v7805 = vld [vmem:[%s7801 + $0x18] sm:$0xf]
    %v7806 = vrot.slane %v6816, 2
    %v7807 = vsel %vm6828, %v7806, 0
    %v7810 = vsel %vm6831, %v7805, 0
    %7812 = vmatpush.msra.mxu0 0.0
    %7813 = vmatpush.msra.mxu0 0.0
    %7814 = vmatpush.msra.mxu0 0.0
    %7815 = vmatpush.msra.mxu0 0.0
    %7816 = vmatpush.msra.mxu0 0.0
    %7817 = vmatpush.msra.mxu0 0.0
    %7818 = vmatpush.msra.mxu0 0.0
    %7819 = vmatpush.msra.mxu0 0.0
    %7820 = vmatpush.msra.mxu0 0.0
    %7821 = vmatpush.msra.mxu0 0.0
    %7822 = vmatpush.msra.mxu0 0.0
    %7823 = vmatpush.msra.mxu0 0.0
    %v7824 = vand.u32 %v7810, 4294901760
    %7825 = vmatpush.msra.mxu0 %v7824
    %v7826 = vand.u32 %v7804, 4294901760
    %7827 = vmatpush.msra.mxu0 %v7826
    %v7828 = vand.u32 %v7803, 4294901760
    %7829 = vmatpush.msra.mxu0 %v7828
    %v7830 = vand.u32 %v7802, 4294901760
    %7831 = vmatpush.msra.mxu0 %v7830
    %v7832 = vand.u32 %v7807, 4294901760
    %v7833 = vsub.f32 %v7807, %v7832
    %v7834 = vand.u32 %v7833, 4294901760
    %v7835 = vsub.f32 %v7833, %v7834
    %v7836 = vand.u32 %v7835, 4294901760
    %7837 = vmatmul.f32.gmra.mxu0 %v7836
    %v7838 = vpop.f32.mrf.mxu0
    %v7839 = vadd.f32 0.0, %v7838
    %7840 = vdwg.mxu0
    %7841 = vmatpush.msra.mxu0 0.0
    %7842 = vmatpush.msra.mxu0 0.0
    %7843 = vmatpush.msra.mxu0 0.0
    %7844 = vmatpush.msra.mxu0 0.0
    %7845 = vmatpush.msra.mxu0 0.0
    %7846 = vmatpush.msra.mxu0 0.0
    %7847 = vmatpush.msra.mxu0 0.0
    %7848 = vmatpush.msra.mxu0 0.0
    %7849 = vmatpush.msra.mxu0 0.0
    %7850 = vmatpush.msra.mxu0 0.0
    %7851 = vmatpush.msra.mxu0 0.0
    %7852 = vmatpush.msra.mxu0 0.0
    %v7853 = vand.u32 %v7810, 4294901760
    %v7854 = vsub.f32 %v7810, %v7853
    %v7855 = vand.u32 %v7854, 4294901760
    %v7856 = vsub.f32 %v7854, %v7855
    %v7857 = vand.u32 %v7856, 4294901760
    %7858 = vmatpush.msra.mxu0 %v7857
    %v7859 = vand.u32 %v7804, 4294901760
    %v7860 = vsub.f32 %v7804, %v7859
    %v7861 = vand.u32 %v7860, 4294901760
    %v7862 = vsub.f32 %v7860, %v7861
    %v7863 = vand.u32 %v7862, 4294901760
    %7864 = vmatpush.msra.mxu0 %v7863
    %v7865 = vand.u32 %v7803, 4294901760
    %v7866 = vsub.f32 %v7803, %v7865
    %v7867 = vand.u32 %v7866, 4294901760
    %v7868 = vsub.f32 %v7866, %v7867
    %v7869 = vand.u32 %v7868, 4294901760
    %7870 = vmatpush.msra.mxu0 %v7869
    %v7871 = vand.u32 %v7802, 4294901760
    %v7872 = vsub.f32 %v7802, %v7871
    %v7873 = vand.u32 %v7872, 4294901760
    %v7874 = vsub.f32 %v7872, %v7873
    %v7875 = vand.u32 %v7874, 4294901760
    %7876 = vmatpush.msra.mxu0 %v7875
    %v7877 = vand.u32 %v7807, 4294901760
    %7878 = vmatmul.f32.gmra.mxu0 %v7877
    %v7879 = vpop.f32.mrf.mxu0
    %v7880 = vadd.f32 %v7839, %v7879
    %7881 = vdwg.mxu0
    %7882 = vmatpush.msra.mxu0 0.0
    %7883 = vmatpush.msra.mxu0 0.0
    %7884 = vmatpush.msra.mxu0 0.0
    %7885 = vmatpush.msra.mxu0 0.0
    %7886 = vmatpush.msra.mxu0 0.0
    %7887 = vmatpush.msra.mxu0 0.0
    %7888 = vmatpush.msra.mxu0 0.0
    %7889 = vmatpush.msra.mxu0 0.0
    %7890 = vmatpush.msra.mxu0 0.0
    %7891 = vmatpush.msra.mxu0 0.0
    %7892 = vmatpush.msra.mxu0 0.0
    %7893 = vmatpush.msra.mxu0 0.0
    %v7894 = vand.u32 %v7810, 4294901760
    %v7895 = vsub.f32 %v7810, %v7894
    %7896 = vmatpush.msra.mxu0 %v7895
    %v7897 = vand.u32 %v7804, 4294901760
    %v7898 = vsub.f32 %v7804, %v7897
    %7899 = vmatpush.msra.mxu0 %v7898
    %v7900 = vand.u32 %v7803, 4294901760
    %v7901 = vsub.f32 %v7803, %v7900
    %7902 = vmatpush.msra.mxu0 %v7901
    %v7903 = vand.u32 %v7802, 4294901760
    %v7904 = vsub.f32 %v7802, %v7903
    %7905 = vmatpush.msra.mxu0 %v7904
    %v7906 = vand.u32 %v7807, 4294901760
    %v7907 = vsub.f32 %v7807, %v7906
    %7908 = vmatmul.f32.gmra.mxu0 %v7907
    %v7909 = vpop.f32.mrf.mxu0
    %v7910 = vadd.f32 %v7880, %v7909
    %7911 = vdwg.mxu0
    %7912 = vmatpush.msra.mxu0 0.0
    %7913 = vmatpush.msra.mxu0 0.0
    %7914 = vmatpush.msra.mxu0 0.0
    %7915 = vmatpush.msra.mxu0 0.0
    %7916 = vmatpush.msra.mxu0 0.0
    %7917 = vmatpush.msra.mxu0 0.0
    %7918 = vmatpush.msra.mxu0 0.0
    %7919 = vmatpush.msra.mxu0 0.0
    %7920 = vmatpush.msra.mxu0 0.0
    %7921 = vmatpush.msra.mxu0 0.0
    %7922 = vmatpush.msra.mxu0 0.0
    %7923 = vmatpush.msra.mxu0 0.0
    %v7924 = vand.u32 %v7810, 4294901760
    %7925 = vmatpush.msra.mxu0 %v7924
    %v7926 = vand.u32 %v7804, 4294901760
    %7927 = vmatpush.msra.mxu0 %v7926
    %v7928 = vand.u32 %v7803, 4294901760
    %7929 = vmatpush.msra.mxu0 %v7928
    %v7930 = vand.u32 %v7802, 4294901760
    %7931 = vmatpush.msra.mxu0 %v7930
    %v7932 = vand.u32 %v7807, 4294901760
    %v7933 = vsub.f32 %v7807, %v7932
    %v7934 = vand.u32 %v7933, 4294901760
    %7935 = vmatmul.f32.gmra.mxu0 %v7934
    %v7936 = vpop.f32.mrf.mxu0
    %v7937 = vadd.f32 %v7910, %v7936
    %7938 = vdwg.mxu0
    %7939 = vmatpush.msra.mxu0 0.0
    %7940 = vmatpush.msra.mxu0 0.0
    %7941 = vmatpush.msra.mxu0 0.0
    %7942 = vmatpush.msra.mxu0 0.0
    %7943 = vmatpush.msra.mxu0 0.0
    %7944 = vmatpush.msra.mxu0 0.0
    %7945 = vmatpush.msra.mxu0 0.0
    %7946 = vmatpush.msra.mxu0 0.0
    %7947 = vmatpush.msra.mxu0 0.0
    %7948 = vmatpush.msra.mxu0 0.0
    %7949 = vmatpush.msra.mxu0 0.0
    %7950 = vmatpush.msra.mxu0 0.0
    %v7951 = vand.u32 %v7810, 4294901760
    %v7952 = vsub.f32 %v7810, %v7951
    %v7953 = vand.u32 %v7952, 4294901760
    %7954 = vmatpush.msra.mxu0 %v7953
    %v7955 = vand.u32 %v7804, 4294901760
    %v7956 = vsub.f32 %v7804, %v7955
    %v7957 = vand.u32 %v7956, 4294901760
    %7958 = vmatpush.msra.mxu0 %v7957
    %v7959 = vand.u32 %v7803, 4294901760
    %v7960 = vsub.f32 %v7803, %v7959
    %v7961 = vand.u32 %v7960, 4294901760
    %7962 = vmatpush.msra.mxu0 %v7961
    %v7963 = vand.u32 %v7802, 4294901760
    %v7964 = vsub.f32 %v7802, %v7963
    %v7965 = vand.u32 %v7964, 4294901760
    %7966 = vmatpush.msra.mxu0 %v7965
    %v7967 = vand.u32 %v7807, 4294901760
    %7968 = vmatmul.f32.gmra.mxu0 %v7967
    %v7969 = vpop.f32.mrf.mxu0
    %v7970 = vadd.f32 %v7937, %v7969
    %7971 = vdwg.mxu0
    %7972 = vmatpush.msra.mxu0 0.0
    %7973 = vmatpush.msra.mxu0 0.0
    %7974 = vmatpush.msra.mxu0 0.0
    %7975 = vmatpush.msra.mxu0 0.0
    %7976 = vmatpush.msra.mxu0 0.0
    %7977 = vmatpush.msra.mxu0 0.0
    %7978 = vmatpush.msra.mxu0 0.0
    %7979 = vmatpush.msra.mxu0 0.0
    %7980 = vmatpush.msra.mxu0 0.0
    %7981 = vmatpush.msra.mxu0 0.0
    %7982 = vmatpush.msra.mxu0 0.0
    %7983 = vmatpush.msra.mxu0 0.0
    %v7984 = vand.u32 %v7810, 4294901760
    %7985 = vmatpush.msra.mxu0 %v7984
    %v7986 = vand.u32 %v7804, 4294901760
    %7987 = vmatpush.msra.mxu0 %v7986
    %v7988 = vand.u32 %v7803, 4294901760
    %7989 = vmatpush.msra.mxu0 %v7988
    %v7990 = vand.u32 %v7802, 4294901760
    %7991 = vmatpush.msra.mxu0 %v7990
    %v7992 = vand.u32 %v7807, 4294901760
    %7993 = vmatmul.f32.gmra.mxu0 %v7992
    %v7994 = vpop.f32.mrf.mxu0
    %v7995 = vadd.f32 %v7970, %v7994
    %7996 = vdwg.mxu0
    %v7997 = vadd.f32 %v7800, %v7995
    %s7998 = scalar_lea.vmem %s4, 192
    %v7999 = vld [vmem:[%s7998] sm:$0xff]
    %v8000 = vld [vmem:[%s7998 + $0x8] sm:$0xff]
    %v8001 = vld [vmem:[%s7998 + $0x10] sm:$0xff]
    %v8002 = vld [vmem:[%s7998 + $0x18] sm:$0xf]
    %v8003 = vrot.slane %v6816, 4
    %v8004 = vsel %vm6828, %v8003, 0
    %v8007 = vsel %vm6831, %v8002, 0
    %8009 = vmatpush.msra.mxu0 0.0
    %8010 = vmatpush.msra.mxu0 0.0
    %8011 = vmatpush.msra.mxu0 0.0
    %8012 = vmatpush.msra.mxu0 0.0
    %8013 = vmatpush.msra.mxu0 0.0
    %8014 = vmatpush.msra.mxu0 0.0
    %8015 = vmatpush.msra.mxu0 0.0
    %8016 = vmatpush.msra.mxu0 0.0
    %8017 = vmatpush.msra.mxu0 0.0
    %8018 = vmatpush.msra.mxu0 0.0
    %8019 = vmatpush.msra.mxu0 0.0
    %8020 = vmatpush.msra.mxu0 0.0
    %v8021 = vand.u32 %v8007, 4294901760
    %8022 = vmatpush.msra.mxu0 %v8021
    %v8023 = vand.u32 %v8001, 4294901760
    %8024 = vmatpush.msra.mxu0 %v8023
    %v8025 = vand.u32 %v8000, 4294901760
    %8026 = vmatpush.msra.mxu0 %v8025
    %v8027 = vand.u32 %v7999, 4294901760
    %8028 = vmatpush.msra.mxu0 %v8027
    %v8029 = vand.u32 %v8004, 4294901760
    %v8030 = vsub.f32 %v8004, %v8029
    %v8031 = vand.u32 %v8030, 4294901760
    %v8032 = vsub.f32 %v8030, %v8031
    %v8033 = vand.u32 %v8032, 4294901760
    %8034 = vmatmul.f32.gmra.mxu0 %v8033
    %v8035 = vpop.f32.mrf.mxu0
    %v8036 = vadd.f32 0.0, %v8035
    %8037 = vdwg.mxu0
    %8038 = vmatpush.msra.mxu0 0.0
    %8039 = vmatpush.msra.mxu0 0.0
    %8040 = vmatpush.msra.mxu0 0.0
    %8041 = vmatpush.msra.mxu0 0.0
    %8042 = vmatpush.msra.mxu0 0.0
    %8043 = vmatpush.msra.mxu0 0.0
    %8044 = vmatpush.msra.mxu0 0.0
    %8045 = vmatpush.msra.mxu0 0.0
    %8046 = vmatpush.msra.mxu0 0.0
    %8047 = vmatpush.msra.mxu0 0.0
    %8048 = vmatpush.msra.mxu0 0.0
    %8049 = vmatpush.msra.mxu0 0.0
    %v8050 = vand.u32 %v8007, 4294901760
    %v8051 = vsub.f32 %v8007, %v8050
    %v8052 = vand.u32 %v8051, 4294901760
    %v8053 = vsub.f32 %v8051, %v8052
    %v8054 = vand.u32 %v8053, 4294901760
    %8055 = vmatpush.msra.mxu0 %v8054
    %v8056 = vand.u32 %v8001, 4294901760
    %v8057 = vsub.f32 %v8001, %v8056
    %v8058 = vand.u32 %v8057, 4294901760
    %v8059 = vsub.f32 %v8057, %v8058
    %v8060 = vand.u32 %v8059, 4294901760
    %8061 = vmatpush.msra.mxu0 %v8060
    %v8062 = vand.u32 %v8000, 4294901760
    %v8063 = vsub.f32 %v8000, %v8062
    %v8064 = vand.u32 %v8063, 4294901760
    %v8065 = vsub.f32 %v8063, %v8064
    %v8066 = vand.u32 %v8065, 4294901760
    %8067 = vmatpush.msra.mxu0 %v8066
    %v8068 = vand.u32 %v7999, 4294901760
    %v8069 = vsub.f32 %v7999, %v8068
    %v8070 = vand.u32 %v8069, 4294901760
    %v8071 = vsub.f32 %v8069, %v8070
    %v8072 = vand.u32 %v8071, 4294901760
    %8073 = vmatpush.msra.mxu0 %v8072
    %v8074 = vand.u32 %v8004, 4294901760
    %8075 = vmatmul.f32.gmra.mxu0 %v8074
    %v8076 = vpop.f32.mrf.mxu0
    %v8077 = vadd.f32 %v8036, %v8076
    %8078 = vdwg.mxu0
    %8079 = vmatpush.msra.mxu0 0.0
    %8080 = vmatpush.msra.mxu0 0.0
    %8081 = vmatpush.msra.mxu0 0.0
    %8082 = vmatpush.msra.mxu0 0.0
    %8083 = vmatpush.msra.mxu0 0.0
    %8084 = vmatpush.msra.mxu0 0.0
    %8085 = vmatpush.msra.mxu0 0.0
    %8086 = vmatpush.msra.mxu0 0.0
    %8087 = vmatpush.msra.mxu0 0.0
    %8088 = vmatpush.msra.mxu0 0.0
    %8089 = vmatpush.msra.mxu0 0.0
    %8090 = vmatpush.msra.mxu0 0.0
    %v8091 = vand.u32 %v8007, 4294901760
    %v8092 = vsub.f32 %v8007, %v8091
    %8093 = vmatpush.msra.mxu0 %v8092
    %v8094 = vand.u32 %v8001, 4294901760
    %v8095 = vsub.f32 %v8001, %v8094
    %8096 = vmatpush.msra.mxu0 %v8095
    %v8097 = vand.u32 %v8000, 4294901760
    %v8098 = vsub.f32 %v8000, %v8097
    %8099 = vmatpush.msra.mxu0 %v8098
    %v8100 = vand.u32 %v7999, 4294901760
    %v8101 = vsub.f32 %v7999, %v8100
    %8102 = vmatpush.msra.mxu0 %v8101
    %v8103 = vand.u32 %v8004, 4294901760
    %v8104 = vsub.f32 %v8004, %v8103
    %8105 = vmatmul.f32.gmra.mxu0 %v8104
    %v8106 = vpop.f32.mrf.mxu0
    %v8107 = vadd.f32 %v8077, %v8106
    %8108 = vdwg.mxu0
    %8109 = vmatpush.msra.mxu0 0.0
    %8110 = vmatpush.msra.mxu0 0.0
    %8111 = vmatpush.msra.mxu0 0.0
    %8112 = vmatpush.msra.mxu0 0.0
    %8113 = vmatpush.msra.mxu0 0.0
    %8114 = vmatpush.msra.mxu0 0.0
    %8115 = vmatpush.msra.mxu0 0.0
    %8116 = vmatpush.msra.mxu0 0.0
    %8117 = vmatpush.msra.mxu0 0.0
    %8118 = vmatpush.msra.mxu0 0.0
    %8119 = vmatpush.msra.mxu0 0.0
    %8120 = vmatpush.msra.mxu0 0.0
    %v8121 = vand.u32 %v8007, 4294901760
    %8122 = vmatpush.msra.mxu0 %v8121
    %v8123 = vand.u32 %v8001, 4294901760
    %8124 = vmatpush.msra.mxu0 %v8123
    %v8125 = vand.u32 %v8000, 4294901760
    %8126 = vmatpush.msra.mxu0 %v8125
    %v8127 = vand.u32 %v7999, 4294901760
    %8128 = vmatpush.msra.mxu0 %v8127
    %v8129 = vand.u32 %v8004, 4294901760
    %v8130 = vsub.f32 %v8004, %v8129
    %v8131 = vand.u32 %v8130, 4294901760
    %8132 = vmatmul.f32.gmra.mxu0 %v8131
    %v8133 = vpop.f32.mrf.mxu0
    %v8134 = vadd.f32 %v8107, %v8133
    %8135 = vdwg.mxu0
    %8136 = vmatpush.msra.mxu0 0.0
    %8137 = vmatpush.msra.mxu0 0.0
    %8138 = vmatpush.msra.mxu0 0.0
    %8139 = vmatpush.msra.mxu0 0.0
    %8140 = vmatpush.msra.mxu0 0.0
    %8141 = vmatpush.msra.mxu0 0.0
    %8142 = vmatpush.msra.mxu0 0.0
    %8143 = vmatpush.msra.mxu0 0.0
    %8144 = vmatpush.msra.mxu0 0.0
    %8145 = vmatpush.msra.mxu0 0.0
    %8146 = vmatpush.msra.mxu0 0.0
    %8147 = vmatpush.msra.mxu0 0.0
    %v8148 = vand.u32 %v8007, 4294901760
    %v8149 = vsub.f32 %v8007, %v8148
    %v8150 = vand.u32 %v8149, 4294901760
    %8151 = vmatpush.msra.mxu0 %v8150
    %v8152 = vand.u32 %v8001, 4294901760
    %v8153 = vsub.f32 %v8001, %v8152
    %v8154 = vand.u32 %v8153, 4294901760
    %8155 = vmatpush.msra.mxu0 %v8154
    %v8156 = vand.u32 %v8000, 4294901760
    %v8157 = vsub.f32 %v8000, %v8156
    %v8158 = vand.u32 %v8157, 4294901760
    %8159 = vmatpush.msra.mxu0 %v8158
    %v8160 = vand.u32 %v7999, 4294901760
    %v8161 = vsub.f32 %v7999, %v8160
    %v8162 = vand.u32 %v8161, 4294901760
    %8163 = vmatpush.msra.mxu0 %v8162
    %v8164 = vand.u32 %v8004, 4294901760
    %8165 = vmatmul.f32.gmra.mxu0 %v8164
    %v8166 = vpop.f32.mrf.mxu0
    %v8167 = vadd.f32 %v8134, %v8166
    %8168 = vdwg.mxu0
    %8169 = vmatpush.msra.mxu0 0.0
    %8170 = vmatpush.msra.mxu0 0.0
    %8171 = vmatpush.msra.mxu0 0.0
    %8172 = vmatpush.msra.mxu0 0.0
    %8173 = vmatpush.msra.mxu0 0.0
    %8174 = vmatpush.msra.mxu0 0.0
    %8175 = vmatpush.msra.mxu0 0.0
    %8176 = vmatpush.msra.mxu0 0.0
    %8177 = vmatpush.msra.mxu0 0.0
    %8178 = vmatpush.msra.mxu0 0.0
    %8179 = vmatpush.msra.mxu0 0.0
    %8180 = vmatpush.msra.mxu0 0.0
    %v8181 = vand.u32 %v8007, 4294901760
    %8182 = vmatpush.msra.mxu0 %v8181
    %v8183 = vand.u32 %v8001, 4294901760
    %8184 = vmatpush.msra.mxu0 %v8183
    %v8185 = vand.u32 %v8000, 4294901760
    %8186 = vmatpush.msra.mxu0 %v8185
    %v8187 = vand.u32 %v7999, 4294901760
    %8188 = vmatpush.msra.mxu0 %v8187
    %v8189 = vand.u32 %v8004, 4294901760
    %8190 = vmatmul.f32.gmra.mxu0 %v8189
    %v8191 = vpop.f32.mrf.mxu0
    %v8192 = vadd.f32 %v8167, %v8191
    %8193 = vdwg.mxu0
    %v8194 = vadd.f32 %v7997, %v8192
    %v8195 = vld [vmem:[%s5] sm:$0x1]
    %v8197 = vperm.slane %v8195, 0
    %v8199 = vadd.f32 %v8194, %v8197
    %vm8200 = vcmask 74752
    %8201 = vst.msk [vmem:[#allocation2] sm:$0x3] %vm8200, %v8199
    // Predicated region
    $region26: #{net_forward_pallas.1} parent=1 // pred_check
      _
    $region27: #{net_forward_pallas.1} parent=1 // pred_check_branch
      %8203 = sbr.rel (0) target = $region29
    $region28: #{net_forward_pallas.1} parent=1 // pred_region
      %8205 = vsyncadd [#allocation3], 0
      %s8207 = sshll.u32 [#allocation2], 4
      %s8208 = int_to_ptr.vmem [resolvable:$true] %s8207
      %s8209 = sshll.u32 %s6, 4
      %s8210 = int_to_ptr.hbm [resolvable:$true] %s8209
      %8212 = dma.vmem_to_hbm [thread:$0]  %s8208, 32, %s8210, [#allocation3]
    $region29: #{net_forward_pallas.1} parent=1 // pred_fallthru
      _
    // Predicated region
    $region30: #{net_forward_pallas.1} parent=1 // pred_check
      _
    $region31: #{net_forward_pallas.1} parent=1 // pred_check_branch
      %8214 = sbr.rel (0) target = $region33
    $region32: #{net_forward_pallas.1} parent=1 // pred_region
      %8216 = dma.done [#allocation3], 32
    $region33: #{net_forward_pallas.1} parent=1 // pred_fallthru
      _
    %8217 = vsyncpa [#allocation3], 1

</llo_original>
